<compile_context>
chip_gen: v7x
topology: tpu7x:2x2x1
jax: 0.10.0
libtpu: 0.0.40
codegen_flags: <defaults>
</compile_context>

<pallas_src>
import functools
import math

import jax
import jax.numpy as jnp
from jax.experimental import pallas as pl
from jax.experimental.pallas import tpu as pltpu

# ----------------------------- model config (tiny, synthetic) -----------------------------
IMG = 64
IN_CH = 3
FPN_CH = 16
NUM_CLASSES = 4
NUM_ANCHORS = 3
HEAD_REPEATS = 2
BN_EPS = 1e-3
FUSE_EPS = 1e-4

NP = 128                 # lane-dense padded output width (all couts here <= 24)
MAX_BLOCK_ROWS = 2048    # largest single M-block (biggest layer here is exactly 2048 rows)
FUSE_BLOCK_ROWS = 1024   # row tile for the fusion kernel at larger resolutions

# (cin, cout, stride, is_feature) -- features taken at strides 8, 16, 32 (P3, P4, P5)
BACKBONE_SPEC = [
    (IN_CH, 8, 2, False),
    (8, 8, 2, False),
    (8, 8, 2, True),
    (8, 16, 2, True),
    (16, 24, 2, True),
]


def _round_up(v, m):
    return ((v + m - 1) // m) * m


# ----------------------------------- Pallas kernels ---------------------------------------
def _matmul_bias_act_kernel(lvl_ref, x_ref, w_ref, b_ref, o_ref, *, act):
    """o = act((x @ w) + bias); BN scale & depthwise taps are pre-folded into w."""
    del lvl_ref  # scalar-prefetch level ids are consumed by the index_maps only
    y = jnp.dot(x_ref[...], w_ref[...], preferred_element_type=jnp.float32)
    y = y + b_ref[...]
    if act:
        y = y * (1.0 / (1.0 + jnp.exp(-y)))  # swish / SiLU (f32 epilogue)
    o_ref[...] = y


def _fuse_swish_kernel(*refs, n_in, eps):
    """BiFPN fast-attention fusion: o = swish(sum_i relu(w_i)*x_i / (sum relu(w_i)+eps))."""
    x_refs = refs[:n_in]
    w_ref = refs[n_in]
    o_ref = refs[n_in + 1]
    ws = [jnp.maximum(w_ref[i], 0.0) for i in range(n_in)]
    total = ws[0]
    for i in range(1, n_in):
        total = total + ws[i]
    inv = 1.0 / (total + eps)
    acc = x_refs[0][...] * (ws[0] * inv)
    for i in range(1, n_in):
        acc = acc + x_refs[i][...] * (ws[i] * inv)
    o_ref[...] = acc * (1.0 / (1.0 + jnp.exp(-acc)))


# ---------------------------------- Pallas wrappers ----------------------------------------
def _pallas_matmul(x2d, w_stack, b_stack, level_ids, act, block_m):
    """x2d: (nb*block_m, K) bf16; w_stack: (L, K, NP) bf16; b_stack: (L, 1, NP) f32.

    level_ids (int32, (nb,)) selects which weight/bias set each M-block uses (scalar prefetch).
    """
    nb = level_ids.shape[0]
    k = x2d.shape[1]
    grid_spec = pltpu.PrefetchScalarGridSpec(
        num_scalar_prefetch=1,
        grid=(nb,),
        in_specs=[
            pl.BlockSpec((block_m, k), lambda i, lvl: (i, 0)),
            pl.BlockSpec((None, k, NP), lambda i, lvl: (lvl[i], 0, 0)),
            pl.BlockSpec((None, 1, NP), lambda i, lvl: (lvl[i], 0, 0)),
        ],
        out_specs=pl.BlockSpec((block_m, NP), lambda i, lvl: (i, 0)),
    )
    return pl.pallas_call(
        functools.partial(_matmul_bias_act_kernel, act=act),
        out_shape=jax.ShapeDtypeStruct((nb * block_m, NP), jnp.float32),
        grid_spec=grid_spec,
        compiler_params=pltpu.CompilerParams(dimension_semantics=("parallel",)),
    )(level_ids, x2d, w_stack, b_stack)


def _pad_k(x2d, kp):
    k = x2d.shape[1]
    if kp != k:
        x2d = jnp.pad(x2d, ((0, 0), (0, kp - k)))
    return x2d


def _single_matmul(x2d, pp, cout, act):
    """One (possibly multi-block) fused matmul for a single weight set."""
    m = x2d.shape[0]
    x2d = _pad_k(x2d, pp["w"].shape[1])
    if m <= MAX_BLOCK_ROWS:
        bm, nb = _round_up(max(m, 8), 8), 1
    else:
        bm = MAX_BLOCK_ROWS
        nb = (m + bm - 1) // bm
    mp = nb * bm
    if mp != m:
        x2d = jnp.pad(x2d, ((0, mp - m), (0, 0)))
    level_ids = jnp.zeros((nb,), jnp.int32)
    out = _pallas_matmul(x2d, pp["w"], pp["b"], level_ids, act, bm)
    return out[:m, :cout]


def fuse_swish(feats, weights):
    """Fast-attention weighted fusion + swish on a flattened lane-dense layout."""
    shape = feats[0].shape
    total = 1
    for d in shape:
        total *= d
    rows = _round_up(total, 8 * NP) // NP
    if rows <= FUSE_BLOCK_ROWS:
        br, nb, rows_p = rows, 1, rows
    else:
        rows_p = _round_up(rows, FUSE_BLOCK_ROWS)
        br, nb = FUSE_BLOCK_ROWS, rows_p // FUSE_BLOCK_ROWS
    pad = rows_p * NP - total
    flats = [jnp.pad(f.reshape(-1), (0, pad)).reshape(rows_p, NP) for f in feats]
    n_in = len(feats)
    out = pl.pallas_call(
        functools.partial(_fuse_swish_kernel, n_in=n_in, eps=FUSE_EPS),
        out_shape=jax.ShapeDtypeStruct((rows_p, NP), jnp.float32),
        grid=(nb,),
        in_specs=[pl.BlockSpec((br, NP), lambda i: (i, 0)) for _ in range(n_in)]
        + [pl.BlockSpec(memory_space=pltpu.MemorySpace.SMEM)],
        out_specs=pl.BlockSpec((br, NP), lambda i: (i, 0)),
        compiler_params=pltpu.CompilerParams(dimension_semantics=("parallel",)),
    )(*flats, weights.astype(jnp.float32))
    return out.reshape(-1)[:total].reshape(shape)


# ---------------------------------- conv building blocks -----------------------------------
def _extract_patches(x, ksize, stride, pad):
    """x: (N,H,W,C) -> (N,Ho,Wo,ksize*ksize,C) im2col taps."""
    n, h, w, c = x.shape
    xp = jnp.pad(x, ((0, 0), (pad, pad), (pad, pad), (0, 0)))
    ho = (h + 2 * pad - ksize) // stride + 1
    wo = (w + 2 * pad - ksize) // stride + 1
    taps = []
    for dy in range(ksize):
        for dx in range(ksize):
            taps.append(xp[:, dy:dy + ho * stride:stride, dx:dx + wo * stride:stride, :])
    return jnp.stack(taps, axis=3), ho, wo


def conv3x3_packed(x, pp, stride, cout, act):
    """Standard 3x3 conv or folded depthwise-separable conv (same packed form)."""
    n = x.shape[0]
    p, ho, wo = _extract_patches(x.astype(jnp.bfloat16), 3, stride, 1)
    y = _single_matmul(p.reshape(n * ho * wo, -1), pp, cout, act)
    return y.reshape(n, ho, wo, cout)


def conv1x1_packed(x, pp, cout, act=False):
    n, h, w, c = x.shape
    y = _single_matmul(x.astype(jnp.bfloat16).reshape(-1, c), pp, cout, act)
    return y.reshape(n, h, w, cout)


def batched_sep(xs, pp, cout, act):
    """One pallas_call for the same (shared-K) separable conv over all feature levels."""
    pats, dims, ms = [], [], []
    for x in xs:
        n = x.shape[0]
        p, ho, wo = _extract_patches(x.astype(jnp.bfloat16), 3, 1, 1)
        pats.append(p.reshape(n * ho * wo, -1))
        dims.append((n, ho, wo))
        ms.append(n * ho * wo)
    bm = _round_up(max(ms), 8)
    xp = jnp.concatenate(
        [jnp.pad(p, ((0, bm - m), (0, 0))) for p, m in zip(pats, ms)], axis=0)
    xp = _pad_k(xp, pp["w"].shape[1])
    n_levels = len(xs)
    n_sets = pp["w"].shape[0]
    level_ids = (jnp.arange(n_levels, dtype=jnp.int32) if n_sets > 1
                 else jnp.zeros((n_levels,), jnp.int32))
    out = _pallas_matmul(xp, pp["w"], pp["b"], level_ids, act, bm)
    outs = []
    for i, (m, (n, ho, wo)) in enumerate(zip(ms, dims)):
        outs.append(out[i * bm:i * bm + m, :cout].reshape(n, ho, wo, cout))
    return outs


def upsample2x(x):
    return jnp.repeat(jnp.repeat(x, 2, axis=1), 2, axis=2)


def downsample2x(x):
    n, h, w, c = x.shape
    return x.reshape(n, h // 2, 2, w // 2, 2, c).max(axis=(2, 4))


# --------------------------------------- forward -------------------------------------------
def backbone_forward(x, layers):
    feats = []
    for spec, pp in zip(BACKBONE_SPEC, layers):
        _, cout, stride, is_feat = spec
        x = conv3x3_packed(x, pp, stride, cout, act=True)
        if is_feat:
            feats.append(x)
    return feats  # [P3, P4, P5]


def bifpn_forward(feats, fp):
    ins = []
    for f, lat in zip(feats, fp["lateral"]):
        ins.append(f if lat is None else conv1x1_packed(f, lat, FPN_CH, act=False))
    p3, p4, p5 = ins
    td4 = conv3x3_packed(fuse_swish([p4, upsample2x(p5)], fp["w_td4"]),
                         fp["sep_td4"], 1, FPN_CH, act=False)
    o3 = conv3x3_packed(fuse_swish([p3, upsample2x(td4)], fp["w_out3"]),
                        fp["sep_out3"], 1, FPN_CH, act=False)
    o4 = conv3x3_packed(fuse_swish([p4, td4, downsample2x(o3)], fp["w_out4"]),
                        fp["sep_out4"], 1, FPN_CH, act=False)
    o5 = conv3x3_packed(fuse_swish([p5, downsample2x(o4)], fp["w_out5"]),
                        fp["sep_out5"], 1, FPN_CH, act=False)
    return [o3, o4, o5]


def head_forward(feats, hp, pred_cout):
    xs = list(feats)
    for rep in hp["reps"]:
        xs = batched_sep(xs, rep, FPN_CH, act=True)   # per-level BN folded into weight sets
    ys = batched_sep(xs, hp["predict"], pred_cout, act=False)
    return [jnp.transpose(y, (0, 3, 1, 2)) for y in ys]  # back to PyTorch NCHW


@jax.jit
def efficientdet_forward(x_nchw, pp):
    x = jnp.transpose(x_nchw, (0, 2, 3, 1))  # NCHW -> NHWC for kernel compute
    feats = backbone_forward(x, pp["backbone"])
    feats = bifpn_forward(feats, pp["fpn"])
    x_class = head_forward(feats, pp["class_net"], NUM_ANCHORS * NUM_CLASSES)
    x_box = head_forward(feats, pp["box_net"], NUM_ANCHORS * 4)
    return tuple(x_class), tuple(x_box)


# ------------------------------------ parameter init ---------------------------------------
class _KeyGen:
    def __init__(self, key):
        self.key = key

    def __call__(self):
        self.key, sub = jax.random.split(self.key)
        return sub


def _bn(c):
    gamma = jnp.ones((c,), jnp.float32)
    beta = jnp.zeros((c,), jnp.float32)
    mean = jnp.zeros((c,), jnp.float32)
    var = jnp.ones((c,), jnp.float32)
    s = gamma / jnp.sqrt(var + BN_EPS)
    return s, beta - mean * s


def init_params(key):
    kg = _KeyGen(key)

    def w(shape):
        return jax.random.normal(kg(), shape, jnp.float32) * 0.05

    def sep_params(cin, cout, with_bn=True):
        d = {"dw": w((9, cin)), "pw": w((cin, cout))}
        if with_bn:
            d["scale"], d["bias"] = _bn(cout)
        return d

    # backbone
    backbone = []
    for cin, cout, _, _ in BACKBONE_SPEC:
        s, b = _bn(cout)
        backbone.append({"w": w((3, 3, cin, cout)), "scale": s, "bias": b})

    # BiFPN (1 cell, levels P3..P5); lateral 1x1+BN only where channels differ
    feat_ch = [spec[1] for spec in BACKBONE_SPEC if spec[3]]
    lateral = []
    for c in feat_ch:
        if c == FPN_CH:
            lateral.append(None)
        else:
            s, b = _bn(FPN_CH)
            lateral.append({"w": w((c, FPN_CH)), "scale": s, "bias": b})
    fpn = {
        "lateral": lateral,
        "w_td4": jnp.ones((2,), jnp.float32),
        "w_out3": jnp.ones((2,), jnp.float32),
        "w_out4": jnp.ones((3,), jnp.float32),
        "w_out5": jnp.ones((2,), jnp.float32),
        "sep_td4": sep_params(FPN_CH, FPN_CH),
        "sep_out3": sep_params(FPN_CH, FPN_CH),
        "sep_out4": sep_params(FPN_CH, FPN_CH),
        "sep_out5": sep_params(FPN_CH, FPN_CH),
    }

    def head(out_per_anchor, prior_bias):
        reps = [sep_params(FPN_CH, FPN_CH, with_bn=False) for _ in range(HEAD_REPEATS)]
        bn = [[_bn(FPN_CH) for _ in range(3)] for _ in range(HEAD_REPEATS)]
        cout = NUM_ANCHORS * out_per_anchor
        predict = {"dw": w((9, FPN_CH)), "pw": w((FPN_CH, cout)),
                   "bias": jnp.full((cout,), prior_bias, jnp.float32)}
        return {"reps": reps, "bn": bn, "predict": predict}

    return {
        "backbone": backbone,
        "fpn": fpn,
        "class_net": head(NUM_CLASSES, -math.log((1.0 - 0.01) / 0.01)),
        "box_net": head(4, 0.0),
    }


# ---------------------------- parameter packing (one-time prep) ----------------------------
def _pack_single(w2d, scale, bias, cout):
    """Fold BN scale into columns, pad K to x16 and cout to NP, cast weights to bf16."""
    w = w2d * scale[None, :]
    k = w.shape[0]
    kp = _round_up(k, 16)
    wp = jnp.zeros((kp, NP), jnp.float32).at[:k, :cout].set(w)
    bp = jnp.zeros((1, NP), jnp.float32).at[:, :cout].set(bias[None, :])
    return {"w": wp.astype(jnp.bfloat16)[None], "b": bp[None]}


def _pack_levels(w2d, sb_list, cout):
    ws, bs = [], []
    for scale, bias in sb_list:
        p = _pack_single(w2d, scale, bias, cout)
        ws.append(p["w"][0])
        bs.append(p["b"][0])
    return {"w": jnp.stack(ws), "b": jnp.stack(bs)}


def _sep_w2d(dw, pw):
    """Fold depthwise taps into the pointwise matmul: W_eff[(t,c), o] = dw[t,c] * pw[c,o]."""
    cin, cout = pw.shape
    return (dw[:, :, None] * pw[None, :, :]).reshape(9 * cin, cout)


def prepare_params(raw):
    packed = {}

    backbone = []
    for spec, p in zip(BACKBONE_SPEC, raw["backbone"]):
        cin, cout = spec[0], spec[1]
        backbone.append(_pack_single(p["w"].reshape(9 * cin, cout), p["scale"], p["bias"], cout))
    packed["backbone"] = backbone

    fp = raw["fpn"]
    lateral = []
    for lat in fp["lateral"]:
        if lat is None:
            lateral.append(None)
        else:
            lateral.append(_pack_single(lat["w"], lat["scale"], lat["bias"], FPN_CH))

    def pack_sep(sp):
        return _pack_single(_sep_w2d(sp["dw"], sp["pw"]), sp["scale"], sp["bias"], FPN_CH)

    packed["fpn"] = {
        "lateral": lateral,
        "w_td4": fp["w_td4"], "w_out3": fp["w_out3"],
        "w_out4": fp["w_out4"], "w_out5": fp["w_out5"],
        "sep_td4": pack_sep(fp["sep_td4"]),
        "sep_out3": pack_sep(fp["sep_out3"]),
        "sep_out4": pack_sep(fp["sep_out4"]),
        "sep_out5": pack_sep(fp["sep_out5"]),
    }

    def pack_head(hp, pred_cout):
        reps = []
        for r, rep in enumerate(hp["reps"]):
            w2d = _sep_w2d(rep["dw"], rep["pw"])
            reps.append(_pack_levels(w2d, hp["bn"][r], FPN_CH))  # per-level BN folded
        pr = hp["predict"]
        predict = _pack_single(_sep_w2d(pr["dw"], pr["pw"]),
                               jnp.ones((pred_cout,), jnp.float32), pr["bias"], pred_cout)
        return {"reps": reps, "predict": predict}

    packed["class_net"] = pack_head(raw["class_net"], NUM_ANCHORS * NUM_CLASSES)
    packed["box_net"] = pack_head(raw["box_net"], NUM_ANCHORS * 4)
    return packed


# -------------------------------------------- main -----------------------------------------
if __name__ == "__main__":
    raw_params = init_params(jax.random.PRNGKey(0))
    params = prepare_params(raw_params)  # one-time host-side fold/pad/bf16 pack
    x = jax.random.normal(jax.random.PRNGKey(0), (2, IN_CH, IMG, IMG), jnp.float32)  # NCHW

    x_class, x_box = efficientdet_forward(x, params)
    jax.block_until_ready((x_class, x_box))

    # sanity on shapes: per-level (N, A*num_classes, H, W) and (N, A*4, H, W)
    expect_hw = [IMG // 8, IMG // 16, IMG // 32]
    for lvl, hw in enumerate(expect_hw):
        assert x_class[lvl].shape == (2, NUM_ANCHORS * NUM_CLASSES, hw, hw)
        assert x_box[lvl].shape == (2, NUM_ANCHORS * 4, hw, hw)
    print("KERNEL_OK")
</pallas_src>

<mosaic_0001>
module attributes {stable_mosaic.version = 11 : i64} {
  func.func @_matmul_bias_act_kernel(%arg0: i32, %arg1: memref<1xi32, #tpu.memory_space<smem>>, %arg2: memref<2048x32xbf16, #tpu.memory_space<vmem>>, %arg3: memref<1x32x128xbf16, #tpu.memory_space<vmem>>, %arg4: memref<1x1x128xf32, #tpu.memory_space<vmem>>, %arg5: memref<2048x128xf32, #tpu.memory_space<vmem>>) attributes {dimension_semantics = [#tpu.dimension_semantics<parallel>], iteration_bounds = array<i64: 1>, scalar_prefetch = 1 : i64, scratch_operands = 0 : i64, tpu.core_type = #tpu.core_type<tc>, window_params = [{transform_indices = @transform_0, window_bounds = array<i64: 2048, 32>}, {transform_indices = @transform_1, window_bounds = array<i64: 1, 32, 128>}, {transform_indices = @transform_2, window_bounds = array<i64: 1, 1, 128>}, {transform_indices = @transform_3, window_bounds = array<i64: 2048, 128>}]} {
    %c0 = arith.constant 0 : index
    %c0_0 = arith.constant 0 : index
    %0 = vector.load %arg2[%c0, %c0_0] : memref<2048x32xbf16, #tpu.memory_space<vmem>>, vector<2048x32xbf16>
    %c0_1 = arith.constant 0 : index
    %c0_2 = arith.constant 0 : index
    %c0_3 = arith.constant 0 : index
    %1 = vector.load %arg3[%c0_1, %c0_2, %c0_3] : memref<1x32x128xbf16, #tpu.memory_space<vmem>>, vector<1x32x128xbf16>
    %2 = vector.shape_cast %1 : vector<1x32x128xbf16> to vector<32x128xbf16>
    %cst = arith.constant dense<0.000000e+00> : vector<2048x128xf32>
    %3 = tpu.matmul %0, %2, %cst {dimension_numbers = #tpu.dot_dimension_numbers<[1], [0], [0], [1], [0, 0, 1, 1], [], []>} : vector<2048x32xbf16>, vector<32x128xbf16>, vector<2048x128xf32> -> vector<2048x128xf32>
    %c0_4 = arith.constant 0 : index
    %c0_5 = arith.constant 0 : index
    %c0_6 = arith.constant 0 : index
    %4 = vector.load %arg4[%c0_4, %c0_5, %c0_6] : memref<1x1x128xf32, #tpu.memory_space<vmem>>, vector<1x1x128xf32>
    %5 = vector.shape_cast %4 : vector<1x1x128xf32> to vector<1x128xf32>
    %6 = vector.broadcast %5 : vector<1x128xf32> to vector<2048x128xf32>
    %7 = arith.addf %3, %6 : vector<2048x128xf32>
    %cst_7 = arith.constant 0.000000e+00 : f32
    %8 = vector.broadcast %cst_7 : f32 to vector<2048x128xf32>
    %9 = arith.subf %8, %7 : vector<2048x128xf32>
    %10 = math.exp %9 : vector<2048x128xf32>
    %cst_8 = arith.constant 1.000000e+00 : f32
    %11 = vector.broadcast %cst_8 : f32 to vector<2048x128xf32>
    %12 = arith.addf %11, %10 : vector<2048x128xf32>
    %cst_9 = arith.constant 1.000000e+00 : f32
    %13 = vector.broadcast %cst_9 : f32 to vector<2048x128xf32>
    %14 = arith.divf %13, %12 : vector<2048x128xf32>
    %15 = arith.mulf %7, %14 : vector<2048x128xf32>
    %c0_10 = arith.constant 0 : index
    %c0_11 = arith.constant 0 : index
    %16 = vector.load %arg5[%c0_10, %c0_11] : memref<2048x128xf32, #tpu.memory_space<vmem>>, vector<2048x128xf32>
    tpu.vector_store %arg5[%c0_10, %c0_11], %15 {strides = array<i32>} : memref<2048x128xf32, #tpu.memory_space<vmem>>, vector<2048x128xf32>,
    return
  }
  func.func @transform_0(%arg0: i32, %arg1: memref<1xi32, #tpu.memory_space<smem>>) -> (i32, i32) {
    %c0_i32 = arith.constant 0 : i32
    %c0_i32_0 = arith.constant 0 : i32
    return %arg0, %c0_i32 : i32, i32
  }
  func.func @transform_1(%arg0: i32, %arg1: memref<1xi32, #tpu.memory_space<smem>>) -> (i32, i32, i32) {
    %0 = arith.index_cast %arg0 : i32 to index
    %1 = memref.load %arg1[%0] : memref<1xi32, #tpu.memory_space<smem>>
    %c0_i32 = arith.constant 0 : i32
    %c0_i32_0 = arith.constant 0 : i32
    %c0_i32_1 = arith.constant 0 : i32
    return %1, %c0_i32, %c0_i32_0 : i32, i32, i32
  }
  func.func @transform_2(%arg0: i32, %arg1: memref<1xi32, #tpu.memory_space<smem>>) -> (i32, i32, i32) {
    %0 = arith.index_cast %arg0 : i32 to index
    %1 = memref.load %arg1[%0] : memref<1xi32, #tpu.memory_space<smem>>
    %c0_i32 = arith.constant 0 : i32
    %c0_i32_0 = arith.constant 0 : i32
    %c0_i32_1 = arith.constant 0 : i32
    return %1, %c0_i32, %c0_i32_0 : i32, i32, i32
  }
  func.func @transform_3(%arg0: i32, %arg1: memref<1xi32, #tpu.memory_space<smem>>) -> (i32, i32) {
    %c0_i32 = arith.constant 0 : i32
    %c0_i32_0 = arith.constant 0 : i32
    return %arg0, %c0_i32 : i32, i32
  }
}

module attributes {stable_mosaic.version = 11 : i64} {
  func.func @_matmul_bias_act_kernel(%arg0: i32, %arg1: memref<1xi32, #tpu.memory_space<smem>>, %arg2: memref<512x80xbf16, #tpu.memory_space<vmem>>, %arg3: memref<1x80x128xbf16, #tpu.memory_space<vmem>>, %arg4: memref<1x1x128xf32, #tpu.memory_space<vmem>>, %arg5: memref<512x128xf32, #tpu.memory_space<vmem>>) attributes {dimension_semantics = [#tpu.dimension_semantics<parallel>], iteration_bounds = array<i64: 1>, scalar_prefetch = 1 : i64, scratch_operands = 0 : i64, tpu.core_type = #tpu.core_type<tc>, window_params = [{transform_indices = @transform_0, window_bounds = array<i64: 512, 80>}, {transform_indices = @transform_1, window_bounds = array<i64: 1, 80, 128>}, {transform_indices = @transform_2, window_bounds = array<i64: 1, 1, 128>}, {transform_indices = @transform_3, window_bounds = array<i64: 512, 128>}]} {
    %c0 = arith.constant 0 : index
    %c0_0 = arith.constant 0 : index
    %0 = vector.load %arg2[%c0, %c0_0] : memref<512x80xbf16, #tpu.memory_space<vmem>>, vector<512x80xbf16>
    %c0_1 = arith.constant 0 : index
    %c0_2 = arith.constant 0 : index
    %c0_3 = arith.constant 0 : index
    %1 = vector.load %arg3[%c0_1, %c0_2, %c0_3] : memref<1x80x128xbf16, #tpu.memory_space<vmem>>, vector<1x80x128xbf16>
    %2 = vector.shape_cast %1 : vector<1x80x128xbf16> to vector<80x128xbf16>
    %cst = arith.constant dense<0.000000e+00> : vector<512x128xf32>
    %3 = tpu.matmul %0, %2, %cst {dimension_numbers = #tpu.dot_dimension_numbers<[1], [0], [0], [1], [0, 0, 1, 1], [], []>} : vector<512x80xbf16>, vector<80x128xbf16>, vector<512x128xf32> -> vector<512x128xf32>
    %c0_4 = arith.constant 0 : index
    %c0_5 = arith.constant 0 : index
    %c0_6 = arith.constant 0 : index
    %4 = vector.load %arg4[%c0_4, %c0_5, %c0_6] : memref<1x1x128xf32, #tpu.memory_space<vmem>>, vector<1x1x128xf32>
    %5 = vector.shape_cast %4 : vector<1x1x128xf32> to vector<1x128xf32>
    %6 = vector.broadcast %5 : vector<1x128xf32> to vector<512x128xf32>
    %7 = arith.addf %3, %6 : vector<512x128xf32>
    %cst_7 = arith.constant 0.000000e+00 : f32
    %8 = vector.broadcast %cst_7 : f32 to vector<512x128xf32>
    %9 = arith.subf %8, %7 : vector<512x128xf32>
    %10 = math.exp %9 : vector<512x128xf32>
    %cst_8 = arith.constant 1.000000e+00 : f32
    %11 = vector.broadcast %cst_8 : f32 to vector<512x128xf32>
    %12 = arith.addf %11, %10 : vector<512x128xf32>
    %cst_9 = arith.constant 1.000000e+00 : f32
    %13 = vector.broadcast %cst_9 : f32 to vector<512x128xf32>
    %14 = arith.divf %13, %12 : vector<512x128xf32>
    %15 = arith.mulf %7, %14 : vector<512x128xf32>
    %c0_10 = arith.constant 0 : index
    %c0_11 = arith.constant 0 : index
    %16 = vector.load %arg5[%c0_10, %c0_11] : memref<512x128xf32, #tpu.memory_space<vmem>>, vector<512x128xf32>
    tpu.vector_store %arg5[%c0_10, %c0_11], %15 {strides = array<i32>} : memref<512x128xf32, #tpu.memory_space<vmem>>, vector<512x128xf32>,
    return
  }
  func.func @transform_0(%arg0: i32, %arg1: memref<1xi32, #tpu.memory_space<smem>>) -> (i32, i32) {
    %c0_i32 = arith.constant 0 : i32
    %c0_i32_0 = arith.constant 0 : i32
    return %arg0, %c0_i32 : i32, i32
  }
  func.func @transform_1(%arg0: i32, %arg1: memref<1xi32, #tpu.memory_space<smem>>) -> (i32, i32, i32) {
    %0 = arith.index_cast %arg0 : i32 to index
    %1 = memref.load %arg1[%0] : memref<1xi32, #tpu.memory_space<smem>>
    %c0_i32 = arith.constant 0 : i32
    %c0_i32_0 = arith.constant 0 : i32
    %c0_i32_1 = arith.constant 0 : i32
    return %1, %c0_i32, %c0_i32_0 : i32, i32, i32
  }
  func.func @transform_2(%arg0: i32, %arg1: memref<1xi32, #tpu.memory_space<smem>>) -> (i32, i32, i32) {
    %0 = arith.index_cast %arg0 : i32 to index
    %1 = memref.load %arg1[%0] : memref<1xi32, #tpu.memory_space<smem>>
    %c0_i32 = arith.constant 0 : i32
    %c0_i32_0 = arith.constant 0 : i32
    %c0_i32_1 = arith.constant 0 : i32
    return %1, %c0_i32, %c0_i32_0 : i32, i32, i32
  }
  func.func @transform_3(%arg0: i32, %arg1: memref<1xi32, #tpu.memory_space<smem>>) -> (i32, i32) {
    %c0_i32 = arith.constant 0 : i32
    %c0_i32_0 = arith.constant 0 : i32
    return %arg0, %c0_i32 : i32, i32
  }
}

module attributes {stable_mosaic.version = 11 : i64} {
  func.func @_matmul_bias_act_kernel(%arg0: i32, %arg1: memref<1xi32, #tpu.memory_space<smem>>, %arg2: memref<128x80xbf16, #tpu.memory_space<vmem>>, %arg3: memref<1x80x128xbf16, #tpu.memory_space<vmem>>, %arg4: memref<1x1x128xf32, #tpu.memory_space<vmem>>, %arg5: memref<128x128xf32, #tpu.memory_space<vmem>>) attributes {dimension_semantics = [#tpu.dimension_semantics<parallel>], iteration_bounds = array<i64: 1>, scalar_prefetch = 1 : i64, scratch_operands = 0 : i64, tpu.core_type = #tpu.core_type<tc>, window_params = [{transform_indices = @transform_0, window_bounds = array<i64: 128, 80>}, {transform_indices = @transform_1, window_bounds = array<i64: 1, 80, 128>}, {transform_indices = @transform_2, window_bounds = array<i64: 1, 1, 128>}, {transform_indices = @transform_3, window_bounds = array<i64: 128, 128>}]} {
    %c0 = arith.constant 0 : index
    %c0_0 = arith.constant 0 : index
    %0 = vector.load %arg2[%c0, %c0_0] : memref<128x80xbf16, #tpu.memory_space<vmem>>, vector<128x80xbf16>
    %c0_1 = arith.constant 0 : index
    %c0_2 = arith.constant 0 : index
    %c0_3 = arith.constant 0 : index
    %1 = vector.load %arg3[%c0_1, %c0_2, %c0_3] : memref<1x80x128xbf16, #tpu.memory_space<vmem>>, vector<1x80x128xbf16>
    %2 = vector.shape_cast %1 : vector<1x80x128xbf16> to vector<80x128xbf16>
    %cst = arith.constant dense<0.000000e+00> : vector<128x128xf32>
    %3 = tpu.matmul %0, %2, %cst {dimension_numbers = #tpu.dot_dimension_numbers<[1], [0], [0], [1], [0, 0, 1, 1], [], []>} : vector<128x80xbf16>, vector<80x128xbf16>, vector<128x128xf32> -> vector<128x128xf32>
    %c0_4 = arith.constant 0 : index
    %c0_5 = arith.constant 0 : index
    %c0_6 = arith.constant 0 : index
    %4 = vector.load %arg4[%c0_4, %c0_5, %c0_6] : memref<1x1x128xf32, #tpu.memory_space<vmem>>, vector<1x1x128xf32>
    %5 = vector.shape_cast %4 : vector<1x1x128xf32> to vector<1x128xf32>
    %6 = vector.broadcast %5 : vector<1x128xf32> to vector<128x128xf32>
    %7 = arith.addf %3, %6 : vector<128x128xf32>
    %cst_7 = arith.constant 0.000000e+00 : f32
    %8 = vector.broadcast %cst_7 : f32 to vector<128x128xf32>
    %9 = arith.subf %8, %7 : vector<128x128xf32>
    %10 = math.exp %9 : vector<128x128xf32>
    %cst_8 = arith.constant 1.000000e+00 : f32
    %11 = vector.broadcast %cst_8 : f32 to vector<128x128xf32>
    %12 = arith.addf %11, %10 : vector<128x128xf32>
    %cst_9 = arith.constant 1.000000e+00 : f32
    %13 = vector.broadcast %cst_9 : f32 to vector<128x128xf32>
    %14 = arith.divf %13, %12 : vector<128x128xf32>
    %15 = arith.mulf %7, %14 : vector<128x128xf32>
    %c0_10 = arith.constant 0 : index
    %c0_11 = arith.constant 0 : index
    %16 = vector.load %arg5[%c0_10, %c0_11] : memref<128x128xf32, #tpu.memory_space<vmem>>, vector<128x128xf32>
    tpu.vector_store %arg5[%c0_10, %c0_11], %15 {strides = array<i32>} : memref<128x128xf32, #tpu.memory_space<vmem>>, vector<128x128xf32>,
    return
  }
  func.func @transform_0(%arg0: i32, %arg1: memref<1xi32, #tpu.memory_space<smem>>) -> (i32, i32) {
    %c0_i32 = arith.constant 0 : i32
    %c0_i32_0 = arith.constant 0 : i32
    return %arg0, %c0_i32 : i32, i32
  }
  func.func @transform_1(%arg0: i32, %arg1: memref<1xi32, #tpu.memory_space<smem>>) -> (i32, i32, i32) {
    %0 = arith.index_cast %arg0 : i32 to index
    %1 = memref.load %arg1[%0] : memref<1xi32, #tpu.memory_space<smem>>
    %c0_i32 = arith.constant 0 : i32
    %c0_i32_0 = arith.constant 0 : i32
    %c0_i32_1 = arith.constant 0 : i32
    return %1, %c0_i32, %c0_i32_0 : i32, i32, i32
  }
  func.func @transform_2(%arg0: i32, %arg1: memref<1xi32, #tpu.memory_space<smem>>) -> (i32, i32, i32) {
    %0 = arith.index_cast %arg0 : i32 to index
    %1 = memref.load %arg1[%0] : memref<1xi32, #tpu.memory_space<smem>>
    %c0_i32 = arith.constant 0 : i32
    %c0_i32_0 = arith.constant 0 : i32
    %c0_i32_1 = arith.constant 0 : i32
    return %1, %c0_i32, %c0_i32_0 : i32, i32, i32
  }
  func.func @transform_3(%arg0: i32, %arg1: memref<1xi32, #tpu.memory_space<smem>>) -> (i32, i32) {
    %c0_i32 = arith.constant 0 : i32
    %c0_i32_0 = arith.constant 0 : i32
    return %arg0, %c0_i32 : i32, i32
  }
}

module attributes {stable_mosaic.version = 11 : i64} {
  func.func @_matmul_bias_act_kernel(%arg0: i32, %arg1: memref<1xi32, #tpu.memory_space<smem>>, %arg2: memref<32x80xbf16, #tpu.memory_space<vmem>>, %arg3: memref<1x80x128xbf16, #tpu.memory_space<vmem>>, %arg4: memref<1x1x128xf32, #tpu.memory_space<vmem>>, %arg5: memref<32x128xf32, #tpu.memory_space<vmem>>) attributes {dimension_semantics = [#tpu.dimension_semantics<parallel>], iteration_bounds = array<i64: 1>, scalar_prefetch = 1 : i64, scratch_operands = 0 : i64, tpu.core_type = #tpu.core_type<tc>, window_params = [{transform_indices = @transform_0, window_bounds = array<i64: 32, 80>}, {transform_indices = @transform_1, window_bounds = array<i64: 1, 80, 128>}, {transform_indices = @transform_2, window_bounds = array<i64: 1, 1, 128>}, {transform_indices = @transform_3, window_bounds = array<i64: 32, 128>}]} {
    %c0 = arith.constant 0 : index
    %c0_0 = arith.constant 0 : index
    %0 = vector.load %arg2[%c0, %c0_0] : memref<32x80xbf16, #tpu.memory_space<vmem>>, vector<32x80xbf16>
    %c0_1 = arith.constant 0 : index
    %c0_2 = arith.constant 0 : index
    %c0_3 = arith.constant 0 : index
    %1 = vector.load %arg3[%c0_1, %c0_2, %c0_3] : memref<1x80x128xbf16, #tpu.memory_space<vmem>>, vector<1x80x128xbf16>
    %2 = vector.shape_cast %1 : vector<1x80x128xbf16> to vector<80x128xbf16>
    %cst = arith.constant dense<0.000000e+00> : vector<32x128xf32>
    %3 = tpu.matmul %0, %2, %cst {dimension_numbers = #tpu.dot_dimension_numbers<[1], [0], [0], [1], [0, 0, 1, 1], [], []>} : vector<32x80xbf16>, vector<80x128xbf16>, vector<32x128xf32> -> vector<32x128xf32>
    %c0_4 = arith.constant 0 : index
    %c0_5 = arith.constant 0 : index
    %c0_6 = arith.constant 0 : index
    %4 = vector.load %arg4[%c0_4, %c0_5, %c0_6] : memref<1x1x128xf32, #tpu.memory_space<vmem>>, vector<1x1x128xf32>
    %5 = vector.shape_cast %4 : vector<1x1x128xf32> to vector<1x128xf32>
    %6 = vector.broadcast %5 : vector<1x128xf32> to vector<32x128xf32>
    %7 = arith.addf %3, %6 : vector<32x128xf32>
    %cst_7 = arith.constant 0.000000e+00 : f32
    %8 = vector.broadcast %cst_7 : f32 to vector<32x128xf32>
    %9 = arith.subf %8, %7 : vector<32x128xf32>
    %10 = math.exp %9 : vector<32x128xf32>
    %cst_8 = arith.constant 1.000000e+00 : f32
    %11 = vector.broadcast %cst_8 : f32 to vector<32x128xf32>
    %12 = arith.addf %11, %10 : vector<32x128xf32>
    %cst_9 = arith.constant 1.000000e+00 : f32
    %13 = vector.broadcast %cst_9 : f32 to vector<32x128xf32>
    %14 = arith.divf %13, %12 : vector<32x128xf32>
    %15 = arith.mulf %7, %14 : vector<32x128xf32>
    %c0_10 = arith.constant 0 : index
    %c0_11 = arith.constant 0 : index
    %16 = vector.load %arg5[%c0_10, %c0_11] : memref<32x128xf32, #tpu.memory_space<vmem>>, vector<32x128xf32>
    tpu.vector_store %arg5[%c0_10, %c0_11], %15 {strides = array<i32>} : memref<32x128xf32, #tpu.memory_space<vmem>>, vector<32x128xf32>,
    return
  }
  func.func @transform_0(%arg0: i32, %arg1: memref<1xi32, #tpu.memory_space<smem>>) -> (i32, i32) {
    %c0_i32 = arith.constant 0 : i32
    %c0_i32_0 = arith.constant 0 : i32
    return %arg0, %c0_i32 : i32, i32
  }
  func.func @transform_1(%arg0: i32, %arg1: memref<1xi32, #tpu.memory_space<smem>>) -> (i32, i32, i32) {
    %0 = arith.index_cast %arg0 : i32 to index
    %1 = memref.load %arg1[%0] : memref<1xi32, #tpu.memory_space<smem>>
    %c0_i32 = arith.constant 0 : i32
    %c0_i32_0 = arith.constant 0 : i32
    %c0_i32_1 = arith.constant 0 : i32
    return %1, %c0_i32, %c0_i32_0 : i32, i32, i32
  }
  func.func @transform_2(%arg0: i32, %arg1: memref<1xi32, #tpu.memory_space<smem>>) -> (i32, i32, i32) {
    %0 = arith.index_cast %arg0 : i32 to index
    %1 = memref.load %arg1[%0] : memref<1xi32, #tpu.memory_space<smem>>
    %c0_i32 = arith.constant 0 : i32
    %c0_i32_0 = arith.constant 0 : i32
    %c0_i32_1 = arith.constant 0 : i32
    return %1, %c0_i32, %c0_i32_0 : i32, i32, i32
  }
  func.func @transform_3(%arg0: i32, %arg1: memref<1xi32, #tpu.memory_space<smem>>) -> (i32, i32) {
    %c0_i32 = arith.constant 0 : i32
    %c0_i32_0 = arith.constant 0 : i32
    return %arg0, %c0_i32 : i32, i32
  }
}

module attributes {stable_mosaic.version = 11 : i64} {
  func.func @_matmul_bias_act_kernel(%arg0: i32, %arg1: memref<1xi32, #tpu.memory_space<smem>>, %arg2: memref<8x32xbf16, #tpu.memory_space<vmem>>, %arg3: memref<1x32x128xbf16, #tpu.memory_space<vmem>>, %arg4: memref<1x1x128xf32, #tpu.memory_space<vmem>>, %arg5: memref<8x128xf32, #tpu.memory_space<vmem>>) attributes {dimension_semantics = [#tpu.dimension_semantics<parallel>], iteration_bounds = array<i64: 1>, scalar_prefetch = 1 : i64, scratch_operands = 0 : i64, tpu.core_type = #tpu.core_type<tc>, window_params = [{transform_indices = @transform_0, window_bounds = array<i64: 8, 32>}, {transform_indices = @transform_1, window_bounds = array<i64: 1, 32, 128>}, {transform_indices = @transform_2, window_bounds = array<i64: 1, 1, 128>}, {transform_indices = @transform_3, window_bounds = array<i64: 8, 128>}]} {
    %c0 = arith.constant 0 : index
    %c0_0 = arith.constant 0 : index
    %0 = vector.load %arg2[%c0, %c0_0] : memref<8x32xbf16, #tpu.memory_space<vmem>>, vector<8x32xbf16>
    %c0_1 = arith.constant 0 : index
    %c0_2 = arith.constant 0 : index
    %c0_3 = arith.constant 0 : index
    %1 = vector.load %arg3[%c0_1, %c0_2, %c0_3] : memref<1x32x128xbf16, #tpu.memory_space<vmem>>, vector<1x32x128xbf16>
    %2 = vector.shape_cast %1 : vector<1x32x128xbf16> to vector<32x128xbf16>
    %cst = arith.constant dense<0.000000e+00> : vector<8x128xf32>
    %3 = tpu.matmul %0, %2, %cst {dimension_numbers = #tpu.dot_dimension_numbers<[1], [0], [0], [1], [0, 0, 1, 1], [], []>} : vector<8x32xbf16>, vector<32x128xbf16>, vector<8x128xf32> -> vector<8x128xf32>
    %c0_4 = arith.constant 0 : index
    %c0_5 = arith.constant 0 : index
    %c0_6 = arith.constant 0 : index
    %4 = vector.load %arg4[%c0_4, %c0_5, %c0_6] : memref<1x1x128xf32, #tpu.memory_space<vmem>>, vector<1x1x128xf32>
    %5 = vector.shape_cast %4 : vector<1x1x128xf32> to vector<1x128xf32>
    %6 = vector.broadcast %5 : vector<1x128xf32> to vector<8x128xf32>
    %7 = arith.addf %3, %6 : vector<8x128xf32>
    %c0_7 = arith.constant 0 : index
    %c0_8 = arith.constant 0 : index
    %8 = vector.load %arg5[%c0_7, %c0_8] : memref<8x128xf32, #tpu.memory_space<vmem>>, vector<8x128xf32>
    tpu.vector_store %arg5[%c0_7, %c0_8], %7 {strides = array<i32>} : memref<8x128xf32, #tpu.memory_space<vmem>>, vector<8x128xf32>,
    return
  }
  func.func @transform_0(%arg0: i32, %arg1: memref<1xi32, #tpu.memory_space<smem>>) -> (i32, i32) {
    %c0_i32 = arith.constant 0 : i32
    %c0_i32_0 = arith.constant 0 : i32
    return %arg0, %c0_i32 : i32, i32
  }
  func.func @transform_1(%arg0: i32, %arg1: memref<1xi32, #tpu.memory_space<smem>>) -> (i32, i32, i32) {
    %0 = arith.index_cast %arg0 : i32 to index
    %1 = memref.load %arg1[%0] : memref<1xi32, #tpu.memory_space<smem>>
    %c0_i32 = arith.constant 0 : i32
    %c0_i32_0 = arith.constant 0 : i32
    %c0_i32_1 = arith.constant 0 : i32
    return %1, %c0_i32, %c0_i32_0 : i32, i32, i32
  }
  func.func @transform_2(%arg0: i32, %arg1: memref<1xi32, #tpu.memory_space<smem>>) -> (i32, i32, i32) {
    %0 = arith.index_cast %arg0 : i32 to index
    %1 = memref.load %arg1[%0] : memref<1xi32, #tpu.memory_space<smem>>
    %c0_i32 = arith.constant 0 : i32
    %c0_i32_0 = arith.constant 0 : i32
    %c0_i32_1 = arith.constant 0 : i32
    return %1, %c0_i32, %c0_i32_0 : i32, i32, i32
  }
  func.func @transform_3(%arg0: i32, %arg1: memref<1xi32, #tpu.memory_space<smem>>) -> (i32, i32) {
    %c0_i32 = arith.constant 0 : i32
    %c0_i32_0 = arith.constant 0 : i32
    return %arg0, %c0_i32 : i32, i32
  }
}

module attributes {stable_mosaic.version = 11 : i64} {
  func.func @_matmul_bias_act_kernel(%arg0: i32, %arg1: memref<1xi32, #tpu.memory_space<smem>>, %arg2: memref<8x144xbf16, #tpu.memory_space<vmem>>, %arg3: memref<1x144x128xbf16, #tpu.memory_space<vmem>>, %arg4: memref<1x1x128xf32, #tpu.memory_space<vmem>>, %arg5: memref<8x128xf32, #tpu.memory_space<vmem>>) attributes {dimension_semantics = [#tpu.dimension_semantics<parallel>], iteration_bounds = array<i64: 1>, scalar_prefetch = 1 : i64, scratch_operands = 0 : i64, tpu.core_type = #tpu.core_type<tc>, window_params = [{transform_indices = @transform_0, window_bounds = array<i64: 8, 144>}, {transform_indices = @transform_1, window_bounds = array<i64: 1, 144, 128>}, {transform_indices = @transform_2, window_bounds = array<i64: 1, 1, 128>}, {transform_indices = @transform_3, window_bounds = array<i64: 8, 128>}]} {
    %c0 = arith.constant 0 : index
    %c0_0 = arith.constant 0 : index
    %0 = vector.load %arg2[%c0, %c0_0] : memref<8x144xbf16, #tpu.memory_space<vmem>>, vector<8x144xbf16>
    %c0_1 = arith.constant 0 : index
    %c0_2 = arith.constant 0 : index
    %c0_3 = arith.constant 0 : index
    %1 = vector.load %arg3[%c0_1, %c0_2, %c0_3] : memref<1x144x128xbf16, #tpu.memory_space<vmem>>, vector<1x144x128xbf16>
    %2 = vector.shape_cast %1 : vector<1x144x128xbf16> to vector<144x128xbf16>
    %cst = arith.constant dense<0.000000e+00> : vector<8x128xf32>
    %3 = tpu.matmul %0, %2, %cst {dimension_numbers = #tpu.dot_dimension_numbers<[1], [0], [0], [1], [0, 0, 1, 1], [], []>} : vector<8x144xbf16>, vector<144x128xbf16>, vector<8x128xf32> -> vector<8x128xf32>
    %c0_4 = arith.constant 0 : index
    %c0_5 = arith.constant 0 : index
    %c0_6 = arith.constant 0 : index
    %4 = vector.load %arg4[%c0_4, %c0_5, %c0_6] : memref<1x1x128xf32, #tpu.memory_space<vmem>>, vector<1x1x128xf32>
    %5 = vector.shape_cast %4 : vector<1x1x128xf32> to vector<1x128xf32>
    %6 = vector.broadcast %5 : vector<1x128xf32> to vector<8x128xf32>
    %7 = arith.addf %3, %6 : vector<8x128xf32>
    %cst_7 = arith.constant 0.000000e+00 : f32
    %8 = vector.broadcast %cst_7 : f32 to vector<8x128xf32>
    %9 = arith.subf %8, %7 : vector<8x128xf32>
    %10 = math.exp %9 : vector<8x128xf32>
    %cst_8 = arith.constant 1.000000e+00 : f32
    %11 = vector.broadcast %cst_8 : f32 to vector<8x128xf32>
    %12 = arith.addf %11, %10 : vector<8x128xf32>
    %cst_9 = arith.constant 1.000000e+00 : f32
    %13 = vector.broadcast %cst_9 : f32 to vector<8x128xf32>
    %14 = arith.divf %13, %12 : vector<8x128xf32>
    %15 = arith.mulf %7, %14 : vector<8x128xf32>
    %c0_10 = arith.constant 0 : index
    %c0_11 = arith.constant 0 : index
    %16 = vector.load %arg5[%c0_10, %c0_11] : memref<8x128xf32, #tpu.memory_space<vmem>>, vector<8x128xf32>
    tpu.vector_store %arg5[%c0_10, %c0_11], %15 {strides = array<i32>} : memref<8x128xf32, #tpu.memory_space<vmem>>, vector<8x128xf32>,
    return
  }
  func.func @transform_0(%arg0: i32, %arg1: memref<1xi32, #tpu.memory_space<smem>>) -> (i32, i32) {
    %c0_i32 = arith.constant 0 : i32
    %c0_i32_0 = arith.constant 0 : i32
    return %arg0, %c0_i32 : i32, i32
  }
  func.func @transform_1(%arg0: i32, %arg1: memref<1xi32, #tpu.memory_space<smem>>) -> (i32, i32, i32) {
    %0 = arith.index_cast %arg0 : i32 to index
    %1 = memref.load %arg1[%0] : memref<1xi32, #tpu.memory_space<smem>>
    %c0_i32 = arith.constant 0 : i32
    %c0_i32_0 = arith.constant 0 : i32
    %c0_i32_1 = arith.constant 0 : i32
    return %1, %c0_i32, %c0_i32_0 : i32, i32, i32
  }
  func.func @transform_2(%arg0: i32, %arg1: memref<1xi32, #tpu.memory_space<smem>>) -> (i32, i32, i32) {
    %0 = arith.index_cast %arg0 : i32 to index
    %1 = memref.load %arg1[%0] : memref<1xi32, #tpu.memory_space<smem>>
    %c0_i32 = arith.constant 0 : i32
    %c0_i32_0 = arith.constant 0 : i32
    %c0_i32_1 = arith.constant 0 : i32
    return %1, %c0_i32, %c0_i32_0 : i32, i32, i32
  }
  func.func @transform_3(%arg0: i32, %arg1: memref<1xi32, #tpu.memory_space<smem>>) -> (i32, i32) {
    %c0_i32 = arith.constant 0 : i32
    %c0_i32_0 = arith.constant 0 : i32
    return %arg0, %c0_i32 : i32, i32
  }
}

module attributes {stable_mosaic.version = 11 : i64} {
  func.func @_fuse_swish_kernel(%arg0: i32, %arg1: memref<8x128xf32, #tpu.memory_space<vmem>>, %arg2: memref<8x128xf32, #tpu.memory_space<vmem>>, %arg3: memref<2xf32, #tpu.memory_space<smem>>, %arg4: memref<8x128xf32, #tpu.memory_space<vmem>>) attributes {dimension_semantics = [#tpu.dimension_semantics<parallel>], iteration_bounds = array<i64: 1>, scalar_prefetch = 0 : i64, scratch_operands = 0 : i64, tpu.core_type = #tpu.core_type<tc>, window_params = [{transform_indices = @transform_0, window_bounds = array<i64: 8, 128>}, {transform_indices = @transform_1, window_bounds = array<i64: 8, 128>}, {transform_indices = @transform_2, window_bounds = array<i64: 2>}, {transform_indices = @transform_3, window_bounds = array<i64: 8, 128>}]} {
    %c0 = arith.constant 0 : index
    %0 = memref.load %arg3[%c0] : memref<2xf32, #tpu.memory_space<smem>>
    %cst = arith.constant 0.000000e+00 : f32
    %1 = arith.maximumf %0, %cst : f32
    %c1 = arith.constant 1 : index
    %2 = memref.load %arg3[%c1] : memref<2xf32, #tpu.memory_space<smem>>
    %cst_0 = arith.constant 0.000000e+00 : f32
    %3 = arith.maximumf %2, %cst_0 : f32
    %4 = arith.addf %1, %3 : f32
    %cst_1 = arith.constant 9.99999974E-5 : f32
    %5 = arith.addf %4, %cst_1 : f32
    %cst_2 = arith.constant 1.000000e+00 : f32
    %6 = arith.divf %cst_2, %5 : f32
    %c0_3 = arith.constant 0 : index
    %c0_4 = arith.constant 0 : index
    %7 = vector.load %arg1[%c0_3, %c0_4] : memref<8x128xf32, #tpu.memory_space<vmem>>, vector<8x128xf32>
    %8 = arith.mulf %1, %6 : f32
    %9 = vector.broadcast %8 : f32 to vector<8x128xf32>
    %10 = arith.mulf %7, %9 : vector<8x128xf32>
    %c0_5 = arith.constant 0 : index
    %c0_6 = arith.constant 0 : index
    %11 = vector.load %arg2[%c0_5, %c0_6] : memref<8x128xf32, #tpu.memory_space<vmem>>, vector<8x128xf32>
    %12 = arith.mulf %3, %6 : f32
    %13 = vector.broadcast %12 : f32 to vector<8x128xf32>
    %14 = arith.mulf %11, %13 : vector<8x128xf32>
    %15 = arith.addf %10, %14 : vector<8x128xf32>
    %cst_7 = arith.constant 0.000000e+00 : f32
    %16 = vector.broadcast %cst_7 : f32 to vector<8x128xf32>
    %17 = arith.subf %16, %15 : vector<8x128xf32>
    %18 = math.exp %17 : vector<8x128xf32>
    %cst_8 = arith.constant 1.000000e+00 : f32
    %19 = vector.broadcast %cst_8 : f32 to vector<8x128xf32>
    %20 = arith.addf %19, %18 : vector<8x128xf32>
    %cst_9 = arith.constant 1.000000e+00 : f32
    %21 = vector.broadcast %cst_9 : f32 to vector<8x128xf32>
    %22 = arith.divf %21, %20 : vector<8x128xf32>
    %23 = arith.mulf %15, %22 : vector<8x128xf32>
    %c0_10 = arith.constant 0 : index
    %c0_11 = arith.constant 0 : index
    %24 = vector.load %arg4[%c0_10, %c0_11] : memref<8x128xf32, #tpu.memory_space<vmem>>, vector<8x128xf32>
    tpu.vector_store %arg4[%c0_10, %c0_11], %23 {strides = array<i32>} : memref<8x128xf32, #tpu.memory_space<vmem>>, vector<8x128xf32>,
    return
  }
  func.func @transform_0(%arg0: i32) -> (i32, i32) {
    %c0_i32 = arith.constant 0 : i32
    %c0_i32_0 = arith.constant 0 : i32
    return %arg0, %c0_i32 : i32, i32
  }
  func.func @transform_1(%arg0: i32) -> (i32, i32) {
    %c0_i32 = arith.constant 0 : i32
    %c0_i32_0 = arith.constant 0 : i32
    return %arg0, %c0_i32 : i32, i32
  }
  func.func @transform_2(%arg0: i32) -> i32 {
    %c0_i32 = arith.constant 0 : i32
    %c0_i32_0 = arith.constant 0 : i32
    return %c0_i32 : i32
  }
  func.func @transform_3(%arg0: i32) -> (i32, i32) {
    %c0_i32 = arith.constant 0 : i32
    %c0_i32_0 = arith.constant 0 : i32
    return %arg0, %c0_i32 : i32, i32
  }
}

module attributes {stable_mosaic.version = 11 : i64} {
  func.func @_matmul_bias_act_kernel(%arg0: i32, %arg1: memref<1xi32, #tpu.memory_space<smem>>, %arg2: memref<32x144xbf16, #tpu.memory_space<vmem>>, %arg3: memref<1x144x128xbf16, #tpu.memory_space<vmem>>, %arg4: memref<1x1x128xf32, #tpu.memory_space<vmem>>, %arg5: memref<32x128xf32, #tpu.memory_space<vmem>>) attributes {dimension_semantics = [#tpu.dimension_semantics<parallel>], iteration_bounds = array<i64: 1>, scalar_prefetch = 1 : i64, scratch_operands = 0 : i64, tpu.core_type = #tpu.core_type<tc>, window_params = [{transform_indices = @transform_0, window_bounds = array<i64: 32, 144>}, {transform_indices = @transform_1, window_bounds = array<i64: 1, 144, 128>}, {transform_indices = @transform_2, window_bounds = array<i64: 1, 1, 128>}, {transform_indices = @transform_3, window_bounds = array<i64: 32, 128>}]} {
    %c0 = arith.constant 0 : index
    %c0_0 = arith.constant 0 : index
    %0 = vector.load %arg2[%c0, %c0_0] : memref<32x144xbf16, #tpu.memory_space<vmem>>, vector<32x144xbf16>
    %c0_1 = arith.constant 0 : index
    %c0_2 = arith.constant 0 : index
    %c0_3 = arith.constant 0 : index
    %1 = vector.load %arg3[%c0_1, %c0_2, %c0_3] : memref<1x144x128xbf16, #tpu.memory_space<vmem>>, vector<1x144x128xbf16>
    %2 = vector.shape_cast %1 : vector<1x144x128xbf16> to vector<144x128xbf16>
    %cst = arith.constant dense<0.000000e+00> : vector<32x128xf32>
    %3 = tpu.matmul %0, %2, %cst {dimension_numbers = #tpu.dot_dimension_numbers<[1], [0], [0], [1], [0, 0, 1, 1], [], []>} : vector<32x144xbf16>, vector<144x128xbf16>, vector<32x128xf32> -> vector<32x128xf32>
    %c0_4 = arith.constant 0 : index
    %c0_5 = arith.constant 0 : index
    %c0_6 = arith.constant 0 : index
    %4 = vector.load %arg4[%c0_4, %c0_5, %c0_6] : memref<1x1x128xf32, #tpu.memory_space<vmem>>, vector<1x1x128xf32>
    %5 = vector.shape_cast %4 : vector<1x1x128xf32> to vector<1x128xf32>
    %6 = vector.broadcast %5 : vector<1x128xf32> to vector<32x128xf32>
    %7 = arith.addf %3, %6 : vector<32x128xf32>
    %c0_7 = arith.constant 0 : index
    %c0_8 = arith.constant 0 : index
    %8 = vector.load %arg5[%c0_7, %c0_8] : memref<32x128xf32, #tpu.memory_space<vmem>>, vector<32x128xf32>
    tpu.vector_store %arg5[%c0_7, %c0_8], %7 {strides = array<i32>} : memref<32x128xf32, #tpu.memory_space<vmem>>, vector<32x128xf32>,
    return
  }
  func.func @transform_0(%arg0: i32, %arg1: memref<1xi32, #tpu.memory_space<smem>>) -> (i32, i32) {
    %c0_i32 = arith.constant 0 : i32
    %c0_i32_0 = arith.constant 0 : i32
    return %arg0, %c0_i32 : i32, i32
  }
  func.func @transform_1(%arg0: i32, %arg1: memref<1xi32, #tpu.memory_space<smem>>) -> (i32, i32, i32) {
    %0 = arith.index_cast %arg0 : i32 to index
    %1 = memref.load %arg1[%0] : memref<1xi32, #tpu.memory_space<smem>>
    %c0_i32 = arith.constant 0 : i32
    %c0_i32_0 = arith.constant 0 : i32
    %c0_i32_1 = arith.constant 0 : i32
    return %1, %c0_i32, %c0_i32_0 : i32, i32, i32
  }
  func.func @transform_2(%arg0: i32, %arg1: memref<1xi32, #tpu.memory_space<smem>>) -> (i32, i32, i32) {
    %0 = arith.index_cast %arg0 : i32 to index
    %1 = memref.load %arg1[%0] : memref<1xi32, #tpu.memory_space<smem>>
    %c0_i32 = arith.constant 0 : i32
    %c0_i32_0 = arith.constant 0 : i32
    %c0_i32_1 = arith.constant 0 : i32
    return %1, %c0_i32, %c0_i32_0 : i32, i32, i32
  }
  func.func @transform_3(%arg0: i32, %arg1: memref<1xi32, #tpu.memory_space<smem>>) -> (i32, i32) {
    %c0_i32 = arith.constant 0 : i32
    %c0_i32_0 = arith.constant 0 : i32
    return %arg0, %c0_i32 : i32, i32
  }
}

module attributes {stable_mosaic.version = 11 : i64} {
  func.func @_fuse_swish_kernel(%arg0: i32, %arg1: memref<16x128xf32, #tpu.memory_space<vmem>>, %arg2: memref<16x128xf32, #tpu.memory_space<vmem>>, %arg3: memref<2xf32, #tpu.memory_space<smem>>, %arg4: memref<16x128xf32, #tpu.memory_space<vmem>>) attributes {dimension_semantics = [#tpu.dimension_semantics<parallel>], iteration_bounds = array<i64: 1>, scalar_prefetch = 0 : i64, scratch_operands = 0 : i64, tpu.core_type = #tpu.core_type<tc>, window_params = [{transform_indices = @transform_0, window_bounds = array<i64: 16, 128>}, {transform_indices = @transform_1, window_bounds = array<i64: 16, 128>}, {transform_indices = @transform_2, window_bounds = array<i64: 2>}, {transform_indices = @transform_3, window_bounds = array<i64: 16, 128>}]} {
    %c0 = arith.constant 0 : index
    %0 = memref.load %arg3[%c0] : memref<2xf32, #tpu.memory_space<smem>>
    %cst = arith.constant 0.000000e+00 : f32
    %1 = arith.maximumf %0, %cst : f32
    %c1 = arith.constant 1 : index
    %2 = memref.load %arg3[%c1] : memref<2xf32, #tpu.memory_space<smem>>
    %cst_0 = arith.constant 0.000000e+00 : f32
    %3 = arith.maximumf %2, %cst_0 : f32
    %4 = arith.addf %1, %3 : f32
    %cst_1 = arith.constant 9.99999974E-5 : f32
    %5 = arith.addf %4, %cst_1 : f32
    %cst_2 = arith.constant 1.000000e+00 : f32
    %6 = arith.divf %cst_2, %5 : f32
    %c0_3 = arith.constant 0 : index
    %c0_4 = arith.constant 0 : index
    %7 = vector.load %arg1[%c0_3, %c0_4] : memref<16x128xf32, #tpu.memory_space<vmem>>, vector<16x128xf32>
    %8 = arith.mulf %1, %6 : f32
    %9 = vector.broadcast %8 : f32 to vector<16x128xf32>
    %10 = arith.mulf %7, %9 : vector<16x128xf32>
    %c0_5 = arith.constant 0 : index
    %c0_6 = arith.constant 0 : index
    %11 = vector.load %arg2[%c0_5, %c0_6] : memref<16x128xf32, #tpu.memory_space<vmem>>, vector<16x128xf32>
    %12 = arith.mulf %3, %6 : f32
    %13 = vector.broadcast %12 : f32 to vector<16x128xf32>
    %14 = arith.mulf %11, %13 : vector<16x128xf32>
    %15 = arith.addf %10, %14 : vector<16x128xf32>
    %cst_7 = arith.constant 0.000000e+00 : f32
    %16 = vector.broadcast %cst_7 : f32 to vector<16x128xf32>
    %17 = arith.subf %16, %15 : vector<16x128xf32>
    %18 = math.exp %17 : vector<16x128xf32>
    %cst_8 = arith.constant 1.000000e+00 : f32
    %19 = vector.broadcast %cst_8 : f32 to vector<16x128xf32>
    %20 = arith.addf %19, %18 : vector<16x128xf32>
    %cst_9 = arith.constant 1.000000e+00 : f32
    %21 = vector.broadcast %cst_9 : f32 to vector<16x128xf32>
    %22 = arith.divf %21, %20 : vector<16x128xf32>
    %23 = arith.mulf %15, %22 : vector<16x128xf32>
    %c0_10 = arith.constant 0 : index
    %c0_11 = arith.constant 0 : index
    %24 = vector.load %arg4[%c0_10, %c0_11] : memref<16x128xf32, #tpu.memory_space<vmem>>, vector<16x128xf32>
    tpu.vector_store %arg4[%c0_10, %c0_11], %23 {strides = array<i32>} : memref<16x128xf32, #tpu.memory_space<vmem>>, vector<16x128xf32>,
    return
  }
  func.func @transform_0(%arg0: i32) -> (i32, i32) {
    %c0_i32 = arith.constant 0 : i32
    %c0_i32_0 = arith.constant 0 : i32
    return %arg0, %c0_i32 : i32, i32
  }
  func.func @transform_1(%arg0: i32) -> (i32, i32) {
    %c0_i32 = arith.constant 0 : i32
    %c0_i32_0 = arith.constant 0 : i32
    return %arg0, %c0_i32 : i32, i32
  }
  func.func @transform_2(%arg0: i32) -> i32 {
    %c0_i32 = arith.constant 0 : i32
    %c0_i32_0 = arith.constant 0 : i32
    return %c0_i32 : i32
  }
  func.func @transform_3(%arg0: i32) -> (i32, i32) {
    %c0_i32 = arith.constant 0 : i32
    %c0_i32_0 = arith.constant 0 : i32
    return %arg0, %c0_i32 : i32, i32
  }
}

module attributes {stable_mosaic.version = 11 : i64} {
  func.func @_matmul_bias_act_kernel(%arg0: i32, %arg1: memref<1xi32, #tpu.memory_space<smem>>, %arg2: memref<128x16xbf16, #tpu.memory_space<vmem>>, %arg3: memref<1x16x128xbf16, #tpu.memory_space<vmem>>, %arg4: memref<1x1x128xf32, #tpu.memory_space<vmem>>, %arg5: memref<128x128xf32, #tpu.memory_space<vmem>>) attributes {dimension_semantics = [#tpu.dimension_semantics<parallel>], iteration_bounds = array<i64: 1>, scalar_prefetch = 1 : i64, scratch_operands = 0 : i64, tpu.core_type = #tpu.core_type<tc>, window_params = [{transform_indices = @transform_0, window_bounds = array<i64: 128, 16>}, {transform_indices = @transform_1, window_bounds = array<i64: 1, 16, 128>}, {transform_indices = @transform_2, window_bounds = array<i64: 1, 1, 128>}, {transform_indices = @transform_3, window_bounds = array<i64: 128, 128>}]} {
    %c0 = arith.constant 0 : index
    %c0_0 = arith.constant 0 : index
    %0 = vector.load %arg2[%c0, %c0_0] : memref<128x16xbf16, #tpu.memory_space<vmem>>, vector<128x16xbf16>
    %c0_1 = arith.constant 0 : index
    %c0_2 = arith.constant 0 : index
    %c0_3 = arith.constant 0 : index
    %1 = vector.load %arg3[%c0_1, %c0_2, %c0_3] : memref<1x16x128xbf16, #tpu.memory_space<vmem>>, vector<1x16x128xbf16>
    %2 = vector.shape_cast %1 : vector<1x16x128xbf16> to vector<16x128xbf16>
    %cst = arith.constant dense<0.000000e+00> : vector<128x128xf32>
    %3 = tpu.matmul %0, %2, %cst {dimension_numbers = #tpu.dot_dimension_numbers<[1], [0], [0], [1], [0, 0, 1, 1], [], []>} : vector<128x16xbf16>, vector<16x128xbf16>, vector<128x128xf32> -> vector<128x128xf32>
    %c0_4 = arith.constant 0 : index
    %c0_5 = arith.constant 0 : index
    %c0_6 = arith.constant 0 : index
    %4 = vector.load %arg4[%c0_4, %c0_5, %c0_6] : memref<1x1x128xf32, #tpu.memory_space<vmem>>, vector<1x1x128xf32>
    %5 = vector.shape_cast %4 : vector<1x1x128xf32> to vector<1x128xf32>
    %6 = vector.broadcast %5 : vector<1x128xf32> to vector<128x128xf32>
    %7 = arith.addf %3, %6 : vector<128x128xf32>
    %c0_7 = arith.constant 0 : index
    %c0_8 = arith.constant 0 : index
    %8 = vector.load %arg5[%c0_7, %c0_8] : memref<128x128xf32, #tpu.memory_space<vmem>>, vector<128x128xf32>
    tpu.vector_store %arg5[%c0_7, %c0_8], %7 {strides = array<i32>} : memref<128x128xf32, #tpu.memory_space<vmem>>, vector<128x128xf32>,
    return
  }
  func.func @transform_0(%arg0: i32, %arg1: memref<1xi32, #tpu.memory_space<smem>>) -> (i32, i32) {
    %c0_i32 = arith.constant 0 : i32
    %c0_i32_0 = arith.constant 0 : i32
    return %arg0, %c0_i32 : i32, i32
  }
  func.func @transform_1(%arg0: i32, %arg1: memref<1xi32, #tpu.memory_space<smem>>) -> (i32, i32, i32) {
    %0 = arith.index_cast %arg0 : i32 to index
    %1 = memref.load %arg1[%0] : memref<1xi32, #tpu.memory_space<smem>>
    %c0_i32 = arith.constant 0 : i32
    %c0_i32_0 = arith.constant 0 : i32
    %c0_i32_1 = arith.constant 0 : i32
    return %1, %c0_i32, %c0_i32_0 : i32, i32, i32
  }
  func.func @transform_2(%arg0: i32, %arg1: memref<1xi32, #tpu.memory_space<smem>>) -> (i32, i32, i32) {
    %0 = arith.index_cast %arg0 : i32 to index
    %1 = memref.load %arg1[%0] : memref<1xi32, #tpu.memory_space<smem>>
    %c0_i32 = arith.constant 0 : i32
    %c0_i32_0 = arith.constant 0 : i32
    %c0_i32_1 = arith.constant 0 : i32
    return %1, %c0_i32, %c0_i32_0 : i32, i32, i32
  }
  func.func @transform_3(%arg0: i32, %arg1: memref<1xi32, #tpu.memory_space<smem>>) -> (i32, i32) {
    %c0_i32 = arith.constant 0 : i32
    %c0_i32_0 = arith.constant 0 : i32
    return %arg0, %c0_i32 : i32, i32
  }
}

module attributes {stable_mosaic.version = 11 : i64} {
  func.func @_matmul_bias_act_kernel(%arg0: i32, %arg1: memref<1xi32, #tpu.memory_space<smem>>, %arg2: memref<128x144xbf16, #tpu.memory_space<vmem>>, %arg3: memref<1x144x128xbf16, #tpu.memory_space<vmem>>, %arg4: memref<1x1x128xf32, #tpu.memory_space<vmem>>, %arg5: memref<128x128xf32, #tpu.memory_space<vmem>>) attributes {dimension_semantics = [#tpu.dimension_semantics<parallel>], iteration_bounds = array<i64: 1>, scalar_prefetch = 1 : i64, scratch_operands = 0 : i64, tpu.core_type = #tpu.core_type<tc>, window_params = [{transform_indices = @transform_0, window_bounds = array<i64: 128, 144>}, {transform_indices = @transform_1, window_bounds = array<i64: 1, 144, 128>}, {transform_indices = @transform_2, window_bounds = array<i64: 1, 1, 128>}, {transform_indices = @transform_3, window_bounds = array<i64: 128, 128>}]} {
    %c0 = arith.constant 0 : index
    %c0_0 = arith.constant 0 : index
    %0 = vector.load %arg2[%c0, %c0_0] : memref<128x144xbf16, #tpu.memory_space<vmem>>, vector<128x144xbf16>
    %c0_1 = arith.constant 0 : index
    %c0_2 = arith.constant 0 : index
    %c0_3 = arith.constant 0 : index
    %1 = vector.load %arg3[%c0_1, %c0_2, %c0_3] : memref<1x144x128xbf16, #tpu.memory_space<vmem>>, vector<1x144x128xbf16>
    %2 = vector.shape_cast %1 : vector<1x144x128xbf16> to vector<144x128xbf16>
    %cst = arith.constant dense<0.000000e+00> : vector<128x128xf32>
    %3 = tpu.matmul %0, %2, %cst {dimension_numbers = #tpu.dot_dimension_numbers<[1], [0], [0], [1], [0, 0, 1, 1], [], []>} : vector<128x144xbf16>, vector<144x128xbf16>, vector<128x128xf32> -> vector<128x128xf32>
    %c0_4 = arith.constant 0 : index
    %c0_5 = arith.constant 0 : index
    %c0_6 = arith.constant 0 : index
    %4 = vector.load %arg4[%c0_4, %c0_5, %c0_6] : memref<1x1x128xf32, #tpu.memory_space<vmem>>, vector<1x1x128xf32>
    %5 = vector.shape_cast %4 : vector<1x1x128xf32> to vector<1x128xf32>
    %6 = vector.broadcast %5 : vector<1x128xf32> to vector<128x128xf32>
    %7 = arith.addf %3, %6 : vector<128x128xf32>
    %c0_7 = arith.constant 0 : index
    %c0_8 = arith.constant 0 : index
    %8 = vector.load %arg5[%c0_7, %c0_8] : memref<128x128xf32, #tpu.memory_space<vmem>>, vector<128x128xf32>
    tpu.vector_store %arg5[%c0_7, %c0_8], %7 {strides = array<i32>} : memref<128x128xf32, #tpu.memory_space<vmem>>, vector<128x128xf32>,
    return
  }
  func.func @transform_0(%arg0: i32, %arg1: memref<1xi32, #tpu.memory_space<smem>>) -> (i32, i32) {
    %c0_i32 = arith.constant 0 : i32
    %c0_i32_0 = arith.constant 0 : i32
    return %arg0, %c0_i32 : i32, i32
  }
  func.func @transform_1(%arg0: i32, %arg1: memref<1xi32, #tpu.memory_space<smem>>) -> (i32, i32, i32) {
    %0 = arith.index_cast %arg0 : i32 to index
    %1 = memref.load %arg1[%0] : memref<1xi32, #tpu.memory_space<smem>>
    %c0_i32 = arith.constant 0 : i32
    %c0_i32_0 = arith.constant 0 : i32
    %c0_i32_1 = arith.constant 0 : i32
    return %1, %c0_i32, %c0_i32_0 : i32, i32, i32
  }
  func.func @transform_2(%arg0: i32, %arg1: memref<1xi32, #tpu.memory_space<smem>>) -> (i32, i32, i32) {
    %0 = arith.index_cast %arg0 : i32 to index
    %1 = memref.load %arg1[%0] : memref<1xi32, #tpu.memory_space<smem>>
    %c0_i32 = arith.constant 0 : i32
    %c0_i32_0 = arith.constant 0 : i32
    %c0_i32_1 = arith.constant 0 : i32
    return %1, %c0_i32, %c0_i32_0 : i32, i32, i32
  }
  func.func @transform_3(%arg0: i32, %arg1: memref<1xi32, #tpu.memory_space<smem>>) -> (i32, i32) {
    %c0_i32 = arith.constant 0 : i32
    %c0_i32_0 = arith.constant 0 : i32
    return %arg0, %c0_i32 : i32, i32
  }
}

module attributes {stable_mosaic.version = 11 : i64} {
  func.func @_fuse_swish_kernel(%arg0: i32, %arg1: memref<8x128xf32, #tpu.memory_space<vmem>>, %arg2: memref<8x128xf32, #tpu.memory_space<vmem>>, %arg3: memref<8x128xf32, #tpu.memory_space<vmem>>, %arg4: memref<3xf32, #tpu.memory_space<smem>>, %arg5: memref<8x128xf32, #tpu.memory_space<vmem>>) attributes {dimension_semantics = [#tpu.dimension_semantics<parallel>], iteration_bounds = array<i64: 1>, scalar_prefetch = 0 : i64, scratch_operands = 0 : i64, tpu.core_type = #tpu.core_type<tc>, window_params = [{transform_indices = @transform_0, window_bounds = array<i64: 8, 128>}, {transform_indices = @transform_1, window_bounds = array<i64: 8, 128>}, {transform_indices = @transform_2, window_bounds = array<i64: 8, 128>}, {transform_indices = @transform_3, window_bounds = array<i64: 3>}, {transform_indices = @transform_4, window_bounds = array<i64: 8, 128>}]} {
    %c0 = arith.constant 0 : index
    %0 = memref.load %arg4[%c0] : memref<3xf32, #tpu.memory_space<smem>>
    %cst = arith.constant 0.000000e+00 : f32
    %1 = arith.maximumf %0, %cst : f32
    %c1 = arith.constant 1 : index
    %2 = memref.load %arg4[%c1] : memref<3xf32, #tpu.memory_space<smem>>
    %cst_0 = arith.constant 0.000000e+00 : f32
    %3 = arith.maximumf %2, %cst_0 : f32
    %c2 = arith.constant 2 : index
    %4 = memref.load %arg4[%c2] : memref<3xf32, #tpu.memory_space<smem>>
    %cst_1 = arith.constant 0.000000e+00 : f32
    %5 = arith.maximumf %4, %cst_1 : f32
    %6 = arith.addf %1, %3 : f32
    %7 = arith.addf %6, %5 : f32
    %cst_2 = arith.constant 9.99999974E-5 : f32
    %8 = arith.addf %7, %cst_2 : f32
    %cst_3 = arith.constant 1.000000e+00 : f32
    %9 = arith.divf %cst_3, %8 : f32
    %c0_4 = arith.constant 0 : index
    %c0_5 = arith.constant 0 : index
    %10 = vector.load %arg1[%c0_4, %c0_5] : memref<8x128xf32, #tpu.memory_space<vmem>>, vector<8x128xf32>
    %11 = arith.mulf %1, %9 : f32
    %12 = vector.broadcast %11 : f32 to vector<8x128xf32>
    %13 = arith.mulf %10, %12 : vector<8x128xf32>
    %c0_6 = arith.constant 0 : index
    %c0_7 = arith.constant 0 : index
    %14 = vector.load %arg2[%c0_6, %c0_7] : memref<8x128xf32, #tpu.memory_space<vmem>>, vector<8x128xf32>
    %15 = arith.mulf %3, %9 : f32
    %16 = vector.broadcast %15 : f32 to vector<8x128xf32>
    %17 = arith.mulf %14, %16 : vector<8x128xf32>
    %18 = arith.addf %13, %17 : vector<8x128xf32>
    %c0_8 = arith.constant 0 : index
    %c0_9 = arith.constant 0 : index
    %19 = vector.load %arg3[%c0_8, %c0_9] : memref<8x128xf32, #tpu.memory_space<vmem>>, vector<8x128xf32>
    %20 = arith.mulf %5, %9 : f32
    %21 = vector.broadcast %20 : f32 to vector<8x128xf32>
    %22 = arith.mulf %19, %21 : vector<8x128xf32>
    %23 = arith.addf %18, %22 : vector<8x128xf32>
    %cst_10 = arith.constant 0.000000e+00 : f32
    %24 = vector.broadcast %cst_10 : f32 to vector<8x128xf32>
    %25 = arith.subf %24, %23 : vector<8x128xf32>
    %26 = math.exp %25 : vector<8x128xf32>
    %cst_11 = arith.constant 1.000000e+00 : f32
    %27 = vector.broadcast %cst_11 : f32 to vector<8x128xf32>
    %28 = arith.addf %27, %26 : vector<8x128xf32>
    %cst_12 = arith.constant 1.000000e+00 : f32
    %29 = vector.broadcast %cst_12 : f32 to vector<8x128xf32>
    %30 = arith.divf %29, %28 : vector<8x128xf32>
    %31 = arith.mulf %23, %30 : vector<8x128xf32>
    %c0_13 = arith.constant 0 : index
    %c0_14 = arith.constant 0 : index
    %32 = vector.load %arg5[%c0_13, %c0_14] : memref<8x128xf32, #tpu.memory_space<vmem>>, vector<8x128xf32>
    tpu.vector_store %arg5[%c0_13, %c0_14], %31 {strides = array<i32>} : memref<8x128xf32, #tpu.memory_space<vmem>>, vector<8x128xf32>,
    return
  }
  func.func @transform_0(%arg0: i32) -> (i32, i32) {
    %c0_i32 = arith.constant 0 : i32
    %c0_i32_0 = arith.constant 0 : i32
    return %arg0, %c0_i32 : i32, i32
  }
  func.func @transform_1(%arg0: i32) -> (i32, i32) {
    %c0_i32 = arith.constant 0 : i32
    %c0_i32_0 = arith.constant 0 : i32
    return %arg0, %c0_i32 : i32, i32
  }
  func.func @transform_2(%arg0: i32) -> (i32, i32) {
    %c0_i32 = arith.constant 0 : i32
    %c0_i32_0 = arith.constant 0 : i32
    return %arg0, %c0_i32 : i32, i32
  }
  func.func @transform_3(%arg0: i32) -> i32 {
    %c0_i32 = arith.constant 0 : i32
    %c0_i32_0 = arith.constant 0 : i32
    return %c0_i32 : i32
  }
  func.func @transform_4(%arg0: i32) -> (i32, i32) {
    %c0_i32 = arith.constant 0 : i32
    %c0_i32_0 = arith.constant 0 : i32
    return %arg0, %c0_i32 : i32, i32
  }
}

module attributes {stable_mosaic.version = 11 : i64} {
  func.func @_matmul_bias_act_kernel(%arg0: i32, %arg1: memref<3xi32, #tpu.memory_space<smem>>, %arg2: memref<128x144xbf16, #tpu.memory_space<vmem>>, %arg3: memref<1x144x128xbf16, #tpu.memory_space<vmem>>, %arg4: memref<1x1x128xf32, #tpu.memory_space<vmem>>, %arg5: memref<128x128xf32, #tpu.memory_space<vmem>>) attributes {dimension_semantics = [#tpu.dimension_semantics<parallel>], iteration_bounds = array<i64: 3>, scalar_prefetch = 1 : i64, scratch_operands = 0 : i64, tpu.core_type = #tpu.core_type<tc>, window_params = [{transform_indices = @transform_0, window_bounds = array<i64: 128, 144>}, {transform_indices = @transform_1, window_bounds = array<i64: 1, 144, 128>}, {transform_indices = @transform_2, window_bounds = array<i64: 1, 1, 128>}, {transform_indices = @transform_3, window_bounds = array<i64: 128, 128>}]} {
    %c0 = arith.constant 0 : index
    %c0_0 = arith.constant 0 : index
    %0 = vector.load %arg2[%c0, %c0_0] : memref<128x144xbf16, #tpu.memory_space<vmem>>, vector<128x144xbf16>
    %c0_1 = arith.constant 0 : index
    %c0_2 = arith.constant 0 : index
    %c0_3 = arith.constant 0 : index
    %1 = vector.load %arg3[%c0_1, %c0_2, %c0_3] : memref<1x144x128xbf16, #tpu.memory_space<vmem>>, vector<1x144x128xbf16>
    %2 = vector.shape_cast %1 : vector<1x144x128xbf16> to vector<144x128xbf16>
    %cst = arith.constant dense<0.000000e+00> : vector<128x128xf32>
    %3 = tpu.matmul %0, %2, %cst {dimension_numbers = #tpu.dot_dimension_numbers<[1], [0], [0], [1], [0, 0, 1, 1], [], []>} : vector<128x144xbf16>, vector<144x128xbf16>, vector<128x128xf32> -> vector<128x128xf32>
    %c0_4 = arith.constant 0 : index
    %c0_5 = arith.constant 0 : index
    %c0_6 = arith.constant 0 : index
    %4 = vector.load %arg4[%c0_4, %c0_5, %c0_6] : memref<1x1x128xf32, #tpu.memory_space<vmem>>, vector<1x1x128xf32>
    %5 = vector.shape_cast %4 : vector<1x1x128xf32> to vector<1x128xf32>
    %6 = vector.broadcast %5 : vector<1x128xf32> to vector<128x128xf32>
    %7 = arith.addf %3, %6 : vector<128x128xf32>
    %cst_7 = arith.constant 0.000000e+00 : f32
    %8 = vector.broadcast %cst_7 : f32 to vector<128x128xf32>
    %9 = arith.subf %8, %7 : vector<128x128xf32>
    %10 = math.exp %9 : vector<128x128xf32>
    %cst_8 = arith.constant 1.000000e+00 : f32
    %11 = vector.broadcast %cst_8 : f32 to vector<128x128xf32>
    %12 = arith.addf %11, %10 : vector<128x128xf32>
    %cst_9 = arith.constant 1.000000e+00 : f32
    %13 = vector.broadcast %cst_9 : f32 to vector<128x128xf32>
    %14 = arith.divf %13, %12 : vector<128x128xf32>
    %15 = arith.mulf %7, %14 : vector<128x128xf32>
    %c0_10 = arith.constant 0 : index
    %c0_11 = arith.constant 0 : index
    %16 = vector.load %arg5[%c0_10, %c0_11] : memref<128x128xf32, #tpu.memory_space<vmem>>, vector<128x128xf32>
    tpu.vector_store %arg5[%c0_10, %c0_11], %15 {strides = array<i32>} : memref<128x128xf32, #tpu.memory_space<vmem>>, vector<128x128xf32>,
    return
  }
  func.func @transform_0(%arg0: i32, %arg1: memref<3xi32, #tpu.memory_space<smem>>) -> (i32, i32) {
    %c0_i32 = arith.constant 0 : i32
    %c0_i32_0 = arith.constant 0 : i32
    return %arg0, %c0_i32 : i32, i32
  }
  func.func @transform_1(%arg0: i32, %arg1: memref<3xi32, #tpu.memory_space<smem>>) -> (i32, i32, i32) {
    %0 = arith.index_cast %arg0 : i32 to index
    %1 = memref.load %arg1[%0] : memref<3xi32, #tpu.memory_space<smem>>
    %c0_i32 = arith.constant 0 : i32
    %c0_i32_0 = arith.constant 0 : i32
    %c0_i32_1 = arith.constant 0 : i32
    return %1, %c0_i32, %c0_i32_0 : i32, i32, i32
  }
  func.func @transform_2(%arg0: i32, %arg1: memref<3xi32, #tpu.memory_space<smem>>) -> (i32, i32, i32) {
    %0 = arith.index_cast %arg0 : i32 to index
    %1 = memref.load %arg1[%0] : memref<3xi32, #tpu.memory_space<smem>>
    %c0_i32 = arith.constant 0 : i32
    %c0_i32_0 = arith.constant 0 : i32
    %c0_i32_1 = arith.constant 0 : i32
    return %1, %c0_i32, %c0_i32_0 : i32, i32, i32
  }
  func.func @transform_3(%arg0: i32, %arg1: memref<3xi32, #tpu.memory_space<smem>>) -> (i32, i32) {
    %c0_i32 = arith.constant 0 : i32
    %c0_i32_0 = arith.constant 0 : i32
    return %arg0, %c0_i32 : i32, i32
  }
}

module attributes {stable_mosaic.version = 11 : i64} {
  func.func @_matmul_bias_act_kernel(%arg0: i32, %arg1: memref<1xi32, #tpu.memory_space<smem>>, %arg2: memref<8x144xbf16, #tpu.memory_space<vmem>>, %arg3: memref<1x144x128xbf16, #tpu.memory_space<vmem>>, %arg4: memref<1x1x128xf32, #tpu.memory_space<vmem>>, %arg5: memref<8x128xf32, #tpu.memory_space<vmem>>) attributes {dimension_semantics = [#tpu.dimension_semantics<parallel>], iteration_bounds = array<i64: 1>, scalar_prefetch = 1 : i64, scratch_operands = 0 : i64, tpu.core_type = #tpu.core_type<tc>, window_params = [{transform_indices = @transform_0, window_bounds = array<i64: 8, 144>}, {transform_indices = @transform_1, window_bounds = array<i64: 1, 144, 128>}, {transform_indices = @transform_2, window_bounds = array<i64: 1, 1, 128>}, {transform_indices = @transform_3, window_bounds = array<i64: 8, 128>}]} {
    %c0 = arith.constant 0 : index
    %c0_0 = arith.constant 0 : index
    %0 = vector.load %arg2[%c0, %c0_0] : memref<8x144xbf16, #tpu.memory_space<vmem>>, vector<8x144xbf16>
    %c0_1 = arith.constant 0 : index
    %c0_2 = arith.constant 0 : index
    %c0_3 = arith.constant 0 : index
    %1 = vector.load %arg3[%c0_1, %c0_2, %c0_3] : memref<1x144x128xbf16, #tpu.memory_space<vmem>>, vector<1x144x128xbf16>
    %2 = vector.shape_cast %1 : vector<1x144x128xbf16> to vector<144x128xbf16>
    %cst = arith.constant dense<0.000000e+00> : vector<8x128xf32>
    %3 = tpu.matmul %0, %2, %cst {dimension_numbers = #tpu.dot_dimension_numbers<[1], [0], [0], [1], [0, 0, 1, 1], [], []>} : vector<8x144xbf16>, vector<144x128xbf16>, vector<8x128xf32> -> vector<8x128xf32>
    %c0_4 = arith.constant 0 : index
    %c0_5 = arith.constant 0 : index
    %c0_6 = arith.constant 0 : index
    %4 = vector.load %arg4[%c0_4, %c0_5, %c0_6] : memref<1x1x128xf32, #tpu.memory_space<vmem>>, vector<1x1x128xf32>
    %5 = vector.shape_cast %4 : vector<1x1x128xf32> to vector<1x128xf32>
    %6 = vector.broadcast %5 : vector<1x128xf32> to vector<8x128xf32>
    %7 = arith.addf %3, %6 : vector<8x128xf32>
    %c0_7 = arith.constant 0 : index
    %c0_8 = arith.constant 0 : index
    %8 = vector.load %arg5[%c0_7, %c0_8] : memref<8x128xf32, #tpu.memory_space<vmem>>, vector<8x128xf32>
    tpu.vector_store %arg5[%c0_7, %c0_8], %7 {strides = array<i32>} : memref<8x128xf32, #tpu.memory_space<vmem>>, vector<8x128xf32>,
    return
  }
  func.func @transform_0(%arg0: i32, %arg1: memref<1xi32, #tpu.memory_space<smem>>) -> (i32, i32) {
    %c0_i32 = arith.constant 0 : i32
    %c0_i32_0 = arith.constant 0 : i32
    return %arg0, %c0_i32 : i32, i32
  }
  func.func @transform_1(%arg0: i32, %arg1: memref<1xi32, #tpu.memory_space<smem>>) -> (i32, i32, i32) {
    %0 = arith.index_cast %arg0 : i32 to index
    %1 = memref.load %arg1[%0] : memref<1xi32, #tpu.memory_space<smem>>
    %c0_i32 = arith.constant 0 : i32
    %c0_i32_0 = arith.constant 0 : i32
    %c0_i32_1 = arith.constant 0 : i32
    return %1, %c0_i32, %c0_i32_0 : i32, i32, i32
  }
  func.func @transform_2(%arg0: i32, %arg1: memref<1xi32, #tpu.memory_space<smem>>) -> (i32, i32, i32) {
    %0 = arith.index_cast %arg0 : i32 to index
    %1 = memref.load %arg1[%0] : memref<1xi32, #tpu.memory_space<smem>>
    %c0_i32 = arith.constant 0 : i32
    %c0_i32_0 = arith.constant 0 : i32
    %c0_i32_1 = arith.constant 0 : i32
    return %1, %c0_i32, %c0_i32_0 : i32, i32, i32
  }
  func.func @transform_3(%arg0: i32, %arg1: memref<1xi32, #tpu.memory_space<smem>>) -> (i32, i32) {
    %c0_i32 = arith.constant 0 : i32
    %c0_i32_0 = arith.constant 0 : i32
    return %arg0, %c0_i32 : i32, i32
  }
}

module attributes {stable_mosaic.version = 11 : i64} {
  func.func @_matmul_bias_act_kernel(%arg0: i32, %arg1: memref<3xi32, #tpu.memory_space<smem>>, %arg2: memref<128x144xbf16, #tpu.memory_space<vmem>>, %arg3: memref<1x144x128xbf16, #tpu.memory_space<vmem>>, %arg4: memref<1x1x128xf32, #tpu.memory_space<vmem>>, %arg5: memref<128x128xf32, #tpu.memory_space<vmem>>) attributes {dimension_semantics = [#tpu.dimension_semantics<parallel>], iteration_bounds = array<i64: 3>, scalar_prefetch = 1 : i64, scratch_operands = 0 : i64, tpu.core_type = #tpu.core_type<tc>, window_params = [{transform_indices = @transform_0, window_bounds = array<i64: 128, 144>}, {transform_indices = @transform_1, window_bounds = array<i64: 1, 144, 128>}, {transform_indices = @transform_2, window_bounds = array<i64: 1, 1, 128>}, {transform_indices = @transform_3, window_bounds = array<i64: 128, 128>}]} {
    %c0 = arith.constant 0 : index
    %c0_0 = arith.constant 0 : index
    %0 = vector.load %arg2[%c0, %c0_0] : memref<128x144xbf16, #tpu.memory_space<vmem>>, vector<128x144xbf16>
    %c0_1 = arith.constant 0 : index
    %c0_2 = arith.constant 0 : index
    %c0_3 = arith.constant 0 : index
    %1 = vector.load %arg3[%c0_1, %c0_2, %c0_3] : memref<1x144x128xbf16, #tpu.memory_space<vmem>>, vector<1x144x128xbf16>
    %2 = vector.shape_cast %1 : vector<1x144x128xbf16> to vector<144x128xbf16>
    %cst = arith.constant dense<0.000000e+00> : vector<128x128xf32>
    %3 = tpu.matmul %0, %2, %cst {dimension_numbers = #tpu.dot_dimension_numbers<[1], [0], [0], [1], [0, 0, 1, 1], [], []>} : vector<128x144xbf16>, vector<144x128xbf16>, vector<128x128xf32> -> vector<128x128xf32>
    %c0_4 = arith.constant 0 : index
    %c0_5 = arith.constant 0 : index
    %c0_6 = arith.constant 0 : index
    %4 = vector.load %arg4[%c0_4, %c0_5, %c0_6] : memref<1x1x128xf32, #tpu.memory_space<vmem>>, vector<1x1x128xf32>
    %5 = vector.shape_cast %4 : vector<1x1x128xf32> to vector<1x128xf32>
    %6 = vector.broadcast %5 : vector<1x128xf32> to vector<128x128xf32>
    %7 = arith.addf %3, %6 : vector<128x128xf32>
    %c0_7 = arith.constant 0 : index
    %c0_8 = arith.constant 0 : index
    %8 = vector.load %arg5[%c0_7, %c0_8] : memref<128x128xf32, #tpu.memory_space<vmem>>, vector<128x128xf32>
    tpu.vector_store %arg5[%c0_7, %c0_8], %7 {strides = array<i32>} : memref<128x128xf32, #tpu.memory_space<vmem>>, vector<128x128xf32>,
    return
  }
  func.func @transform_0(%arg0: i32, %arg1: memref<3xi32, #tpu.memory_space<smem>>) -> (i32, i32) {
    %c0_i32 = arith.constant 0 : i32
    %c0_i32_0 = arith.constant 0 : i32
    return %arg0, %c0_i32 : i32, i32
  }
  func.func @transform_1(%arg0: i32, %arg1: memref<3xi32, #tpu.memory_space<smem>>) -> (i32, i32, i32) {
    %0 = arith.index_cast %arg0 : i32 to index
    %1 = memref.load %arg1[%0] : memref<3xi32, #tpu.memory_space<smem>>
    %c0_i32 = arith.constant 0 : i32
    %c0_i32_0 = arith.constant 0 : i32
    %c0_i32_1 = arith.constant 0 : i32
    return %1, %c0_i32, %c0_i32_0 : i32, i32, i32
  }
  func.func @transform_2(%arg0: i32, %arg1: memref<3xi32, #tpu.memory_space<smem>>) -> (i32, i32, i32) {
    %0 = arith.index_cast %arg0 : i32 to index
    %1 = memref.load %arg1[%0] : memref<3xi32, #tpu.memory_space<smem>>
    %c0_i32 = arith.constant 0 : i32
    %c0_i32_0 = arith.constant 0 : i32
    %c0_i32_1 = arith.constant 0 : i32
    return %1, %c0_i32, %c0_i32_0 : i32, i32, i32
  }
  func.func @transform_3(%arg0: i32, %arg1: memref<3xi32, #tpu.memory_space<smem>>) -> (i32, i32) {
    %c0_i32 = arith.constant 0 : i32
    %c0_i32_0 = arith.constant 0 : i32
    return %arg0, %c0_i32 : i32, i32
  }
}

</mosaic_0001>

<llo_original>
// kernel: efficientdet_forward.21
$region0: #{efficientdet_forward.21}
  #allocation0 [shape = 'u32[]', space=smem, size = 0x4, offset = 0x4, fixed_abs, tag = 'smem constant byte address 0x4 - core index']
  #allocation1 [shape = 'u32[144,128]{1,0:T(1,128)}', space=vmem, size = 0x12000, scoped, tag = 'internal scratch']
  #allocation2 [shape = 's32[1]{0}', space=sflag, size = 0x4, scoped, tag = 'scoped memory for efficientdet_forward.21']
  #allocation3 [shape = 's32[1]{0:T(128)S(6)}', space=smem, size = 0x200, scoped, tag = 'prefetched SMEM operand 0']
  %s0 = inlined_call_operand.<no memory space> [shape: s32[1], index: 0, kind: input, shape index: {}]
  %s1 = inlined_call_operand.vmem [shape: bf16[2048,32], index: 1, kind: input, shape index: {}]
  %s2 = inlined_call_operand.vmem [shape: bf16[1,32,128], index: 2, kind: input, shape index: {}]
  %s3 = inlined_call_operand.vmem [shape: f32[1,1,128], index: 3, kind: input, shape index: {}]
  %s4 = inlined_call_operand.vmem [shape: f32[2048,128], index: 4, kind: output, shape index: {}]
  %s5 = sld [smem:[#allocation0]]
  $region22: #{efficientdet_forward.21} parent=0
    _
  %s7 = ssub.s32 1, %s5
  %s8 = scalar_select 0, %s7, %s5
  %9 = sst [smem:[#allocation3]] %s0
  // Predicated region
  $region2: #{efficientdet_forward.21} parent=0 // pred_check
    _
  $region3: #{efficientdet_forward.21} parent=0 // pred_check_branch
    %11 = sbr.rel (0) target = $region5
  $region4: #{efficientdet_forward.21} parent=0 // pred_region
    _
  $region5: #{efficientdet_forward.21} parent=0 // pred_fallthru
    _
  // Predicated region
  $region6: #{efficientdet_forward.21} parent=0 // pred_check
    _
  $region7: #{efficientdet_forward.21} parent=0 // pred_check_branch
    %13 = sbr.rel (0) target = $region9
  $region8: #{efficientdet_forward.21} parent=0 // pred_region
    %s14 = sld [smem:[#allocation3]]
    %p15 = scmp.lt.s32.totalorder %s14, 0
    %s16 = scalar_select %p15, %s14, 0
    %s17 = smul.addr %s16, 4
    %s18 = smul.addr %s17, 4
    %s19 = scalar_lea.vmem %s2, %s18
    %s20 = sld [smem:[#allocation3]]
  $region9: #{efficientdet_forward.21} parent=0 // pred_fallthru
    _
  // Predicated region
  $region10: #{efficientdet_forward.21} parent=0 // pred_check
    _
  $region11: #{efficientdet_forward.21} parent=0 // pred_check_branch
    %22 = sbr.rel (0) target = $region13
  $region12: #{efficientdet_forward.21} parent=0 // pred_region
    %s23 = sld [smem:[#allocation3]]
    %p24 = scmp.lt.s32.totalorder %s23, 0
    %s25 = scalar_select %p24, %s23, 0
    %s26 = scalar_lea.vmem %s3, %s25
    %s27 = sld [smem:[#allocation3]]
  $region13: #{efficientdet_forward.21} parent=0 // pred_fallthru
    _
  %s28 = sld [smem:[#allocation3]]
  %p29 = scmp.lt.s32.totalorder %s28, 0
  %s30 = scalar_select %p29, %s28, 0
  %s31 = smul.addr %s30, 4
  %s32 = smul.addr %s31, 4
  %s33 = scalar_lea.vmem %s2, %s32
  %s34 = sld [smem:[#allocation3]]
  %p35 = scmp.lt.s32.totalorder %s34, 0
  %s36 = scalar_select %p35, %s34, 0
  %s37 = scalar_lea.vmem %s3, %s36
  %s38 = sld [smem:[#allocation3]]
  %p39 = scmp.lt.s32.totalorder %s38, 0
  %s40 = scalar_select %p39, %s38, 0
  %s41 = smul.addr %s40, 4
  %s42 = smul.addr %s41, 4
  %s43 = scalar_lea.vmem %s2, %s42
  %s44 = sld [smem:[#allocation3]]
  %s45 = sld [smem:[#allocation3]]
  %p46 = scmp.lt.s32.totalorder %s45, 0
  %s47 = scalar_select %p46, %s45, 0
  %s48 = scalar_lea.vmem %s3, %s47
  %s49 = sld [smem:[#allocation3]]
  %v51 = vld [vmem:[%s1] sm:$0xf]
  %v52 = vld [vmem:[%s1 + $0x4] sm:$0xf]
  %v53 = vld [vmem:[%s1 + $0x8] sm:$0xf]
  %v54 = vld [vmem:[%s1 + $0xc] sm:$0xf]
  %v55 = vld [vmem:[%s1 + $0x10] sm:$0xf]
  %v56 = vld [vmem:[%s1 + $0x14] sm:$0xf]
  %v57 = vld [vmem:[%s1 + $0x18] sm:$0xf]
  %v58 = vld [vmem:[%s1 + $0x1c] sm:$0xf]
  %v59 = vld [vmem:[%s1 + $0x20] sm:$0xf]
  %v60 = vld [vmem:[%s1 + $0x24] sm:$0xf]
  %v61 = vld [vmem:[%s1 + $0x28] sm:$0xf]
  %v62 = vld [vmem:[%s1 + $0x2c] sm:$0xf]
  %v63 = vld [vmem:[%s1 + $0x30] sm:$0xf]
  %v64 = vld [vmem:[%s1 + $0x34] sm:$0xf]
  %v65 = vld [vmem:[%s1 + $0x38] sm:$0xf]
  %v66 = vld [vmem:[%s1 + $0x3c] sm:$0xf]
  %v67 = vld [vmem:[%s1 + $0x40] sm:$0xf]
  %v68 = vld [vmem:[%s1 + $0x44] sm:$0xf]
  %v69 = vld [vmem:[%s1 + $0x48] sm:$0xf]
  %v70 = vld [vmem:[%s1 + $0x4c] sm:$0xf]
  %v71 = vld [vmem:[%s1 + $0x50] sm:$0xf]
  %v72 = vld [vmem:[%s1 + $0x54] sm:$0xf]
  %v73 = vld [vmem:[%s1 + $0x58] sm:$0xf]
  %v74 = vld [vmem:[%s1 + $0x5c] sm:$0xf]
  %v75 = vld [vmem:[%s1 + $0x60] sm:$0xf]
  %v76 = vld [vmem:[%s1 + $0x64] sm:$0xf]
  %v77 = vld [vmem:[%s1 + $0x68] sm:$0xf]
  %v78 = vld [vmem:[%s1 + $0x6c] sm:$0xf]
  %v79 = vld [vmem:[%s1 + $0x70] sm:$0xf]
  %v80 = vld [vmem:[%s1 + $0x74] sm:$0xf]
  %v81 = vld [vmem:[%s1 + $0x78] sm:$0xf]
  %v82 = vld [vmem:[%s1 + $0x7c] sm:$0xf]
  %v83 = vld [vmem:[%s1 + $0x80] sm:$0xf]
  %v84 = vld [vmem:[%s1 + $0x84] sm:$0xf]
  %v85 = vld [vmem:[%s1 + $0x88] sm:$0xf]
  %v86 = vld [vmem:[%s1 + $0x8c] sm:$0xf]
  %v87 = vld [vmem:[%s1 + $0x90] sm:$0xf]
  %v88 = vld [vmem:[%s1 + $0x94] sm:$0xf]
  %v89 = vld [vmem:[%s1 + $0x98] sm:$0xf]
  %v90 = vld [vmem:[%s1 + $0x9c] sm:$0xf]
  %v91 = vld [vmem:[%s1 + $0xa0] sm:$0xf]
  %v92 = vld [vmem:[%s1 + $0xa4] sm:$0xf]
  %v93 = vld [vmem:[%s1 + $0xa8] sm:$0xf]
  %v94 = vld [vmem:[%s1 + $0xac] sm:$0xf]
  %v95 = vld [vmem:[%s1 + $0xb0] sm:$0xf]
  %v96 = vld [vmem:[%s1 + $0xb4] sm:$0xf]
  %v97 = vld [vmem:[%s1 + $0xb8] sm:$0xf]
  %v98 = vld [vmem:[%s1 + $0xbc] sm:$0xf]
  %v99 = vld [vmem:[%s1 + $0xc0] sm:$0xf]
  %v100 = vld [vmem:[%s1 + $0xc4] sm:$0xf]
  %v101 = vld [vmem:[%s1 + $0xc8] sm:$0xf]
  %v102 = vld [vmem:[%s1 + $0xcc] sm:$0xf]
  %v103 = vld [vmem:[%s1 + $0xd0] sm:$0xf]
  %v104 = vld [vmem:[%s1 + $0xd4] sm:$0xf]
  %v105 = vld [vmem:[%s1 + $0xd8] sm:$0xf]
  %v106 = vld [vmem:[%s1 + $0xdc] sm:$0xf]
  %v107 = vld [vmem:[%s1 + $0xe0] sm:$0xf]
  %v108 = vld [vmem:[%s1 + $0xe4] sm:$0xf]
  %v109 = vld [vmem:[%s1 + $0xe8] sm:$0xf]
  %v110 = vld [vmem:[%s1 + $0xec] sm:$0xf]
  %v111 = vld [vmem:[%s1 + $0xf0] sm:$0xf]
  %v112 = vld [vmem:[%s1 + $0xf4] sm:$0xf]
  %v113 = vld [vmem:[%s1 + $0xf8] sm:$0xf]
  %v114 = vld [vmem:[%s1 + $0xfc] sm:$0xf]
  %v115 = vld [vmem:[%s1 + $0x100] sm:$0xf]
  %v116 = vld [vmem:[%s1 + $0x104] sm:$0xf]
  %v117 = vld [vmem:[%s1 + $0x108] sm:$0xf]
  %v118 = vld [vmem:[%s1 + $0x10c] sm:$0xf]
  %v119 = vld [vmem:[%s1 + $0x110] sm:$0xf]
  %v120 = vld [vmem:[%s1 + $0x114] sm:$0xf]
  %v121 = vld [vmem:[%s1 + $0x118] sm:$0xf]
  %v122 = vld [vmem:[%s1 + $0x11c] sm:$0xf]
  %v123 = vld [vmem:[%s1 + $0x120] sm:$0xf]
  %v124 = vld [vmem:[%s1 + $0x124] sm:$0xf]
  %v125 = vld [vmem:[%s1 + $0x128] sm:$0xf]
  %v126 = vld [vmem:[%s1 + $0x12c] sm:$0xf]
  %v127 = vld [vmem:[%s1 + $0x130] sm:$0xf]
  %v128 = vld [vmem:[%s1 + $0x134] sm:$0xf]
  %v129 = vld [vmem:[%s1 + $0x138] sm:$0xf]
  %v130 = vld [vmem:[%s1 + $0x13c] sm:$0xf]
  %v131 = vld [vmem:[%s1 + $0x140] sm:$0xf]
  %v132 = vld [vmem:[%s1 + $0x144] sm:$0xf]
  %v133 = vld [vmem:[%s1 + $0x148] sm:$0xf]
  %v134 = vld [vmem:[%s1 + $0x14c] sm:$0xf]
  %v135 = vld [vmem:[%s1 + $0x150] sm:$0xf]
  %v136 = vld [vmem:[%s1 + $0x154] sm:$0xf]
  %v137 = vld [vmem:[%s1 + $0x158] sm:$0xf]
  %v138 = vld [vmem:[%s1 + $0x15c] sm:$0xf]
  %v139 = vld [vmem:[%s1 + $0x160] sm:$0xf]
  %v140 = vld [vmem:[%s1 + $0x164] sm:$0xf]
  %v141 = vld [vmem:[%s1 + $0x168] sm:$0xf]
  %v142 = vld [vmem:[%s1 + $0x16c] sm:$0xf]
  %v143 = vld [vmem:[%s1 + $0x170] sm:$0xf]
  %v144 = vld [vmem:[%s1 + $0x174] sm:$0xf]
  %v145 = vld [vmem:[%s1 + $0x178] sm:$0xf]
  %v146 = vld [vmem:[%s1 + $0x17c] sm:$0xf]
  %v147 = vld [vmem:[%s1 + $0x180] sm:$0xf]
  %v148 = vld [vmem:[%s1 + $0x184] sm:$0xf]
  %v149 = vld [vmem:[%s1 + $0x188] sm:$0xf]
  %v150 = vld [vmem:[%s1 + $0x18c] sm:$0xf]
  %v151 = vld [vmem:[%s1 + $0x190] sm:$0xf]
  %v152 = vld [vmem:[%s1 + $0x194] sm:$0xf]
  %v153 = vld [vmem:[%s1 + $0x198] sm:$0xf]
  %v154 = vld [vmem:[%s1 + $0x19c] sm:$0xf]
  %v155 = vld [vmem:[%s1 + $0x1a0] sm:$0xf]
  %v156 = vld [vmem:[%s1 + $0x1a4] sm:$0xf]
  %v157 = vld [vmem:[%s1 + $0x1a8] sm:$0xf]
  %v158 = vld [vmem:[%s1 + $0x1ac] sm:$0xf]
  %v159 = vld [vmem:[%s1 + $0x1b0] sm:$0xf]
  %v160 = vld [vmem:[%s1 + $0x1b4] sm:$0xf]
  %v161 = vld [vmem:[%s1 + $0x1b8] sm:$0xf]
  %v162 = vld [vmem:[%s1 + $0x1bc] sm:$0xf]
  %v163 = vld [vmem:[%s1 + $0x1c0] sm:$0xf]
  %v164 = vld [vmem:[%s1 + $0x1c4] sm:$0xf]
  %v165 = vld [vmem:[%s1 + $0x1c8] sm:$0xf]
  %v166 = vld [vmem:[%s1 + $0x1cc] sm:$0xf]
  %v167 = vld [vmem:[%s1 + $0x1d0] sm:$0xf]
  %v168 = vld [vmem:[%s1 + $0x1d4] sm:$0xf]
  %v169 = vld [vmem:[%s1 + $0x1d8] sm:$0xf]
  %v170 = vld [vmem:[%s1 + $0x1dc] sm:$0xf]
  %v171 = vld [vmem:[%s1 + $0x1e0] sm:$0xf]
  %v172 = vld [vmem:[%s1 + $0x1e4] sm:$0xf]
  %v173 = vld [vmem:[%s1 + $0x1e8] sm:$0xf]
  %v174 = vld [vmem:[%s1 + $0x1ec] sm:$0xf]
  %v175 = vld [vmem:[%s1 + $0x1f0] sm:$0xf]
  %v176 = vld [vmem:[%s1 + $0x1f4] sm:$0xf]
  %v177 = vld [vmem:[%s1 + $0x1f8] sm:$0xf]
  %v178 = vld [vmem:[%s1 + $0x1fc] sm:$0xf]
  %v179 = vld [vmem:[%s1 + $0x200] sm:$0xf]
  %v180 = vld [vmem:[%s1 + $0x204] sm:$0xf]
  %v181 = vld [vmem:[%s1 + $0x208] sm:$0xf]
  %v182 = vld [vmem:[%s1 + $0x20c] sm:$0xf]
  %v183 = vld [vmem:[%s1 + $0x210] sm:$0xf]
  %v184 = vld [vmem:[%s1 + $0x214] sm:$0xf]
  %v185 = vld [vmem:[%s1 + $0x218] sm:$0xf]
  %v186 = vld [vmem:[%s1 + $0x21c] sm:$0xf]
  %v187 = vld [vmem:[%s1 + $0x220] sm:$0xf]
  %v188 = vld [vmem:[%s1 + $0x224] sm:$0xf]
  %v189 = vld [vmem:[%s1 + $0x228] sm:$0xf]
  %v190 = vld [vmem:[%s1 + $0x22c] sm:$0xf]
  %v191 = vld [vmem:[%s1 + $0x230] sm:$0xf]
  %v192 = vld [vmem:[%s1 + $0x234] sm:$0xf]
  %v193 = vld [vmem:[%s1 + $0x238] sm:$0xf]
  %v194 = vld [vmem:[%s1 + $0x23c] sm:$0xf]
  %v195 = vld [vmem:[%s1 + $0x240] sm:$0xf]
  %v196 = vld [vmem:[%s1 + $0x244] sm:$0xf]
  %v197 = vld [vmem:[%s1 + $0x248] sm:$0xf]
  %v198 = vld [vmem:[%s1 + $0x24c] sm:$0xf]
  %v199 = vld [vmem:[%s1 + $0x250] sm:$0xf]
  %v200 = vld [vmem:[%s1 + $0x254] sm:$0xf]
  %v201 = vld [vmem:[%s1 + $0x258] sm:$0xf]
  %v202 = vld [vmem:[%s1 + $0x25c] sm:$0xf]
  %v203 = vld [vmem:[%s1 + $0x260] sm:$0xf]
  %v204 = vld [vmem:[%s1 + $0x264] sm:$0xf]
  %v205 = vld [vmem:[%s1 + $0x268] sm:$0xf]
  %v206 = vld [vmem:[%s1 + $0x26c] sm:$0xf]
  %v207 = vld [vmem:[%s1 + $0x270] sm:$0xf]
  %v208 = vld [vmem:[%s1 + $0x274] sm:$0xf]
  %v209 = vld [vmem:[%s1 + $0x278] sm:$0xf]
  %v210 = vld [vmem:[%s1 + $0x27c] sm:$0xf]
  %v211 = vld [vmem:[%s1 + $0x280] sm:$0xf]
  %v212 = vld [vmem:[%s1 + $0x284] sm:$0xf]
  %v213 = vld [vmem:[%s1 + $0x288] sm:$0xf]
  %v214 = vld [vmem:[%s1 + $0x28c] sm:$0xf]
  %v215 = vld [vmem:[%s1 + $0x290] sm:$0xf]
  %v216 = vld [vmem:[%s1 + $0x294] sm:$0xf]
  %v217 = vld [vmem:[%s1 + $0x298] sm:$0xf]
  %v218 = vld [vmem:[%s1 + $0x29c] sm:$0xf]
  %v219 = vld [vmem:[%s1 + $0x2a0] sm:$0xf]
  %v220 = vld [vmem:[%s1 + $0x2a4] sm:$0xf]
  %v221 = vld [vmem:[%s1 + $0x2a8] sm:$0xf]
  %v222 = vld [vmem:[%s1 + $0x2ac] sm:$0xf]
  %v223 = vld [vmem:[%s1 + $0x2b0] sm:$0xf]
  %v224 = vld [vmem:[%s1 + $0x2b4] sm:$0xf]
  %v225 = vld [vmem:[%s1 + $0x2b8] sm:$0xf]
  %v226 = vld [vmem:[%s1 + $0x2bc] sm:$0xf]
  %v227 = vld [vmem:[%s1 + $0x2c0] sm:$0xf]
  %v228 = vld [vmem:[%s1 + $0x2c4] sm:$0xf]
  %v229 = vld [vmem:[%s1 + $0x2c8] sm:$0xf]
  %v230 = vld [vmem:[%s1 + $0x2cc] sm:$0xf]
  %v231 = vld [vmem:[%s1 + $0x2d0] sm:$0xf]
  %v232 = vld [vmem:[%s1 + $0x2d4] sm:$0xf]
  %v233 = vld [vmem:[%s1 + $0x2d8] sm:$0xf]
  %v234 = vld [vmem:[%s1 + $0x2dc] sm:$0xf]
  %v235 = vld [vmem:[%s1 + $0x2e0] sm:$0xf]
  %v236 = vld [vmem:[%s1 + $0x2e4] sm:$0xf]
  %v237 = vld [vmem:[%s1 + $0x2e8] sm:$0xf]
  %v238 = vld [vmem:[%s1 + $0x2ec] sm:$0xf]
  %v239 = vld [vmem:[%s1 + $0x2f0] sm:$0xf]
  %v240 = vld [vmem:[%s1 + $0x2f4] sm:$0xf]
  %v241 = vld [vmem:[%s1 + $0x2f8] sm:$0xf]
  %v242 = vld [vmem:[%s1 + $0x2fc] sm:$0xf]
  %v243 = vld [vmem:[%s1 + $0x300] sm:$0xf]
  %v244 = vld [vmem:[%s1 + $0x304] sm:$0xf]
  %v245 = vld [vmem:[%s1 + $0x308] sm:$0xf]
  %v246 = vld [vmem:[%s1 + $0x30c] sm:$0xf]
  %v247 = vld [vmem:[%s1 + $0x310] sm:$0xf]
  %v248 = vld [vmem:[%s1 + $0x314] sm:$0xf]
  %v249 = vld [vmem:[%s1 + $0x318] sm:$0xf]
  %v250 = vld [vmem:[%s1 + $0x31c] sm:$0xf]
  %v251 = vld [vmem:[%s1 + $0x320] sm:$0xf]
  %v252 = vld [vmem:[%s1 + $0x324] sm:$0xf]
  %v253 = vld [vmem:[%s1 + $0x328] sm:$0xf]
  %v254 = vld [vmem:[%s1 + $0x32c] sm:$0xf]
  %v255 = vld [vmem:[%s1 + $0x330] sm:$0xf]
  %v256 = vld [vmem:[%s1 + $0x334] sm:$0xf]
  %v257 = vld [vmem:[%s1 + $0x338] sm:$0xf]
  %v258 = vld [vmem:[%s1 + $0x33c] sm:$0xf]
  %v259 = vld [vmem:[%s1 + $0x340] sm:$0xf]
  %v260 = vld [vmem:[%s1 + $0x344] sm:$0xf]
  %v261 = vld [vmem:[%s1 + $0x348] sm:$0xf]
  %v262 = vld [vmem:[%s1 + $0x34c] sm:$0xf]
  %v263 = vld [vmem:[%s1 + $0x350] sm:$0xf]
  %v264 = vld [vmem:[%s1 + $0x354] sm:$0xf]
  %v265 = vld [vmem:[%s1 + $0x358] sm:$0xf]
  %v266 = vld [vmem:[%s1 + $0x35c] sm:$0xf]
  %v267 = vld [vmem:[%s1 + $0x360] sm:$0xf]
  %v268 = vld [vmem:[%s1 + $0x364] sm:$0xf]
  %v269 = vld [vmem:[%s1 + $0x368] sm:$0xf]
  %v270 = vld [vmem:[%s1 + $0x36c] sm:$0xf]
  %v271 = vld [vmem:[%s1 + $0x370] sm:$0xf]
  %v272 = vld [vmem:[%s1 + $0x374] sm:$0xf]
  %v273 = vld [vmem:[%s1 + $0x378] sm:$0xf]
  %v274 = vld [vmem:[%s1 + $0x37c] sm:$0xf]
  %v275 = vld [vmem:[%s1 + $0x380] sm:$0xf]
  %v276 = vld [vmem:[%s1 + $0x384] sm:$0xf]
  %v277 = vld [vmem:[%s1 + $0x388] sm:$0xf]
  %v278 = vld [vmem:[%s1 + $0x38c] sm:$0xf]
  %v279 = vld [vmem:[%s1 + $0x390] sm:$0xf]
  %v280 = vld [vmem:[%s1 + $0x394] sm:$0xf]
  %v281 = vld [vmem:[%s1 + $0x398] sm:$0xf]
  %v282 = vld [vmem:[%s1 + $0x39c] sm:$0xf]
  %v283 = vld [vmem:[%s1 + $0x3a0] sm:$0xf]
  %v284 = vld [vmem:[%s1 + $0x3a4] sm:$0xf]
  %v285 = vld [vmem:[%s1 + $0x3a8] sm:$0xf]
  %v286 = vld [vmem:[%s1 + $0x3ac] sm:$0xf]
  %v287 = vld [vmem:[%s1 + $0x3b0] sm:$0xf]
  %v288 = vld [vmem:[%s1 + $0x3b4] sm:$0xf]
  %v289 = vld [vmem:[%s1 + $0x3b8] sm:$0xf]
  %v290 = vld [vmem:[%s1 + $0x3bc] sm:$0xf]
  %v291 = vld [vmem:[%s1 + $0x3c0] sm:$0xf]
  %v292 = vld [vmem:[%s1 + $0x3c4] sm:$0xf]
  %v293 = vld [vmem:[%s1 + $0x3c8] sm:$0xf]
  %v294 = vld [vmem:[%s1 + $0x3cc] sm:$0xf]
  %v295 = vld [vmem:[%s1 + $0x3d0] sm:$0xf]
  %v296 = vld [vmem:[%s1 + $0x3d4] sm:$0xf]
  %v297 = vld [vmem:[%s1 + $0x3d8] sm:$0xf]
  %v298 = vld [vmem:[%s1 + $0x3dc] sm:$0xf]
  %v299 = vld [vmem:[%s1 + $0x3e0] sm:$0xf]
  %v300 = vld [vmem:[%s1 + $0x3e4] sm:$0xf]
  %v301 = vld [vmem:[%s1 + $0x3e8] sm:$0xf]
  %v302 = vld [vmem:[%s1 + $0x3ec] sm:$0xf]
  %v303 = vld [vmem:[%s1 + $0x3f0] sm:$0xf]
  %v304 = vld [vmem:[%s1 + $0x3f4] sm:$0xf]
  %v305 = vld [vmem:[%s1 + $0x3f8] sm:$0xf]
  %v306 = vld [vmem:[%s1 + $0x3fc] sm:$0xf]
  %v307 = vld [vmem:[%s43] sm:$0xf]
  %v308 = vld [vmem:[%s43 + $0x4] sm:$0xf]
  %v309 = vld [vmem:[%s43 + $0x8] sm:$0xf]
  %v310 = vld [vmem:[%s43 + $0xc] sm:$0xf]
  %v311 = vld [vmem:[%s48] sm:$0x1]
  %v313 = vlaneseq
  %v314 = vshrl.u32 %v313, 7
  %v315 = vsub.s32 0, %v314
  %v316 = vrot.slane %v311, %v315
  %v574 = vunpack.c.l.b16 %v51
  %v575 = vunpack.c.l.b16 %v52
  %v576 = vunpack.c.l.b16 %v53
  %v577 = vunpack.c.l.b16 %v54
  %v578 = vunpack.c.l.b16 %v55
  %v579 = vunpack.c.l.b16 %v56
  %v580 = vunpack.c.l.b16 %v57
  %v581 = vunpack.c.l.b16 %v58
  %v582 = vunpack.c.l.b16 %v59
  %v583 = vunpack.c.l.b16 %v60
  %v584 = vunpack.c.l.b16 %v61
  %v585 = vunpack.c.l.b16 %v62
  %v586 = vunpack.c.l.b16 %v63
  %v587 = vunpack.c.l.b16 %v64
  %v588 = vunpack.c.l.b16 %v65
  %v589 = vunpack.c.l.b16 %v66
  %v590 = vunpack.c.l.b16 %v67
  %v591 = vunpack.c.l.b16 %v68
  %v592 = vunpack.c.l.b16 %v69
  %v593 = vunpack.c.l.b16 %v70
  %v594 = vunpack.c.l.b16 %v71
  %v595 = vunpack.c.l.b16 %v72
  %v596 = vunpack.c.l.b16 %v73
  %v597 = vunpack.c.l.b16 %v74
  %v598 = vunpack.c.l.b16 %v75
  %v599 = vunpack.c.l.b16 %v76
  %v600 = vunpack.c.l.b16 %v77
  %v601 = vunpack.c.l.b16 %v78
  %v602 = vunpack.c.l.b16 %v79
  %v603 = vunpack.c.l.b16 %v80
  %v604 = vunpack.c.l.b16 %v81
  %v605 = vunpack.c.l.b16 %v82
  %v606 = vunpack.c.l.b16 %v83
  %v607 = vunpack.c.l.b16 %v84
  %v608 = vunpack.c.l.b16 %v85
  %v609 = vunpack.c.l.b16 %v86
  %v610 = vunpack.c.l.b16 %v87
  %v611 = vunpack.c.l.b16 %v88
  %v612 = vunpack.c.l.b16 %v89
  %v613 = vunpack.c.l.b16 %v90
  %v614 = vunpack.c.l.b16 %v91
  %v615 = vunpack.c.l.b16 %v92
  %v616 = vunpack.c.l.b16 %v93
  %v617 = vunpack.c.l.b16 %v94
  %v618 = vunpack.c.l.b16 %v95
  %v619 = vunpack.c.l.b16 %v96
  %v620 = vunpack.c.l.b16 %v97
  %v621 = vunpack.c.l.b16 %v98
  %v622 = vunpack.c.l.b16 %v99
  %v623 = vunpack.c.l.b16 %v100
  %v624 = vunpack.c.l.b16 %v101
  %v625 = vunpack.c.l.b16 %v102
  %v626 = vunpack.c.l.b16 %v103
  %v627 = vunpack.c.l.b16 %v104
  %v628 = vunpack.c.l.b16 %v105
  %v629 = vunpack.c.l.b16 %v106
  %v630 = vunpack.c.l.b16 %v107
  %v631 = vunpack.c.l.b16 %v108
  %v632 = vunpack.c.l.b16 %v109
  %v633 = vunpack.c.l.b16 %v110
  %v634 = vunpack.c.l.b16 %v111
  %v635 = vunpack.c.l.b16 %v112
  %v636 = vunpack.c.l.b16 %v113
  %v637 = vunpack.c.l.b16 %v114
  %v638 = vunpack.c.l.b16 %v115
  %v639 = vunpack.c.l.b16 %v116
  %v640 = vunpack.c.l.b16 %v117
  %v641 = vunpack.c.l.b16 %v118
  %v642 = vunpack.c.l.b16 %v119
  %v643 = vunpack.c.l.b16 %v120
  %v644 = vunpack.c.l.b16 %v121
  %v645 = vunpack.c.l.b16 %v122
  %v646 = vunpack.c.l.b16 %v123
  %v647 = vunpack.c.l.b16 %v124
  %v648 = vunpack.c.l.b16 %v125
  %v649 = vunpack.c.l.b16 %v126
  %v650 = vunpack.c.l.b16 %v127
  %v651 = vunpack.c.l.b16 %v128
  %v652 = vunpack.c.l.b16 %v129
  %v653 = vunpack.c.l.b16 %v130
  %v654 = vunpack.c.l.b16 %v131
  %v655 = vunpack.c.l.b16 %v132
  %v656 = vunpack.c.l.b16 %v133
  %v657 = vunpack.c.l.b16 %v134
  %v658 = vunpack.c.l.b16 %v135
  %v659 = vunpack.c.l.b16 %v136
  %v660 = vunpack.c.l.b16 %v137
  %v661 = vunpack.c.l.b16 %v138
  %v662 = vunpack.c.l.b16 %v139
  %v663 = vunpack.c.l.b16 %v140
  %v664 = vunpack.c.l.b16 %v141
  %v665 = vunpack.c.l.b16 %v142
  %v666 = vunpack.c.l.b16 %v143
  %v667 = vunpack.c.l.b16 %v144
  %v668 = vunpack.c.l.b16 %v145
  %v669 = vunpack.c.l.b16 %v146
  %v670 = vunpack.c.l.b16 %v147
  %v671 = vunpack.c.l.b16 %v148
  %v672 = vunpack.c.l.b16 %v149
  %v673 = vunpack.c.l.b16 %v150
  %v674 = vunpack.c.l.b16 %v151
  %v675 = vunpack.c.l.b16 %v152
  %v676 = vunpack.c.l.b16 %v153
  %v677 = vunpack.c.l.b16 %v154
  %v678 = vunpack.c.l.b16 %v155
  %v679 = vunpack.c.l.b16 %v156
  %v680 = vunpack.c.l.b16 %v157
  %v681 = vunpack.c.l.b16 %v158
  %v682 = vunpack.c.l.b16 %v159
  %v683 = vunpack.c.l.b16 %v160
  %v684 = vunpack.c.l.b16 %v161
  %v685 = vunpack.c.l.b16 %v162
  %v686 = vunpack.c.l.b16 %v163
  %v687 = vunpack.c.l.b16 %v164
  %v688 = vunpack.c.l.b16 %v165
  %v689 = vunpack.c.l.b16 %v166
  %v690 = vunpack.c.l.b16 %v167
  %v691 = vunpack.c.l.b16 %v168
  %v692 = vunpack.c.l.b16 %v169
  %v693 = vunpack.c.l.b16 %v170
  %v694 = vunpack.c.l.b16 %v171
  %v695 = vunpack.c.l.b16 %v172
  %v696 = vunpack.c.l.b16 %v173
  %v697 = vunpack.c.l.b16 %v174
  %v698 = vunpack.c.l.b16 %v175
  %v699 = vunpack.c.l.b16 %v176
  %v700 = vunpack.c.l.b16 %v177
  %v701 = vunpack.c.l.b16 %v178
  %v702 = vunpack.c.l.b16 %v179
  %v703 = vunpack.c.l.b16 %v180
  %v704 = vunpack.c.l.b16 %v181
  %v705 = vunpack.c.l.b16 %v182
  %v706 = vunpack.c.l.b16 %v183
  %v707 = vunpack.c.l.b16 %v184
  %v708 = vunpack.c.l.b16 %v185
  %v709 = vunpack.c.l.b16 %v186
  %v710 = vunpack.c.l.b16 %v187
  %v711 = vunpack.c.l.b16 %v188
  %v712 = vunpack.c.l.b16 %v189
  %v713 = vunpack.c.l.b16 %v190
  %v714 = vunpack.c.l.b16 %v191
  %v715 = vunpack.c.l.b16 %v192
  %v716 = vunpack.c.l.b16 %v193
  %v717 = vunpack.c.l.b16 %v194
  %v718 = vunpack.c.l.b16 %v195
  %v719 = vunpack.c.l.b16 %v196
  %v720 = vunpack.c.l.b16 %v197
  %v721 = vunpack.c.l.b16 %v198
  %v722 = vunpack.c.l.b16 %v199
  %v723 = vunpack.c.l.b16 %v200
  %v724 = vunpack.c.l.b16 %v201
  %v725 = vunpack.c.l.b16 %v202
  %v726 = vunpack.c.l.b16 %v203
  %v727 = vunpack.c.l.b16 %v204
  %v728 = vunpack.c.l.b16 %v205
  %v729 = vunpack.c.l.b16 %v206
  %v730 = vunpack.c.l.b16 %v207
  %v731 = vunpack.c.l.b16 %v208
  %v732 = vunpack.c.l.b16 %v209
  %v733 = vunpack.c.l.b16 %v210
  %v734 = vunpack.c.l.b16 %v211
  %v735 = vunpack.c.l.b16 %v212
  %v736 = vunpack.c.l.b16 %v213
  %v737 = vunpack.c.l.b16 %v214
  %v738 = vunpack.c.l.b16 %v215
  %v739 = vunpack.c.l.b16 %v216
  %v740 = vunpack.c.l.b16 %v217
  %v741 = vunpack.c.l.b16 %v218
  %v742 = vunpack.c.l.b16 %v219
  %v743 = vunpack.c.l.b16 %v220
  %v744 = vunpack.c.l.b16 %v221
  %v745 = vunpack.c.l.b16 %v222
  %v746 = vunpack.c.l.b16 %v223
  %v747 = vunpack.c.l.b16 %v224
  %v748 = vunpack.c.l.b16 %v225
  %v749 = vunpack.c.l.b16 %v226
  %v750 = vunpack.c.l.b16 %v227
  %v751 = vunpack.c.l.b16 %v228
  %v752 = vunpack.c.l.b16 %v229
  %v753 = vunpack.c.l.b16 %v230
  %v754 = vunpack.c.l.b16 %v231
  %v755 = vunpack.c.l.b16 %v232
  %v756 = vunpack.c.l.b16 %v233
  %v757 = vunpack.c.l.b16 %v234
  %v758 = vunpack.c.l.b16 %v235
  %v759 = vunpack.c.l.b16 %v236
  %v760 = vunpack.c.l.b16 %v237
  %v761 = vunpack.c.l.b16 %v238
  %v762 = vunpack.c.l.b16 %v239
  %v763 = vunpack.c.l.b16 %v240
  %v764 = vunpack.c.l.b16 %v241
  %v765 = vunpack.c.l.b16 %v242
  %v766 = vunpack.c.l.b16 %v243
  %v767 = vunpack.c.l.b16 %v244
  %v768 = vunpack.c.l.b16 %v245
  %v769 = vunpack.c.l.b16 %v246
  %v770 = vunpack.c.l.b16 %v247
  %v771 = vunpack.c.l.b16 %v248
  %v772 = vunpack.c.l.b16 %v249
  %v773 = vunpack.c.l.b16 %v250
  %v774 = vunpack.c.l.b16 %v251
  %v775 = vunpack.c.l.b16 %v252
  %v776 = vunpack.c.l.b16 %v253
  %v777 = vunpack.c.l.b16 %v254
  %v778 = vunpack.c.l.b16 %v255
  %v779 = vunpack.c.l.b16 %v256
  %v780 = vunpack.c.l.b16 %v257
  %v781 = vunpack.c.l.b16 %v258
  %v782 = vunpack.c.l.b16 %v259
  %v783 = vunpack.c.l.b16 %v260
  %v784 = vunpack.c.l.b16 %v261
  %v785 = vunpack.c.l.b16 %v262
  %v786 = vunpack.c.l.b16 %v263
  %v787 = vunpack.c.l.b16 %v264
  %v788 = vunpack.c.l.b16 %v265
  %v789 = vunpack.c.l.b16 %v266
  %v790 = vunpack.c.l.b16 %v267
  %v791 = vunpack.c.l.b16 %v268
  %v792 = vunpack.c.l.b16 %v269
  %v793 = vunpack.c.l.b16 %v270
  %v794 = vunpack.c.l.b16 %v271
  %v795 = vunpack.c.l.b16 %v272
  %v796 = vunpack.c.l.b16 %v273
  %v797 = vunpack.c.l.b16 %v274
  %v798 = vunpack.c.l.b16 %v275
  %v799 = vunpack.c.l.b16 %v276
  %v800 = vunpack.c.l.b16 %v277
  %v801 = vunpack.c.l.b16 %v278
  %v802 = vunpack.c.l.b16 %v279
  %v803 = vunpack.c.l.b16 %v280
  %v804 = vunpack.c.l.b16 %v281
  %v805 = vunpack.c.l.b16 %v282
  %v806 = vunpack.c.l.b16 %v283
  %v807 = vunpack.c.l.b16 %v284
  %v808 = vunpack.c.l.b16 %v285
  %v809 = vunpack.c.l.b16 %v286
  %v810 = vunpack.c.l.b16 %v287
  %v811 = vunpack.c.l.b16 %v288
  %v812 = vunpack.c.l.b16 %v289
  %v813 = vunpack.c.l.b16 %v290
  %v814 = vunpack.c.l.b16 %v291
  %v815 = vunpack.c.l.b16 %v292
  %v816 = vunpack.c.l.b16 %v293
  %v817 = vunpack.c.l.b16 %v294
  %v818 = vunpack.c.l.b16 %v295
  %v819 = vunpack.c.l.b16 %v296
  %v820 = vunpack.c.l.b16 %v297
  %v821 = vunpack.c.l.b16 %v298
  %v822 = vunpack.c.l.b16 %v299
  %v823 = vunpack.c.l.b16 %v300
  %v824 = vunpack.c.l.b16 %v301
  %v825 = vunpack.c.l.b16 %v302
  %v826 = vunpack.c.l.b16 %v303
  %v827 = vunpack.c.l.b16 %v304
  %v828 = vunpack.c.l.b16 %v305
  %v829 = vunpack.c.l.b16 %v306
  %v830 = vpack.c.b16 %v575, %v574
  %v831 = vpack.c.b16 %v577, %v576
  %v832 = vpack.c.b16 %v579, %v578
  %v833 = vpack.c.b16 %v581, %v580
  %v834 = vpack.c.b16 %v583, %v582
  %v835 = vpack.c.b16 %v585, %v584
  %v836 = vpack.c.b16 %v587, %v586
  %v837 = vpack.c.b16 %v589, %v588
  %v838 = vpack.c.b16 %v591, %v590
  %v839 = vpack.c.b16 %v593, %v592
  %v840 = vpack.c.b16 %v595, %v594
  %v841 = vpack.c.b16 %v597, %v596
  %v842 = vpack.c.b16 %v599, %v598
  %v843 = vpack.c.b16 %v601, %v600
  %v844 = vpack.c.b16 %v603, %v602
  %v845 = vpack.c.b16 %v605, %v604
  %v846 = vpack.c.b16 %v607, %v606
  %v847 = vpack.c.b16 %v609, %v608
  %v848 = vpack.c.b16 %v611, %v610
  %v849 = vpack.c.b16 %v613, %v612
  %v850 = vpack.c.b16 %v615, %v614
  %v851 = vpack.c.b16 %v617, %v616
  %v852 = vpack.c.b16 %v619, %v618
  %v853 = vpack.c.b16 %v621, %v620
  %v854 = vpack.c.b16 %v623, %v622
  %v855 = vpack.c.b16 %v625, %v624
  %v856 = vpack.c.b16 %v627, %v626
  %v857 = vpack.c.b16 %v629, %v628
  %v858 = vpack.c.b16 %v631, %v630
  %v859 = vpack.c.b16 %v633, %v632
  %v860 = vpack.c.b16 %v635, %v634
  %v861 = vpack.c.b16 %v637, %v636
  %v862 = vpack.c.b16 %v639, %v638
  %v863 = vpack.c.b16 %v641, %v640
  %v864 = vpack.c.b16 %v643, %v642
  %v865 = vpack.c.b16 %v645, %v644
  %v866 = vpack.c.b16 %v647, %v646
  %v867 = vpack.c.b16 %v649, %v648
  %v868 = vpack.c.b16 %v651, %v650
  %v869 = vpack.c.b16 %v653, %v652
  %v870 = vpack.c.b16 %v655, %v654
  %v871 = vpack.c.b16 %v657, %v656
  %v872 = vpack.c.b16 %v659, %v658
  %v873 = vpack.c.b16 %v661, %v660
  %v874 = vpack.c.b16 %v663, %v662
  %v875 = vpack.c.b16 %v665, %v664
  %v876 = vpack.c.b16 %v667, %v666
  %v877 = vpack.c.b16 %v669, %v668
  %v878 = vpack.c.b16 %v671, %v670
  %v879 = vpack.c.b16 %v673, %v672
  %v880 = vpack.c.b16 %v675, %v674
  %v881 = vpack.c.b16 %v677, %v676
  %v882 = vpack.c.b16 %v679, %v678
  %v883 = vpack.c.b16 %v681, %v680
  %v884 = vpack.c.b16 %v683, %v682
  %v885 = vpack.c.b16 %v685, %v684
  %v886 = vpack.c.b16 %v687, %v686
  %v887 = vpack.c.b16 %v689, %v688
  %v888 = vpack.c.b16 %v691, %v690
  %v889 = vpack.c.b16 %v693, %v692
  %v890 = vpack.c.b16 %v695, %v694
  %v891 = vpack.c.b16 %v697, %v696
  %v892 = vpack.c.b16 %v699, %v698
  %v893 = vpack.c.b16 %v701, %v700
  %v894 = vpack.c.b16 %v703, %v702
  %v895 = vpack.c.b16 %v705, %v704
  %v896 = vpack.c.b16 %v707, %v706
  %v897 = vpack.c.b16 %v709, %v708
  %v898 = vpack.c.b16 %v711, %v710
  %v899 = vpack.c.b16 %v713, %v712
  %v900 = vpack.c.b16 %v715, %v714
  %v901 = vpack.c.b16 %v717, %v716
  %v902 = vpack.c.b16 %v719, %v718
  %v903 = vpack.c.b16 %v721, %v720
  %v904 = vpack.c.b16 %v723, %v722
  %v905 = vpack.c.b16 %v725, %v724
  %v906 = vpack.c.b16 %v727, %v726
  %v907 = vpack.c.b16 %v729, %v728
  %v908 = vpack.c.b16 %v731, %v730
  %v909 = vpack.c.b16 %v733, %v732
  %v910 = vpack.c.b16 %v735, %v734
  %v911 = vpack.c.b16 %v737, %v736
  %v912 = vpack.c.b16 %v739, %v738
  %v913 = vpack.c.b16 %v741, %v740
  %v914 = vpack.c.b16 %v743, %v742
  %v915 = vpack.c.b16 %v745, %v744
  %v916 = vpack.c.b16 %v747, %v746
  %v917 = vpack.c.b16 %v749, %v748
  %v918 = vpack.c.b16 %v751, %v750
  %v919 = vpack.c.b16 %v753, %v752
  %v920 = vpack.c.b16 %v755, %v754
  %v921 = vpack.c.b16 %v757, %v756
  %v922 = vpack.c.b16 %v759, %v758
  %v923 = vpack.c.b16 %v761, %v760
  %v924 = vpack.c.b16 %v763, %v762
  %v925 = vpack.c.b16 %v765, %v764
  %v926 = vpack.c.b16 %v767, %v766
  %v927 = vpack.c.b16 %v769, %v768
  %v928 = vpack.c.b16 %v771, %v770
  %v929 = vpack.c.b16 %v773, %v772
  %v930 = vpack.c.b16 %v775, %v774
  %v931 = vpack.c.b16 %v777, %v776
  %v932 = vpack.c.b16 %v779, %v778
  %v933 = vpack.c.b16 %v781, %v780
  %v934 = vpack.c.b16 %v783, %v782
  %v935 = vpack.c.b16 %v785, %v784
  %v936 = vpack.c.b16 %v787, %v786
  %v937 = vpack.c.b16 %v789, %v788
  %v938 = vpack.c.b16 %v791, %v790
  %v939 = vpack.c.b16 %v793, %v792
  %v940 = vpack.c.b16 %v795, %v794
  %v941 = vpack.c.b16 %v797, %v796
  %v942 = vpack.c.b16 %v799, %v798
  %v943 = vpack.c.b16 %v801, %v800
  %v944 = vpack.c.b16 %v803, %v802
  %v945 = vpack.c.b16 %v805, %v804
  %v946 = vpack.c.b16 %v807, %v806
  %v947 = vpack.c.b16 %v809, %v808
  %v948 = vpack.c.b16 %v811, %v810
  %v949 = vpack.c.b16 %v813, %v812
  %v950 = vpack.c.b16 %v815, %v814
  %v951 = vpack.c.b16 %v817, %v816
  %v952 = vpack.c.b16 %v819, %v818
  %v953 = vpack.c.b16 %v821, %v820
  %v954 = vpack.c.b16 %v823, %v822
  %v955 = vpack.c.b16 %v825, %v824
  %v956 = vpack.c.b16 %v827, %v826
  %v957 = vpack.c.b16 %v829, %v828
  %v962 = vunpack.c.l.b16 %v307
  %v963 = vunpack.c.l.b16 %v308
  %v964 = vunpack.c.l.b16 %v309
  %v965 = vunpack.c.l.b16 %v310
  %v966 = vpack.c.b16 %v963, %v962
  %v967 = vpack.c.b16 %v965, %v964
  %vm970 = vcmask 261120
  %v972 = vsel %vm970, %v830, 0
  %v975 = vsel %vm970, %v831, 0
  %v978 = vsel %vm970, %v832, 0
  %v981 = vsel %vm970, %v833, 0
  %v984 = vsel %vm970, %v834, 0
  %v987 = vsel %vm970, %v835, 0
  %v990 = vsel %vm970, %v836, 0
  %v993 = vsel %vm970, %v837, 0
  %v996 = vsel %vm970, %v838, 0
  %v999 = vsel %vm970, %v839, 0
  %v1002 = vsel %vm970, %v840, 0
  %v1005 = vsel %vm970, %v841, 0
  %v1008 = vsel %vm970, %v842, 0
  %v1011 = vsel %vm970, %v843, 0
  %v1014 = vsel %vm970, %v844, 0
  %v1017 = vsel %vm970, %v845, 0
  %v1020 = vsel %vm970, %v846, 0
  %v1023 = vsel %vm970, %v847, 0
  %v1026 = vsel %vm970, %v848, 0
  %v1029 = vsel %vm970, %v849, 0
  %v1032 = vsel %vm970, %v850, 0
  %v1035 = vsel %vm970, %v851, 0
  %v1038 = vsel %vm970, %v852, 0
  %v1041 = vsel %vm970, %v853, 0
  %v1044 = vsel %vm970, %v854, 0
  %v1047 = vsel %vm970, %v855, 0
  %v1050 = vsel %vm970, %v856, 0
  %v1053 = vsel %vm970, %v857, 0
  %v1056 = vsel %vm970, %v858, 0
  %v1059 = vsel %vm970, %v859, 0
  %v1062 = vsel %vm970, %v860, 0
  %v1065 = vsel %vm970, %v861, 0
  %v1068 = vsel %vm970, %v862, 0
  %v1071 = vsel %vm970, %v863, 0
  %v1074 = vsel %vm970, %v864, 0
  %v1077 = vsel %vm970, %v865, 0
  %v1080 = vsel %vm970, %v866, 0
  %v1083 = vsel %vm970, %v867, 0
  %v1086 = vsel %vm970, %v868, 0
  %v1089 = vsel %vm970, %v869, 0
  %v1092 = vsel %vm970, %v870, 0
  %v1095 = vsel %vm970, %v871, 0
  %v1098 = vsel %vm970, %v872, 0
  %v1101 = vsel %vm970, %v873, 0
  %v1104 = vsel %vm970, %v874, 0
  %v1107 = vsel %vm970, %v875, 0
  %v1110 = vsel %vm970, %v876, 0
  %v1113 = vsel %vm970, %v877, 0
  %v1116 = vsel %vm970, %v878, 0
  %v1119 = vsel %vm970, %v879, 0
  %v1122 = vsel %vm970, %v880, 0
  %v1125 = vsel %vm970, %v881, 0
  %v1128 = vsel %vm970, %v882, 0
  %v1131 = vsel %vm970, %v883, 0
  %v1134 = vsel %vm970, %v884, 0
  %v1137 = vsel %vm970, %v885, 0
  %v1140 = vsel %vm970, %v886, 0
  %v1143 = vsel %vm970, %v887, 0
  %v1146 = vsel %vm970, %v888, 0
  %v1149 = vsel %vm970, %v889, 0
  %v1152 = vsel %vm970, %v890, 0
  %v1155 = vsel %vm970, %v891, 0
  %v1158 = vsel %vm970, %v892, 0
  %v1161 = vsel %vm970, %v893, 0
  %v1164 = vsel %vm970, %v894, 0
  %v1167 = vsel %vm970, %v895, 0
  %v1170 = vsel %vm970, %v896, 0
  %v1173 = vsel %vm970, %v897, 0
  %v1176 = vsel %vm970, %v898, 0
  %v1179 = vsel %vm970, %v899, 0
  %v1182 = vsel %vm970, %v900, 0
  %v1185 = vsel %vm970, %v901, 0
  %v1188 = vsel %vm970, %v902, 0
  %v1191 = vsel %vm970, %v903, 0
  %v1194 = vsel %vm970, %v904, 0
  %v1197 = vsel %vm970, %v905, 0
  %v1200 = vsel %vm970, %v906, 0
  %v1203 = vsel %vm970, %v907, 0
  %v1206 = vsel %vm970, %v908, 0
  %v1209 = vsel %vm970, %v909, 0
  %v1212 = vsel %vm970, %v910, 0
  %v1215 = vsel %vm970, %v911, 0
  %v1218 = vsel %vm970, %v912, 0
  %v1221 = vsel %vm970, %v913, 0
  %v1224 = vsel %vm970, %v914, 0
  %v1227 = vsel %vm970, %v915, 0
  %v1230 = vsel %vm970, %v916, 0
  %v1233 = vsel %vm970, %v917, 0
  %v1236 = vsel %vm970, %v918, 0
  %v1239 = vsel %vm970, %v919, 0
  %v1242 = vsel %vm970, %v920, 0
  %v1245 = vsel %vm970, %v921, 0
  %v1248 = vsel %vm970, %v922, 0
  %v1251 = vsel %vm970, %v923, 0
  %v1254 = vsel %vm970, %v924, 0
  %v1257 = vsel %vm970, %v925, 0
  %v1260 = vsel %vm970, %v926, 0
  %v1263 = vsel %vm970, %v927, 0
  %v1266 = vsel %vm970, %v928, 0
  %v1269 = vsel %vm970, %v929, 0
  %v1272 = vsel %vm970, %v930, 0
  %v1275 = vsel %vm970, %v931, 0
  %v1278 = vsel %vm970, %v932, 0
  %v1281 = vsel %vm970, %v933, 0
  %v1284 = vsel %vm970, %v934, 0
  %v1287 = vsel %vm970, %v935, 0
  %v1290 = vsel %vm970, %v936, 0
  %v1293 = vsel %vm970, %v937, 0
  %v1296 = vsel %vm970, %v938, 0
  %v1299 = vsel %vm970, %v939, 0
  %v1302 = vsel %vm970, %v940, 0
  %v1305 = vsel %vm970, %v941, 0
  %v1308 = vsel %vm970, %v942, 0
  %v1311 = vsel %vm970, %v943, 0
  %v1314 = vsel %vm970, %v944, 0
  %v1317 = vsel %vm970, %v945, 0
  %v1320 = vsel %vm970, %v946, 0
  %v1323 = vsel %vm970, %v947, 0
  %v1326 = vsel %vm970, %v948, 0
  %v1329 = vsel %vm970, %v949, 0
  %v1332 = vsel %vm970, %v950, 0
  %v1335 = vsel %vm970, %v951, 0
  %v1338 = vsel %vm970, %v952, 0
  %v1341 = vsel %vm970, %v953, 0
  %v1344 = vsel %vm970, %v954, 0
  %v1347 = vsel %vm970, %v955, 0
  %v1350 = vsel %vm970, %v956, 0
  %v1353 = vsel %vm970, %v957, 0
  %1355 = vmatprep.subr.bf16.mxu0 0
  %1356 = vmatpush1.bf16.msra.mxu0 %v966
  %1357 = vmatprep.subr.bf16.mxu0 0
  %1358 = vmatpush1.bf16.msra.mxu0 %v967
  %1359 = vmatprep.subr.bf16.mxu0 0
  %1360 = vmatpush1.bf16.msra.mxu0 0
  %1361 = vmatprep.subr.bf16.mxu0 0
  %1362 = vmatpush1.bf16.msra.mxu0 0
  %1363 = vmatprep.subr.bf16.mxu0 0
  %1364 = vmatpush1.bf16.msra.mxu0 0
  %1365 = vmatprep.subr.bf16.mxu0 0
  %1366 = vmatpush1.bf16.msra.mxu0 0
  %1367 = vmatprep.subr.bf16.mxu0 0
  %1368 = vmatpush1.bf16.msra.mxu0 0
  %1369 = vmatprep.subr.bf16.mxu0 0
  %1370 = vmatpush1.bf16.msra.mxu0 0
  %1371 = vmatprep.subr.bf16.mxu0 0
  %1372 = vmatpush1.bf16.msra.mxu0 0
  %1373 = vmatprep.subr.bf16.mxu0 0
  %1374 = vmatpush1.bf16.msra.mxu0 0
  %1375 = vmatprep.subr.bf16.mxu0 0
  %1376 = vmatpush1.bf16.msra.mxu0 0
  %1377 = vmatprep.subr.bf16.mxu0 0
  %1378 = vmatpush1.bf16.msra.mxu0 0
  %1379 = vmatprep.subr.bf16.mxu0 0
  %1380 = vmatpush1.bf16.msra.mxu0 0
  %1381 = vmatprep.subr.bf16.mxu0 0
  %1382 = vmatpush1.bf16.msra.mxu0 0
  %1383 = vmatprep.subr.bf16.mxu0 0
  %1384 = vmatpush1.bf16.msra.mxu0 0
  %1385 = vmatprep.subr.bf16.mxu0 0
  %1386 = vmatpush1.bf16.msra.mxu0 0
  %1387 = vmatprep.mubr.bf16.mxu0 0
  %1388 = vmatmul.mubr.bf16.gmra.mrb[0].mxu0 %v972
  %v1389 = vpop.f32.mrb[0].mxu0
  %v1390 = vadd.f32 %v316, %v1389
  %v1391 = vpop.f32.mrb[0].mxu0
  %v1392 = vpop.f32.mrb[0].mxu0
  %v1393 = vadd.f32 %v316, %v1392
  %v1394 = vpop.f32.mrb[0].mxu0
  %1395 = vmatprep.mubr.bf16.mxu0 0
  %1396 = vmatmul.mubr.bf16.gmra.mrb[0].mxu0 %v975
  %v1397 = vpop.f32.mrb[0].mxu0
  %v1398 = vadd.f32 %v316, %v1397
  %v1399 = vpop.f32.mrb[0].mxu0
  %v1400 = vpop.f32.mrb[0].mxu0
  %v1401 = vadd.f32 %v316, %v1400
  %v1402 = vpop.f32.mrb[0].mxu0
  %1403 = vmatprep.mubr.bf16.mxu0 0
  %1404 = vmatmul.mubr.bf16.gmra.mrb[0].mxu0 %v978
  %v1405 = vpop.f32.mrb[0].mxu0
  %v1406 = vadd.f32 %v316, %v1405
  %v1407 = vpop.f32.mrb[0].mxu0
  %v1408 = vpop.f32.mrb[0].mxu0
  %v1409 = vadd.f32 %v316, %v1408
  %v1410 = vpop.f32.mrb[0].mxu0
  %1411 = vmatprep.mubr.bf16.mxu0 0
  %1412 = vmatmul.mubr.bf16.gmra.mrb[0].mxu0 %v981
  %v1413 = vpop.f32.mrb[0].mxu0
  %v1414 = vadd.f32 %v316, %v1413
  %v1415 = vpop.f32.mrb[0].mxu0
  %v1416 = vpop.f32.mrb[0].mxu0
  %v1417 = vadd.f32 %v316, %v1416
  %v1418 = vpop.f32.mrb[0].mxu0
  %1419 = vmatprep.mubr.bf16.mxu0 0
  %1420 = vmatmul.mubr.bf16.gmra.mrb[0].mxu0 %v984
  %v1421 = vpop.f32.mrb[0].mxu0
  %v1422 = vadd.f32 %v316, %v1421
  %v1423 = vpop.f32.mrb[0].mxu0
  %v1424 = vpop.f32.mrb[0].mxu0
  %v1425 = vadd.f32 %v316, %v1424
  %v1426 = vpop.f32.mrb[0].mxu0
  %1427 = vmatprep.mubr.bf16.mxu0 0
  %1428 = vmatmul.mubr.bf16.gmra.mrb[0].mxu0 %v987
  %v1429 = vpop.f32.mrb[0].mxu0
  %v1430 = vadd.f32 %v316, %v1429
  %v1431 = vpop.f32.mrb[0].mxu0
  %v1432 = vpop.f32.mrb[0].mxu0
  %v1433 = vadd.f32 %v316, %v1432
  %v1434 = vpop.f32.mrb[0].mxu0
  %1435 = vmatprep.mubr.bf16.mxu0 0
  %1436 = vmatmul.mubr.bf16.gmra.mrb[0].mxu0 %v990
  %v1437 = vpop.f32.mrb[0].mxu0
  %v1438 = vadd.f32 %v316, %v1437
  %v1439 = vpop.f32.mrb[0].mxu0
  %v1440 = vpop.f32.mrb[0].mxu0
  %v1441 = vadd.f32 %v316, %v1440
  %v1442 = vpop.f32.mrb[0].mxu0
  %1443 = vmatprep.mubr.bf16.mxu0 0
  %1444 = vmatmul.mubr.bf16.gmra.mrb[0].mxu0 %v993
  %v1445 = vpop.f32.mrb[0].mxu0
  %v1446 = vadd.f32 %v316, %v1445
  %v1447 = vpop.f32.mrb[0].mxu0
  %v1448 = vpop.f32.mrb[0].mxu0
  %v1449 = vadd.f32 %v316, %v1448
  %v1450 = vpop.f32.mrb[0].mxu0
  %1451 = vmatprep.mubr.bf16.mxu0 0
  %1452 = vmatmul.mubr.bf16.gmra.mrb[0].mxu0 %v996
  %v1453 = vpop.f32.mrb[0].mxu0
  %v1454 = vadd.f32 %v316, %v1453
  %v1455 = vpop.f32.mrb[0].mxu0
  %v1456 = vpop.f32.mrb[0].mxu0
  %v1457 = vadd.f32 %v316, %v1456
  %v1458 = vpop.f32.mrb[0].mxu0
  %1459 = vmatprep.mubr.bf16.mxu0 0
  %1460 = vmatmul.mubr.bf16.gmra.mrb[0].mxu0 %v999
  %v1461 = vpop.f32.mrb[0].mxu0
  %v1462 = vadd.f32 %v316, %v1461
  %v1463 = vpop.f32.mrb[0].mxu0
  %v1464 = vpop.f32.mrb[0].mxu0
  %v1465 = vadd.f32 %v316, %v1464
  %v1466 = vpop.f32.mrb[0].mxu0
  %1467 = vmatprep.mubr.bf16.mxu0 0
  %1468 = vmatmul.mubr.bf16.gmra.mrb[0].mxu0 %v1002
  %v1469 = vpop.f32.mrb[0].mxu0
  %v1470 = vadd.f32 %v316, %v1469
  %v1471 = vpop.f32.mrb[0].mxu0
  %v1472 = vpop.f32.mrb[0].mxu0
  %v1473 = vadd.f32 %v316, %v1472
  %v1474 = vpop.f32.mrb[0].mxu0
  %1475 = vmatprep.mubr.bf16.mxu0 0
  %1476 = vmatmul.mubr.bf16.gmra.mrb[0].mxu0 %v1005
  %v1477 = vpop.f32.mrb[0].mxu0
  %v1478 = vadd.f32 %v316, %v1477
  %v1479 = vpop.f32.mrb[0].mxu0
  %v1480 = vpop.f32.mrb[0].mxu0
  %v1481 = vadd.f32 %v316, %v1480
  %v1482 = vpop.f32.mrb[0].mxu0
  %1483 = vmatprep.mubr.bf16.mxu0 0
  %1484 = vmatmul.mubr.bf16.gmra.mrb[0].mxu0 %v1008
  %v1485 = vpop.f32.mrb[0].mxu0
  %v1486 = vadd.f32 %v316, %v1485
  %v1487 = vpop.f32.mrb[0].mxu0
  %v1488 = vpop.f32.mrb[0].mxu0
  %v1489 = vadd.f32 %v316, %v1488
  %v1490 = vpop.f32.mrb[0].mxu0
  %1491 = vmatprep.mubr.bf16.mxu0 0
  %1492 = vmatmul.mubr.bf16.gmra.mrb[0].mxu0 %v1011
  %v1493 = vpop.f32.mrb[0].mxu0
  %v1494 = vadd.f32 %v316, %v1493
  %v1495 = vpop.f32.mrb[0].mxu0
  %v1496 = vpop.f32.mrb[0].mxu0
  %v1497 = vadd.f32 %v316, %v1496
  %v1498 = vpop.f32.mrb[0].mxu0
  %1499 = vmatprep.mubr.bf16.mxu0 0
  %1500 = vmatmul.mubr.bf16.gmra.mrb[0].mxu0 %v1014
  %v1501 = vpop.f32.mrb[0].mxu0
  %v1502 = vadd.f32 %v316, %v1501
  %v1503 = vpop.f32.mrb[0].mxu0
  %v1504 = vpop.f32.mrb[0].mxu0
  %v1505 = vadd.f32 %v316, %v1504
  %v1506 = vpop.f32.mrb[0].mxu0
  %1507 = vmatprep.mubr.bf16.mxu0 0
  %1508 = vmatmul.mubr.bf16.gmra.mrb[0].mxu0 %v1017
  %v1509 = vpop.f32.mrb[0].mxu0
  %v1510 = vadd.f32 %v316, %v1509
  %v1511 = vpop.f32.mrb[0].mxu0
  %v1512 = vpop.f32.mrb[0].mxu0
  %v1513 = vadd.f32 %v316, %v1512
  %v1514 = vpop.f32.mrb[0].mxu0
  %1515 = vmatprep.mubr.bf16.mxu0 0
  %1516 = vmatmul.mubr.bf16.gmra.mrb[0].mxu0 %v1020
  %v1517 = vpop.f32.mrb[0].mxu0
  %v1518 = vadd.f32 %v316, %v1517
  %v1519 = vpop.f32.mrb[0].mxu0
  %v1520 = vpop.f32.mrb[0].mxu0
  %v1521 = vadd.f32 %v316, %v1520
  %v1522 = vpop.f32.mrb[0].mxu0
  %1523 = vmatprep.mubr.bf16.mxu0 0
  %1524 = vmatmul.mubr.bf16.gmra.mrb[0].mxu0 %v1023
  %v1525 = vpop.f32.mrb[0].mxu0
  %v1526 = vadd.f32 %v316, %v1525
  %v1527 = vpop.f32.mrb[0].mxu0
  %v1528 = vpop.f32.mrb[0].mxu0
  %v1529 = vadd.f32 %v316, %v1528
  %v1530 = vpop.f32.mrb[0].mxu0
  %1531 = vmatprep.mubr.bf16.mxu0 0
  %1532 = vmatmul.mubr.bf16.gmra.mrb[0].mxu0 %v1026
  %v1533 = vpop.f32.mrb[0].mxu0
  %v1534 = vadd.f32 %v316, %v1533
  %v1535 = vpop.f32.mrb[0].mxu0
  %v1536 = vpop.f32.mrb[0].mxu0
  %v1537 = vadd.f32 %v316, %v1536
  %v1538 = vpop.f32.mrb[0].mxu0
  %1539 = vmatprep.mubr.bf16.mxu0 0
  %1540 = vmatmul.mubr.bf16.gmra.mrb[0].mxu0 %v1029
  %v1541 = vpop.f32.mrb[0].mxu0
  %v1542 = vadd.f32 %v316, %v1541
  %v1543 = vpop.f32.mrb[0].mxu0
  %v1544 = vpop.f32.mrb[0].mxu0
  %v1545 = vadd.f32 %v316, %v1544
  %v1546 = vpop.f32.mrb[0].mxu0
  %1547 = vmatprep.mubr.bf16.mxu0 0
  %1548 = vmatmul.mubr.bf16.gmra.mrb[0].mxu0 %v1032
  %v1549 = vpop.f32.mrb[0].mxu0
  %v1550 = vadd.f32 %v316, %v1549
  %v1551 = vpop.f32.mrb[0].mxu0
  %v1552 = vpop.f32.mrb[0].mxu0
  %v1553 = vadd.f32 %v316, %v1552
  %v1554 = vpop.f32.mrb[0].mxu0
  %1555 = vmatprep.mubr.bf16.mxu0 0
  %1556 = vmatmul.mubr.bf16.gmra.mrb[0].mxu0 %v1035
  %v1557 = vpop.f32.mrb[0].mxu0
  %v1558 = vadd.f32 %v316, %v1557
  %v1559 = vpop.f32.mrb[0].mxu0
  %v1560 = vpop.f32.mrb[0].mxu0
  %v1561 = vadd.f32 %v316, %v1560
  %v1562 = vpop.f32.mrb[0].mxu0
  %1563 = vmatprep.mubr.bf16.mxu0 0
  %1564 = vmatmul.mubr.bf16.gmra.mrb[0].mxu0 %v1038
  %v1565 = vpop.f32.mrb[0].mxu0
  %v1566 = vadd.f32 %v316, %v1565
  %v1567 = vpop.f32.mrb[0].mxu0
  %v1568 = vpop.f32.mrb[0].mxu0
  %v1569 = vadd.f32 %v316, %v1568
  %v1570 = vpop.f32.mrb[0].mxu0
  %1571 = vmatprep.mubr.bf16.mxu0 0
  %1572 = vmatmul.mubr.bf16.gmra.mrb[0].mxu0 %v1041
  %v1573 = vpop.f32.mrb[0].mxu0
  %v1574 = vadd.f32 %v316, %v1573
  %v1575 = vpop.f32.mrb[0].mxu0
  %v1576 = vpop.f32.mrb[0].mxu0
  %v1577 = vadd.f32 %v316, %v1576
  %v1578 = vpop.f32.mrb[0].mxu0
  %1579 = vmatprep.mubr.bf16.mxu0 0
  %1580 = vmatmul.mubr.bf16.gmra.mrb[0].mxu0 %v1044
  %v1581 = vpop.f32.mrb[0].mxu0
  %v1582 = vadd.f32 %v316, %v1581
  %v1583 = vpop.f32.mrb[0].mxu0
  %v1584 = vpop.f32.mrb[0].mxu0
  %v1585 = vadd.f32 %v316, %v1584
  %v1586 = vpop.f32.mrb[0].mxu0
  %1587 = vmatprep.mubr.bf16.mxu0 0
  %1588 = vmatmul.mubr.bf16.gmra.mrb[0].mxu0 %v1047
  %v1589 = vpop.f32.mrb[0].mxu0
  %v1590 = vadd.f32 %v316, %v1589
  %v1591 = vpop.f32.mrb[0].mxu0
  %v1592 = vpop.f32.mrb[0].mxu0
  %v1593 = vadd.f32 %v316, %v1592
  %v1594 = vpop.f32.mrb[0].mxu0
  %1595 = vmatprep.mubr.bf16.mxu0 0
  %1596 = vmatmul.mubr.bf16.gmra.mrb[0].mxu0 %v1050
  %v1597 = vpop.f32.mrb[0].mxu0
  %v1598 = vadd.f32 %v316, %v1597
  %v1599 = vpop.f32.mrb[0].mxu0
  %v1600 = vpop.f32.mrb[0].mxu0
  %v1601 = vadd.f32 %v316, %v1600
  %v1602 = vpop.f32.mrb[0].mxu0
  %1603 = vmatprep.mubr.bf16.mxu0 0
  %1604 = vmatmul.mubr.bf16.gmra.mrb[0].mxu0 %v1053
  %v1605 = vpop.f32.mrb[0].mxu0
  %v1606 = vadd.f32 %v316, %v1605
  %v1607 = vpop.f32.mrb[0].mxu0
  %v1608 = vpop.f32.mrb[0].mxu0
  %v1609 = vadd.f32 %v316, %v1608
  %v1610 = vpop.f32.mrb[0].mxu0
  %1611 = vmatprep.mubr.bf16.mxu0 0
  %1612 = vmatmul.mubr.bf16.gmra.mrb[0].mxu0 %v1056
  %v1613 = vpop.f32.mrb[0].mxu0
  %v1614 = vadd.f32 %v316, %v1613
  %v1615 = vpop.f32.mrb[0].mxu0
  %v1616 = vpop.f32.mrb[0].mxu0
  %v1617 = vadd.f32 %v316, %v1616
  %v1618 = vpop.f32.mrb[0].mxu0
  %1619 = vmatprep.mubr.bf16.mxu0 0
  %1620 = vmatmul.mubr.bf16.gmra.mrb[0].mxu0 %v1059
  %v1621 = vpop.f32.mrb[0].mxu0
  %v1622 = vadd.f32 %v316, %v1621
  %v1623 = vpop.f32.mrb[0].mxu0
  %v1624 = vpop.f32.mrb[0].mxu0
  %v1625 = vadd.f32 %v316, %v1624
  %v1626 = vpop.f32.mrb[0].mxu0
  %1627 = vmatprep.mubr.bf16.mxu0 0
  %1628 = vmatmul.mubr.bf16.gmra.mrb[0].mxu0 %v1062
  %v1629 = vpop.f32.mrb[0].mxu0
  %v1630 = vadd.f32 %v316, %v1629
  %v1631 = vpop.f32.mrb[0].mxu0
  %v1632 = vpop.f32.mrb[0].mxu0
  %v1633 = vadd.f32 %v316, %v1632
  %v1634 = vpop.f32.mrb[0].mxu0
  %1635 = vmatprep.mubr.bf16.mxu0 0
  %1636 = vmatmul.mubr.bf16.gmra.mrb[0].mxu0 %v1065
  %v1637 = vpop.f32.mrb[0].mxu0
  %v1638 = vadd.f32 %v316, %v1637
  %v1639 = vpop.f32.mrb[0].mxu0
  %v1640 = vpop.f32.mrb[0].mxu0
  %v1641 = vadd.f32 %v316, %v1640
  %v1642 = vpop.f32.mrb[0].mxu0
  %1643 = vmatprep.mubr.bf16.mxu0 0
  %1644 = vmatmul.mubr.bf16.gmra.mrb[0].mxu0 %v1068
  %v1645 = vpop.f32.mrb[0].mxu0
  %v1646 = vadd.f32 %v316, %v1645
  %v1647 = vpop.f32.mrb[0].mxu0
  %v1648 = vpop.f32.mrb[0].mxu0
  %v1649 = vadd.f32 %v316, %v1648
  %v1650 = vpop.f32.mrb[0].mxu0
  %1651 = vmatprep.mubr.bf16.mxu0 0
  %1652 = vmatmul.mubr.bf16.gmra.mrb[0].mxu0 %v1071
  %v1653 = vpop.f32.mrb[0].mxu0
  %v1654 = vadd.f32 %v316, %v1653
  %v1655 = vpop.f32.mrb[0].mxu0
  %v1656 = vpop.f32.mrb[0].mxu0
  %v1657 = vadd.f32 %v316, %v1656
  %v1658 = vpop.f32.mrb[0].mxu0
  %1659 = vmatprep.mubr.bf16.mxu0 0
  %1660 = vmatmul.mubr.bf16.gmra.mrb[0].mxu0 %v1074
  %v1661 = vpop.f32.mrb[0].mxu0
  %v1662 = vadd.f32 %v316, %v1661
  %v1663 = vpop.f32.mrb[0].mxu0
  %v1664 = vpop.f32.mrb[0].mxu0
  %v1665 = vadd.f32 %v316, %v1664
  %v1666 = vpop.f32.mrb[0].mxu0
  %1667 = vmatprep.mubr.bf16.mxu0 0
  %1668 = vmatmul.mubr.bf16.gmra.mrb[0].mxu0 %v1077
  %v1669 = vpop.f32.mrb[0].mxu0
  %v1670 = vadd.f32 %v316, %v1669
  %v1671 = vpop.f32.mrb[0].mxu0
  %v1672 = vpop.f32.mrb[0].mxu0
  %v1673 = vadd.f32 %v316, %v1672
  %v1674 = vpop.f32.mrb[0].mxu0
  %1675 = vmatprep.mubr.bf16.mxu0 0
  %1676 = vmatmul.mubr.bf16.gmra.mrb[0].mxu0 %v1080
  %v1677 = vpop.f32.mrb[0].mxu0
  %v1678 = vadd.f32 %v316, %v1677
  %v1679 = vpop.f32.mrb[0].mxu0
  %v1680 = vpop.f32.mrb[0].mxu0
  %v1681 = vadd.f32 %v316, %v1680
  %v1682 = vpop.f32.mrb[0].mxu0
  %1683 = vmatprep.mubr.bf16.mxu0 0
  %1684 = vmatmul.mubr.bf16.gmra.mrb[0].mxu0 %v1083
  %v1685 = vpop.f32.mrb[0].mxu0
  %v1686 = vadd.f32 %v316, %v1685
  %v1687 = vpop.f32.mrb[0].mxu0
  %v1688 = vpop.f32.mrb[0].mxu0
  %v1689 = vadd.f32 %v316, %v1688
  %v1690 = vpop.f32.mrb[0].mxu0
  %1691 = vmatprep.mubr.bf16.mxu0 0
  %1692 = vmatmul.mubr.bf16.gmra.mrb[0].mxu0 %v1086
  %v1693 = vpop.f32.mrb[0].mxu0
  %v1694 = vadd.f32 %v316, %v1693
  %v1695 = vpop.f32.mrb[0].mxu0
  %v1696 = vpop.f32.mrb[0].mxu0
  %v1697 = vadd.f32 %v316, %v1696
  %v1698 = vpop.f32.mrb[0].mxu0
  %1699 = vmatprep.mubr.bf16.mxu0 0
  %1700 = vmatmul.mubr.bf16.gmra.mrb[0].mxu0 %v1089
  %v1701 = vpop.f32.mrb[0].mxu0
  %v1702 = vadd.f32 %v316, %v1701
  %v1703 = vpop.f32.mrb[0].mxu0
  %v1704 = vpop.f32.mrb[0].mxu0
  %v1705 = vadd.f32 %v316, %v1704
  %v1706 = vpop.f32.mrb[0].mxu0
  %1707 = vmatprep.mubr.bf16.mxu0 0
  %1708 = vmatmul.mubr.bf16.gmra.mrb[0].mxu0 %v1092
  %v1709 = vpop.f32.mrb[0].mxu0
  %v1710 = vadd.f32 %v316, %v1709
  %v1711 = vpop.f32.mrb[0].mxu0
  %v1712 = vpop.f32.mrb[0].mxu0
  %v1713 = vadd.f32 %v316, %v1712
  %v1714 = vpop.f32.mrb[0].mxu0
  %1715 = vmatprep.mubr.bf16.mxu0 0
  %1716 = vmatmul.mubr.bf16.gmra.mrb[0].mxu0 %v1095
  %v1717 = vpop.f32.mrb[0].mxu0
  %v1718 = vadd.f32 %v316, %v1717
  %v1719 = vpop.f32.mrb[0].mxu0
  %v1720 = vpop.f32.mrb[0].mxu0
  %v1721 = vadd.f32 %v316, %v1720
  %v1722 = vpop.f32.mrb[0].mxu0
  %1723 = vmatprep.mubr.bf16.mxu0 0
  %1724 = vmatmul.mubr.bf16.gmra.mrb[0].mxu0 %v1098
  %v1725 = vpop.f32.mrb[0].mxu0
  %v1726 = vadd.f32 %v316, %v1725
  %v1727 = vpop.f32.mrb[0].mxu0
  %v1728 = vpop.f32.mrb[0].mxu0
  %v1729 = vadd.f32 %v316, %v1728
  %v1730 = vpop.f32.mrb[0].mxu0
  %1731 = vmatprep.mubr.bf16.mxu0 0
  %1732 = vmatmul.mubr.bf16.gmra.mrb[0].mxu0 %v1101
  %v1733 = vpop.f32.mrb[0].mxu0
  %v1734 = vadd.f32 %v316, %v1733
  %v1735 = vpop.f32.mrb[0].mxu0
  %v1736 = vpop.f32.mrb[0].mxu0
  %v1737 = vadd.f32 %v316, %v1736
  %v1738 = vpop.f32.mrb[0].mxu0
  %1739 = vmatprep.mubr.bf16.mxu0 0
  %1740 = vmatmul.mubr.bf16.gmra.mrb[0].mxu0 %v1104
  %v1741 = vpop.f32.mrb[0].mxu0
  %v1742 = vadd.f32 %v316, %v1741
  %v1743 = vpop.f32.mrb[0].mxu0
  %v1744 = vpop.f32.mrb[0].mxu0
  %v1745 = vadd.f32 %v316, %v1744
  %v1746 = vpop.f32.mrb[0].mxu0
  %1747 = vmatprep.mubr.bf16.mxu0 0
  %1748 = vmatmul.mubr.bf16.gmra.mrb[0].mxu0 %v1107
  %v1749 = vpop.f32.mrb[0].mxu0
  %v1750 = vadd.f32 %v316, %v1749
  %v1751 = vpop.f32.mrb[0].mxu0
  %v1752 = vpop.f32.mrb[0].mxu0
  %v1753 = vadd.f32 %v316, %v1752
  %v1754 = vpop.f32.mrb[0].mxu0
  %1755 = vmatprep.mubr.bf16.mxu0 0
  %1756 = vmatmul.mubr.bf16.gmra.mrb[0].mxu0 %v1110
  %v1757 = vpop.f32.mrb[0].mxu0
  %v1758 = vadd.f32 %v316, %v1757
  %v1759 = vpop.f32.mrb[0].mxu0
  %v1760 = vpop.f32.mrb[0].mxu0
  %v1761 = vadd.f32 %v316, %v1760
  %v1762 = vpop.f32.mrb[0].mxu0
  %1763 = vmatprep.mubr.bf16.mxu0 0
  %1764 = vmatmul.mubr.bf16.gmra.mrb[0].mxu0 %v1113
  %v1765 = vpop.f32.mrb[0].mxu0
  %v1766 = vadd.f32 %v316, %v1765
  %v1767 = vpop.f32.mrb[0].mxu0
  %v1768 = vpop.f32.mrb[0].mxu0
  %v1769 = vadd.f32 %v316, %v1768
  %v1770 = vpop.f32.mrb[0].mxu0
  %1771 = vmatprep.mubr.bf16.mxu0 0
  %1772 = vmatmul.mubr.bf16.gmra.mrb[0].mxu0 %v1116
  %v1773 = vpop.f32.mrb[0].mxu0
  %v1774 = vadd.f32 %v316, %v1773
  %v1775 = vpop.f32.mrb[0].mxu0
  %v1776 = vpop.f32.mrb[0].mxu0
  %v1777 = vadd.f32 %v316, %v1776
  %v1778 = vpop.f32.mrb[0].mxu0
  %1779 = vmatprep.mubr.bf16.mxu0 0
  %1780 = vmatmul.mubr.bf16.gmra.mrb[0].mxu0 %v1119
  %v1781 = vpop.f32.mrb[0].mxu0
  %v1782 = vadd.f32 %v316, %v1781
  %v1783 = vpop.f32.mrb[0].mxu0
  %v1784 = vpop.f32.mrb[0].mxu0
  %v1785 = vadd.f32 %v316, %v1784
  %v1786 = vpop.f32.mrb[0].mxu0
  %1787 = vmatprep.mubr.bf16.mxu0 0
  %1788 = vmatmul.mubr.bf16.gmra.mrb[0].mxu0 %v1122
  %v1789 = vpop.f32.mrb[0].mxu0
  %v1790 = vadd.f32 %v316, %v1789
  %v1791 = vpop.f32.mrb[0].mxu0
  %v1792 = vpop.f32.mrb[0].mxu0
  %v1793 = vadd.f32 %v316, %v1792
  %v1794 = vpop.f32.mrb[0].mxu0
  %1795 = vmatprep.mubr.bf16.mxu0 0
  %1796 = vmatmul.mubr.bf16.gmra.mrb[0].mxu0 %v1125
  %v1797 = vpop.f32.mrb[0].mxu0
  %v1798 = vadd.f32 %v316, %v1797
  %v1799 = vpop.f32.mrb[0].mxu0
  %v1800 = vpop.f32.mrb[0].mxu0
  %v1801 = vadd.f32 %v316, %v1800
  %v1802 = vpop.f32.mrb[0].mxu0
  %1803 = vmatprep.mubr.bf16.mxu0 0
  %1804 = vmatmul.mubr.bf16.gmra.mrb[0].mxu0 %v1128
  %v1805 = vpop.f32.mrb[0].mxu0
  %v1806 = vadd.f32 %v316, %v1805
  %v1807 = vpop.f32.mrb[0].mxu0
  %v1808 = vpop.f32.mrb[0].mxu0
  %v1809 = vadd.f32 %v316, %v1808
  %v1810 = vpop.f32.mrb[0].mxu0
  %1811 = vmatprep.mubr.bf16.mxu0 0
  %1812 = vmatmul.mubr.bf16.gmra.mrb[0].mxu0 %v1131
  %v1813 = vpop.f32.mrb[0].mxu0
  %v1814 = vadd.f32 %v316, %v1813
  %v1815 = vpop.f32.mrb[0].mxu0
  %v1816 = vpop.f32.mrb[0].mxu0
  %v1817 = vadd.f32 %v316, %v1816
  %v1818 = vpop.f32.mrb[0].mxu0
  %1819 = vmatprep.mubr.bf16.mxu0 0
  %1820 = vmatmul.mubr.bf16.gmra.mrb[0].mxu0 %v1134
  %v1821 = vpop.f32.mrb[0].mxu0
  %v1822 = vadd.f32 %v316, %v1821
  %v1823 = vpop.f32.mrb[0].mxu0
  %v1824 = vpop.f32.mrb[0].mxu0
  %v1825 = vadd.f32 %v316, %v1824
  %v1826 = vpop.f32.mrb[0].mxu0
  %1827 = vmatprep.mubr.bf16.mxu0 0
  %1828 = vmatmul.mubr.bf16.gmra.mrb[0].mxu0 %v1137
  %v1829 = vpop.f32.mrb[0].mxu0
  %v1830 = vadd.f32 %v316, %v1829
  %v1831 = vpop.f32.mrb[0].mxu0
  %v1832 = vpop.f32.mrb[0].mxu0
  %v1833 = vadd.f32 %v316, %v1832
  %v1834 = vpop.f32.mrb[0].mxu0
  %1835 = vmatprep.mubr.bf16.mxu0 0
  %1836 = vmatmul.mubr.bf16.gmra.mrb[0].mxu0 %v1140
  %v1837 = vpop.f32.mrb[0].mxu0
  %v1838 = vadd.f32 %v316, %v1837
  %v1839 = vpop.f32.mrb[0].mxu0
  %v1840 = vpop.f32.mrb[0].mxu0
  %v1841 = vadd.f32 %v316, %v1840
  %v1842 = vpop.f32.mrb[0].mxu0
  %1843 = vmatprep.mubr.bf16.mxu0 0
  %1844 = vmatmul.mubr.bf16.gmra.mrb[0].mxu0 %v1143
  %v1845 = vpop.f32.mrb[0].mxu0
  %v1846 = vadd.f32 %v316, %v1845
  %v1847 = vpop.f32.mrb[0].mxu0
  %v1848 = vpop.f32.mrb[0].mxu0
  %v1849 = vadd.f32 %v316, %v1848
  %v1850 = vpop.f32.mrb[0].mxu0
  %1851 = vmatprep.mubr.bf16.mxu0 0
  %1852 = vmatmul.mubr.bf16.gmra.mrb[0].mxu0 %v1146
  %v1853 = vpop.f32.mrb[0].mxu0
  %v1854 = vadd.f32 %v316, %v1853
  %v1855 = vpop.f32.mrb[0].mxu0
  %v1856 = vpop.f32.mrb[0].mxu0
  %v1857 = vadd.f32 %v316, %v1856
  %v1858 = vpop.f32.mrb[0].mxu0
  %1859 = vmatprep.mubr.bf16.mxu0 0
  %1860 = vmatmul.mubr.bf16.gmra.mrb[0].mxu0 %v1149
  %v1861 = vpop.f32.mrb[0].mxu0
  %v1862 = vadd.f32 %v316, %v1861
  %v1863 = vpop.f32.mrb[0].mxu0
  %v1864 = vpop.f32.mrb[0].mxu0
  %v1865 = vadd.f32 %v316, %v1864
  %v1866 = vpop.f32.mrb[0].mxu0
  %1867 = vmatprep.mubr.bf16.mxu0 0
  %1868 = vmatmul.mubr.bf16.gmra.mrb[0].mxu0 %v1152
  %v1869 = vpop.f32.mrb[0].mxu0
  %v1870 = vadd.f32 %v316, %v1869
  %v1871 = vpop.f32.mrb[0].mxu0
  %v1872 = vpop.f32.mrb[0].mxu0
  %v1873 = vadd.f32 %v316, %v1872
  %v1874 = vpop.f32.mrb[0].mxu0
  %1875 = vmatprep.mubr.bf16.mxu0 0
  %1876 = vmatmul.mubr.bf16.gmra.mrb[0].mxu0 %v1155
  %v1877 = vpop.f32.mrb[0].mxu0
  %v1878 = vadd.f32 %v316, %v1877
  %v1879 = vpop.f32.mrb[0].mxu0
  %v1880 = vpop.f32.mrb[0].mxu0
  %v1881 = vadd.f32 %v316, %v1880
  %v1882 = vpop.f32.mrb[0].mxu0
  %1883 = vmatprep.mubr.bf16.mxu0 0
  %1884 = vmatmul.mubr.bf16.gmra.mrb[0].mxu0 %v1158
  %v1885 = vpop.f32.mrb[0].mxu0
  %v1886 = vadd.f32 %v316, %v1885
  %v1887 = vpop.f32.mrb[0].mxu0
  %v1888 = vpop.f32.mrb[0].mxu0
  %v1889 = vadd.f32 %v316, %v1888
  %v1890 = vpop.f32.mrb[0].mxu0
  %1891 = vmatprep.mubr.bf16.mxu0 0
  %1892 = vmatmul.mubr.bf16.gmra.mrb[0].mxu0 %v1161
  %v1893 = vpop.f32.mrb[0].mxu0
  %v1894 = vadd.f32 %v316, %v1893
  %v1895 = vpop.f32.mrb[0].mxu0
  %v1896 = vpop.f32.mrb[0].mxu0
  %v1897 = vadd.f32 %v316, %v1896
  %v1898 = vpop.f32.mrb[0].mxu0
  %1899 = vmatprep.mubr.bf16.mxu0 0
  %1900 = vmatmul.mubr.bf16.gmra.mrb[0].mxu0 %v1164
  %v1901 = vpop.f32.mrb[0].mxu0
  %v1902 = vadd.f32 %v316, %v1901
  %v1903 = vpop.f32.mrb[0].mxu0
  %v1904 = vpop.f32.mrb[0].mxu0
  %v1905 = vadd.f32 %v316, %v1904
  %v1906 = vpop.f32.mrb[0].mxu0
  %1907 = vmatprep.mubr.bf16.mxu0 0
  %1908 = vmatmul.mubr.bf16.gmra.mrb[0].mxu0 %v1167
  %v1909 = vpop.f32.mrb[0].mxu0
  %v1910 = vadd.f32 %v316, %v1909
  %v1911 = vpop.f32.mrb[0].mxu0
  %v1912 = vpop.f32.mrb[0].mxu0
  %v1913 = vadd.f32 %v316, %v1912
  %v1914 = vpop.f32.mrb[0].mxu0
  %1915 = vmatprep.mubr.bf16.mxu0 0
  %1916 = vmatmul.mubr.bf16.gmra.mrb[0].mxu0 %v1170
  %v1917 = vpop.f32.mrb[0].mxu0
  %v1918 = vadd.f32 %v316, %v1917
  %v1919 = vpop.f32.mrb[0].mxu0
  %v1920 = vpop.f32.mrb[0].mxu0
  %v1921 = vadd.f32 %v316, %v1920
  %v1922 = vpop.f32.mrb[0].mxu0
  %1923 = vmatprep.mubr.bf16.mxu0 0
  %1924 = vmatmul.mubr.bf16.gmra.mrb[0].mxu0 %v1173
  %v1925 = vpop.f32.mrb[0].mxu0
  %v1926 = vadd.f32 %v316, %v1925
  %v1927 = vpop.f32.mrb[0].mxu0
  %v1928 = vpop.f32.mrb[0].mxu0
  %v1929 = vadd.f32 %v316, %v1928
  %v1930 = vpop.f32.mrb[0].mxu0
  %1931 = vmatprep.mubr.bf16.mxu0 0
  %1932 = vmatmul.mubr.bf16.gmra.mrb[0].mxu0 %v1176
  %v1933 = vpop.f32.mrb[0].mxu0
  %v1934 = vadd.f32 %v316, %v1933
  %v1935 = vpop.f32.mrb[0].mxu0
  %v1936 = vpop.f32.mrb[0].mxu0
  %v1937 = vadd.f32 %v316, %v1936
  %v1938 = vpop.f32.mrb[0].mxu0
  %1939 = vmatprep.mubr.bf16.mxu0 0
  %1940 = vmatmul.mubr.bf16.gmra.mrb[0].mxu0 %v1179
  %v1941 = vpop.f32.mrb[0].mxu0
  %v1942 = vadd.f32 %v316, %v1941
  %v1943 = vpop.f32.mrb[0].mxu0
  %v1944 = vpop.f32.mrb[0].mxu0
  %v1945 = vadd.f32 %v316, %v1944
  %v1946 = vpop.f32.mrb[0].mxu0
  %1947 = vmatprep.mubr.bf16.mxu0 0
  %1948 = vmatmul.mubr.bf16.gmra.mrb[0].mxu0 %v1182
  %v1949 = vpop.f32.mrb[0].mxu0
  %v1950 = vadd.f32 %v316, %v1949
  %v1951 = vpop.f32.mrb[0].mxu0
  %v1952 = vpop.f32.mrb[0].mxu0
  %v1953 = vadd.f32 %v316, %v1952
  %v1954 = vpop.f32.mrb[0].mxu0
  %1955 = vmatprep.mubr.bf16.mxu0 0
  %1956 = vmatmul.mubr.bf16.gmra.mrb[0].mxu0 %v1185
  %v1957 = vpop.f32.mrb[0].mxu0
  %v1958 = vadd.f32 %v316, %v1957
  %v1959 = vpop.f32.mrb[0].mxu0
  %v1960 = vpop.f32.mrb[0].mxu0
  %v1961 = vadd.f32 %v316, %v1960
  %v1962 = vpop.f32.mrb[0].mxu0
  %1963 = vmatprep.mubr.bf16.mxu0 0
  %1964 = vmatmul.mubr.bf16.gmra.mrb[0].mxu0 %v1188
  %v1965 = vpop.f32.mrb[0].mxu0
  %v1966 = vadd.f32 %v316, %v1965
  %v1967 = vpop.f32.mrb[0].mxu0
  %v1968 = vpop.f32.mrb[0].mxu0
  %v1969 = vadd.f32 %v316, %v1968
  %v1970 = vpop.f32.mrb[0].mxu0
  %1971 = vmatprep.mubr.bf16.mxu0 0
  %1972 = vmatmul.mubr.bf16.gmra.mrb[0].mxu0 %v1191
  %v1973 = vpop.f32.mrb[0].mxu0
  %v1974 = vadd.f32 %v316, %v1973
  %v1975 = vpop.f32.mrb[0].mxu0
  %v1976 = vpop.f32.mrb[0].mxu0
  %v1977 = vadd.f32 %v316, %v1976
  %v1978 = vpop.f32.mrb[0].mxu0
  %1979 = vmatprep.mubr.bf16.mxu0 0
  %1980 = vmatmul.mubr.bf16.gmra.mrb[0].mxu0 %v1194
  %v1981 = vpop.f32.mrb[0].mxu0
  %v1982 = vadd.f32 %v316, %v1981
  %v1983 = vpop.f32.mrb[0].mxu0
  %v1984 = vpop.f32.mrb[0].mxu0
  %v1985 = vadd.f32 %v316, %v1984
  %v1986 = vpop.f32.mrb[0].mxu0
  %1987 = vmatprep.mubr.bf16.mxu0 0
  %1988 = vmatmul.mubr.bf16.gmra.mrb[0].mxu0 %v1197
  %v1989 = vpop.f32.mrb[0].mxu0
  %v1990 = vadd.f32 %v316, %v1989
  %v1991 = vpop.f32.mrb[0].mxu0
  %v1992 = vpop.f32.mrb[0].mxu0
  %v1993 = vadd.f32 %v316, %v1992
  %v1994 = vpop.f32.mrb[0].mxu0
  %1995 = vmatprep.mubr.bf16.mxu0 0
  %1996 = vmatmul.mubr.bf16.gmra.mrb[0].mxu0 %v1200
  %v1997 = vpop.f32.mrb[0].mxu0
  %v1998 = vadd.f32 %v316, %v1997
  %v1999 = vpop.f32.mrb[0].mxu0
  %v2000 = vpop.f32.mrb[0].mxu0
  %v2001 = vadd.f32 %v316, %v2000
  %v2002 = vpop.f32.mrb[0].mxu0
  %2003 = vmatprep.mubr.bf16.mxu0 0
  %2004 = vmatmul.mubr.bf16.gmra.mrb[0].mxu0 %v1203
  %v2005 = vpop.f32.mrb[0].mxu0
  %v2006 = vadd.f32 %v316, %v2005
  %v2007 = vpop.f32.mrb[0].mxu0
  %v2008 = vpop.f32.mrb[0].mxu0
  %v2009 = vadd.f32 %v316, %v2008
  %v2010 = vpop.f32.mrb[0].mxu0
  %2011 = vmatprep.mubr.bf16.mxu0 0
  %2012 = vmatmul.mubr.bf16.gmra.mrb[0].mxu0 %v1206
  %v2013 = vpop.f32.mrb[0].mxu0
  %v2014 = vadd.f32 %v316, %v2013
  %v2015 = vpop.f32.mrb[0].mxu0
  %v2016 = vpop.f32.mrb[0].mxu0
  %v2017 = vadd.f32 %v316, %v2016
  %v2018 = vpop.f32.mrb[0].mxu0
  %2019 = vmatprep.mubr.bf16.mxu0 0
  %2020 = vmatmul.mubr.bf16.gmra.mrb[0].mxu0 %v1209
  %v2021 = vpop.f32.mrb[0].mxu0
  %v2022 = vadd.f32 %v316, %v2021
  %v2023 = vpop.f32.mrb[0].mxu0
  %v2024 = vpop.f32.mrb[0].mxu0
  %v2025 = vadd.f32 %v316, %v2024
  %v2026 = vpop.f32.mrb[0].mxu0
  %2027 = vmatprep.mubr.bf16.mxu0 0
  %2028 = vmatmul.mubr.bf16.gmra.mrb[0].mxu0 %v1212
  %v2029 = vpop.f32.mrb[0].mxu0
  %v2030 = vadd.f32 %v316, %v2029
  %v2031 = vpop.f32.mrb[0].mxu0
  %v2032 = vpop.f32.mrb[0].mxu0
  %v2033 = vadd.f32 %v316, %v2032
  %v2034 = vpop.f32.mrb[0].mxu0
  %2035 = vmatprep.mubr.bf16.mxu0 0
  %2036 = vmatmul.mubr.bf16.gmra.mrb[0].mxu0 %v1215
  %v2037 = vpop.f32.mrb[0].mxu0
  %v2038 = vadd.f32 %v316, %v2037
  %v2039 = vpop.f32.mrb[0].mxu0
  %v2040 = vpop.f32.mrb[0].mxu0
  %v2041 = vadd.f32 %v316, %v2040
  %v2042 = vpop.f32.mrb[0].mxu0
  %2043 = vmatprep.mubr.bf16.mxu0 0
  %2044 = vmatmul.mubr.bf16.gmra.mrb[0].mxu0 %v1218
  %v2045 = vpop.f32.mrb[0].mxu0
  %v2046 = vadd.f32 %v316, %v2045
  %v2047 = vpop.f32.mrb[0].mxu0
  %v2048 = vpop.f32.mrb[0].mxu0
  %v2049 = vadd.f32 %v316, %v2048
  %v2050 = vpop.f32.mrb[0].mxu0
  %2051 = vmatprep.mubr.bf16.mxu0 0
  %2052 = vmatmul.mubr.bf16.gmra.mrb[0].mxu0 %v1221
  %v2053 = vpop.f32.mrb[0].mxu0
  %v2054 = vadd.f32 %v316, %v2053
  %v2055 = vpop.f32.mrb[0].mxu0
  %v2056 = vpop.f32.mrb[0].mxu0
  %v2057 = vadd.f32 %v316, %v2056
  %v2058 = vpop.f32.mrb[0].mxu0
  %2059 = vmatprep.mubr.bf16.mxu0 0
  %2060 = vmatmul.mubr.bf16.gmra.mrb[0].mxu0 %v1224
  %v2061 = vpop.f32.mrb[0].mxu0
  %v2062 = vadd.f32 %v316, %v2061
  %v2063 = vpop.f32.mrb[0].mxu0
  %v2064 = vpop.f32.mrb[0].mxu0
  %v2065 = vadd.f32 %v316, %v2064
  %v2066 = vpop.f32.mrb[0].mxu0
  %2067 = vmatprep.mubr.bf16.mxu0 0
  %2068 = vmatmul.mubr.bf16.gmra.mrb[0].mxu0 %v1227
  %v2069 = vpop.f32.mrb[0].mxu0
  %v2070 = vadd.f32 %v316, %v2069
  %v2071 = vpop.f32.mrb[0].mxu0
  %v2072 = vpop.f32.mrb[0].mxu0
  %v2073 = vadd.f32 %v316, %v2072
  %v2074 = vpop.f32.mrb[0].mxu0
  %2075 = vmatprep.mubr.bf16.mxu0 0
  %2076 = vmatmul.mubr.bf16.gmra.mrb[0].mxu0 %v1230
  %v2077 = vpop.f32.mrb[0].mxu0
  %v2078 = vadd.f32 %v316, %v2077
  %v2079 = vpop.f32.mrb[0].mxu0
  %v2080 = vpop.f32.mrb[0].mxu0
  %v2081 = vadd.f32 %v316, %v2080
  %v2082 = vpop.f32.mrb[0].mxu0
  %2083 = vmatprep.mubr.bf16.mxu0 0
  %2084 = vmatmul.mubr.bf16.gmra.mrb[0].mxu0 %v1233
  %v2085 = vpop.f32.mrb[0].mxu0
  %v2086 = vadd.f32 %v316, %v2085
  %v2087 = vpop.f32.mrb[0].mxu0
  %v2088 = vpop.f32.mrb[0].mxu0
  %v2089 = vadd.f32 %v316, %v2088
  %v2090 = vpop.f32.mrb[0].mxu0
  %2091 = vmatprep.mubr.bf16.mxu0 0
  %2092 = vmatmul.mubr.bf16.gmra.mrb[0].mxu0 %v1236
  %v2093 = vpop.f32.mrb[0].mxu0
  %v2094 = vadd.f32 %v316, %v2093
  %v2095 = vpop.f32.mrb[0].mxu0
  %v2096 = vpop.f32.mrb[0].mxu0
  %v2097 = vadd.f32 %v316, %v2096
  %v2098 = vpop.f32.mrb[0].mxu0
  %2099 = vmatprep.mubr.bf16.mxu0 0
  %2100 = vmatmul.mubr.bf16.gmra.mrb[0].mxu0 %v1239
  %v2101 = vpop.f32.mrb[0].mxu0
  %v2102 = vadd.f32 %v316, %v2101
  %v2103 = vpop.f32.mrb[0].mxu0
  %v2104 = vpop.f32.mrb[0].mxu0
  %v2105 = vadd.f32 %v316, %v2104
  %v2106 = vpop.f32.mrb[0].mxu0
  %2107 = vmatprep.mubr.bf16.mxu0 0
  %2108 = vmatmul.mubr.bf16.gmra.mrb[0].mxu0 %v1242
  %v2109 = vpop.f32.mrb[0].mxu0
  %v2110 = vadd.f32 %v316, %v2109
  %v2111 = vpop.f32.mrb[0].mxu0
  %v2112 = vpop.f32.mrb[0].mxu0
  %v2113 = vadd.f32 %v316, %v2112
  %v2114 = vpop.f32.mrb[0].mxu0
  %2115 = vmatprep.mubr.bf16.mxu0 0
  %2116 = vmatmul.mubr.bf16.gmra.mrb[0].mxu0 %v1245
  %v2117 = vpop.f32.mrb[0].mxu0
  %v2118 = vadd.f32 %v316, %v2117
  %v2119 = vpop.f32.mrb[0].mxu0
  %v2120 = vpop.f32.mrb[0].mxu0
  %v2121 = vadd.f32 %v316, %v2120
  %v2122 = vpop.f32.mrb[0].mxu0
  %2123 = vmatprep.mubr.bf16.mxu0 0
  %2124 = vmatmul.mubr.bf16.gmra.mrb[0].mxu0 %v1248
  %v2125 = vpop.f32.mrb[0].mxu0
  %v2126 = vadd.f32 %v316, %v2125
  %v2127 = vpop.f32.mrb[0].mxu0
  %v2128 = vpop.f32.mrb[0].mxu0
  %v2129 = vadd.f32 %v316, %v2128
  %v2130 = vpop.f32.mrb[0].mxu0
  %2131 = vmatprep.mubr.bf16.mxu0 0
  %2132 = vmatmul.mubr.bf16.gmra.mrb[0].mxu0 %v1251
  %v2133 = vpop.f32.mrb[0].mxu0
  %v2134 = vadd.f32 %v316, %v2133
  %v2135 = vpop.f32.mrb[0].mxu0
  %v2136 = vpop.f32.mrb[0].mxu0
  %v2137 = vadd.f32 %v316, %v2136
  %v2138 = vpop.f32.mrb[0].mxu0
  %2139 = vmatprep.mubr.bf16.mxu0 0
  %2140 = vmatmul.mubr.bf16.gmra.mrb[0].mxu0 %v1254
  %v2141 = vpop.f32.mrb[0].mxu0
  %v2142 = vadd.f32 %v316, %v2141
  %v2143 = vpop.f32.mrb[0].mxu0
  %v2144 = vpop.f32.mrb[0].mxu0
  %v2145 = vadd.f32 %v316, %v2144
  %v2146 = vpop.f32.mrb[0].mxu0
  %2147 = vmatprep.mubr.bf16.mxu0 0
  %2148 = vmatmul.mubr.bf16.gmra.mrb[0].mxu0 %v1257
  %v2149 = vpop.f32.mrb[0].mxu0
  %v2150 = vadd.f32 %v316, %v2149
  %v2151 = vpop.f32.mrb[0].mxu0
  %v2152 = vpop.f32.mrb[0].mxu0
  %v2153 = vadd.f32 %v316, %v2152
  %v2154 = vpop.f32.mrb[0].mxu0
  %2155 = vmatprep.mubr.bf16.mxu0 0
  %2156 = vmatmul.mubr.bf16.gmra.mrb[0].mxu0 %v1260
  %v2157 = vpop.f32.mrb[0].mxu0
  %v2158 = vadd.f32 %v316, %v2157
  %v2159 = vpop.f32.mrb[0].mxu0
  %v2160 = vpop.f32.mrb[0].mxu0
  %v2161 = vadd.f32 %v316, %v2160
  %v2162 = vpop.f32.mrb[0].mxu0
  %2163 = vmatprep.mubr.bf16.mxu0 0
  %2164 = vmatmul.mubr.bf16.gmra.mrb[0].mxu0 %v1263
  %v2165 = vpop.f32.mrb[0].mxu0
  %v2166 = vadd.f32 %v316, %v2165
  %v2167 = vpop.f32.mrb[0].mxu0
  %v2168 = vpop.f32.mrb[0].mxu0
  %v2169 = vadd.f32 %v316, %v2168
  %v2170 = vpop.f32.mrb[0].mxu0
  %2171 = vmatprep.mubr.bf16.mxu0 0
  %2172 = vmatmul.mubr.bf16.gmra.mrb[0].mxu0 %v1266
  %v2173 = vpop.f32.mrb[0].mxu0
  %v2174 = vadd.f32 %v316, %v2173
  %v2175 = vpop.f32.mrb[0].mxu0
  %v2176 = vpop.f32.mrb[0].mxu0
  %v2177 = vadd.f32 %v316, %v2176
  %v2178 = vpop.f32.mrb[0].mxu0
  %2179 = vmatprep.mubr.bf16.mxu0 0
  %2180 = vmatmul.mubr.bf16.gmra.mrb[0].mxu0 %v1269
  %v2181 = vpop.f32.mrb[0].mxu0
  %v2182 = vadd.f32 %v316, %v2181
  %v2183 = vpop.f32.mrb[0].mxu0
  %v2184 = vpop.f32.mrb[0].mxu0
  %v2185 = vadd.f32 %v316, %v2184
  %v2186 = vpop.f32.mrb[0].mxu0
  %2187 = vmatprep.mubr.bf16.mxu0 0
  %2188 = vmatmul.mubr.bf16.gmra.mrb[0].mxu0 %v1272
  %v2189 = vpop.f32.mrb[0].mxu0
  %v2190 = vadd.f32 %v316, %v2189
  %v2191 = vpop.f32.mrb[0].mxu0
  %v2192 = vpop.f32.mrb[0].mxu0
  %v2193 = vadd.f32 %v316, %v2192
  %v2194 = vpop.f32.mrb[0].mxu0
  %2195 = vmatprep.mubr.bf16.mxu0 0
  %2196 = vmatmul.mubr.bf16.gmra.mrb[0].mxu0 %v1275
  %v2197 = vpop.f32.mrb[0].mxu0
  %v2198 = vadd.f32 %v316, %v2197
  %v2199 = vpop.f32.mrb[0].mxu0
  %v2200 = vpop.f32.mrb[0].mxu0
  %v2201 = vadd.f32 %v316, %v2200
  %v2202 = vpop.f32.mrb[0].mxu0
  %2203 = vmatprep.mubr.bf16.mxu0 0
  %2204 = vmatmul.mubr.bf16.gmra.mrb[0].mxu0 %v1278
  %v2205 = vpop.f32.mrb[0].mxu0
  %v2206 = vadd.f32 %v316, %v2205
  %v2207 = vpop.f32.mrb[0].mxu0
  %v2208 = vpop.f32.mrb[0].mxu0
  %v2209 = vadd.f32 %v316, %v2208
  %v2210 = vpop.f32.mrb[0].mxu0
  %2211 = vmatprep.mubr.bf16.mxu0 0
  %2212 = vmatmul.mubr.bf16.gmra.mrb[0].mxu0 %v1281
  %v2213 = vpop.f32.mrb[0].mxu0
  %v2214 = vadd.f32 %v316, %v2213
  %v2215 = vpop.f32.mrb[0].mxu0
  %v2216 = vpop.f32.mrb[0].mxu0
  %v2217 = vadd.f32 %v316, %v2216
  %v2218 = vpop.f32.mrb[0].mxu0
  %2219 = vmatprep.mubr.bf16.mxu0 0
  %2220 = vmatmul.mubr.bf16.gmra.mrb[0].mxu0 %v1284
  %v2221 = vpop.f32.mrb[0].mxu0
  %v2222 = vadd.f32 %v316, %v2221
  %v2223 = vpop.f32.mrb[0].mxu0
  %v2224 = vpop.f32.mrb[0].mxu0
  %v2225 = vadd.f32 %v316, %v2224
  %v2226 = vpop.f32.mrb[0].mxu0
  %2227 = vmatprep.mubr.bf16.mxu0 0
  %2228 = vmatmul.mubr.bf16.gmra.mrb[0].mxu0 %v1287
  %v2229 = vpop.f32.mrb[0].mxu0
  %v2230 = vadd.f32 %v316, %v2229
  %v2231 = vpop.f32.mrb[0].mxu0
  %v2232 = vpop.f32.mrb[0].mxu0
  %v2233 = vadd.f32 %v316, %v2232
  %v2234 = vpop.f32.mrb[0].mxu0
  %2235 = vmatprep.mubr.bf16.mxu0 0
  %2236 = vmatmul.mubr.bf16.gmra.mrb[0].mxu0 %v1290
  %v2237 = vpop.f32.mrb[0].mxu0
  %v2238 = vadd.f32 %v316, %v2237
  %v2239 = vpop.f32.mrb[0].mxu0
  %v2240 = vpop.f32.mrb[0].mxu0
  %v2241 = vadd.f32 %v316, %v2240
  %v2242 = vpop.f32.mrb[0].mxu0
  %2243 = vmatprep.mubr.bf16.mxu0 0
  %2244 = vmatmul.mubr.bf16.gmra.mrb[0].mxu0 %v1293
  %v2245 = vpop.f32.mrb[0].mxu0
  %v2246 = vadd.f32 %v316, %v2245
  %v2247 = vpop.f32.mrb[0].mxu0
  %v2248 = vpop.f32.mrb[0].mxu0
  %v2249 = vadd.f32 %v316, %v2248
  %v2250 = vpop.f32.mrb[0].mxu0
  %2251 = vmatprep.mubr.bf16.mxu0 0
  %2252 = vmatmul.mubr.bf16.gmra.mrb[0].mxu0 %v1296
  %v2253 = vpop.f32.mrb[0].mxu0
  %v2254 = vadd.f32 %v316, %v2253
  %v2255 = vpop.f32.mrb[0].mxu0
  %v2256 = vpop.f32.mrb[0].mxu0
  %v2257 = vadd.f32 %v316, %v2256
  %v2258 = vpop.f32.mrb[0].mxu0
  %2259 = vmatprep.mubr.bf16.mxu0 0
  %2260 = vmatmul.mubr.bf16.gmra.mrb[0].mxu0 %v1299
  %v2261 = vpop.f32.mrb[0].mxu0
  %v2262 = vadd.f32 %v316, %v2261
  %v2263 = vpop.f32.mrb[0].mxu0
  %v2264 = vpop.f32.mrb[0].mxu0
  %v2265 = vadd.f32 %v316, %v2264
  %v2266 = vpop.f32.mrb[0].mxu0
  %2267 = vmatprep.mubr.bf16.mxu0 0
  %2268 = vmatmul.mubr.bf16.gmra.mrb[0].mxu0 %v1302
  %v2269 = vpop.f32.mrb[0].mxu0
  %v2270 = vadd.f32 %v316, %v2269
  %v2271 = vpop.f32.mrb[0].mxu0
  %v2272 = vpop.f32.mrb[0].mxu0
  %v2273 = vadd.f32 %v316, %v2272
  %v2274 = vpop.f32.mrb[0].mxu0
  %2275 = vmatprep.mubr.bf16.mxu0 0
  %2276 = vmatmul.mubr.bf16.gmra.mrb[0].mxu0 %v1305
  %v2277 = vpop.f32.mrb[0].mxu0
  %v2278 = vadd.f32 %v316, %v2277
  %v2279 = vpop.f32.mrb[0].mxu0
  %v2280 = vpop.f32.mrb[0].mxu0
  %v2281 = vadd.f32 %v316, %v2280
  %v2282 = vpop.f32.mrb[0].mxu0
  %2283 = vmatprep.mubr.bf16.mxu0 0
  %2284 = vmatmul.mubr.bf16.gmra.mrb[0].mxu0 %v1308
  %v2285 = vpop.f32.mrb[0].mxu0
  %v2286 = vadd.f32 %v316, %v2285
  %v2287 = vpop.f32.mrb[0].mxu0
  %v2288 = vpop.f32.mrb[0].mxu0
  %v2289 = vadd.f32 %v316, %v2288
  %v2290 = vpop.f32.mrb[0].mxu0
  %2291 = vmatprep.mubr.bf16.mxu0 0
  %2292 = vmatmul.mubr.bf16.gmra.mrb[0].mxu0 %v1311
  %v2293 = vpop.f32.mrb[0].mxu0
  %v2294 = vadd.f32 %v316, %v2293
  %v2295 = vpop.f32.mrb[0].mxu0
  %v2296 = vpop.f32.mrb[0].mxu0
  %v2297 = vadd.f32 %v316, %v2296
  %v2298 = vpop.f32.mrb[0].mxu0
  %2299 = vmatprep.mubr.bf16.mxu0 0
  %2300 = vmatmul.mubr.bf16.gmra.mrb[0].mxu0 %v1314
  %v2301 = vpop.f32.mrb[0].mxu0
  %v2302 = vadd.f32 %v316, %v2301
  %v2303 = vpop.f32.mrb[0].mxu0
  %v2304 = vpop.f32.mrb[0].mxu0
  %v2305 = vadd.f32 %v316, %v2304
  %v2306 = vpop.f32.mrb[0].mxu0
  %2307 = vmatprep.mubr.bf16.mxu0 0
  %2308 = vmatmul.mubr.bf16.gmra.mrb[0].mxu0 %v1317
  %v2309 = vpop.f32.mrb[0].mxu0
  %v2310 = vadd.f32 %v316, %v2309
  %v2311 = vpop.f32.mrb[0].mxu0
  %v2312 = vpop.f32.mrb[0].mxu0
  %v2313 = vadd.f32 %v316, %v2312
  %v2314 = vpop.f32.mrb[0].mxu0
  %2315 = vmatprep.mubr.bf16.mxu0 0
  %2316 = vmatmul.mubr.bf16.gmra.mrb[0].mxu0 %v1320
  %v2317 = vpop.f32.mrb[0].mxu0
  %v2318 = vadd.f32 %v316, %v2317
  %v2319 = vpop.f32.mrb[0].mxu0
  %v2320 = vpop.f32.mrb[0].mxu0
  %v2321 = vadd.f32 %v316, %v2320
  %v2322 = vpop.f32.mrb[0].mxu0
  %2323 = vmatprep.mubr.bf16.mxu0 0
  %2324 = vmatmul.mubr.bf16.gmra.mrb[0].mxu0 %v1323
  %v2325 = vpop.f32.mrb[0].mxu0
  %v2326 = vadd.f32 %v316, %v2325
  %v2327 = vpop.f32.mrb[0].mxu0
  %v2328 = vpop.f32.mrb[0].mxu0
  %v2329 = vadd.f32 %v316, %v2328
  %v2330 = vpop.f32.mrb[0].mxu0
  %2331 = vmatprep.mubr.bf16.mxu0 0
  %2332 = vmatmul.mubr.bf16.gmra.mrb[0].mxu0 %v1326
  %v2333 = vpop.f32.mrb[0].mxu0
  %v2334 = vadd.f32 %v316, %v2333
  %v2335 = vpop.f32.mrb[0].mxu0
  %v2336 = vpop.f32.mrb[0].mxu0
  %v2337 = vadd.f32 %v316, %v2336
  %v2338 = vpop.f32.mrb[0].mxu0
  %2339 = vmatprep.mubr.bf16.mxu0 0
  %2340 = vmatmul.mubr.bf16.gmra.mrb[0].mxu0 %v1329
  %v2341 = vpop.f32.mrb[0].mxu0
  %v2342 = vadd.f32 %v316, %v2341
  %v2343 = vpop.f32.mrb[0].mxu0
  %v2344 = vpop.f32.mrb[0].mxu0
  %v2345 = vadd.f32 %v316, %v2344
  %v2346 = vpop.f32.mrb[0].mxu0
  %2347 = vmatprep.mubr.bf16.mxu0 0
  %2348 = vmatmul.mubr.bf16.gmra.mrb[0].mxu0 %v1332
  %v2349 = vpop.f32.mrb[0].mxu0
  %v2350 = vadd.f32 %v316, %v2349
  %v2351 = vpop.f32.mrb[0].mxu0
  %v2352 = vpop.f32.mrb[0].mxu0
  %v2353 = vadd.f32 %v316, %v2352
  %v2354 = vpop.f32.mrb[0].mxu0
  %2355 = vmatprep.mubr.bf16.mxu0 0
  %2356 = vmatmul.mubr.bf16.gmra.mrb[0].mxu0 %v1335
  %v2357 = vpop.f32.mrb[0].mxu0
  %v2358 = vadd.f32 %v316, %v2357
  %v2359 = vpop.f32.mrb[0].mxu0
  %v2360 = vpop.f32.mrb[0].mxu0
  %v2361 = vadd.f32 %v316, %v2360
  %v2362 = vpop.f32.mrb[0].mxu0
  %2363 = vmatprep.mubr.bf16.mxu0 0
  %2364 = vmatmul.mubr.bf16.gmra.mrb[0].mxu0 %v1338
  %v2365 = vpop.f32.mrb[0].mxu0
  %v2366 = vadd.f32 %v316, %v2365
  %v2367 = vpop.f32.mrb[0].mxu0
  %v2368 = vpop.f32.mrb[0].mxu0
  %v2369 = vadd.f32 %v316, %v2368
  %v2370 = vpop.f32.mrb[0].mxu0
  %2371 = vmatprep.mubr.bf16.mxu0 0
  %2372 = vmatmul.mubr.bf16.gmra.mrb[0].mxu0 %v1341
  %v2373 = vpop.f32.mrb[0].mxu0
  %v2374 = vadd.f32 %v316, %v2373
  %v2375 = vpop.f32.mrb[0].mxu0
  %v2376 = vpop.f32.mrb[0].mxu0
  %v2377 = vadd.f32 %v316, %v2376
  %v2378 = vpop.f32.mrb[0].mxu0
  %2379 = vmatprep.mubr.bf16.mxu0 0
  %2380 = vmatmul.mubr.bf16.gmra.mrb[0].mxu0 %v1344
  %v2381 = vpop.f32.mrb[0].mxu0
  %v2382 = vadd.f32 %v316, %v2381
  %v2383 = vpop.f32.mrb[0].mxu0
  %v2384 = vpop.f32.mrb[0].mxu0
  %v2385 = vadd.f32 %v316, %v2384
  %v2386 = vpop.f32.mrb[0].mxu0
  %2387 = vmatprep.mubr.bf16.mxu0 0
  %2388 = vmatmul.mubr.bf16.gmra.mrb[0].mxu0 %v1347
  %v2389 = vpop.f32.mrb[0].mxu0
  %v2390 = vadd.f32 %v316, %v2389
  %v2391 = vpop.f32.mrb[0].mxu0
  %v2392 = vpop.f32.mrb[0].mxu0
  %v2393 = vadd.f32 %v316, %v2392
  %v2394 = vpop.f32.mrb[0].mxu0
  %2395 = vmatprep.mubr.bf16.mxu0 0
  %2396 = vmatmul.mubr.bf16.gmra.mrb[0].mxu0 %v1350
  %v2397 = vpop.f32.mrb[0].mxu0
  %v2398 = vadd.f32 %v316, %v2397
  %v2399 = vpop.f32.mrb[0].mxu0
  %v2400 = vpop.f32.mrb[0].mxu0
  %v2401 = vadd.f32 %v316, %v2400
  %v2402 = vpop.f32.mrb[0].mxu0
  %2403 = vmatprep.mubr.bf16.mxu0 0
  %2404 = vmatmul.mubr.bf16.gmra.mrb[0].mxu0 %v1353
  %v2405 = vpop.f32.mrb[0].mxu0
  %v2406 = vadd.f32 %v316, %v2405
  %v2407 = vpop.f32.mrb[0].mxu0
  %v2408 = vpop.f32.mrb[0].mxu0
  %v2409 = vadd.f32 %v316, %v2408
  %v2410 = vpop.f32.mrb[0].mxu0
  %2411 = vdwg.mxu0
  %v2412 = vsub.f32 0.0, %v1390
  %v2413 = vsub.f32 0.0, %v1393
  %v2414 = vsub.f32 0.0, %v1398
  %v2415 = vsub.f32 0.0, %v1401
  %v2416 = vsub.f32 0.0, %v1406
  %v2417 = vsub.f32 0.0, %v1409
  %v2418 = vsub.f32 0.0, %v1414
  %v2419 = vsub.f32 0.0, %v1417
  %v2420 = vsub.f32 0.0, %v1422
  %v2421 = vsub.f32 0.0, %v1425
  %v2422 = vsub.f32 0.0, %v1430
  %v2423 = vsub.f32 0.0, %v1433
  %v2424 = vsub.f32 0.0, %v1438
  %v2425 = vsub.f32 0.0, %v1441
  %v2426 = vsub.f32 0.0, %v1446
  %v2427 = vsub.f32 0.0, %v1449
  %v2428 = vsub.f32 0.0, %v1454
  %v2429 = vsub.f32 0.0, %v1457
  %v2430 = vsub.f32 0.0, %v1462
  %v2431 = vsub.f32 0.0, %v1465
  %v2432 = vsub.f32 0.0, %v1470
  %v2433 = vsub.f32 0.0, %v1473
  %v2434 = vsub.f32 0.0, %v1478
  %v2435 = vsub.f32 0.0, %v1481
  %v2436 = vsub.f32 0.0, %v1486
  %v2437 = vsub.f32 0.0, %v1489
  %v2438 = vsub.f32 0.0, %v1494
  %v2439 = vsub.f32 0.0, %v1497
  %v2440 = vsub.f32 0.0, %v1502
  %v2441 = vsub.f32 0.0, %v1505
  %v2442 = vsub.f32 0.0, %v1510
  %v2443 = vsub.f32 0.0, %v1513
  %v2444 = vsub.f32 0.0, %v1518
  %v2445 = vsub.f32 0.0, %v1521
  %v2446 = vsub.f32 0.0, %v1526
  %v2447 = vsub.f32 0.0, %v1529
  %v2448 = vsub.f32 0.0, %v1534
  %v2449 = vsub.f32 0.0, %v1537
  %v2450 = vsub.f32 0.0, %v1542
  %v2451 = vsub.f32 0.0, %v1545
  %v2452 = vsub.f32 0.0, %v1550
  %v2453 = vsub.f32 0.0, %v1553
  %v2454 = vsub.f32 0.0, %v1558
  %v2455 = vsub.f32 0.0, %v1561
  %v2456 = vsub.f32 0.0, %v1566
  %v2457 = vsub.f32 0.0, %v1569
  %v2458 = vsub.f32 0.0, %v1574
  %v2459 = vsub.f32 0.0, %v1577
  %v2460 = vsub.f32 0.0, %v1582
  %v2461 = vsub.f32 0.0, %v1585
  %v2462 = vsub.f32 0.0, %v1590
  %v2463 = vsub.f32 0.0, %v1593
  %v2464 = vsub.f32 0.0, %v1598
  %v2465 = vsub.f32 0.0, %v1601
  %v2466 = vsub.f32 0.0, %v1606
  %v2467 = vsub.f32 0.0, %v1609
  %v2468 = vsub.f32 0.0, %v1614
  %v2469 = vsub.f32 0.0, %v1617
  %v2470 = vsub.f32 0.0, %v1622
  %v2471 = vsub.f32 0.0, %v1625
  %v2472 = vsub.f32 0.0, %v1630
  %v2473 = vsub.f32 0.0, %v1633
  %v2474 = vsub.f32 0.0, %v1638
  %v2475 = vsub.f32 0.0, %v1641
  %v2476 = vsub.f32 0.0, %v1646
  %v2477 = vsub.f32 0.0, %v1649
  %v2478 = vsub.f32 0.0, %v1654
  %v2479 = vsub.f32 0.0, %v1657
  %v2480 = vsub.f32 0.0, %v1662
  %v2481 = vsub.f32 0.0, %v1665
  %v2482 = vsub.f32 0.0, %v1670
  %v2483 = vsub.f32 0.0, %v1673
  %v2484 = vsub.f32 0.0, %v1678
  %v2485 = vsub.f32 0.0, %v1681
  %v2486 = vsub.f32 0.0, %v1686
  %v2487 = vsub.f32 0.0, %v1689
  %v2488 = vsub.f32 0.0, %v1694
  %v2489 = vsub.f32 0.0, %v1697
  %v2490 = vsub.f32 0.0, %v1702
  %v2491 = vsub.f32 0.0, %v1705
  %v2492 = vsub.f32 0.0, %v1710
  %v2493 = vsub.f32 0.0, %v1713
  %v2494 = vsub.f32 0.0, %v1718
  %v2495 = vsub.f32 0.0, %v1721
  %v2496 = vsub.f32 0.0, %v1726
  %v2497 = vsub.f32 0.0, %v1729
  %v2498 = vsub.f32 0.0, %v1734
  %v2499 = vsub.f32 0.0, %v1737
  %v2500 = vsub.f32 0.0, %v1742
  %v2501 = vsub.f32 0.0, %v1745
  %v2502 = vsub.f32 0.0, %v1750
  %v2503 = vsub.f32 0.0, %v1753
  %v2504 = vsub.f32 0.0, %v1758
  %v2505 = vsub.f32 0.0, %v1761
  %v2506 = vsub.f32 0.0, %v1766
  %v2507 = vsub.f32 0.0, %v1769
  %v2508 = vsub.f32 0.0, %v1774
  %v2509 = vsub.f32 0.0, %v1777
  %v2510 = vsub.f32 0.0, %v1782
  %v2511 = vsub.f32 0.0, %v1785
  %v2512 = vsub.f32 0.0, %v1790
  %v2513 = vsub.f32 0.0, %v1793
  %v2514 = vsub.f32 0.0, %v1798
  %v2515 = vsub.f32 0.0, %v1801
  %v2516 = vsub.f32 0.0, %v1806
  %v2517 = vsub.f32 0.0, %v1809
  %v2518 = vsub.f32 0.0, %v1814
  %v2519 = vsub.f32 0.0, %v1817
  %v2520 = vsub.f32 0.0, %v1822
  %v2521 = vsub.f32 0.0, %v1825
  %v2522 = vsub.f32 0.0, %v1830
  %v2523 = vsub.f32 0.0, %v1833
  %v2524 = vsub.f32 0.0, %v1838
  %v2525 = vsub.f32 0.0, %v1841
  %v2526 = vsub.f32 0.0, %v1846
  %v2527 = vsub.f32 0.0, %v1849
  %v2528 = vsub.f32 0.0, %v1854
  %v2529 = vsub.f32 0.0, %v1857
  %v2530 = vsub.f32 0.0, %v1862
  %v2531 = vsub.f32 0.0, %v1865
  %v2532 = vsub.f32 0.0, %v1870
  %v2533 = vsub.f32 0.0, %v1873
  %v2534 = vsub.f32 0.0, %v1878
  %v2535 = vsub.f32 0.0, %v1881
  %v2536 = vsub.f32 0.0, %v1886
  %v2537 = vsub.f32 0.0, %v1889
  %v2538 = vsub.f32 0.0, %v1894
  %v2539 = vsub.f32 0.0, %v1897
  %v2540 = vsub.f32 0.0, %v1902
  %v2541 = vsub.f32 0.0, %v1905
  %v2542 = vsub.f32 0.0, %v1910
  %v2543 = vsub.f32 0.0, %v1913
  %v2544 = vsub.f32 0.0, %v1918
  %v2545 = vsub.f32 0.0, %v1921
  %v2546 = vsub.f32 0.0, %v1926
  %v2547 = vsub.f32 0.0, %v1929
  %v2548 = vsub.f32 0.0, %v1934
  %v2549 = vsub.f32 0.0, %v1937
  %v2550 = vsub.f32 0.0, %v1942
  %v2551 = vsub.f32 0.0, %v1945
  %v2552 = vsub.f32 0.0, %v1950
  %v2553 = vsub.f32 0.0, %v1953
  %v2554 = vsub.f32 0.0, %v1958
  %v2555 = vsub.f32 0.0, %v1961
  %v2556 = vsub.f32 0.0, %v1966
  %v2557 = vsub.f32 0.0, %v1969
  %v2558 = vsub.f32 0.0, %v1974
  %v2559 = vsub.f32 0.0, %v1977
  %v2560 = vsub.f32 0.0, %v1982
  %v2561 = vsub.f32 0.0, %v1985
  %v2562 = vsub.f32 0.0, %v1990
  %v2563 = vsub.f32 0.0, %v1993
  %v2564 = vsub.f32 0.0, %v1998
  %v2565 = vsub.f32 0.0, %v2001
  %v2566 = vsub.f32 0.0, %v2006
  %v2567 = vsub.f32 0.0, %v2009
  %v2568 = vsub.f32 0.0, %v2014
  %v2569 = vsub.f32 0.0, %v2017
  %v2570 = vsub.f32 0.0, %v2022
  %v2571 = vsub.f32 0.0, %v2025
  %v2572 = vsub.f32 0.0, %v2030
  %v2573 = vsub.f32 0.0, %v2033
  %v2574 = vsub.f32 0.0, %v2038
  %v2575 = vsub.f32 0.0, %v2041
  %v2576 = vsub.f32 0.0, %v2046
  %v2577 = vsub.f32 0.0, %v2049
  %v2578 = vsub.f32 0.0, %v2054
  %v2579 = vsub.f32 0.0, %v2057
  %v2580 = vsub.f32 0.0, %v2062
  %v2581 = vsub.f32 0.0, %v2065
  %v2582 = vsub.f32 0.0, %v2070
  %v2583 = vsub.f32 0.0, %v2073
  %v2584 = vsub.f32 0.0, %v2078
  %v2585 = vsub.f32 0.0, %v2081
  %v2586 = vsub.f32 0.0, %v2086
  %v2587 = vsub.f32 0.0, %v2089
  %v2588 = vsub.f32 0.0, %v2094
  %v2589 = vsub.f32 0.0, %v2097
  %v2590 = vsub.f32 0.0, %v2102
  %v2591 = vsub.f32 0.0, %v2105
  %v2592 = vsub.f32 0.0, %v2110
  %v2593 = vsub.f32 0.0, %v2113
  %v2594 = vsub.f32 0.0, %v2118
  %v2595 = vsub.f32 0.0, %v2121
  %v2596 = vsub.f32 0.0, %v2126
  %v2597 = vsub.f32 0.0, %v2129
  %v2598 = vsub.f32 0.0, %v2134
  %v2599 = vsub.f32 0.0, %v2137
  %v2600 = vsub.f32 0.0, %v2142
  %v2601 = vsub.f32 0.0, %v2145
  %v2602 = vsub.f32 0.0, %v2150
  %v2603 = vsub.f32 0.0, %v2153
  %v2604 = vsub.f32 0.0, %v2158
  %v2605 = vsub.f32 0.0, %v2161
  %v2606 = vsub.f32 0.0, %v2166
  %v2607 = vsub.f32 0.0, %v2169
  %v2608 = vsub.f32 0.0, %v2174
  %v2609 = vsub.f32 0.0, %v2177
  %v2610 = vsub.f32 0.0, %v2182
  %v2611 = vsub.f32 0.0, %v2185
  %v2612 = vsub.f32 0.0, %v2190
  %v2613 = vsub.f32 0.0, %v2193
  %v2614 = vsub.f32 0.0, %v2198
  %v2615 = vsub.f32 0.0, %v2201
  %v2616 = vsub.f32 0.0, %v2206
  %v2617 = vsub.f32 0.0, %v2209
  %v2618 = vsub.f32 0.0, %v2214
  %v2619 = vsub.f32 0.0, %v2217
  %v2620 = vsub.f32 0.0, %v2222
  %v2621 = vsub.f32 0.0, %v2225
  %v2622 = vsub.f32 0.0, %v2230
  %v2623 = vsub.f32 0.0, %v2233
  %v2624 = vsub.f32 0.0, %v2238
  %v2625 = vsub.f32 0.0, %v2241
  %v2626 = vsub.f32 0.0, %v2246
  %v2627 = vsub.f32 0.0, %v2249
  %v2628 = vsub.f32 0.0, %v2254
  %v2629 = vsub.f32 0.0, %v2257
  %v2630 = vsub.f32 0.0, %v2262
  %v2631 = vsub.f32 0.0, %v2265
  %v2632 = vsub.f32 0.0, %v2270
  %v2633 = vsub.f32 0.0, %v2273
  %v2634 = vsub.f32 0.0, %v2278
  %v2635 = vsub.f32 0.0, %v2281
  %v2636 = vsub.f32 0.0, %v2286
  %v2637 = vsub.f32 0.0, %v2289
  %v2638 = vsub.f32 0.0, %v2294
  %v2639 = vsub.f32 0.0, %v2297
  %v2640 = vsub.f32 0.0, %v2302
  %v2641 = vsub.f32 0.0, %v2305
  %v2642 = vsub.f32 0.0, %v2310
  %v2643 = vsub.f32 0.0, %v2313
  %v2644 = vsub.f32 0.0, %v2318
  %v2645 = vsub.f32 0.0, %v2321
  %v2646 = vsub.f32 0.0, %v2326
  %v2647 = vsub.f32 0.0, %v2329
  %v2648 = vsub.f32 0.0, %v2334
  %v2649 = vsub.f32 0.0, %v2337
  %v2650 = vsub.f32 0.0, %v2342
  %v2651 = vsub.f32 0.0, %v2345
  %v2652 = vsub.f32 0.0, %v2350
  %v2653 = vsub.f32 0.0, %v2353
  %v2654 = vsub.f32 0.0, %v2358
  %v2655 = vsub.f32 0.0, %v2361
  %v2656 = vsub.f32 0.0, %v2366
  %v2657 = vsub.f32 0.0, %v2369
  %v2658 = vsub.f32 0.0, %v2374
  %v2659 = vsub.f32 0.0, %v2377
  %v2660 = vsub.f32 0.0, %v2382
  %v2661 = vsub.f32 0.0, %v2385
  %v2662 = vsub.f32 0.0, %v2390
  %v2663 = vsub.f32 0.0, %v2393
  %v2664 = vsub.f32 0.0, %v2398
  %v2665 = vsub.f32 0.0, %v2401
  %v2666 = vsub.f32 0.0, %v2406
  %v2667 = vsub.f32 0.0, %v2409
  %v2668 = vmul.f32 %v2412, 1.442695
  %v2669 = vpow.pop %v2668
  %v2670 = vmul.f32 %v2413, 1.442695
  %v2671 = vpow.pop %v2670
  %v2672 = vmul.f32 %v2414, 1.442695
  %v2673 = vpow.pop %v2672
  %v2674 = vmul.f32 %v2415, 1.442695
  %v2675 = vpow.pop %v2674
  %v2676 = vmul.f32 %v2416, 1.442695
  %v2677 = vpow.pop %v2676
  %v2678 = vmul.f32 %v2417, 1.442695
  %v2679 = vpow.pop %v2678
  %v2680 = vmul.f32 %v2418, 1.442695
  %v2681 = vpow.pop %v2680
  %v2682 = vmul.f32 %v2419, 1.442695
  %v2683 = vpow.pop %v2682
  %v2684 = vmul.f32 %v2420, 1.442695
  %v2685 = vpow.pop %v2684
  %v2686 = vmul.f32 %v2421, 1.442695
  %v2687 = vpow.pop %v2686
  %v2688 = vmul.f32 %v2422, 1.442695
  %v2689 = vpow.pop %v2688
  %v2690 = vmul.f32 %v2423, 1.442695
  %v2691 = vpow.pop %v2690
  %v2692 = vmul.f32 %v2424, 1.442695
  %v2693 = vpow.pop %v2692
  %v2694 = vmul.f32 %v2425, 1.442695
  %v2695 = vpow.pop %v2694
  %v2696 = vmul.f32 %v2426, 1.442695
  %v2697 = vpow.pop %v2696
  %v2698 = vmul.f32 %v2427, 1.442695
  %v2699 = vpow.pop %v2698
  %v2700 = vmul.f32 %v2428, 1.442695
  %v2701 = vpow.pop %v2700
  %v2702 = vmul.f32 %v2429, 1.442695
  %v2703 = vpow.pop %v2702
  %v2704 = vmul.f32 %v2430, 1.442695
  %v2705 = vpow.pop %v2704
  %v2706 = vmul.f32 %v2431, 1.442695
  %v2707 = vpow.pop %v2706
  %v2708 = vmul.f32 %v2432, 1.442695
  %v2709 = vpow.pop %v2708
  %v2710 = vmul.f32 %v2433, 1.442695
  %v2711 = vpow.pop %v2710
  %v2712 = vmul.f32 %v2434, 1.442695
  %v2713 = vpow.pop %v2712
  %v2714 = vmul.f32 %v2435, 1.442695
  %v2715 = vpow.pop %v2714
  %v2716 = vmul.f32 %v2436, 1.442695
  %v2717 = vpow.pop %v2716
  %v2718 = vmul.f32 %v2437, 1.442695
  %v2719 = vpow.pop %v2718
  %v2720 = vmul.f32 %v2438, 1.442695
  %v2721 = vpow.pop %v2720
  %v2722 = vmul.f32 %v2439, 1.442695
  %v2723 = vpow.pop %v2722
  %v2724 = vmul.f32 %v2440, 1.442695
  %v2725 = vpow.pop %v2724
  %v2726 = vmul.f32 %v2441, 1.442695
  %v2727 = vpow.pop %v2726
  %v2728 = vmul.f32 %v2442, 1.442695
  %v2729 = vpow.pop %v2728
  %v2730 = vmul.f32 %v2443, 1.442695
  %v2731 = vpow.pop %v2730
  %v2732 = vmul.f32 %v2444, 1.442695
  %v2733 = vpow.pop %v2732
  %v2734 = vmul.f32 %v2445, 1.442695
  %v2735 = vpow.pop %v2734
  %v2736 = vmul.f32 %v2446, 1.442695
  %v2737 = vpow.pop %v2736
  %v2738 = vmul.f32 %v2447, 1.442695
  %v2739 = vpow.pop %v2738
  %v2740 = vmul.f32 %v2448, 1.442695
  %v2741 = vpow.pop %v2740
  %v2742 = vmul.f32 %v2449, 1.442695
  %v2743 = vpow.pop %v2742
  %v2744 = vmul.f32 %v2450, 1.442695
  %v2745 = vpow.pop %v2744
  %v2746 = vmul.f32 %v2451, 1.442695
  %v2747 = vpow.pop %v2746
  %v2748 = vmul.f32 %v2452, 1.442695
  %v2749 = vpow.pop %v2748
  %v2750 = vmul.f32 %v2453, 1.442695
  %v2751 = vpow.pop %v2750
  %v2752 = vmul.f32 %v2454, 1.442695
  %v2753 = vpow.pop %v2752
  %v2754 = vmul.f32 %v2455, 1.442695
  %v2755 = vpow.pop %v2754
  %v2756 = vmul.f32 %v2456, 1.442695
  %v2757 = vpow.pop %v2756
  %v2758 = vmul.f32 %v2457, 1.442695
  %v2759 = vpow.pop %v2758
  %v2760 = vmul.f32 %v2458, 1.442695
  %v2761 = vpow.pop %v2760
  %v2762 = vmul.f32 %v2459, 1.442695
  %v2763 = vpow.pop %v2762
  %v2764 = vmul.f32 %v2460, 1.442695
  %v2765 = vpow.pop %v2764
  %v2766 = vmul.f32 %v2461, 1.442695
  %v2767 = vpow.pop %v2766
  %v2768 = vmul.f32 %v2462, 1.442695
  %v2769 = vpow.pop %v2768
  %v2770 = vmul.f32 %v2463, 1.442695
  %v2771 = vpow.pop %v2770
  %v2772 = vmul.f32 %v2464, 1.442695
  %v2773 = vpow.pop %v2772
  %v2774 = vmul.f32 %v2465, 1.442695
  %v2775 = vpow.pop %v2774
  %v2776 = vmul.f32 %v2466, 1.442695
  %v2777 = vpow.pop %v2776
  %v2778 = vmul.f32 %v2467, 1.442695
  %v2779 = vpow.pop %v2778
  %v2780 = vmul.f32 %v2468, 1.442695
  %v2781 = vpow.pop %v2780
  %v2782 = vmul.f32 %v2469, 1.442695
  %v2783 = vpow.pop %v2782
  %v2784 = vmul.f32 %v2470, 1.442695
  %v2785 = vpow.pop %v2784
  %v2786 = vmul.f32 %v2471, 1.442695
  %v2787 = vpow.pop %v2786
  %v2788 = vmul.f32 %v2472, 1.442695
  %v2789 = vpow.pop %v2788
  %v2790 = vmul.f32 %v2473, 1.442695
  %v2791 = vpow.pop %v2790
  %v2792 = vmul.f32 %v2474, 1.442695
  %v2793 = vpow.pop %v2792
  %v2794 = vmul.f32 %v2475, 1.442695
  %v2795 = vpow.pop %v2794
  %v2796 = vmul.f32 %v2476, 1.442695
  %v2797 = vpow.pop %v2796
  %v2798 = vmul.f32 %v2477, 1.442695
  %v2799 = vpow.pop %v2798
  %v2800 = vmul.f32 %v2478, 1.442695
  %v2801 = vpow.pop %v2800
  %v2802 = vmul.f32 %v2479, 1.442695
  %v2803 = vpow.pop %v2802
  %v2804 = vmul.f32 %v2480, 1.442695
  %v2805 = vpow.pop %v2804
  %v2806 = vmul.f32 %v2481, 1.442695
  %v2807 = vpow.pop %v2806
  %v2808 = vmul.f32 %v2482, 1.442695
  %v2809 = vpow.pop %v2808
  %v2810 = vmul.f32 %v2483, 1.442695
  %v2811 = vpow.pop %v2810
  %v2812 = vmul.f32 %v2484, 1.442695
  %v2813 = vpow.pop %v2812
  %v2814 = vmul.f32 %v2485, 1.442695
  %v2815 = vpow.pop %v2814
  %v2816 = vmul.f32 %v2486, 1.442695
  %v2817 = vpow.pop %v2816
  %v2818 = vmul.f32 %v2487, 1.442695
  %v2819 = vpow.pop %v2818
  %v2820 = vmul.f32 %v2488, 1.442695
  %v2821 = vpow.pop %v2820
  %v2822 = vmul.f32 %v2489, 1.442695
  %v2823 = vpow.pop %v2822
  %v2824 = vmul.f32 %v2490, 1.442695
  %v2825 = vpow.pop %v2824
  %v2826 = vmul.f32 %v2491, 1.442695
  %v2827 = vpow.pop %v2826
  %v2828 = vmul.f32 %v2492, 1.442695
  %v2829 = vpow.pop %v2828
  %v2830 = vmul.f32 %v2493, 1.442695
  %v2831 = vpow.pop %v2830
  %v2832 = vmul.f32 %v2494, 1.442695
  %v2833 = vpow.pop %v2832
  %v2834 = vmul.f32 %v2495, 1.442695
  %v2835 = vpow.pop %v2834
  %v2836 = vmul.f32 %v2496, 1.442695
  %v2837 = vpow.pop %v2836
  %v2838 = vmul.f32 %v2497, 1.442695
  %v2839 = vpow.pop %v2838
  %v2840 = vmul.f32 %v2498, 1.442695
  %v2841 = vpow.pop %v2840
  %v2842 = vmul.f32 %v2499, 1.442695
  %v2843 = vpow.pop %v2842
  %v2844 = vmul.f32 %v2500, 1.442695
  %v2845 = vpow.pop %v2844
  %v2846 = vmul.f32 %v2501, 1.442695
  %v2847 = vpow.pop %v2846
  %v2848 = vmul.f32 %v2502, 1.442695
  %v2849 = vpow.pop %v2848
  %v2850 = vmul.f32 %v2503, 1.442695
  %v2851 = vpow.pop %v2850
  %v2852 = vmul.f32 %v2504, 1.442695
  %v2853 = vpow.pop %v2852
  %v2854 = vmul.f32 %v2505, 1.442695
  %v2855 = vpow.pop %v2854
  %v2856 = vmul.f32 %v2506, 1.442695
  %v2857 = vpow.pop %v2856
  %v2858 = vmul.f32 %v2507, 1.442695
  %v2859 = vpow.pop %v2858
  %v2860 = vmul.f32 %v2508, 1.442695
  %v2861 = vpow.pop %v2860
  %v2862 = vmul.f32 %v2509, 1.442695
  %v2863 = vpow.pop %v2862
  %v2864 = vmul.f32 %v2510, 1.442695
  %v2865 = vpow.pop %v2864
  %v2866 = vmul.f32 %v2511, 1.442695
  %v2867 = vpow.pop %v2866
  %v2868 = vmul.f32 %v2512, 1.442695
  %v2869 = vpow.pop %v2868
  %v2870 = vmul.f32 %v2513, 1.442695
  %v2871 = vpow.pop %v2870
  %v2872 = vmul.f32 %v2514, 1.442695
  %v2873 = vpow.pop %v2872
  %v2874 = vmul.f32 %v2515, 1.442695
  %v2875 = vpow.pop %v2874
  %v2876 = vmul.f32 %v2516, 1.442695
  %v2877 = vpow.pop %v2876
  %v2878 = vmul.f32 %v2517, 1.442695
  %v2879 = vpow.pop %v2878
  %v2880 = vmul.f32 %v2518, 1.442695
  %v2881 = vpow.pop %v2880
  %v2882 = vmul.f32 %v2519, 1.442695
  %v2883 = vpow.pop %v2882
  %v2884 = vmul.f32 %v2520, 1.442695
  %v2885 = vpow.pop %v2884
  %v2886 = vmul.f32 %v2521, 1.442695
  %v2887 = vpow.pop %v2886
  %v2888 = vmul.f32 %v2522, 1.442695
  %v2889 = vpow.pop %v2888
  %v2890 = vmul.f32 %v2523, 1.442695
  %v2891 = vpow.pop %v2890
  %v2892 = vmul.f32 %v2524, 1.442695
  %v2893 = vpow.pop %v2892
  %v2894 = vmul.f32 %v2525, 1.442695
  %v2895 = vpow.pop %v2894
  %v2896 = vmul.f32 %v2526, 1.442695
  %v2897 = vpow.pop %v2896
  %v2898 = vmul.f32 %v2527, 1.442695
  %v2899 = vpow.pop %v2898
  %v2900 = vmul.f32 %v2528, 1.442695
  %v2901 = vpow.pop %v2900
  %v2902 = vmul.f32 %v2529, 1.442695
  %v2903 = vpow.pop %v2902
  %v2904 = vmul.f32 %v2530, 1.442695
  %v2905 = vpow.pop %v2904
  %v2906 = vmul.f32 %v2531, 1.442695
  %v2907 = vpow.pop %v2906
  %v2908 = vmul.f32 %v2532, 1.442695
  %v2909 = vpow.pop %v2908
  %v2910 = vmul.f32 %v2533, 1.442695
  %v2911 = vpow.pop %v2910
  %v2912 = vmul.f32 %v2534, 1.442695
  %v2913 = vpow.pop %v2912
  %v2914 = vmul.f32 %v2535, 1.442695
  %v2915 = vpow.pop %v2914
  %v2916 = vmul.f32 %v2536, 1.442695
  %v2917 = vpow.pop %v2916
  %v2918 = vmul.f32 %v2537, 1.442695
  %v2919 = vpow.pop %v2918
  %v2920 = vmul.f32 %v2538, 1.442695
  %v2921 = vpow.pop %v2920
  %v2922 = vmul.f32 %v2539, 1.442695
  %v2923 = vpow.pop %v2922
  %v2924 = vmul.f32 %v2540, 1.442695
  %v2925 = vpow.pop %v2924
  %v2926 = vmul.f32 %v2541, 1.442695
  %v2927 = vpow.pop %v2926
  %v2928 = vmul.f32 %v2542, 1.442695
  %v2929 = vpow.pop %v2928
  %v2930 = vmul.f32 %v2543, 1.442695
  %v2931 = vpow.pop %v2930
  %v2932 = vmul.f32 %v2544, 1.442695
  %v2933 = vpow.pop %v2932
  %v2934 = vmul.f32 %v2545, 1.442695
  %v2935 = vpow.pop %v2934
  %v2936 = vmul.f32 %v2546, 1.442695
  %v2937 = vpow.pop %v2936
  %v2938 = vmul.f32 %v2547, 1.442695
  %v2939 = vpow.pop %v2938
  %v2940 = vmul.f32 %v2548, 1.442695
  %v2941 = vpow.pop %v2940
  %v2942 = vmul.f32 %v2549, 1.442695
  %v2943 = vpow.pop %v2942
  %v2944 = vmul.f32 %v2550, 1.442695
  %v2945 = vpow.pop %v2944
  %v2946 = vmul.f32 %v2551, 1.442695
  %v2947 = vpow.pop %v2946
  %v2948 = vmul.f32 %v2552, 1.442695
  %v2949 = vpow.pop %v2948
  %v2950 = vmul.f32 %v2553, 1.442695
  %v2951 = vpow.pop %v2950
  %v2952 = vmul.f32 %v2554, 1.442695
  %v2953 = vpow.pop %v2952
  %v2954 = vmul.f32 %v2555, 1.442695
  %v2955 = vpow.pop %v2954
  %v2956 = vmul.f32 %v2556, 1.442695
  %v2957 = vpow.pop %v2956
  %v2958 = vmul.f32 %v2557, 1.442695
  %v2959 = vpow.pop %v2958
  %v2960 = vmul.f32 %v2558, 1.442695
  %v2961 = vpow.pop %v2960
  %v2962 = vmul.f32 %v2559, 1.442695
  %v2963 = vpow.pop %v2962
  %v2964 = vmul.f32 %v2560, 1.442695
  %v2965 = vpow.pop %v2964
  %v2966 = vmul.f32 %v2561, 1.442695
  %v2967 = vpow.pop %v2966
  %v2968 = vmul.f32 %v2562, 1.442695
  %v2969 = vpow.pop %v2968
  %v2970 = vmul.f32 %v2563, 1.442695
  %v2971 = vpow.pop %v2970
  %v2972 = vmul.f32 %v2564, 1.442695
  %v2973 = vpow.pop %v2972
  %v2974 = vmul.f32 %v2565, 1.442695
  %v2975 = vpow.pop %v2974
  %v2976 = vmul.f32 %v2566, 1.442695
  %v2977 = vpow.pop %v2976
  %v2978 = vmul.f32 %v2567, 1.442695
  %v2979 = vpow.pop %v2978
  %v2980 = vmul.f32 %v2568, 1.442695
  %v2981 = vpow.pop %v2980
  %v2982 = vmul.f32 %v2569, 1.442695
  %v2983 = vpow.pop %v2982
  %v2984 = vmul.f32 %v2570, 1.442695
  %v2985 = vpow.pop %v2984
  %v2986 = vmul.f32 %v2571, 1.442695
  %v2987 = vpow.pop %v2986
  %v2988 = vmul.f32 %v2572, 1.442695
  %v2989 = vpow.pop %v2988
  %v2990 = vmul.f32 %v2573, 1.442695
  %v2991 = vpow.pop %v2990
  %v2992 = vmul.f32 %v2574, 1.442695
  %v2993 = vpow.pop %v2992
  %v2994 = vmul.f32 %v2575, 1.442695
  %v2995 = vpow.pop %v2994
  %v2996 = vmul.f32 %v2576, 1.442695
  %v2997 = vpow.pop %v2996
  %v2998 = vmul.f32 %v2577, 1.442695
  %v2999 = vpow.pop %v2998
  %v3000 = vmul.f32 %v2578, 1.442695
  %v3001 = vpow.pop %v3000
  %v3002 = vmul.f32 %v2579, 1.442695
  %v3003 = vpow.pop %v3002
  %v3004 = vmul.f32 %v2580, 1.442695
  %v3005 = vpow.pop %v3004
  %v3006 = vmul.f32 %v2581, 1.442695
  %v3007 = vpow.pop %v3006
  %v3008 = vmul.f32 %v2582, 1.442695
  %v3009 = vpow.pop %v3008
  %v3010 = vmul.f32 %v2583, 1.442695
  %v3011 = vpow.pop %v3010
  %v3012 = vmul.f32 %v2584, 1.442695
  %v3013 = vpow.pop %v3012
  %v3014 = vmul.f32 %v2585, 1.442695
  %v3015 = vpow.pop %v3014
  %v3016 = vmul.f32 %v2586, 1.442695
  %v3017 = vpow.pop %v3016
  %v3018 = vmul.f32 %v2587, 1.442695
  %v3019 = vpow.pop %v3018
  %v3020 = vmul.f32 %v2588, 1.442695
  %v3021 = vpow.pop %v3020
  %v3022 = vmul.f32 %v2589, 1.442695
  %v3023 = vpow.pop %v3022
  %v3024 = vmul.f32 %v2590, 1.442695
  %v3025 = vpow.pop %v3024
  %v3026 = vmul.f32 %v2591, 1.442695
  %v3027 = vpow.pop %v3026
  %v3028 = vmul.f32 %v2592, 1.442695
  %v3029 = vpow.pop %v3028
  %v3030 = vmul.f32 %v2593, 1.442695
  %v3031 = vpow.pop %v3030
  %v3032 = vmul.f32 %v2594, 1.442695
  %v3033 = vpow.pop %v3032
  %v3034 = vmul.f32 %v2595, 1.442695
  %v3035 = vpow.pop %v3034
  %v3036 = vmul.f32 %v2596, 1.442695
  %v3037 = vpow.pop %v3036
  %v3038 = vmul.f32 %v2597, 1.442695
  %v3039 = vpow.pop %v3038
  %v3040 = vmul.f32 %v2598, 1.442695
  %v3041 = vpow.pop %v3040
  %v3042 = vmul.f32 %v2599, 1.442695
  %v3043 = vpow.pop %v3042
  %v3044 = vmul.f32 %v2600, 1.442695
  %v3045 = vpow.pop %v3044
  %v3046 = vmul.f32 %v2601, 1.442695
  %v3047 = vpow.pop %v3046
  %v3048 = vmul.f32 %v2602, 1.442695
  %v3049 = vpow.pop %v3048
  %v3050 = vmul.f32 %v2603, 1.442695
  %v3051 = vpow.pop %v3050
  %v3052 = vmul.f32 %v2604, 1.442695
  %v3053 = vpow.pop %v3052
  %v3054 = vmul.f32 %v2605, 1.442695
  %v3055 = vpow.pop %v3054
  %v3056 = vmul.f32 %v2606, 1.442695
  %v3057 = vpow.pop %v3056
  %v3058 = vmul.f32 %v2607, 1.442695
  %v3059 = vpow.pop %v3058
  %v3060 = vmul.f32 %v2608, 1.442695
  %v3061 = vpow.pop %v3060
  %v3062 = vmul.f32 %v2609, 1.442695
  %v3063 = vpow.pop %v3062
  %v3064 = vmul.f32 %v2610, 1.442695
  %v3065 = vpow.pop %v3064
  %v3066 = vmul.f32 %v2611, 1.442695
  %v3067 = vpow.pop %v3066
  %v3068 = vmul.f32 %v2612, 1.442695
  %v3069 = vpow.pop %v3068
  %v3070 = vmul.f32 %v2613, 1.442695
  %v3071 = vpow.pop %v3070
  %v3072 = vmul.f32 %v2614, 1.442695
  %v3073 = vpow.pop %v3072
  %v3074 = vmul.f32 %v2615, 1.442695
  %v3075 = vpow.pop %v3074
  %v3076 = vmul.f32 %v2616, 1.442695
  %v3077 = vpow.pop %v3076
  %v3078 = vmul.f32 %v2617, 1.442695
  %v3079 = vpow.pop %v3078
  %v3080 = vmul.f32 %v2618, 1.442695
  %v3081 = vpow.pop %v3080
  %v3082 = vmul.f32 %v2619, 1.442695
  %v3083 = vpow.pop %v3082
  %v3084 = vmul.f32 %v2620, 1.442695
  %v3085 = vpow.pop %v3084
  %v3086 = vmul.f32 %v2621, 1.442695
  %v3087 = vpow.pop %v3086
  %v3088 = vmul.f32 %v2622, 1.442695
  %v3089 = vpow.pop %v3088
  %v3090 = vmul.f32 %v2623, 1.442695
  %v3091 = vpow.pop %v3090
  %v3092 = vmul.f32 %v2624, 1.442695
  %v3093 = vpow.pop %v3092
  %v3094 = vmul.f32 %v2625, 1.442695
  %v3095 = vpow.pop %v3094
  %v3096 = vmul.f32 %v2626, 1.442695
  %v3097 = vpow.pop %v3096
  %v3098 = vmul.f32 %v2627, 1.442695
  %v3099 = vpow.pop %v3098
  %v3100 = vmul.f32 %v2628, 1.442695
  %v3101 = vpow.pop %v3100
  %v3102 = vmul.f32 %v2629, 1.442695
  %v3103 = vpow.pop %v3102
  %v3104 = vmul.f32 %v2630, 1.442695
  %v3105 = vpow.pop %v3104
  %v3106 = vmul.f32 %v2631, 1.442695
  %v3107 = vpow.pop %v3106
  %v3108 = vmul.f32 %v2632, 1.442695
  %v3109 = vpow.pop %v3108
  %v3110 = vmul.f32 %v2633, 1.442695
  %v3111 = vpow.pop %v3110
  %v3112 = vmul.f32 %v2634, 1.442695
  %v3113 = vpow.pop %v3112
  %v3114 = vmul.f32 %v2635, 1.442695
  %v3115 = vpow.pop %v3114
  %v3116 = vmul.f32 %v2636, 1.442695
  %v3117 = vpow.pop %v3116
  %v3118 = vmul.f32 %v2637, 1.442695
  %v3119 = vpow.pop %v3118
  %v3120 = vmul.f32 %v2638, 1.442695
  %v3121 = vpow.pop %v3120
  %v3122 = vmul.f32 %v2639, 1.442695
  %v3123 = vpow.pop %v3122
  %v3124 = vmul.f32 %v2640, 1.442695
  %v3125 = vpow.pop %v3124
  %v3126 = vmul.f32 %v2641, 1.442695
  %v3127 = vpow.pop %v3126
  %v3128 = vmul.f32 %v2642, 1.442695
  %v3129 = vpow.pop %v3128
  %v3130 = vmul.f32 %v2643, 1.442695
  %v3131 = vpow.pop %v3130
  %v3132 = vmul.f32 %v2644, 1.442695
  %v3133 = vpow.pop %v3132
  %v3134 = vmul.f32 %v2645, 1.442695
  %v3135 = vpow.pop %v3134
  %v3136 = vmul.f32 %v2646, 1.442695
  %v3137 = vpow.pop %v3136
  %v3138 = vmul.f32 %v2647, 1.442695
  %v3139 = vpow.pop %v3138
  %v3140 = vmul.f32 %v2648, 1.442695
  %v3141 = vpow.pop %v3140
  %v3142 = vmul.f32 %v2649, 1.442695
  %v3143 = vpow.pop %v3142
  %v3144 = vmul.f32 %v2650, 1.442695
  %v3145 = vpow.pop %v3144
  %v3146 = vmul.f32 %v2651, 1.442695
  %v3147 = vpow.pop %v3146
  %v3148 = vmul.f32 %v2652, 1.442695
  %v3149 = vpow.pop %v3148
  %v3150 = vmul.f32 %v2653, 1.442695
  %v3151 = vpow.pop %v3150
  %v3152 = vmul.f32 %v2654, 1.442695
  %v3153 = vpow.pop %v3152
  %v3154 = vmul.f32 %v2655, 1.442695
  %v3155 = vpow.pop %v3154
  %v3156 = vmul.f32 %v2656, 1.442695
  %v3157 = vpow.pop %v3156
  %v3158 = vmul.f32 %v2657, 1.442695
  %v3159 = vpow.pop %v3158
  %v3160 = vmul.f32 %v2658, 1.442695
  %v3161 = vpow.pop %v3160
  %v3162 = vmul.f32 %v2659, 1.442695
  %v3163 = vpow.pop %v3162
  %v3164 = vmul.f32 %v2660, 1.442695
  %v3165 = vpow.pop %v3164
  %v3166 = vmul.f32 %v2661, 1.442695
  %v3167 = vpow.pop %v3166
  %v3168 = vmul.f32 %v2662, 1.442695
  %v3169 = vpow.pop %v3168
  %v3170 = vmul.f32 %v2663, 1.442695
  %v3171 = vpow.pop %v3170
  %v3172 = vmul.f32 %v2664, 1.442695
  %v3173 = vpow.pop %v3172
  %v3174 = vmul.f32 %v2665, 1.442695
  %v3175 = vpow.pop %v3174
  %v3176 = vmul.f32 %v2666, 1.442695
  %v3177 = vpow.pop %v3176
  %v3178 = vmul.f32 %v2667, 1.442695
  %v3179 = vpow.pop %v3178
  %v3180 = vadd.f32 %v2669, 1.0
  %v3181 = vadd.f32 %v2671, 1.0
  %v3182 = vadd.f32 %v2673, 1.0
  %v3183 = vadd.f32 %v2675, 1.0
  %v3184 = vadd.f32 %v2677, 1.0
  %v3185 = vadd.f32 %v2679, 1.0
  %v3186 = vadd.f32 %v2681, 1.0
  %v3187 = vadd.f32 %v2683, 1.0
  %v3188 = vadd.f32 %v2685, 1.0
  %v3189 = vadd.f32 %v2687, 1.0
  %v3190 = vadd.f32 %v2689, 1.0
  %v3191 = vadd.f32 %v2691, 1.0
  %v3192 = vadd.f32 %v2693, 1.0
  %v3193 = vadd.f32 %v2695, 1.0
  %v3194 = vadd.f32 %v2697, 1.0
  %v3195 = vadd.f32 %v2699, 1.0
  %v3196 = vadd.f32 %v2701, 1.0
  %v3197 = vadd.f32 %v2703, 1.0
  %v3198 = vadd.f32 %v2705, 1.0
  %v3199 = vadd.f32 %v2707, 1.0
  %v3200 = vadd.f32 %v2709, 1.0
  %v3201 = vadd.f32 %v2711, 1.0
  %v3202 = vadd.f32 %v2713, 1.0
  %v3203 = vadd.f32 %v2715, 1.0
  %v3204 = vadd.f32 %v2717, 1.0
  %v3205 = vadd.f32 %v2719, 1.0
  %v3206 = vadd.f32 %v2721, 1.0
  %v3207 = vadd.f32 %v2723, 1.0
  %v3208 = vadd.f32 %v2725, 1.0
  %v3209 = vadd.f32 %v2727, 1.0
  %v3210 = vadd.f32 %v2729, 1.0
  %v3211 = vadd.f32 %v2731, 1.0
  %v3212 = vadd.f32 %v2733, 1.0
  %v3213 = vadd.f32 %v2735, 1.0
  %v3214 = vadd.f32 %v2737, 1.0
  %v3215 = vadd.f32 %v2739, 1.0
  %v3216 = vadd.f32 %v2741, 1.0
  %v3217 = vadd.f32 %v2743, 1.0
  %v3218 = vadd.f32 %v2745, 1.0
  %v3219 = vadd.f32 %v2747, 1.0
  %v3220 = vadd.f32 %v2749, 1.0
  %v3221 = vadd.f32 %v2751, 1.0
  %v3222 = vadd.f32 %v2753, 1.0
  %v3223 = vadd.f32 %v2755, 1.0
  %v3224 = vadd.f32 %v2757, 1.0
  %v3225 = vadd.f32 %v2759, 1.0
  %v3226 = vadd.f32 %v2761, 1.0
  %v3227 = vadd.f32 %v2763, 1.0
  %v3228 = vadd.f32 %v2765, 1.0
  %v3229 = vadd.f32 %v2767, 1.0
  %v3230 = vadd.f32 %v2769, 1.0
  %v3231 = vadd.f32 %v2771, 1.0
  %v3232 = vadd.f32 %v2773, 1.0
  %v3233 = vadd.f32 %v2775, 1.0
  %v3234 = vadd.f32 %v2777, 1.0
  %v3235 = vadd.f32 %v2779, 1.0
  %v3236 = vadd.f32 %v2781, 1.0
  %v3237 = vadd.f32 %v2783, 1.0
  %v3238 = vadd.f32 %v2785, 1.0
  %v3239 = vadd.f32 %v2787, 1.0
  %v3240 = vadd.f32 %v2789, 1.0
  %v3241 = vadd.f32 %v2791, 1.0
  %v3242 = vadd.f32 %v2793, 1.0
  %v3243 = vadd.f32 %v2795, 1.0
  %v3244 = vadd.f32 %v2797, 1.0
  %v3245 = vadd.f32 %v2799, 1.0
  %v3246 = vadd.f32 %v2801, 1.0
  %v3247 = vadd.f32 %v2803, 1.0
  %v3248 = vadd.f32 %v2805, 1.0
  %v3249 = vadd.f32 %v2807, 1.0
  %v3250 = vadd.f32 %v2809, 1.0
  %v3251 = vadd.f32 %v2811, 1.0
  %v3252 = vadd.f32 %v2813, 1.0
  %v3253 = vadd.f32 %v2815, 1.0
  %v3254 = vadd.f32 %v2817, 1.0
  %v3255 = vadd.f32 %v2819, 1.0
  %v3256 = vadd.f32 %v2821, 1.0
  %v3257 = vadd.f32 %v2823, 1.0
  %v3258 = vadd.f32 %v2825, 1.0
  %v3259 = vadd.f32 %v2827, 1.0
  %v3260 = vadd.f32 %v2829, 1.0
  %v3261 = vadd.f32 %v2831, 1.0
  %v3262 = vadd.f32 %v2833, 1.0
  %v3263 = vadd.f32 %v2835, 1.0
  %v3264 = vadd.f32 %v2837, 1.0
  %v3265 = vadd.f32 %v2839, 1.0
  %v3266 = vadd.f32 %v2841, 1.0
  %v3267 = vadd.f32 %v2843, 1.0
  %v3268 = vadd.f32 %v2845, 1.0
  %v3269 = vadd.f32 %v2847, 1.0
  %v3270 = vadd.f32 %v2849, 1.0
  %v3271 = vadd.f32 %v2851, 1.0
  %v3272 = vadd.f32 %v2853, 1.0
  %v3273 = vadd.f32 %v2855, 1.0
  %v3274 = vadd.f32 %v2857, 1.0
  %v3275 = vadd.f32 %v2859, 1.0
  %v3276 = vadd.f32 %v2861, 1.0
  %v3277 = vadd.f32 %v2863, 1.0
  %v3278 = vadd.f32 %v2865, 1.0
  %v3279 = vadd.f32 %v2867, 1.0
  %v3280 = vadd.f32 %v2869, 1.0
  %v3281 = vadd.f32 %v2871, 1.0
  %v3282 = vadd.f32 %v2873, 1.0
  %v3283 = vadd.f32 %v2875, 1.0
  %v3284 = vadd.f32 %v2877, 1.0
  %v3285 = vadd.f32 %v2879, 1.0
  %v3286 = vadd.f32 %v2881, 1.0
  %v3287 = vadd.f32 %v2883, 1.0
  %v3288 = vadd.f32 %v2885, 1.0
  %v3289 = vadd.f32 %v2887, 1.0
  %v3290 = vadd.f32 %v2889, 1.0
  %v3291 = vadd.f32 %v2891, 1.0
  %v3292 = vadd.f32 %v2893, 1.0
  %v3293 = vadd.f32 %v2895, 1.0
  %v3294 = vadd.f32 %v2897, 1.0
  %v3295 = vadd.f32 %v2899, 1.0
  %v3296 = vadd.f32 %v2901, 1.0
  %v3297 = vadd.f32 %v2903, 1.0
  %v3298 = vadd.f32 %v2905, 1.0
  %v3299 = vadd.f32 %v2907, 1.0
  %v3300 = vadd.f32 %v2909, 1.0
  %v3301 = vadd.f32 %v2911, 1.0
  %v3302 = vadd.f32 %v2913, 1.0
  %v3303 = vadd.f32 %v2915, 1.0
  %v3304 = vadd.f32 %v2917, 1.0
  %v3305 = vadd.f32 %v2919, 1.0
  %v3306 = vadd.f32 %v2921, 1.0
  %v3307 = vadd.f32 %v2923, 1.0
  %v3308 = vadd.f32 %v2925, 1.0
  %v3309 = vadd.f32 %v2927, 1.0
  %v3310 = vadd.f32 %v2929, 1.0
  %v3311 = vadd.f32 %v2931, 1.0
  %v3312 = vadd.f32 %v2933, 1.0
  %v3313 = vadd.f32 %v2935, 1.0
  %v3314 = vadd.f32 %v2937, 1.0
  %v3315 = vadd.f32 %v2939, 1.0
  %v3316 = vadd.f32 %v2941, 1.0
  %v3317 = vadd.f32 %v2943, 1.0
  %v3318 = vadd.f32 %v2945, 1.0
  %v3319 = vadd.f32 %v2947, 1.0
  %v3320 = vadd.f32 %v2949, 1.0
  %v3321 = vadd.f32 %v2951, 1.0
  %v3322 = vadd.f32 %v2953, 1.0
  %v3323 = vadd.f32 %v2955, 1.0
  %v3324 = vadd.f32 %v2957, 1.0
  %v3325 = vadd.f32 %v2959, 1.0
  %v3326 = vadd.f32 %v2961, 1.0
  %v3327 = vadd.f32 %v2963, 1.0
  %v3328 = vadd.f32 %v2965, 1.0
  %v3329 = vadd.f32 %v2967, 1.0
  %v3330 = vadd.f32 %v2969, 1.0
  %v3331 = vadd.f32 %v2971, 1.0
  %v3332 = vadd.f32 %v2973, 1.0
  %v3333 = vadd.f32 %v2975, 1.0
  %v3334 = vadd.f32 %v2977, 1.0
  %v3335 = vadd.f32 %v2979, 1.0
  %v3336 = vadd.f32 %v2981, 1.0
  %v3337 = vadd.f32 %v2983, 1.0
  %v3338 = vadd.f32 %v2985, 1.0
  %v3339 = vadd.f32 %v2987, 1.0
  %v3340 = vadd.f32 %v2989, 1.0
  %v3341 = vadd.f32 %v2991, 1.0
  %v3342 = vadd.f32 %v2993, 1.0
  %v3343 = vadd.f32 %v2995, 1.0
  %v3344 = vadd.f32 %v2997, 1.0
  %v3345 = vadd.f32 %v2999, 1.0
  %v3346 = vadd.f32 %v3001, 1.0
  %v3347 = vadd.f32 %v3003, 1.0
  %v3348 = vadd.f32 %v3005, 1.0
  %v3349 = vadd.f32 %v3007, 1.0
  %v3350 = vadd.f32 %v3009, 1.0
  %v3351 = vadd.f32 %v3011, 1.0
  %v3352 = vadd.f32 %v3013, 1.0
  %v3353 = vadd.f32 %v3015, 1.0
  %v3354 = vadd.f32 %v3017, 1.0
  %v3355 = vadd.f32 %v3019, 1.0
  %v3356 = vadd.f32 %v3021, 1.0
  %v3357 = vadd.f32 %v3023, 1.0
  %v3358 = vadd.f32 %v3025, 1.0
  %v3359 = vadd.f32 %v3027, 1.0
  %v3360 = vadd.f32 %v3029, 1.0
  %v3361 = vadd.f32 %v3031, 1.0
  %v3362 = vadd.f32 %v3033, 1.0
  %v3363 = vadd.f32 %v3035, 1.0
  %v3364 = vadd.f32 %v3037, 1.0
  %v3365 = vadd.f32 %v3039, 1.0
  %v3366 = vadd.f32 %v3041, 1.0
  %v3367 = vadd.f32 %v3043, 1.0
  %v3368 = vadd.f32 %v3045, 1.0
  %v3369 = vadd.f32 %v3047, 1.0
  %v3370 = vadd.f32 %v3049, 1.0
  %v3371 = vadd.f32 %v3051, 1.0
  %v3372 = vadd.f32 %v3053, 1.0
  %v3373 = vadd.f32 %v3055, 1.0
  %v3374 = vadd.f32 %v3057, 1.0
  %v3375 = vadd.f32 %v3059, 1.0
  %v3376 = vadd.f32 %v3061, 1.0
  %v3377 = vadd.f32 %v3063, 1.0
  %v3378 = vadd.f32 %v3065, 1.0
  %v3379 = vadd.f32 %v3067, 1.0
  %v3380 = vadd.f32 %v3069, 1.0
  %v3381 = vadd.f32 %v3071, 1.0
  %v3382 = vadd.f32 %v3073, 1.0
  %v3383 = vadd.f32 %v3075, 1.0
  %v3384 = vadd.f32 %v3077, 1.0
  %v3385 = vadd.f32 %v3079, 1.0
  %v3386 = vadd.f32 %v3081, 1.0
  %v3387 = vadd.f32 %v3083, 1.0
  %v3388 = vadd.f32 %v3085, 1.0
  %v3389 = vadd.f32 %v3087, 1.0
  %v3390 = vadd.f32 %v3089, 1.0
  %v3391 = vadd.f32 %v3091, 1.0
  %v3392 = vadd.f32 %v3093, 1.0
  %v3393 = vadd.f32 %v3095, 1.0
  %v3394 = vadd.f32 %v3097, 1.0
  %v3395 = vadd.f32 %v3099, 1.0
  %v3396 = vadd.f32 %v3101, 1.0
  %v3397 = vadd.f32 %v3103, 1.0
  %v3398 = vadd.f32 %v3105, 1.0
  %v3399 = vadd.f32 %v3107, 1.0
  %v3400 = vadd.f32 %v3109, 1.0
  %v3401 = vadd.f32 %v3111, 1.0
  %v3402 = vadd.f32 %v3113, 1.0
  %v3403 = vadd.f32 %v3115, 1.0
  %v3404 = vadd.f32 %v3117, 1.0
  %v3405 = vadd.f32 %v3119, 1.0
  %v3406 = vadd.f32 %v3121, 1.0
  %v3407 = vadd.f32 %v3123, 1.0
  %v3408 = vadd.f32 %v3125, 1.0
  %v3409 = vadd.f32 %v3127, 1.0
  %v3410 = vadd.f32 %v3129, 1.0
  %v3411 = vadd.f32 %v3131, 1.0
  %v3412 = vadd.f32 %v3133, 1.0
  %v3413 = vadd.f32 %v3135, 1.0
  %v3414 = vadd.f32 %v3137, 1.0
  %v3415 = vadd.f32 %v3139, 1.0
  %v3416 = vadd.f32 %v3141, 1.0
  %v3417 = vadd.f32 %v3143, 1.0
  %v3418 = vadd.f32 %v3145, 1.0
  %v3419 = vadd.f32 %v3147, 1.0
  %v3420 = vadd.f32 %v3149, 1.0
  %v3421 = vadd.f32 %v3151, 1.0
  %v3422 = vadd.f32 %v3153, 1.0
  %v3423 = vadd.f32 %v3155, 1.0
  %v3424 = vadd.f32 %v3157, 1.0
  %v3425 = vadd.f32 %v3159, 1.0
  %v3426 = vadd.f32 %v3161, 1.0
  %v3427 = vadd.f32 %v3163, 1.0
  %v3428 = vadd.f32 %v3165, 1.0
  %v3429 = vadd.f32 %v3167, 1.0
  %v3430 = vadd.f32 %v3169, 1.0
  %v3431 = vadd.f32 %v3171, 1.0
  %v3432 = vadd.f32 %v3173, 1.0
  %v3433 = vadd.f32 %v3175, 1.0
  %v3434 = vadd.f32 %v3177, 1.0
  %v3435 = vadd.f32 %v3179, 1.0
  %v3436 = vrcp.pop %v3180
  %v3437 = vmul.f32 1.0, %v3436
  %v3438 = vrcp.pop %v3181
  %v3439 = vmul.f32 1.0, %v3438
  %v3440 = vrcp.pop %v3182
  %v3441 = vmul.f32 1.0, %v3440
  %v3442 = vrcp.pop %v3183
  %v3443 = vmul.f32 1.0, %v3442
  %v3444 = vrcp.pop %v3184
  %v3445 = vmul.f32 1.0, %v3444
  %v3446 = vrcp.pop %v3185
  %v3447 = vmul.f32 1.0, %v3446
  %v3448 = vrcp.pop %v3186
  %v3449 = vmul.f32 1.0, %v3448
  %v3450 = vrcp.pop %v3187
  %v3451 = vmul.f32 1.0, %v3450
  %v3452 = vrcp.pop %v3188
  %v3453 = vmul.f32 1.0, %v3452
  %v3454 = vrcp.pop %v3189
  %v3455 = vmul.f32 1.0, %v3454
  %v3456 = vrcp.pop %v3190
  %v3457 = vmul.f32 1.0, %v3456
  %v3458 = vrcp.pop %v3191
  %v3459 = vmul.f32 1.0, %v3458
  %v3460 = vrcp.pop %v3192
  %v3461 = vmul.f32 1.0, %v3460
  %v3462 = vrcp.pop %v3193
  %v3463 = vmul.f32 1.0, %v3462
  %v3464 = vrcp.pop %v3194
  %v3465 = vmul.f32 1.0, %v3464
  %v3466 = vrcp.pop %v3195
  %v3467 = vmul.f32 1.0, %v3466
  %v3468 = vrcp.pop %v3196
  %v3469 = vmul.f32 1.0, %v3468
  %v3470 = vrcp.pop %v3197
  %v3471 = vmul.f32 1.0, %v3470
  %v3472 = vrcp.pop %v3198
  %v3473 = vmul.f32 1.0, %v3472
  %v3474 = vrcp.pop %v3199
  %v3475 = vmul.f32 1.0, %v3474
  %v3476 = vrcp.pop %v3200
  %v3477 = vmul.f32 1.0, %v3476
  %v3478 = vrcp.pop %v3201
  %v3479 = vmul.f32 1.0, %v3478
  %v3480 = vrcp.pop %v3202
  %v3481 = vmul.f32 1.0, %v3480
  %v3482 = vrcp.pop %v3203
  %v3483 = vmul.f32 1.0, %v3482
  %v3484 = vrcp.pop %v3204
  %v3485 = vmul.f32 1.0, %v3484
  %v3486 = vrcp.pop %v3205
  %v3487 = vmul.f32 1.0, %v3486
  %v3488 = vrcp.pop %v3206
  %v3489 = vmul.f32 1.0, %v3488
  %v3490 = vrcp.pop %v3207
  %v3491 = vmul.f32 1.0, %v3490
  %v3492 = vrcp.pop %v3208
  %v3493 = vmul.f32 1.0, %v3492
  %v3494 = vrcp.pop %v3209
  %v3495 = vmul.f32 1.0, %v3494
  %v3496 = vrcp.pop %v3210
  %v3497 = vmul.f32 1.0, %v3496
  %v3498 = vrcp.pop %v3211
  %v3499 = vmul.f32 1.0, %v3498
  %v3500 = vrcp.pop %v3212
  %v3501 = vmul.f32 1.0, %v3500
  %v3502 = vrcp.pop %v3213
  %v3503 = vmul.f32 1.0, %v3502
  %v3504 = vrcp.pop %v3214
  %v3505 = vmul.f32 1.0, %v3504
  %v3506 = vrcp.pop %v3215
  %v3507 = vmul.f32 1.0, %v3506
  %v3508 = vrcp.pop %v3216
  %v3509 = vmul.f32 1.0, %v3508
  %v3510 = vrcp.pop %v3217
  %v3511 = vmul.f32 1.0, %v3510
  %v3512 = vrcp.pop %v3218
  %v3513 = vmul.f32 1.0, %v3512
  %v3514 = vrcp.pop %v3219
  %v3515 = vmul.f32 1.0, %v3514
  %v3516 = vrcp.pop %v3220
  %v3517 = vmul.f32 1.0, %v3516
  %v3518 = vrcp.pop %v3221
  %v3519 = vmul.f32 1.0, %v3518
  %v3520 = vrcp.pop %v3222
  %v3521 = vmul.f32 1.0, %v3520
  %v3522 = vrcp.pop %v3223
  %v3523 = vmul.f32 1.0, %v3522
  %v3524 = vrcp.pop %v3224
  %v3525 = vmul.f32 1.0, %v3524
  %v3526 = vrcp.pop %v3225
  %v3527 = vmul.f32 1.0, %v3526
  %v3528 = vrcp.pop %v3226
  %v3529 = vmul.f32 1.0, %v3528
  %v3530 = vrcp.pop %v3227
  %v3531 = vmul.f32 1.0, %v3530
  %v3532 = vrcp.pop %v3228
  %v3533 = vmul.f32 1.0, %v3532
  %v3534 = vrcp.pop %v3229
  %v3535 = vmul.f32 1.0, %v3534
  %v3536 = vrcp.pop %v3230
  %v3537 = vmul.f32 1.0, %v3536
  %v3538 = vrcp.pop %v3231
  %v3539 = vmul.f32 1.0, %v3538
  %v3540 = vrcp.pop %v3232
  %v3541 = vmul.f32 1.0, %v3540
  %v3542 = vrcp.pop %v3233
  %v3543 = vmul.f32 1.0, %v3542
  %v3544 = vrcp.pop %v3234
  %v3545 = vmul.f32 1.0, %v3544
  %v3546 = vrcp.pop %v3235
  %v3547 = vmul.f32 1.0, %v3546
  %v3548 = vrcp.pop %v3236
  %v3549 = vmul.f32 1.0, %v3548
  %v3550 = vrcp.pop %v3237
  %v3551 = vmul.f32 1.0, %v3550
  %v3552 = vrcp.pop %v3238
  %v3553 = vmul.f32 1.0, %v3552
  %v3554 = vrcp.pop %v3239
  %v3555 = vmul.f32 1.0, %v3554
  %v3556 = vrcp.pop %v3240
  %v3557 = vmul.f32 1.0, %v3556
  %v3558 = vrcp.pop %v3241
  %v3559 = vmul.f32 1.0, %v3558
  %v3560 = vrcp.pop %v3242
  %v3561 = vmul.f32 1.0, %v3560
  %v3562 = vrcp.pop %v3243
  %v3563 = vmul.f32 1.0, %v3562
  %v3564 = vrcp.pop %v3244
  %v3565 = vmul.f32 1.0, %v3564
  %v3566 = vrcp.pop %v3245
  %v3567 = vmul.f32 1.0, %v3566
  %v3568 = vrcp.pop %v3246
  %v3569 = vmul.f32 1.0, %v3568
  %v3570 = vrcp.pop %v3247
  %v3571 = vmul.f32 1.0, %v3570
  %v3572 = vrcp.pop %v3248
  %v3573 = vmul.f32 1.0, %v3572
  %v3574 = vrcp.pop %v3249
  %v3575 = vmul.f32 1.0, %v3574
  %v3576 = vrcp.pop %v3250
  %v3577 = vmul.f32 1.0, %v3576
  %v3578 = vrcp.pop %v3251
  %v3579 = vmul.f32 1.0, %v3578
  %v3580 = vrcp.pop %v3252
  %v3581 = vmul.f32 1.0, %v3580
  %v3582 = vrcp.pop %v3253
  %v3583 = vmul.f32 1.0, %v3582
  %v3584 = vrcp.pop %v3254
  %v3585 = vmul.f32 1.0, %v3584
  %v3586 = vrcp.pop %v3255
  %v3587 = vmul.f32 1.0, %v3586
  %v3588 = vrcp.pop %v3256
  %v3589 = vmul.f32 1.0, %v3588
  %v3590 = vrcp.pop %v3257
  %v3591 = vmul.f32 1.0, %v3590
  %v3592 = vrcp.pop %v3258
  %v3593 = vmul.f32 1.0, %v3592
  %v3594 = vrcp.pop %v3259
  %v3595 = vmul.f32 1.0, %v3594
  %v3596 = vrcp.pop %v3260
  %v3597 = vmul.f32 1.0, %v3596
  %v3598 = vrcp.pop %v3261
  %v3599 = vmul.f32 1.0, %v3598
  %v3600 = vrcp.pop %v3262
  %v3601 = vmul.f32 1.0, %v3600
  %v3602 = vrcp.pop %v3263
  %v3603 = vmul.f32 1.0, %v3602
  %v3604 = vrcp.pop %v3264
  %v3605 = vmul.f32 1.0, %v3604
  %v3606 = vrcp.pop %v3265
  %v3607 = vmul.f32 1.0, %v3606
  %v3608 = vrcp.pop %v3266
  %v3609 = vmul.f32 1.0, %v3608
  %v3610 = vrcp.pop %v3267
  %v3611 = vmul.f32 1.0, %v3610
  %v3612 = vrcp.pop %v3268
  %v3613 = vmul.f32 1.0, %v3612
  %v3614 = vrcp.pop %v3269
  %v3615 = vmul.f32 1.0, %v3614
  %v3616 = vrcp.pop %v3270
  %v3617 = vmul.f32 1.0, %v3616
  %v3618 = vrcp.pop %v3271
  %v3619 = vmul.f32 1.0, %v3618
  %v3620 = vrcp.pop %v3272
  %v3621 = vmul.f32 1.0, %v3620
  %v3622 = vrcp.pop %v3273
  %v3623 = vmul.f32 1.0, %v3622
  %v3624 = vrcp.pop %v3274
  %v3625 = vmul.f32 1.0, %v3624
  %v3626 = vrcp.pop %v3275
  %v3627 = vmul.f32 1.0, %v3626
  %v3628 = vrcp.pop %v3276
  %v3629 = vmul.f32 1.0, %v3628
  %v3630 = vrcp.pop %v3277
  %v3631 = vmul.f32 1.0, %v3630
  %v3632 = vrcp.pop %v3278
  %v3633 = vmul.f32 1.0, %v3632
  %v3634 = vrcp.pop %v3279
  %v3635 = vmul.f32 1.0, %v3634
  %v3636 = vrcp.pop %v3280
  %v3637 = vmul.f32 1.0, %v3636
  %v3638 = vrcp.pop %v3281
  %v3639 = vmul.f32 1.0, %v3638
  %v3640 = vrcp.pop %v3282
  %v3641 = vmul.f32 1.0, %v3640
  %v3642 = vrcp.pop %v3283
  %v3643 = vmul.f32 1.0, %v3642
  %v3644 = vrcp.pop %v3284
  %v3645 = vmul.f32 1.0, %v3644
  %v3646 = vrcp.pop %v3285
  %v3647 = vmul.f32 1.0, %v3646
  %v3648 = vrcp.pop %v3286
  %v3649 = vmul.f32 1.0, %v3648
  %v3650 = vrcp.pop %v3287
  %v3651 = vmul.f32 1.0, %v3650
  %v3652 = vrcp.pop %v3288
  %v3653 = vmul.f32 1.0, %v3652
  %v3654 = vrcp.pop %v3289
  %v3655 = vmul.f32 1.0, %v3654
  %v3656 = vrcp.pop %v3290
  %v3657 = vmul.f32 1.0, %v3656
  %v3658 = vrcp.pop %v3291
  %v3659 = vmul.f32 1.0, %v3658
  %v3660 = vrcp.pop %v3292
  %v3661 = vmul.f32 1.0, %v3660
  %v3662 = vrcp.pop %v3293
  %v3663 = vmul.f32 1.0, %v3662
  %v3664 = vrcp.pop %v3294
  %v3665 = vmul.f32 1.0, %v3664
  %v3666 = vrcp.pop %v3295
  %v3667 = vmul.f32 1.0, %v3666
  %v3668 = vrcp.pop %v3296
  %v3669 = vmul.f32 1.0, %v3668
  %v3670 = vrcp.pop %v3297
  %v3671 = vmul.f32 1.0, %v3670
  %v3672 = vrcp.pop %v3298
  %v3673 = vmul.f32 1.0, %v3672
  %v3674 = vrcp.pop %v3299
  %v3675 = vmul.f32 1.0, %v3674
  %v3676 = vrcp.pop %v3300
  %v3677 = vmul.f32 1.0, %v3676
  %v3678 = vrcp.pop %v3301
  %v3679 = vmul.f32 1.0, %v3678
  %v3680 = vrcp.pop %v3302
  %v3681 = vmul.f32 1.0, %v3680
  %v3682 = vrcp.pop %v3303
  %v3683 = vmul.f32 1.0, %v3682
  %v3684 = vrcp.pop %v3304
  %v3685 = vmul.f32 1.0, %v3684
  %v3686 = vrcp.pop %v3305
  %v3687 = vmul.f32 1.0, %v3686
  %v3688 = vrcp.pop %v3306
  %v3689 = vmul.f32 1.0, %v3688
  %v3690 = vrcp.pop %v3307
  %v3691 = vmul.f32 1.0, %v3690
  %v3692 = vrcp.pop %v3308
  %v3693 = vmul.f32 1.0, %v3692
  %v3694 = vrcp.pop %v3309
  %v3695 = vmul.f32 1.0, %v3694
  %v3696 = vrcp.pop %v3310
  %v3697 = vmul.f32 1.0, %v3696
  %v3698 = vrcp.pop %v3311
  %v3699 = vmul.f32 1.0, %v3698
  %v3700 = vrcp.pop %v3312
  %v3701 = vmul.f32 1.0, %v3700
  %v3702 = vrcp.pop %v3313
  %v3703 = vmul.f32 1.0, %v3702
  %v3704 = vrcp.pop %v3314
  %v3705 = vmul.f32 1.0, %v3704
  %v3706 = vrcp.pop %v3315
  %v3707 = vmul.f32 1.0, %v3706
  %v3708 = vrcp.pop %v3316
  %v3709 = vmul.f32 1.0, %v3708
  %v3710 = vrcp.pop %v3317
  %v3711 = vmul.f32 1.0, %v3710
  %v3712 = vrcp.pop %v3318
  %v3713 = vmul.f32 1.0, %v3712
  %v3714 = vrcp.pop %v3319
  %v3715 = vmul.f32 1.0, %v3714
  %v3716 = vrcp.pop %v3320
  %v3717 = vmul.f32 1.0, %v3716
  %v3718 = vrcp.pop %v3321
  %v3719 = vmul.f32 1.0, %v3718
  %v3720 = vrcp.pop %v3322
  %v3721 = vmul.f32 1.0, %v3720
  %v3722 = vrcp.pop %v3323
  %v3723 = vmul.f32 1.0, %v3722
  %v3724 = vrcp.pop %v3324
  %v3725 = vmul.f32 1.0, %v3724
  %v3726 = vrcp.pop %v3325
  %v3727 = vmul.f32 1.0, %v3726
  %v3728 = vrcp.pop %v3326
  %v3729 = vmul.f32 1.0, %v3728
  %v3730 = vrcp.pop %v3327
  %v3731 = vmul.f32 1.0, %v3730
  %v3732 = vrcp.pop %v3328
  %v3733 = vmul.f32 1.0, %v3732
  %v3734 = vrcp.pop %v3329
  %v3735 = vmul.f32 1.0, %v3734
  %v3736 = vrcp.pop %v3330
  %v3737 = vmul.f32 1.0, %v3736
  %v3738 = vrcp.pop %v3331
  %v3739 = vmul.f32 1.0, %v3738
  %v3740 = vrcp.pop %v3332
  %v3741 = vmul.f32 1.0, %v3740
  %v3742 = vrcp.pop %v3333
  %v3743 = vmul.f32 1.0, %v3742
  %v3744 = vrcp.pop %v3334
  %v3745 = vmul.f32 1.0, %v3744
  %v3746 = vrcp.pop %v3335
  %v3747 = vmul.f32 1.0, %v3746
  %v3748 = vrcp.pop %v3336
  %v3749 = vmul.f32 1.0, %v3748
  %v3750 = vrcp.pop %v3337
  %v3751 = vmul.f32 1.0, %v3750
  %v3752 = vrcp.pop %v3338
  %v3753 = vmul.f32 1.0, %v3752
  %v3754 = vrcp.pop %v3339
  %v3755 = vmul.f32 1.0, %v3754
  %v3756 = vrcp.pop %v3340
  %v3757 = vmul.f32 1.0, %v3756
  %v3758 = vrcp.pop %v3341
  %v3759 = vmul.f32 1.0, %v3758
  %v3760 = vrcp.pop %v3342
  %v3761 = vmul.f32 1.0, %v3760
  %v3762 = vrcp.pop %v3343
  %v3763 = vmul.f32 1.0, %v3762
  %v3764 = vrcp.pop %v3344
  %v3765 = vmul.f32 1.0, %v3764
  %v3766 = vrcp.pop %v3345
  %v3767 = vmul.f32 1.0, %v3766
  %v3768 = vrcp.pop %v3346
  %v3769 = vmul.f32 1.0, %v3768
  %v3770 = vrcp.pop %v3347
  %v3771 = vmul.f32 1.0, %v3770
  %v3772 = vrcp.pop %v3348
  %v3773 = vmul.f32 1.0, %v3772
  %v3774 = vrcp.pop %v3349
  %v3775 = vmul.f32 1.0, %v3774
  %v3776 = vrcp.pop %v3350
  %v3777 = vmul.f32 1.0, %v3776
  %v3778 = vrcp.pop %v3351
  %v3779 = vmul.f32 1.0, %v3778
  %v3780 = vrcp.pop %v3352
  %v3781 = vmul.f32 1.0, %v3780
  %v3782 = vrcp.pop %v3353
  %v3783 = vmul.f32 1.0, %v3782
  %v3784 = vrcp.pop %v3354
  %v3785 = vmul.f32 1.0, %v3784
  %v3786 = vrcp.pop %v3355
  %v3787 = vmul.f32 1.0, %v3786
  %v3788 = vrcp.pop %v3356
  %v3789 = vmul.f32 1.0, %v3788
  %v3790 = vrcp.pop %v3357
  %v3791 = vmul.f32 1.0, %v3790
  %v3792 = vrcp.pop %v3358
  %v3793 = vmul.f32 1.0, %v3792
  %v3794 = vrcp.pop %v3359
  %v3795 = vmul.f32 1.0, %v3794
  %v3796 = vrcp.pop %v3360
  %v3797 = vmul.f32 1.0, %v3796
  %v3798 = vrcp.pop %v3361
  %v3799 = vmul.f32 1.0, %v3798
  %v3800 = vrcp.pop %v3362
  %v3801 = vmul.f32 1.0, %v3800
  %v3802 = vrcp.pop %v3363
  %v3803 = vmul.f32 1.0, %v3802
  %v3804 = vrcp.pop %v3364
  %v3805 = vmul.f32 1.0, %v3804
  %v3806 = vrcp.pop %v3365
  %v3807 = vmul.f32 1.0, %v3806
  %v3808 = vrcp.pop %v3366
  %v3809 = vmul.f32 1.0, %v3808
  %v3810 = vrcp.pop %v3367
  %v3811 = vmul.f32 1.0, %v3810
  %v3812 = vrcp.pop %v3368
  %v3813 = vmul.f32 1.0, %v3812
  %v3814 = vrcp.pop %v3369
  %v3815 = vmul.f32 1.0, %v3814
  %v3816 = vrcp.pop %v3370
  %v3817 = vmul.f32 1.0, %v3816
  %v3818 = vrcp.pop %v3371
  %v3819 = vmul.f32 1.0, %v3818
  %v3820 = vrcp.pop %v3372
  %v3821 = vmul.f32 1.0, %v3820
  %v3822 = vrcp.pop %v3373
  %v3823 = vmul.f32 1.0, %v3822
  %v3824 = vrcp.pop %v3374
  %v3825 = vmul.f32 1.0, %v3824
  %v3826 = vrcp.pop %v3375
  %v3827 = vmul.f32 1.0, %v3826
  %v3828 = vrcp.pop %v3376
  %v3829 = vmul.f32 1.0, %v3828
  %v3830 = vrcp.pop %v3377
  %v3831 = vmul.f32 1.0, %v3830
  %v3832 = vrcp.pop %v3378
  %v3833 = vmul.f32 1.0, %v3832
  %v3834 = vrcp.pop %v3379
  %v3835 = vmul.f32 1.0, %v3834
  %v3836 = vrcp.pop %v3380
  %v3837 = vmul.f32 1.0, %v3836
  %v3838 = vrcp.pop %v3381
  %v3839 = vmul.f32 1.0, %v3838
  %v3840 = vrcp.pop %v3382
  %v3841 = vmul.f32 1.0, %v3840
  %v3842 = vrcp.pop %v3383
  %v3843 = vmul.f32 1.0, %v3842
  %v3844 = vrcp.pop %v3384
  %v3845 = vmul.f32 1.0, %v3844
  %v3846 = vrcp.pop %v3385
  %v3847 = vmul.f32 1.0, %v3846
  %v3848 = vrcp.pop %v3386
  %v3849 = vmul.f32 1.0, %v3848
  %v3850 = vrcp.pop %v3387
  %v3851 = vmul.f32 1.0, %v3850
  %v3852 = vrcp.pop %v3388
  %v3853 = vmul.f32 1.0, %v3852
  %v3854 = vrcp.pop %v3389
  %v3855 = vmul.f32 1.0, %v3854
  %v3856 = vrcp.pop %v3390
  %v3857 = vmul.f32 1.0, %v3856
  %v3858 = vrcp.pop %v3391
  %v3859 = vmul.f32 1.0, %v3858
  %v3860 = vrcp.pop %v3392
  %v3861 = vmul.f32 1.0, %v3860
  %v3862 = vrcp.pop %v3393
  %v3863 = vmul.f32 1.0, %v3862
  %v3864 = vrcp.pop %v3394
  %v3865 = vmul.f32 1.0, %v3864
  %v3866 = vrcp.pop %v3395
  %v3867 = vmul.f32 1.0, %v3866
  %v3868 = vrcp.pop %v3396
  %v3869 = vmul.f32 1.0, %v3868
  %v3870 = vrcp.pop %v3397
  %v3871 = vmul.f32 1.0, %v3870
  %v3872 = vrcp.pop %v3398
  %v3873 = vmul.f32 1.0, %v3872
  %v3874 = vrcp.pop %v3399
  %v3875 = vmul.f32 1.0, %v3874
  %v3876 = vrcp.pop %v3400
  %v3877 = vmul.f32 1.0, %v3876
  %v3878 = vrcp.pop %v3401
  %v3879 = vmul.f32 1.0, %v3878
  %v3880 = vrcp.pop %v3402
  %v3881 = vmul.f32 1.0, %v3880
  %v3882 = vrcp.pop %v3403
  %v3883 = vmul.f32 1.0, %v3882
  %v3884 = vrcp.pop %v3404
  %v3885 = vmul.f32 1.0, %v3884
  %v3886 = vrcp.pop %v3405
  %v3887 = vmul.f32 1.0, %v3886
  %v3888 = vrcp.pop %v3406
  %v3889 = vmul.f32 1.0, %v3888
  %v3890 = vrcp.pop %v3407
  %v3891 = vmul.f32 1.0, %v3890
  %v3892 = vrcp.pop %v3408
  %v3893 = vmul.f32 1.0, %v3892
  %v3894 = vrcp.pop %v3409
  %v3895 = vmul.f32 1.0, %v3894
  %v3896 = vrcp.pop %v3410
  %v3897 = vmul.f32 1.0, %v3896
  %v3898 = vrcp.pop %v3411
  %v3899 = vmul.f32 1.0, %v3898
  %v3900 = vrcp.pop %v3412
  %v3901 = vmul.f32 1.0, %v3900
  %v3902 = vrcp.pop %v3413
  %v3903 = vmul.f32 1.0, %v3902
  %v3904 = vrcp.pop %v3414
  %v3905 = vmul.f32 1.0, %v3904
  %v3906 = vrcp.pop %v3415
  %v3907 = vmul.f32 1.0, %v3906
  %v3908 = vrcp.pop %v3416
  %v3909 = vmul.f32 1.0, %v3908
  %v3910 = vrcp.pop %v3417
  %v3911 = vmul.f32 1.0, %v3910
  %v3912 = vrcp.pop %v3418
  %v3913 = vmul.f32 1.0, %v3912
  %v3914 = vrcp.pop %v3419
  %v3915 = vmul.f32 1.0, %v3914
  %v3916 = vrcp.pop %v3420
  %v3917 = vmul.f32 1.0, %v3916
  %v3918 = vrcp.pop %v3421
  %v3919 = vmul.f32 1.0, %v3918
  %v3920 = vrcp.pop %v3422
  %v3921 = vmul.f32 1.0, %v3920
  %v3922 = vrcp.pop %v3423
  %v3923 = vmul.f32 1.0, %v3922
  %v3924 = vrcp.pop %v3424
  %v3925 = vmul.f32 1.0, %v3924
  %v3926 = vrcp.pop %v3425
  %v3927 = vmul.f32 1.0, %v3926
  %v3928 = vrcp.pop %v3426
  %v3929 = vmul.f32 1.0, %v3928
  %v3930 = vrcp.pop %v3427
  %v3931 = vmul.f32 1.0, %v3930
  %v3932 = vrcp.pop %v3428
  %v3933 = vmul.f32 1.0, %v3932
  %v3934 = vrcp.pop %v3429
  %v3935 = vmul.f32 1.0, %v3934
  %v3936 = vrcp.pop %v3430
  %v3937 = vmul.f32 1.0, %v3936
  %v3938 = vrcp.pop %v3431
  %v3939 = vmul.f32 1.0, %v3938
  %v3940 = vrcp.pop %v3432
  %v3941 = vmul.f32 1.0, %v3940
  %v3942 = vrcp.pop %v3433
  %v3943 = vmul.f32 1.0, %v3942
  %v3944 = vrcp.pop %v3434
  %v3945 = vmul.f32 1.0, %v3944
  %v3946 = vrcp.pop %v3435
  %v3947 = vmul.f32 1.0, %v3946
  %v3948 = vmul.f32 %v1390, %v3437
  %v3949 = vmul.f32 %v1393, %v3439
  %v3950 = vmul.f32 %v1398, %v3441
  %v3951 = vmul.f32 %v1401, %v3443
  %v3952 = vmul.f32 %v1406, %v3445
  %v3953 = vmul.f32 %v1409, %v3447
  %v3954 = vmul.f32 %v1414, %v3449
  %v3955 = vmul.f32 %v1417, %v3451
  %v3956 = vmul.f32 %v1422, %v3453
  %v3957 = vmul.f32 %v1425, %v3455
  %v3958 = vmul.f32 %v1430, %v3457
  %v3959 = vmul.f32 %v1433, %v3459
  %v3960 = vmul.f32 %v1438, %v3461
  %v3961 = vmul.f32 %v1441, %v3463
  %v3962 = vmul.f32 %v1446, %v3465
  %v3963 = vmul.f32 %v1449, %v3467
  %v3964 = vmul.f32 %v1454, %v3469
  %v3965 = vmul.f32 %v1457, %v3471
  %v3966 = vmul.f32 %v1462, %v3473
  %v3967 = vmul.f32 %v1465, %v3475
  %v3968 = vmul.f32 %v1470, %v3477
  %v3969 = vmul.f32 %v1473, %v3479
  %v3970 = vmul.f32 %v1478, %v3481
  %v3971 = vmul.f32 %v1481, %v3483
  %v3972 = vmul.f32 %v1486, %v3485
  %v3973 = vmul.f32 %v1489, %v3487
  %v3974 = vmul.f32 %v1494, %v3489
  %v3975 = vmul.f32 %v1497, %v3491
  %v3976 = vmul.f32 %v1502, %v3493
  %v3977 = vmul.f32 %v1505, %v3495
  %v3978 = vmul.f32 %v1510, %v3497
  %v3979 = vmul.f32 %v1513, %v3499
  %v3980 = vmul.f32 %v1518, %v3501
  %v3981 = vmul.f32 %v1521, %v3503
  %v3982 = vmul.f32 %v1526, %v3505
  %v3983 = vmul.f32 %v1529, %v3507
  %v3984 = vmul.f32 %v1534, %v3509
  %v3985 = vmul.f32 %v1537, %v3511
  %v3986 = vmul.f32 %v1542, %v3513
  %v3987 = vmul.f32 %v1545, %v3515
  %v3988 = vmul.f32 %v1550, %v3517
  %v3989 = vmul.f32 %v1553, %v3519
  %v3990 = vmul.f32 %v1558, %v3521
  %v3991 = vmul.f32 %v1561, %v3523
  %v3992 = vmul.f32 %v1566, %v3525
  %v3993 = vmul.f32 %v1569, %v3527
  %v3994 = vmul.f32 %v1574, %v3529
  %v3995 = vmul.f32 %v1577, %v3531
  %v3996 = vmul.f32 %v1582, %v3533
  %v3997 = vmul.f32 %v1585, %v3535
  %v3998 = vmul.f32 %v1590, %v3537
  %v3999 = vmul.f32 %v1593, %v3539
  %v4000 = vmul.f32 %v1598, %v3541
  %v4001 = vmul.f32 %v1601, %v3543
  %v4002 = vmul.f32 %v1606, %v3545
  %v4003 = vmul.f32 %v1609, %v3547
  %v4004 = vmul.f32 %v1614, %v3549
  %v4005 = vmul.f32 %v1617, %v3551
  %v4006 = vmul.f32 %v1622, %v3553
  %v4007 = vmul.f32 %v1625, %v3555
  %v4008 = vmul.f32 %v1630, %v3557
  %v4009 = vmul.f32 %v1633, %v3559
  %v4010 = vmul.f32 %v1638, %v3561
  %v4011 = vmul.f32 %v1641, %v3563
  %v4012 = vmul.f32 %v1646, %v3565
  %v4013 = vmul.f32 %v1649, %v3567
  %v4014 = vmul.f32 %v1654, %v3569
  %v4015 = vmul.f32 %v1657, %v3571
  %v4016 = vmul.f32 %v1662, %v3573
  %v4017 = vmul.f32 %v1665, %v3575
  %v4018 = vmul.f32 %v1670, %v3577
  %v4019 = vmul.f32 %v1673, %v3579
  %v4020 = vmul.f32 %v1678, %v3581
  %v4021 = vmul.f32 %v1681, %v3583
  %v4022 = vmul.f32 %v1686, %v3585
  %v4023 = vmul.f32 %v1689, %v3587
  %v4024 = vmul.f32 %v1694, %v3589
  %v4025 = vmul.f32 %v1697, %v3591
  %v4026 = vmul.f32 %v1702, %v3593
  %v4027 = vmul.f32 %v1705, %v3595
  %v4028 = vmul.f32 %v1710, %v3597
  %v4029 = vmul.f32 %v1713, %v3599
  %v4030 = vmul.f32 %v1718, %v3601
  %v4031 = vmul.f32 %v1721, %v3603
  %v4032 = vmul.f32 %v1726, %v3605
  %v4033 = vmul.f32 %v1729, %v3607
  %v4034 = vmul.f32 %v1734, %v3609
  %v4035 = vmul.f32 %v1737, %v3611
  %v4036 = vmul.f32 %v1742, %v3613
  %v4037 = vmul.f32 %v1745, %v3615
  %v4038 = vmul.f32 %v1750, %v3617
  %v4039 = vmul.f32 %v1753, %v3619
  %v4040 = vmul.f32 %v1758, %v3621
  %v4041 = vmul.f32 %v1761, %v3623
  %v4042 = vmul.f32 %v1766, %v3625
  %v4043 = vmul.f32 %v1769, %v3627
  %v4044 = vmul.f32 %v1774, %v3629
  %v4045 = vmul.f32 %v1777, %v3631
  %v4046 = vmul.f32 %v1782, %v3633
  %v4047 = vmul.f32 %v1785, %v3635
  %v4048 = vmul.f32 %v1790, %v3637
  %v4049 = vmul.f32 %v1793, %v3639
  %v4050 = vmul.f32 %v1798, %v3641
  %v4051 = vmul.f32 %v1801, %v3643
  %v4052 = vmul.f32 %v1806, %v3645
  %v4053 = vmul.f32 %v1809, %v3647
  %v4054 = vmul.f32 %v1814, %v3649
  %v4055 = vmul.f32 %v1817, %v3651
  %v4056 = vmul.f32 %v1822, %v3653
  %v4057 = vmul.f32 %v1825, %v3655
  %v4058 = vmul.f32 %v1830, %v3657
  %v4059 = vmul.f32 %v1833, %v3659
  %v4060 = vmul.f32 %v1838, %v3661
  %v4061 = vmul.f32 %v1841, %v3663
  %v4062 = vmul.f32 %v1846, %v3665
  %v4063 = vmul.f32 %v1849, %v3667
  %v4064 = vmul.f32 %v1854, %v3669
  %v4065 = vmul.f32 %v1857, %v3671
  %v4066 = vmul.f32 %v1862, %v3673
  %v4067 = vmul.f32 %v1865, %v3675
  %v4068 = vmul.f32 %v1870, %v3677
  %v4069 = vmul.f32 %v1873, %v3679
  %v4070 = vmul.f32 %v1878, %v3681
  %v4071 = vmul.f32 %v1881, %v3683
  %v4072 = vmul.f32 %v1886, %v3685
  %v4073 = vmul.f32 %v1889, %v3687
  %v4074 = vmul.f32 %v1894, %v3689
  %v4075 = vmul.f32 %v1897, %v3691
  %v4076 = vmul.f32 %v1902, %v3693
  %v4077 = vmul.f32 %v1905, %v3695
  %v4078 = vmul.f32 %v1910, %v3697
  %v4079 = vmul.f32 %v1913, %v3699
  %v4080 = vmul.f32 %v1918, %v3701
  %v4081 = vmul.f32 %v1921, %v3703
  %v4082 = vmul.f32 %v1926, %v3705
  %v4083 = vmul.f32 %v1929, %v3707
  %v4084 = vmul.f32 %v1934, %v3709
  %v4085 = vmul.f32 %v1937, %v3711
  %v4086 = vmul.f32 %v1942, %v3713
  %v4087 = vmul.f32 %v1945, %v3715
  %v4088 = vmul.f32 %v1950, %v3717
  %v4089 = vmul.f32 %v1953, %v3719
  %v4090 = vmul.f32 %v1958, %v3721
  %v4091 = vmul.f32 %v1961, %v3723
  %v4092 = vmul.f32 %v1966, %v3725
  %v4093 = vmul.f32 %v1969, %v3727
  %v4094 = vmul.f32 %v1974, %v3729
  %v4095 = vmul.f32 %v1977, %v3731
  %v4096 = vmul.f32 %v1982, %v3733
  %v4097 = vmul.f32 %v1985, %v3735
  %v4098 = vmul.f32 %v1990, %v3737
  %v4099 = vmul.f32 %v1993, %v3739
  %v4100 = vmul.f32 %v1998, %v3741
  %v4101 = vmul.f32 %v2001, %v3743
  %v4102 = vmul.f32 %v2006, %v3745
  %v4103 = vmul.f32 %v2009, %v3747
  %v4104 = vmul.f32 %v2014, %v3749
  %v4105 = vmul.f32 %v2017, %v3751
  %v4106 = vmul.f32 %v2022, %v3753
  %v4107 = vmul.f32 %v2025, %v3755
  %v4108 = vmul.f32 %v2030, %v3757
  %v4109 = vmul.f32 %v2033, %v3759
  %v4110 = vmul.f32 %v2038, %v3761
  %v4111 = vmul.f32 %v2041, %v3763
  %v4112 = vmul.f32 %v2046, %v3765
  %v4113 = vmul.f32 %v2049, %v3767
  %v4114 = vmul.f32 %v2054, %v3769
  %v4115 = vmul.f32 %v2057, %v3771
  %v4116 = vmul.f32 %v2062, %v3773
  %v4117 = vmul.f32 %v2065, %v3775
  %v4118 = vmul.f32 %v2070, %v3777
  %v4119 = vmul.f32 %v2073, %v3779
  %v4120 = vmul.f32 %v2078, %v3781
  %v4121 = vmul.f32 %v2081, %v3783
  %v4122 = vmul.f32 %v2086, %v3785
  %v4123 = vmul.f32 %v2089, %v3787
  %v4124 = vmul.f32 %v2094, %v3789
  %v4125 = vmul.f32 %v2097, %v3791
  %v4126 = vmul.f32 %v2102, %v3793
  %v4127 = vmul.f32 %v2105, %v3795
  %v4128 = vmul.f32 %v2110, %v3797
  %v4129 = vmul.f32 %v2113, %v3799
  %v4130 = vmul.f32 %v2118, %v3801
  %v4131 = vmul.f32 %v2121, %v3803
  %v4132 = vmul.f32 %v2126, %v3805
  %v4133 = vmul.f32 %v2129, %v3807
  %v4134 = vmul.f32 %v2134, %v3809
  %v4135 = vmul.f32 %v2137, %v3811
  %v4136 = vmul.f32 %v2142, %v3813
  %v4137 = vmul.f32 %v2145, %v3815
  %v4138 = vmul.f32 %v2150, %v3817
  %v4139 = vmul.f32 %v2153, %v3819
  %v4140 = vmul.f32 %v2158, %v3821
  %v4141 = vmul.f32 %v2161, %v3823
  %v4142 = vmul.f32 %v2166, %v3825
  %v4143 = vmul.f32 %v2169, %v3827
  %v4144 = vmul.f32 %v2174, %v3829
  %v4145 = vmul.f32 %v2177, %v3831
  %v4146 = vmul.f32 %v2182, %v3833
  %v4147 = vmul.f32 %v2185, %v3835
  %v4148 = vmul.f32 %v2190, %v3837
  %v4149 = vmul.f32 %v2193, %v3839
  %v4150 = vmul.f32 %v2198, %v3841
  %v4151 = vmul.f32 %v2201, %v3843
  %v4152 = vmul.f32 %v2206, %v3845
  %v4153 = vmul.f32 %v2209, %v3847
  %v4154 = vmul.f32 %v2214, %v3849
  %v4155 = vmul.f32 %v2217, %v3851
  %v4156 = vmul.f32 %v2222, %v3853
  %v4157 = vmul.f32 %v2225, %v3855
  %v4158 = vmul.f32 %v2230, %v3857
  %v4159 = vmul.f32 %v2233, %v3859
  %v4160 = vmul.f32 %v2238, %v3861
  %v4161 = vmul.f32 %v2241, %v3863
  %v4162 = vmul.f32 %v2246, %v3865
  %v4163 = vmul.f32 %v2249, %v3867
  %v4164 = vmul.f32 %v2254, %v3869
  %v4165 = vmul.f32 %v2257, %v3871
  %v4166 = vmul.f32 %v2262, %v3873
  %v4167 = vmul.f32 %v2265, %v3875
  %v4168 = vmul.f32 %v2270, %v3877
  %v4169 = vmul.f32 %v2273, %v3879
  %v4170 = vmul.f32 %v2278, %v3881
  %v4171 = vmul.f32 %v2281, %v3883
  %v4172 = vmul.f32 %v2286, %v3885
  %v4173 = vmul.f32 %v2289, %v3887
  %v4174 = vmul.f32 %v2294, %v3889
  %v4175 = vmul.f32 %v2297, %v3891
  %v4176 = vmul.f32 %v2302, %v3893
  %v4177 = vmul.f32 %v2305, %v3895
  %v4178 = vmul.f32 %v2310, %v3897
  %v4179 = vmul.f32 %v2313, %v3899
  %v4180 = vmul.f32 %v2318, %v3901
  %v4181 = vmul.f32 %v2321, %v3903
  %v4182 = vmul.f32 %v2326, %v3905
  %v4183 = vmul.f32 %v2329, %v3907
  %v4184 = vmul.f32 %v2334, %v3909
  %v4185 = vmul.f32 %v2337, %v3911
  %v4186 = vmul.f32 %v2342, %v3913
  %v4187 = vmul.f32 %v2345, %v3915
  %v4188 = vmul.f32 %v2350, %v3917
  %v4189 = vmul.f32 %v2353, %v3919
  %v4190 = vmul.f32 %v2358, %v3921
  %v4191 = vmul.f32 %v2361, %v3923
  %v4192 = vmul.f32 %v2366, %v3925
  %v4193 = vmul.f32 %v2369, %v3927
  %v4194 = vmul.f32 %v2374, %v3929
  %v4195 = vmul.f32 %v2377, %v3931
  %v4196 = vmul.f32 %v2382, %v3933
  %v4197 = vmul.f32 %v2385, %v3935
  %v4198 = vmul.f32 %v2390, %v3937
  %v4199 = vmul.f32 %v2393, %v3939
  %v4200 = vmul.f32 %v2398, %v3941
  %v4201 = vmul.f32 %v2401, %v3943
  %v4202 = vmul.f32 %v2406, %v3945
  %v4203 = vmul.f32 %v2409, %v3947
  %4204 = vst [vmem:[%s4] sm:$0xff] %v3948
  %4205 = vst [vmem:[%s4 + $0x8] sm:$0xff] %v3949
  %4206 = vst [vmem:[%s4 + $0x10] sm:$0xff] %v3950
  %4207 = vst [vmem:[%s4 + $0x18] sm:$0xff] %v3951
  %4208 = vst [vmem:[%s4 + $0x20] sm:$0xff] %v3952
  %4209 = vst [vmem:[%s4 + $0x28] sm:$0xff] %v3953
  %4210 = vst [vmem:[%s4 + $0x30] sm:$0xff] %v3954
  %4211 = vst [vmem:[%s4 + $0x38] sm:$0xff] %v3955
  %4212 = vst [vmem:[%s4 + $0x40] sm:$0xff] %v3956
  %4213 = vst [vmem:[%s4 + $0x48] sm:$0xff] %v3957
  %4214 = vst [vmem:[%s4 + $0x50] sm:$0xff] %v3958
  %4215 = vst [vmem:[%s4 + $0x58] sm:$0xff] %v3959
  %4216 = vst [vmem:[%s4 + $0x60] sm:$0xff] %v3960
  %4217 = vst [vmem:[%s4 + $0x68] sm:$0xff] %v3961
  %4218 = vst [vmem:[%s4 + $0x70] sm:$0xff] %v3962
  %4219 = vst [vmem:[%s4 + $0x78] sm:$0xff] %v3963
  %4220 = vst [vmem:[%s4 + $0x80] sm:$0xff] %v3964
  %4221 = vst [vmem:[%s4 + $0x88] sm:$0xff] %v3965
  %4222 = vst [vmem:[%s4 + $0x90] sm:$0xff] %v3966
  %4223 = vst [vmem:[%s4 + $0x98] sm:$0xff] %v3967
  %4224 = vst [vmem:[%s4 + $0xa0] sm:$0xff] %v3968
  %4225 = vst [vmem:[%s4 + $0xa8] sm:$0xff] %v3969
  %4226 = vst [vmem:[%s4 + $0xb0] sm:$0xff] %v3970
  %4227 = vst [vmem:[%s4 + $0xb8] sm:$0xff] %v3971
  %4228 = vst [vmem:[%s4 + $0xc0] sm:$0xff] %v3972
  %4229 = vst [vmem:[%s4 + $0xc8] sm:$0xff] %v3973
  %4230 = vst [vmem:[%s4 + $0xd0] sm:$0xff] %v3974
  %4231 = vst [vmem:[%s4 + $0xd8] sm:$0xff] %v3975
  %4232 = vst [vmem:[%s4 + $0xe0] sm:$0xff] %v3976
  %4233 = vst [vmem:[%s4 + $0xe8] sm:$0xff] %v3977
  %4234 = vst [vmem:[%s4 + $0xf0] sm:$0xff] %v3978
  %4235 = vst [vmem:[%s4 + $0xf8] sm:$0xff] %v3979
  %4236 = vst [vmem:[%s4 + $0x100] sm:$0xff] %v3980
  %4237 = vst [vmem:[%s4 + $0x108] sm:$0xff] %v3981
  %4238 = vst [vmem:[%s4 + $0x110] sm:$0xff] %v3982
  %4239 = vst [vmem:[%s4 + $0x118] sm:$0xff] %v3983
  %4240 = vst [vmem:[%s4 + $0x120] sm:$0xff] %v3984
  %4241 = vst [vmem:[%s4 + $0x128] sm:$0xff] %v3985
  %4242 = vst [vmem:[%s4 + $0x130] sm:$0xff] %v3986
  %4243 = vst [vmem:[%s4 + $0x138] sm:$0xff] %v3987
  %4244 = vst [vmem:[%s4 + $0x140] sm:$0xff] %v3988
  %4245 = vst [vmem:[%s4 + $0x148] sm:$0xff] %v3989
  %4246 = vst [vmem:[%s4 + $0x150] sm:$0xff] %v3990
  %4247 = vst [vmem:[%s4 + $0x158] sm:$0xff] %v3991
  %4248 = vst [vmem:[%s4 + $0x160] sm:$0xff] %v3992
  %4249 = vst [vmem:[%s4 + $0x168] sm:$0xff] %v3993
  %4250 = vst [vmem:[%s4 + $0x170] sm:$0xff] %v3994
  %4251 = vst [vmem:[%s4 + $0x178] sm:$0xff] %v3995
  %4252 = vst [vmem:[%s4 + $0x180] sm:$0xff] %v3996
  %4253 = vst [vmem:[%s4 + $0x188] sm:$0xff] %v3997
  %4254 = vst [vmem:[%s4 + $0x190] sm:$0xff] %v3998
  %4255 = vst [vmem:[%s4 + $0x198] sm:$0xff] %v3999
  %4256 = vst [vmem:[%s4 + $0x1a0] sm:$0xff] %v4000
  %4257 = vst [vmem:[%s4 + $0x1a8] sm:$0xff] %v4001
  %4258 = vst [vmem:[%s4 + $0x1b0] sm:$0xff] %v4002
  %4259 = vst [vmem:[%s4 + $0x1b8] sm:$0xff] %v4003
  %4260 = vst [vmem:[%s4 + $0x1c0] sm:$0xff] %v4004
  %4261 = vst [vmem:[%s4 + $0x1c8] sm:$0xff] %v4005
  %4262 = vst [vmem:[%s4 + $0x1d0] sm:$0xff] %v4006
  %4263 = vst [vmem:[%s4 + $0x1d8] sm:$0xff] %v4007
  %4264 = vst [vmem:[%s4 + $0x1e0] sm:$0xff] %v4008
  %4265 = vst [vmem:[%s4 + $0x1e8] sm:$0xff] %v4009
  %4266 = vst [vmem:[%s4 + $0x1f0] sm:$0xff] %v4010
  %4267 = vst [vmem:[%s4 + $0x1f8] sm:$0xff] %v4011
  %4268 = vst [vmem:[%s4 + $0x200] sm:$0xff] %v4012
  %4269 = vst [vmem:[%s4 + $0x208] sm:$0xff] %v4013
  %4270 = vst [vmem:[%s4 + $0x210] sm:$0xff] %v4014
  %4271 = vst [vmem:[%s4 + $0x218] sm:$0xff] %v4015
  %4272 = vst [vmem:[%s4 + $0x220] sm:$0xff] %v4016
  %4273 = vst [vmem:[%s4 + $0x228] sm:$0xff] %v4017
  %4274 = vst [vmem:[%s4 + $0x230] sm:$0xff] %v4018
  %4275 = vst [vmem:[%s4 + $0x238] sm:$0xff] %v4019
  %4276 = vst [vmem:[%s4 + $0x240] sm:$0xff] %v4020
  %4277 = vst [vmem:[%s4 + $0x248] sm:$0xff] %v4021
  %4278 = vst [vmem:[%s4 + $0x250] sm:$0xff] %v4022
  %4279 = vst [vmem:[%s4 + $0x258] sm:$0xff] %v4023
  %4280 = vst [vmem:[%s4 + $0x260] sm:$0xff] %v4024
  %4281 = vst [vmem:[%s4 + $0x268] sm:$0xff] %v4025
  %4282 = vst [vmem:[%s4 + $0x270] sm:$0xff] %v4026
  %4283 = vst [vmem:[%s4 + $0x278] sm:$0xff] %v4027
  %4284 = vst [vmem:[%s4 + $0x280] sm:$0xff] %v4028
  %4285 = vst [vmem:[%s4 + $0x288] sm:$0xff] %v4029
  %4286 = vst [vmem:[%s4 + $0x290] sm:$0xff] %v4030
  %4287 = vst [vmem:[%s4 + $0x298] sm:$0xff] %v4031
  %4288 = vst [vmem:[%s4 + $0x2a0] sm:$0xff] %v4032
  %4289 = vst [vmem:[%s4 + $0x2a8] sm:$0xff] %v4033
  %4290 = vst [vmem:[%s4 + $0x2b0] sm:$0xff] %v4034
  %4291 = vst [vmem:[%s4 + $0x2b8] sm:$0xff] %v4035
  %4292 = vst [vmem:[%s4 + $0x2c0] sm:$0xff] %v4036
  %4293 = vst [vmem:[%s4 + $0x2c8] sm:$0xff] %v4037
  %4294 = vst [vmem:[%s4 + $0x2d0] sm:$0xff] %v4038
  %4295 = vst [vmem:[%s4 + $0x2d8] sm:$0xff] %v4039
  %4296 = vst [vmem:[%s4 + $0x2e0] sm:$0xff] %v4040
  %4297 = vst [vmem:[%s4 + $0x2e8] sm:$0xff] %v4041
  %4298 = vst [vmem:[%s4 + $0x2f0] sm:$0xff] %v4042
  %4299 = vst [vmem:[%s4 + $0x2f8] sm:$0xff] %v4043
  %4300 = vst [vmem:[%s4 + $0x300] sm:$0xff] %v4044
  %4301 = vst [vmem:[%s4 + $0x308] sm:$0xff] %v4045
  %4302 = vst [vmem:[%s4 + $0x310] sm:$0xff] %v4046
  %4303 = vst [vmem:[%s4 + $0x318] sm:$0xff] %v4047
  %4304 = vst [vmem:[%s4 + $0x320] sm:$0xff] %v4048
  %4305 = vst [vmem:[%s4 + $0x328] sm:$0xff] %v4049
  %4306 = vst [vmem:[%s4 + $0x330] sm:$0xff] %v4050
  %4307 = vst [vmem:[%s4 + $0x338] sm:$0xff] %v4051
  %4308 = vst [vmem:[%s4 + $0x340] sm:$0xff] %v4052
  %4309 = vst [vmem:[%s4 + $0x348] sm:$0xff] %v4053
  %4310 = vst [vmem:[%s4 + $0x350] sm:$0xff] %v4054
  %4311 = vst [vmem:[%s4 + $0x358] sm:$0xff] %v4055
  %4312 = vst [vmem:[%s4 + $0x360] sm:$0xff] %v4056
  %4313 = vst [vmem:[%s4 + $0x368] sm:$0xff] %v4057
  %4314 = vst [vmem:[%s4 + $0x370] sm:$0xff] %v4058
  %4315 = vst [vmem:[%s4 + $0x378] sm:$0xff] %v4059
  %4316 = vst [vmem:[%s4 + $0x380] sm:$0xff] %v4060
  %4317 = vst [vmem:[%s4 + $0x388] sm:$0xff] %v4061
  %4318 = vst [vmem:[%s4 + $0x390] sm:$0xff] %v4062
  %4319 = vst [vmem:[%s4 + $0x398] sm:$0xff] %v4063
  %4320 = vst [vmem:[%s4 + $0x3a0] sm:$0xff] %v4064
  %4321 = vst [vmem:[%s4 + $0x3a8] sm:$0xff] %v4065
  %4322 = vst [vmem:[%s4 + $0x3b0] sm:$0xff] %v4066
  %4323 = vst [vmem:[%s4 + $0x3b8] sm:$0xff] %v4067
  %4324 = vst [vmem:[%s4 + $0x3c0] sm:$0xff] %v4068
  %4325 = vst [vmem:[%s4 + $0x3c8] sm:$0xff] %v4069
  %4326 = vst [vmem:[%s4 + $0x3d0] sm:$0xff] %v4070
  %4327 = vst [vmem:[%s4 + $0x3d8] sm:$0xff] %v4071
  %4328 = vst [vmem:[%s4 + $0x3e0] sm:$0xff] %v4072
  %4329 = vst [vmem:[%s4 + $0x3e8] sm:$0xff] %v4073
  %4330 = vst [vmem:[%s4 + $0x3f0] sm:$0xff] %v4074
  %4331 = vst [vmem:[%s4 + $0x3f8] sm:$0xff] %v4075
  %4332 = vst [vmem:[%s4 + $0x400] sm:$0xff] %v4076
  %4333 = vst [vmem:[%s4 + $0x408] sm:$0xff] %v4077
  %4334 = vst [vmem:[%s4 + $0x410] sm:$0xff] %v4078
  %4335 = vst [vmem:[%s4 + $0x418] sm:$0xff] %v4079
  %4336 = vst [vmem:[%s4 + $0x420] sm:$0xff] %v4080
  %4337 = vst [vmem:[%s4 + $0x428] sm:$0xff] %v4081
  %4338 = vst [vmem:[%s4 + $0x430] sm:$0xff] %v4082
  %4339 = vst [vmem:[%s4 + $0x438] sm:$0xff] %v4083
  %4340 = vst [vmem:[%s4 + $0x440] sm:$0xff] %v4084
  %4341 = vst [vmem:[%s4 + $0x448] sm:$0xff] %v4085
  %4342 = vst [vmem:[%s4 + $0x450] sm:$0xff] %v4086
  %4343 = vst [vmem:[%s4 + $0x458] sm:$0xff] %v4087
  %4344 = vst [vmem:[%s4 + $0x460] sm:$0xff] %v4088
  %4345 = vst [vmem:[%s4 + $0x468] sm:$0xff] %v4089
  %4346 = vst [vmem:[%s4 + $0x470] sm:$0xff] %v4090
  %4347 = vst [vmem:[%s4 + $0x478] sm:$0xff] %v4091
  %4348 = vst [vmem:[%s4 + $0x480] sm:$0xff] %v4092
  %4349 = vst [vmem:[%s4 + $0x488] sm:$0xff] %v4093
  %4350 = vst [vmem:[%s4 + $0x490] sm:$0xff] %v4094
  %4351 = vst [vmem:[%s4 + $0x498] sm:$0xff] %v4095
  %4352 = vst [vmem:[%s4 + $0x4a0] sm:$0xff] %v4096
  %4353 = vst [vmem:[%s4 + $0x4a8] sm:$0xff] %v4097
  %4354 = vst [vmem:[%s4 + $0x4b0] sm:$0xff] %v4098
  %4355 = vst [vmem:[%s4 + $0x4b8] sm:$0xff] %v4099
  %4356 = vst [vmem:[%s4 + $0x4c0] sm:$0xff] %v4100
  %4357 = vst [vmem:[%s4 + $0x4c8] sm:$0xff] %v4101
  %4358 = vst [vmem:[%s4 + $0x4d0] sm:$0xff] %v4102
  %4359 = vst [vmem:[%s4 + $0x4d8] sm:$0xff] %v4103
  %4360 = vst [vmem:[%s4 + $0x4e0] sm:$0xff] %v4104
  %4361 = vst [vmem:[%s4 + $0x4e8] sm:$0xff] %v4105
  %4362 = vst [vmem:[%s4 + $0x4f0] sm:$0xff] %v4106
  %4363 = vst [vmem:[%s4 + $0x4f8] sm:$0xff] %v4107
  %4364 = vst [vmem:[%s4 + $0x500] sm:$0xff] %v4108
  %4365 = vst [vmem:[%s4 + $0x508] sm:$0xff] %v4109
  %4366 = vst [vmem:[%s4 + $0x510] sm:$0xff] %v4110
  %4367 = vst [vmem:[%s4 + $0x518] sm:$0xff] %v4111
  %4368 = vst [vmem:[%s4 + $0x520] sm:$0xff] %v4112
  %4369 = vst [vmem:[%s4 + $0x528] sm:$0xff] %v4113
  %4370 = vst [vmem:[%s4 + $0x530] sm:$0xff] %v4114
  %4371 = vst [vmem:[%s4 + $0x538] sm:$0xff] %v4115
  %4372 = vst [vmem:[%s4 + $0x540] sm:$0xff] %v4116
  %4373 = vst [vmem:[%s4 + $0x548] sm:$0xff] %v4117
  %4374 = vst [vmem:[%s4 + $0x550] sm:$0xff] %v4118
  %4375 = vst [vmem:[%s4 + $0x558] sm:$0xff] %v4119
  %4376 = vst [vmem:[%s4 + $0x560] sm:$0xff] %v4120
  %4377 = vst [vmem:[%s4 + $0x568] sm:$0xff] %v4121
  %4378 = vst [vmem:[%s4 + $0x570] sm:$0xff] %v4122
  %4379 = vst [vmem:[%s4 + $0x578] sm:$0xff] %v4123
  %4380 = vst [vmem:[%s4 + $0x580] sm:$0xff] %v4124
  %4381 = vst [vmem:[%s4 + $0x588] sm:$0xff] %v4125
  %4382 = vst [vmem:[%s4 + $0x590] sm:$0xff] %v4126
  %4383 = vst [vmem:[%s4 + $0x598] sm:$0xff] %v4127
  %4384 = vst [vmem:[%s4 + $0x5a0] sm:$0xff] %v4128
  %4385 = vst [vmem:[%s4 + $0x5a8] sm:$0xff] %v4129
  %4386 = vst [vmem:[%s4 + $0x5b0] sm:$0xff] %v4130
  %4387 = vst [vmem:[%s4 + $0x5b8] sm:$0xff] %v4131
  %4388 = vst [vmem:[%s4 + $0x5c0] sm:$0xff] %v4132
  %4389 = vst [vmem:[%s4 + $0x5c8] sm:$0xff] %v4133
  %4390 = vst [vmem:[%s4 + $0x5d0] sm:$0xff] %v4134
  %4391 = vst [vmem:[%s4 + $0x5d8] sm:$0xff] %v4135
  %4392 = vst [vmem:[%s4 + $0x5e0] sm:$0xff] %v4136
  %4393 = vst [vmem:[%s4 + $0x5e8] sm:$0xff] %v4137
  %4394 = vst [vmem:[%s4 + $0x5f0] sm:$0xff] %v4138
  %4395 = vst [vmem:[%s4 + $0x5f8] sm:$0xff] %v4139
  %4396 = vst [vmem:[%s4 + $0x600] sm:$0xff] %v4140
  %4397 = vst [vmem:[%s4 + $0x608] sm:$0xff] %v4141
  %4398 = vst [vmem:[%s4 + $0x610] sm:$0xff] %v4142
  %4399 = vst [vmem:[%s4 + $0x618] sm:$0xff] %v4143
  %4400 = vst [vmem:[%s4 + $0x620] sm:$0xff] %v4144
  %4401 = vst [vmem:[%s4 + $0x628] sm:$0xff] %v4145
  %4402 = vst [vmem:[%s4 + $0x630] sm:$0xff] %v4146
  %4403 = vst [vmem:[%s4 + $0x638] sm:$0xff] %v4147
  %4404 = vst [vmem:[%s4 + $0x640] sm:$0xff] %v4148
  %4405 = vst [vmem:[%s4 + $0x648] sm:$0xff] %v4149
  %4406 = vst [vmem:[%s4 + $0x650] sm:$0xff] %v4150
  %4407 = vst [vmem:[%s4 + $0x658] sm:$0xff] %v4151
  %4408 = vst [vmem:[%s4 + $0x660] sm:$0xff] %v4152
  %4409 = vst [vmem:[%s4 + $0x668] sm:$0xff] %v4153
  %4410 = vst [vmem:[%s4 + $0x670] sm:$0xff] %v4154
  %4411 = vst [vmem:[%s4 + $0x678] sm:$0xff] %v4155
  %4412 = vst [vmem:[%s4 + $0x680] sm:$0xff] %v4156
  %4413 = vst [vmem:[%s4 + $0x688] sm:$0xff] %v4157
  %4414 = vst [vmem:[%s4 + $0x690] sm:$0xff] %v4158
  %4415 = vst [vmem:[%s4 + $0x698] sm:$0xff] %v4159
  %4416 = vst [vmem:[%s4 + $0x6a0] sm:$0xff] %v4160
  %4417 = vst [vmem:[%s4 + $0x6a8] sm:$0xff] %v4161
  %4418 = vst [vmem:[%s4 + $0x6b0] sm:$0xff] %v4162
  %4419 = vst [vmem:[%s4 + $0x6b8] sm:$0xff] %v4163
  %4420 = vst [vmem:[%s4 + $0x6c0] sm:$0xff] %v4164
  %4421 = vst [vmem:[%s4 + $0x6c8] sm:$0xff] %v4165
  %4422 = vst [vmem:[%s4 + $0x6d0] sm:$0xff] %v4166
  %4423 = vst [vmem:[%s4 + $0x6d8] sm:$0xff] %v4167
  %4424 = vst [vmem:[%s4 + $0x6e0] sm:$0xff] %v4168
  %4425 = vst [vmem:[%s4 + $0x6e8] sm:$0xff] %v4169
  %4426 = vst [vmem:[%s4 + $0x6f0] sm:$0xff] %v4170
  %4427 = vst [vmem:[%s4 + $0x6f8] sm:$0xff] %v4171
  %4428 = vst [vmem:[%s4 + $0x700] sm:$0xff] %v4172
  %4429 = vst [vmem:[%s4 + $0x708] sm:$0xff] %v4173
  %4430 = vst [vmem:[%s4 + $0x710] sm:$0xff] %v4174
  %4431 = vst [vmem:[%s4 + $0x718] sm:$0xff] %v4175
  %4432 = vst [vmem:[%s4 + $0x720] sm:$0xff] %v4176
  %4433 = vst [vmem:[%s4 + $0x728] sm:$0xff] %v4177
  %4434 = vst [vmem:[%s4 + $0x730] sm:$0xff] %v4178
  %4435 = vst [vmem:[%s4 + $0x738] sm:$0xff] %v4179
  %4436 = vst [vmem:[%s4 + $0x740] sm:$0xff] %v4180
  %4437 = vst [vmem:[%s4 + $0x748] sm:$0xff] %v4181
  %4438 = vst [vmem:[%s4 + $0x750] sm:$0xff] %v4182
  %4439 = vst [vmem:[%s4 + $0x758] sm:$0xff] %v4183
  %4440 = vst [vmem:[%s4 + $0x760] sm:$0xff] %v4184
  %4441 = vst [vmem:[%s4 + $0x768] sm:$0xff] %v4185
  %4442 = vst [vmem:[%s4 + $0x770] sm:$0xff] %v4186
  %4443 = vst [vmem:[%s4 + $0x778] sm:$0xff] %v4187
  %4444 = vst [vmem:[%s4 + $0x780] sm:$0xff] %v4188
  %4445 = vst [vmem:[%s4 + $0x788] sm:$0xff] %v4189
  %4446 = vst [vmem:[%s4 + $0x790] sm:$0xff] %v4190
  %4447 = vst [vmem:[%s4 + $0x798] sm:$0xff] %v4191
  %4448 = vst [vmem:[%s4 + $0x7a0] sm:$0xff] %v4192
  %4449 = vst [vmem:[%s4 + $0x7a8] sm:$0xff] %v4193
  %4450 = vst [vmem:[%s4 + $0x7b0] sm:$0xff] %v4194
  %4451 = vst [vmem:[%s4 + $0x7b8] sm:$0xff] %v4195
  %4452 = vst [vmem:[%s4 + $0x7c0] sm:$0xff] %v4196
  %4453 = vst [vmem:[%s4 + $0x7c8] sm:$0xff] %v4197
  %4454 = vst [vmem:[%s4 + $0x7d0] sm:$0xff] %v4198
  %4455 = vst [vmem:[%s4 + $0x7d8] sm:$0xff] %v4199
  %4456 = vst [vmem:[%s4 + $0x7e0] sm:$0xff] %v4200
  %4457 = vst [vmem:[%s4 + $0x7e8] sm:$0xff] %v4201
  %4458 = vst [vmem:[%s4 + $0x7f0] sm:$0xff] %v4202
  %4459 = vst [vmem:[%s4 + $0x7f8] sm:$0xff] %v4203
  // Predicated region
  $region14: #{efficientdet_forward.21} parent=0 // pred_check
    _
  $region15: #{efficientdet_forward.21} parent=0 // pred_check_branch
    %4461 = sbr.rel (0) target = $region17
  $region16: #{efficientdet_forward.21} parent=0 // pred_region
    _
  $region17: #{efficientdet_forward.21} parent=0 // pred_fallthru
    _
  // Predicated region
  $region18: #{efficientdet_forward.21} parent=0 // pred_check
    _
  $region19: #{efficientdet_forward.21} parent=0 // pred_check_branch
    %4463 = sbr.rel (0) target = $region21
  $region20: #{efficientdet_forward.21} parent=0 // pred_region
    _
  $region21: #{efficientdet_forward.21} parent=0 // pred_fallthru
    _

// kernel: efficientdet_forward.22
$region0: #{efficientdet_forward.22}
  #allocation0 [shape = 'u32[]', space=smem, size = 0x4, offset = 0x4, fixed_abs, tag = 'smem constant byte address 0x4 - core index']
  #allocation1 [shape = 'u32[144,128]{1,0:T(1,128)}', space=vmem, size = 0x12000, scoped, tag = 'internal scratch']
  #allocation2 [shape = 's32[1]{0}', space=sflag, size = 0x4, scoped, tag = 'scoped memory for efficientdet_forward.22']
  #allocation3 [shape = 's32[1]{0:T(128)S(6)}', space=smem, size = 0x200, scoped, tag = 'prefetched SMEM operand 0']
  %s0 = inlined_call_operand.<no memory space> [shape: s32[1], index: 0, kind: input, shape index: {}]
  %s1 = inlined_call_operand.vmem [shape: bf16[512,80], index: 1, kind: input, shape index: {}]
  %s2 = inlined_call_operand.vmem [shape: bf16[1,80,128], index: 2, kind: input, shape index: {}]
  %s3 = inlined_call_operand.vmem [shape: f32[1,1,128], index: 3, kind: input, shape index: {}]
  %s4 = inlined_call_operand.vmem [shape: f32[512,128], index: 4, kind: output, shape index: {}]
  %s5 = sld [smem:[#allocation0]]
  $region22: #{efficientdet_forward.22} parent=0
    _
  %s7 = ssub.s32 1, %s5
  %s8 = scalar_select 0, %s7, %s5
  %9 = sst [smem:[#allocation3]] %s0
  // Predicated region
  $region2: #{efficientdet_forward.22} parent=0 // pred_check
    _
  $region3: #{efficientdet_forward.22} parent=0 // pred_check_branch
    %11 = sbr.rel (0) target = $region5
  $region4: #{efficientdet_forward.22} parent=0 // pred_region
    _
  $region5: #{efficientdet_forward.22} parent=0 // pred_fallthru
    _
  // Predicated region
  $region6: #{efficientdet_forward.22} parent=0 // pred_check
    _
  $region7: #{efficientdet_forward.22} parent=0 // pred_check_branch
    %13 = sbr.rel (0) target = $region9
  $region8: #{efficientdet_forward.22} parent=0 // pred_region
    %s14 = sld [smem:[#allocation3]]
    %p15 = scmp.lt.s32.totalorder %s14, 0
    %s16 = scalar_select %p15, %s14, 0
    %s17 = smul.addr %s16, 10
    %s18 = smul.addr %s17, 4
    %s19 = scalar_lea.vmem %s2, %s18
    %s20 = sld [smem:[#allocation3]]
  $region9: #{efficientdet_forward.22} parent=0 // pred_fallthru
    _
  // Predicated region
  $region10: #{efficientdet_forward.22} parent=0 // pred_check
    _
  $region11: #{efficientdet_forward.22} parent=0 // pred_check_branch
    %22 = sbr.rel (0) target = $region13
  $region12: #{efficientdet_forward.22} parent=0 // pred_region
    %s23 = sld [smem:[#allocation3]]
    %p24 = scmp.lt.s32.totalorder %s23, 0
    %s25 = scalar_select %p24, %s23, 0
    %s26 = scalar_lea.vmem %s3, %s25
    %s27 = sld [smem:[#allocation3]]
  $region13: #{efficientdet_forward.22} parent=0 // pred_fallthru
    _
  %s28 = sld [smem:[#allocation3]]
  %p29 = scmp.lt.s32.totalorder %s28, 0
  %s30 = scalar_select %p29, %s28, 0
  %s31 = smul.addr %s30, 10
  %s32 = smul.addr %s31, 4
  %s33 = scalar_lea.vmem %s2, %s32
  %s34 = sld [smem:[#allocation3]]
  %p35 = scmp.lt.s32.totalorder %s34, 0
  %s36 = scalar_select %p35, %s34, 0
  %s37 = scalar_lea.vmem %s3, %s36
  %s38 = sld [smem:[#allocation3]]
  %p39 = scmp.lt.s32.totalorder %s38, 0
  %s40 = scalar_select %p39, %s38, 0
  %s41 = smul.addr %s40, 10
  %s42 = smul.addr %s41, 4
  %s43 = scalar_lea.vmem %s2, %s42
  %s44 = sld [smem:[#allocation3]]
  %s45 = sld [smem:[#allocation3]]
  %p46 = scmp.lt.s32.totalorder %s45, 0
  %s47 = scalar_select %p46, %s45, 0
  %s48 = scalar_lea.vmem %s3, %s47
  %s49 = sld [smem:[#allocation3]]
  %v51 = vld [vmem:[%s1] sm:$0xf]
  %v52 = vld [vmem:[%s1 + $0x4] sm:$0xf]
  %v53 = vld [vmem:[%s1 + $0x8] sm:$0xf]
  %v54 = vld [vmem:[%s1 + $0xc] sm:$0xf]
  %v55 = vld [vmem:[%s1 + $0x10] sm:$0xf]
  %v56 = vld [vmem:[%s1 + $0x14] sm:$0xf]
  %v57 = vld [vmem:[%s1 + $0x18] sm:$0xf]
  %v58 = vld [vmem:[%s1 + $0x1c] sm:$0xf]
  %v59 = vld [vmem:[%s1 + $0x20] sm:$0xf]
  %v60 = vld [vmem:[%s1 + $0x24] sm:$0xf]
  %v61 = vld [vmem:[%s1 + $0x28] sm:$0xf]
  %v62 = vld [vmem:[%s1 + $0x2c] sm:$0xf]
  %v63 = vld [vmem:[%s1 + $0x30] sm:$0xf]
  %v64 = vld [vmem:[%s1 + $0x34] sm:$0xf]
  %v65 = vld [vmem:[%s1 + $0x38] sm:$0xf]
  %v66 = vld [vmem:[%s1 + $0x3c] sm:$0xf]
  %v67 = vld [vmem:[%s1 + $0x40] sm:$0xf]
  %v68 = vld [vmem:[%s1 + $0x44] sm:$0xf]
  %v69 = vld [vmem:[%s1 + $0x48] sm:$0xf]
  %v70 = vld [vmem:[%s1 + $0x4c] sm:$0xf]
  %v71 = vld [vmem:[%s1 + $0x50] sm:$0xf]
  %v72 = vld [vmem:[%s1 + $0x54] sm:$0xf]
  %v73 = vld [vmem:[%s1 + $0x58] sm:$0xf]
  %v74 = vld [vmem:[%s1 + $0x5c] sm:$0xf]
  %v75 = vld [vmem:[%s1 + $0x60] sm:$0xf]
  %v76 = vld [vmem:[%s1 + $0x64] sm:$0xf]
  %v77 = vld [vmem:[%s1 + $0x68] sm:$0xf]
  %v78 = vld [vmem:[%s1 + $0x6c] sm:$0xf]
  %v79 = vld [vmem:[%s1 + $0x70] sm:$0xf]
  %v80 = vld [vmem:[%s1 + $0x74] sm:$0xf]
  %v81 = vld [vmem:[%s1 + $0x78] sm:$0xf]
  %v82 = vld [vmem:[%s1 + $0x7c] sm:$0xf]
  %v83 = vld [vmem:[%s1 + $0x80] sm:$0xf]
  %v84 = vld [vmem:[%s1 + $0x84] sm:$0xf]
  %v85 = vld [vmem:[%s1 + $0x88] sm:$0xf]
  %v86 = vld [vmem:[%s1 + $0x8c] sm:$0xf]
  %v87 = vld [vmem:[%s1 + $0x90] sm:$0xf]
  %v88 = vld [vmem:[%s1 + $0x94] sm:$0xf]
  %v89 = vld [vmem:[%s1 + $0x98] sm:$0xf]
  %v90 = vld [vmem:[%s1 + $0x9c] sm:$0xf]
  %v91 = vld [vmem:[%s1 + $0xa0] sm:$0xf]
  %v92 = vld [vmem:[%s1 + $0xa4] sm:$0xf]
  %v93 = vld [vmem:[%s1 + $0xa8] sm:$0xf]
  %v94 = vld [vmem:[%s1 + $0xac] sm:$0xf]
  %v95 = vld [vmem:[%s1 + $0xb0] sm:$0xf]
  %v96 = vld [vmem:[%s1 + $0xb4] sm:$0xf]
  %v97 = vld [vmem:[%s1 + $0xb8] sm:$0xf]
  %v98 = vld [vmem:[%s1 + $0xbc] sm:$0xf]
  %v99 = vld [vmem:[%s1 + $0xc0] sm:$0xf]
  %v100 = vld [vmem:[%s1 + $0xc4] sm:$0xf]
  %v101 = vld [vmem:[%s1 + $0xc8] sm:$0xf]
  %v102 = vld [vmem:[%s1 + $0xcc] sm:$0xf]
  %v103 = vld [vmem:[%s1 + $0xd0] sm:$0xf]
  %v104 = vld [vmem:[%s1 + $0xd4] sm:$0xf]
  %v105 = vld [vmem:[%s1 + $0xd8] sm:$0xf]
  %v106 = vld [vmem:[%s1 + $0xdc] sm:$0xf]
  %v107 = vld [vmem:[%s1 + $0xe0] sm:$0xf]
  %v108 = vld [vmem:[%s1 + $0xe4] sm:$0xf]
  %v109 = vld [vmem:[%s1 + $0xe8] sm:$0xf]
  %v110 = vld [vmem:[%s1 + $0xec] sm:$0xf]
  %v111 = vld [vmem:[%s1 + $0xf0] sm:$0xf]
  %v112 = vld [vmem:[%s1 + $0xf4] sm:$0xf]
  %v113 = vld [vmem:[%s1 + $0xf8] sm:$0xf]
  %v114 = vld [vmem:[%s1 + $0xfc] sm:$0xf]
  %v115 = vld [vmem:[%s43] sm:$0xf]
  %v116 = vld [vmem:[%s43 + $0x4] sm:$0xf]
  %v117 = vld [vmem:[%s43 + $0x8] sm:$0xf]
  %v118 = vld [vmem:[%s43 + $0xc] sm:$0xf]
  %v119 = vld [vmem:[%s43 + $0x10] sm:$0xf]
  %v120 = vld [vmem:[%s43 + $0x14] sm:$0xf]
  %v121 = vld [vmem:[%s43 + $0x18] sm:$0xf]
  %v122 = vld [vmem:[%s43 + $0x1c] sm:$0xf]
  %v123 = vld [vmem:[%s43 + $0x20] sm:$0xf]
  %v124 = vld [vmem:[%s43 + $0x24] sm:$0xf]
  %v125 = vld [vmem:[%s48] sm:$0x1]
  %v127 = vlaneseq
  %v128 = vshrl.u32 %v127, 7
  %v129 = vsub.s32 0, %v128
  %v130 = vrot.slane %v125, %v129
  %v196 = vunpack.c.l.b16 %v51
  %v197 = vunpack.c.l.b16 %v52
  %v198 = vunpack.c.l.b16 %v53
  %v199 = vunpack.c.l.b16 %v54
  %v200 = vunpack.c.l.b16 %v55
  %v201 = vunpack.c.l.b16 %v56
  %v202 = vunpack.c.l.b16 %v57
  %v203 = vunpack.c.l.b16 %v58
  %v204 = vunpack.c.l.b16 %v59
  %v205 = vunpack.c.l.b16 %v60
  %v206 = vunpack.c.l.b16 %v61
  %v207 = vunpack.c.l.b16 %v62
  %v208 = vunpack.c.l.b16 %v63
  %v209 = vunpack.c.l.b16 %v64
  %v210 = vunpack.c.l.b16 %v65
  %v211 = vunpack.c.l.b16 %v66
  %v212 = vunpack.c.l.b16 %v67
  %v213 = vunpack.c.l.b16 %v68
  %v214 = vunpack.c.l.b16 %v69
  %v215 = vunpack.c.l.b16 %v70
  %v216 = vunpack.c.l.b16 %v71
  %v217 = vunpack.c.l.b16 %v72
  %v218 = vunpack.c.l.b16 %v73
  %v219 = vunpack.c.l.b16 %v74
  %v220 = vunpack.c.l.b16 %v75
  %v221 = vunpack.c.l.b16 %v76
  %v222 = vunpack.c.l.b16 %v77
  %v223 = vunpack.c.l.b16 %v78
  %v224 = vunpack.c.l.b16 %v79
  %v225 = vunpack.c.l.b16 %v80
  %v226 = vunpack.c.l.b16 %v81
  %v227 = vunpack.c.l.b16 %v82
  %v228 = vunpack.c.l.b16 %v83
  %v229 = vunpack.c.l.b16 %v84
  %v230 = vunpack.c.l.b16 %v85
  %v231 = vunpack.c.l.b16 %v86
  %v232 = vunpack.c.l.b16 %v87
  %v233 = vunpack.c.l.b16 %v88
  %v234 = vunpack.c.l.b16 %v89
  %v235 = vunpack.c.l.b16 %v90
  %v236 = vunpack.c.l.b16 %v91
  %v237 = vunpack.c.l.b16 %v92
  %v238 = vunpack.c.l.b16 %v93
  %v239 = vunpack.c.l.b16 %v94
  %v240 = vunpack.c.l.b16 %v95
  %v241 = vunpack.c.l.b16 %v96
  %v242 = vunpack.c.l.b16 %v97
  %v243 = vunpack.c.l.b16 %v98
  %v244 = vunpack.c.l.b16 %v99
  %v245 = vunpack.c.l.b16 %v100
  %v246 = vunpack.c.l.b16 %v101
  %v247 = vunpack.c.l.b16 %v102
  %v248 = vunpack.c.l.b16 %v103
  %v249 = vunpack.c.l.b16 %v104
  %v250 = vunpack.c.l.b16 %v105
  %v251 = vunpack.c.l.b16 %v106
  %v252 = vunpack.c.l.b16 %v107
  %v253 = vunpack.c.l.b16 %v108
  %v254 = vunpack.c.l.b16 %v109
  %v255 = vunpack.c.l.b16 %v110
  %v256 = vunpack.c.l.b16 %v111
  %v257 = vunpack.c.l.b16 %v112
  %v258 = vunpack.c.l.b16 %v113
  %v259 = vunpack.c.l.b16 %v114
  %v260 = vpack.c.b16 %v197, %v196
  %v261 = vpack.c.b16 %v199, %v198
  %v262 = vpack.c.b16 %v201, %v200
  %v263 = vpack.c.b16 %v203, %v202
  %v264 = vpack.c.b16 %v205, %v204
  %v265 = vpack.c.b16 %v207, %v206
  %v266 = vpack.c.b16 %v209, %v208
  %v267 = vpack.c.b16 %v211, %v210
  %v268 = vpack.c.b16 %v213, %v212
  %v269 = vpack.c.b16 %v215, %v214
  %v270 = vpack.c.b16 %v217, %v216
  %v271 = vpack.c.b16 %v219, %v218
  %v272 = vpack.c.b16 %v221, %v220
  %v273 = vpack.c.b16 %v223, %v222
  %v274 = vpack.c.b16 %v225, %v224
  %v275 = vpack.c.b16 %v227, %v226
  %v276 = vpack.c.b16 %v229, %v228
  %v277 = vpack.c.b16 %v231, %v230
  %v278 = vpack.c.b16 %v233, %v232
  %v279 = vpack.c.b16 %v235, %v234
  %v280 = vpack.c.b16 %v237, %v236
  %v281 = vpack.c.b16 %v239, %v238
  %v282 = vpack.c.b16 %v241, %v240
  %v283 = vpack.c.b16 %v243, %v242
  %v284 = vpack.c.b16 %v245, %v244
  %v285 = vpack.c.b16 %v247, %v246
  %v286 = vpack.c.b16 %v249, %v248
  %v287 = vpack.c.b16 %v251, %v250
  %v288 = vpack.c.b16 %v253, %v252
  %v289 = vpack.c.b16 %v255, %v254
  %v290 = vpack.c.b16 %v257, %v256
  %v291 = vpack.c.b16 %v259, %v258
  %v302 = vunpack.c.l.b16 %v115
  %v303 = vunpack.c.l.b16 %v116
  %v304 = vunpack.c.l.b16 %v117
  %v305 = vunpack.c.l.b16 %v118
  %v306 = vunpack.c.l.b16 %v119
  %v307 = vunpack.c.l.b16 %v120
  %v308 = vunpack.c.l.b16 %v121
  %v309 = vunpack.c.l.b16 %v122
  %v310 = vunpack.c.l.b16 %v123
  %v311 = vunpack.c.l.b16 %v124
  %v312 = vpack.c.b16 %v303, %v302
  %v313 = vpack.c.b16 %v305, %v304
  %v314 = vpack.c.b16 %v307, %v306
  %v315 = vpack.c.b16 %v309, %v308
  %v316 = vpack.c.b16 %v311, %v310
  %vm322 = vcmask 654336
  %v324 = vsel %vm322, %v260, 0
  %v327 = vsel %vm322, %v261, 0
  %v330 = vsel %vm322, %v262, 0
  %v333 = vsel %vm322, %v263, 0
  %v336 = vsel %vm322, %v264, 0
  %v339 = vsel %vm322, %v265, 0
  %v342 = vsel %vm322, %v266, 0
  %v345 = vsel %vm322, %v267, 0
  %v348 = vsel %vm322, %v268, 0
  %v351 = vsel %vm322, %v269, 0
  %v354 = vsel %vm322, %v270, 0
  %v357 = vsel %vm322, %v271, 0
  %v360 = vsel %vm322, %v272, 0
  %v363 = vsel %vm322, %v273, 0
  %v366 = vsel %vm322, %v274, 0
  %v369 = vsel %vm322, %v275, 0
  %v372 = vsel %vm322, %v276, 0
  %v375 = vsel %vm322, %v277, 0
  %v378 = vsel %vm322, %v278, 0
  %v381 = vsel %vm322, %v279, 0
  %v384 = vsel %vm322, %v280, 0
  %v387 = vsel %vm322, %v281, 0
  %v390 = vsel %vm322, %v282, 0
  %v393 = vsel %vm322, %v283, 0
  %v396 = vsel %vm322, %v284, 0
  %v399 = vsel %vm322, %v285, 0
  %v402 = vsel %vm322, %v286, 0
  %v405 = vsel %vm322, %v287, 0
  %v408 = vsel %vm322, %v288, 0
  %v411 = vsel %vm322, %v289, 0
  %v414 = vsel %vm322, %v290, 0
  %v417 = vsel %vm322, %v291, 0
  %419 = vmatprep.subr.bf16.mxu0 0
  %420 = vmatpush1.bf16.msra.mxu0 %v312
  %421 = vmatprep.subr.bf16.mxu0 0
  %422 = vmatpush1.bf16.msra.mxu0 %v313
  %423 = vmatprep.subr.bf16.mxu0 0
  %424 = vmatpush1.bf16.msra.mxu0 %v314
  %425 = vmatprep.subr.bf16.mxu0 0
  %426 = vmatpush1.bf16.msra.mxu0 %v315
  %427 = vmatprep.subr.bf16.mxu0 0
  %428 = vmatpush1.bf16.msra.mxu0 %v316
  %429 = vmatprep.subr.bf16.mxu0 0
  %430 = vmatpush1.bf16.msra.mxu0 0
  %431 = vmatprep.subr.bf16.mxu0 0
  %432 = vmatpush1.bf16.msra.mxu0 0
  %433 = vmatprep.subr.bf16.mxu0 0
  %434 = vmatpush1.bf16.msra.mxu0 0
  %435 = vmatprep.subr.bf16.mxu0 0
  %436 = vmatpush1.bf16.msra.mxu0 0
  %437 = vmatprep.subr.bf16.mxu0 0
  %438 = vmatpush1.bf16.msra.mxu0 0
  %439 = vmatprep.subr.bf16.mxu0 0
  %440 = vmatpush1.bf16.msra.mxu0 0
  %441 = vmatprep.subr.bf16.mxu0 0
  %442 = vmatpush1.bf16.msra.mxu0 0
  %443 = vmatprep.subr.bf16.mxu0 0
  %444 = vmatpush1.bf16.msra.mxu0 0
  %445 = vmatprep.subr.bf16.mxu0 0
  %446 = vmatpush1.bf16.msra.mxu0 0
  %447 = vmatprep.subr.bf16.mxu0 0
  %448 = vmatpush1.bf16.msra.mxu0 0
  %449 = vmatprep.subr.bf16.mxu0 0
  %450 = vmatpush1.bf16.msra.mxu0 0
  %451 = vmatprep.mubr.bf16.mxu0 0
  %452 = vmatmul.mubr.bf16.gmra.mrb[0].mxu0 %v324
  %v453 = vpop.f32.mrb[0].mxu0
  %v454 = vadd.f32 %v130, %v453
  %v455 = vpop.f32.mrb[0].mxu0
  %v456 = vpop.f32.mrb[0].mxu0
  %v457 = vadd.f32 %v130, %v456
  %v458 = vpop.f32.mrb[0].mxu0
  %459 = vmatprep.mubr.bf16.mxu0 0
  %460 = vmatmul.mubr.bf16.gmra.mrb[0].mxu0 %v327
  %v461 = vpop.f32.mrb[0].mxu0
  %v462 = vadd.f32 %v130, %v461
  %v463 = vpop.f32.mrb[0].mxu0
  %v464 = vpop.f32.mrb[0].mxu0
  %v465 = vadd.f32 %v130, %v464
  %v466 = vpop.f32.mrb[0].mxu0
  %467 = vmatprep.mubr.bf16.mxu0 0
  %468 = vmatmul.mubr.bf16.gmra.mrb[0].mxu0 %v330
  %v469 = vpop.f32.mrb[0].mxu0
  %v470 = vadd.f32 %v130, %v469
  %v471 = vpop.f32.mrb[0].mxu0
  %v472 = vpop.f32.mrb[0].mxu0
  %v473 = vadd.f32 %v130, %v472
  %v474 = vpop.f32.mrb[0].mxu0
  %475 = vmatprep.mubr.bf16.mxu0 0
  %476 = vmatmul.mubr.bf16.gmra.mrb[0].mxu0 %v333
  %v477 = vpop.f32.mrb[0].mxu0
  %v478 = vadd.f32 %v130, %v477
  %v479 = vpop.f32.mrb[0].mxu0
  %v480 = vpop.f32.mrb[0].mxu0
  %v481 = vadd.f32 %v130, %v480
  %v482 = vpop.f32.mrb[0].mxu0
  %483 = vmatprep.mubr.bf16.mxu0 0
  %484 = vmatmul.mubr.bf16.gmra.mrb[0].mxu0 %v336
  %v485 = vpop.f32.mrb[0].mxu0
  %v486 = vadd.f32 %v130, %v485
  %v487 = vpop.f32.mrb[0].mxu0
  %v488 = vpop.f32.mrb[0].mxu0
  %v489 = vadd.f32 %v130, %v488
  %v490 = vpop.f32.mrb[0].mxu0
  %491 = vmatprep.mubr.bf16.mxu0 0
  %492 = vmatmul.mubr.bf16.gmra.mrb[0].mxu0 %v339
  %v493 = vpop.f32.mrb[0].mxu0
  %v494 = vadd.f32 %v130, %v493
  %v495 = vpop.f32.mrb[0].mxu0
  %v496 = vpop.f32.mrb[0].mxu0
  %v497 = vadd.f32 %v130, %v496
  %v498 = vpop.f32.mrb[0].mxu0
  %499 = vmatprep.mubr.bf16.mxu0 0
  %500 = vmatmul.mubr.bf16.gmra.mrb[0].mxu0 %v342
  %v501 = vpop.f32.mrb[0].mxu0
  %v502 = vadd.f32 %v130, %v501
  %v503 = vpop.f32.mrb[0].mxu0
  %v504 = vpop.f32.mrb[0].mxu0
  %v505 = vadd.f32 %v130, %v504
  %v506 = vpop.f32.mrb[0].mxu0
  %507 = vmatprep.mubr.bf16.mxu0 0
  %508 = vmatmul.mubr.bf16.gmra.mrb[0].mxu0 %v345
  %v509 = vpop.f32.mrb[0].mxu0
  %v510 = vadd.f32 %v130, %v509
  %v511 = vpop.f32.mrb[0].mxu0
  %v512 = vpop.f32.mrb[0].mxu0
  %v513 = vadd.f32 %v130, %v512
  %v514 = vpop.f32.mrb[0].mxu0
  %515 = vmatprep.mubr.bf16.mxu0 0
  %516 = vmatmul.mubr.bf16.gmra.mrb[0].mxu0 %v348
  %v517 = vpop.f32.mrb[0].mxu0
  %v518 = vadd.f32 %v130, %v517
  %v519 = vpop.f32.mrb[0].mxu0
  %v520 = vpop.f32.mrb[0].mxu0
  %v521 = vadd.f32 %v130, %v520
  %v522 = vpop.f32.mrb[0].mxu0
  %523 = vmatprep.mubr.bf16.mxu0 0
  %524 = vmatmul.mubr.bf16.gmra.mrb[0].mxu0 %v351
  %v525 = vpop.f32.mrb[0].mxu0
  %v526 = vadd.f32 %v130, %v525
  %v527 = vpop.f32.mrb[0].mxu0
  %v528 = vpop.f32.mrb[0].mxu0
  %v529 = vadd.f32 %v130, %v528
  %v530 = vpop.f32.mrb[0].mxu0
  %531 = vmatprep.mubr.bf16.mxu0 0
  %532 = vmatmul.mubr.bf16.gmra.mrb[0].mxu0 %v354
  %v533 = vpop.f32.mrb[0].mxu0
  %v534 = vadd.f32 %v130, %v533
  %v535 = vpop.f32.mrb[0].mxu0
  %v536 = vpop.f32.mrb[0].mxu0
  %v537 = vadd.f32 %v130, %v536
  %v538 = vpop.f32.mrb[0].mxu0
  %539 = vmatprep.mubr.bf16.mxu0 0
  %540 = vmatmul.mubr.bf16.gmra.mrb[0].mxu0 %v357
  %v541 = vpop.f32.mrb[0].mxu0
  %v542 = vadd.f32 %v130, %v541
  %v543 = vpop.f32.mrb[0].mxu0
  %v544 = vpop.f32.mrb[0].mxu0
  %v545 = vadd.f32 %v130, %v544
  %v546 = vpop.f32.mrb[0].mxu0
  %547 = vmatprep.mubr.bf16.mxu0 0
  %548 = vmatmul.mubr.bf16.gmra.mrb[0].mxu0 %v360
  %v549 = vpop.f32.mrb[0].mxu0
  %v550 = vadd.f32 %v130, %v549
  %v551 = vpop.f32.mrb[0].mxu0
  %v552 = vpop.f32.mrb[0].mxu0
  %v553 = vadd.f32 %v130, %v552
  %v554 = vpop.f32.mrb[0].mxu0
  %555 = vmatprep.mubr.bf16.mxu0 0
  %556 = vmatmul.mubr.bf16.gmra.mrb[0].mxu0 %v363
  %v557 = vpop.f32.mrb[0].mxu0
  %v558 = vadd.f32 %v130, %v557
  %v559 = vpop.f32.mrb[0].mxu0
  %v560 = vpop.f32.mrb[0].mxu0
  %v561 = vadd.f32 %v130, %v560
  %v562 = vpop.f32.mrb[0].mxu0
  %563 = vmatprep.mubr.bf16.mxu0 0
  %564 = vmatmul.mubr.bf16.gmra.mrb[0].mxu0 %v366
  %v565 = vpop.f32.mrb[0].mxu0
  %v566 = vadd.f32 %v130, %v565
  %v567 = vpop.f32.mrb[0].mxu0
  %v568 = vpop.f32.mrb[0].mxu0
  %v569 = vadd.f32 %v130, %v568
  %v570 = vpop.f32.mrb[0].mxu0
  %571 = vmatprep.mubr.bf16.mxu0 0
  %572 = vmatmul.mubr.bf16.gmra.mrb[0].mxu0 %v369
  %v573 = vpop.f32.mrb[0].mxu0
  %v574 = vadd.f32 %v130, %v573
  %v575 = vpop.f32.mrb[0].mxu0
  %v576 = vpop.f32.mrb[0].mxu0
  %v577 = vadd.f32 %v130, %v576
  %v578 = vpop.f32.mrb[0].mxu0
  %579 = vmatprep.mubr.bf16.mxu0 0
  %580 = vmatmul.mubr.bf16.gmra.mrb[0].mxu0 %v372
  %v581 = vpop.f32.mrb[0].mxu0
  %v582 = vadd.f32 %v130, %v581
  %v583 = vpop.f32.mrb[0].mxu0
  %v584 = vpop.f32.mrb[0].mxu0
  %v585 = vadd.f32 %v130, %v584
  %v586 = vpop.f32.mrb[0].mxu0
  %587 = vmatprep.mubr.bf16.mxu0 0
  %588 = vmatmul.mubr.bf16.gmra.mrb[0].mxu0 %v375
  %v589 = vpop.f32.mrb[0].mxu0
  %v590 = vadd.f32 %v130, %v589
  %v591 = vpop.f32.mrb[0].mxu0
  %v592 = vpop.f32.mrb[0].mxu0
  %v593 = vadd.f32 %v130, %v592
  %v594 = vpop.f32.mrb[0].mxu0
  %595 = vmatprep.mubr.bf16.mxu0 0
  %596 = vmatmul.mubr.bf16.gmra.mrb[0].mxu0 %v378
  %v597 = vpop.f32.mrb[0].mxu0
  %v598 = vadd.f32 %v130, %v597
  %v599 = vpop.f32.mrb[0].mxu0
  %v600 = vpop.f32.mrb[0].mxu0
  %v601 = vadd.f32 %v130, %v600
  %v602 = vpop.f32.mrb[0].mxu0
  %603 = vmatprep.mubr.bf16.mxu0 0
  %604 = vmatmul.mubr.bf16.gmra.mrb[0].mxu0 %v381
  %v605 = vpop.f32.mrb[0].mxu0
  %v606 = vadd.f32 %v130, %v605
  %v607 = vpop.f32.mrb[0].mxu0
  %v608 = vpop.f32.mrb[0].mxu0
  %v609 = vadd.f32 %v130, %v608
  %v610 = vpop.f32.mrb[0].mxu0
  %611 = vmatprep.mubr.bf16.mxu0 0
  %612 = vmatmul.mubr.bf16.gmra.mrb[0].mxu0 %v384
  %v613 = vpop.f32.mrb[0].mxu0
  %v614 = vadd.f32 %v130, %v613
  %v615 = vpop.f32.mrb[0].mxu0
  %v616 = vpop.f32.mrb[0].mxu0
  %v617 = vadd.f32 %v130, %v616
  %v618 = vpop.f32.mrb[0].mxu0
  %619 = vmatprep.mubr.bf16.mxu0 0
  %620 = vmatmul.mubr.bf16.gmra.mrb[0].mxu0 %v387
  %v621 = vpop.f32.mrb[0].mxu0
  %v622 = vadd.f32 %v130, %v621
  %v623 = vpop.f32.mrb[0].mxu0
  %v624 = vpop.f32.mrb[0].mxu0
  %v625 = vadd.f32 %v130, %v624
  %v626 = vpop.f32.mrb[0].mxu0
  %627 = vmatprep.mubr.bf16.mxu0 0
  %628 = vmatmul.mubr.bf16.gmra.mrb[0].mxu0 %v390
  %v629 = vpop.f32.mrb[0].mxu0
  %v630 = vadd.f32 %v130, %v629
  %v631 = vpop.f32.mrb[0].mxu0
  %v632 = vpop.f32.mrb[0].mxu0
  %v633 = vadd.f32 %v130, %v632
  %v634 = vpop.f32.mrb[0].mxu0
  %635 = vmatprep.mubr.bf16.mxu0 0
  %636 = vmatmul.mubr.bf16.gmra.mrb[0].mxu0 %v393
  %v637 = vpop.f32.mrb[0].mxu0
  %v638 = vadd.f32 %v130, %v637
  %v639 = vpop.f32.mrb[0].mxu0
  %v640 = vpop.f32.mrb[0].mxu0
  %v641 = vadd.f32 %v130, %v640
  %v642 = vpop.f32.mrb[0].mxu0
  %643 = vmatprep.mubr.bf16.mxu0 0
  %644 = vmatmul.mubr.bf16.gmra.mrb[0].mxu0 %v396
  %v645 = vpop.f32.mrb[0].mxu0
  %v646 = vadd.f32 %v130, %v645
  %v647 = vpop.f32.mrb[0].mxu0
  %v648 = vpop.f32.mrb[0].mxu0
  %v649 = vadd.f32 %v130, %v648
  %v650 = vpop.f32.mrb[0].mxu0
  %651 = vmatprep.mubr.bf16.mxu0 0
  %652 = vmatmul.mubr.bf16.gmra.mrb[0].mxu0 %v399
  %v653 = vpop.f32.mrb[0].mxu0
  %v654 = vadd.f32 %v130, %v653
  %v655 = vpop.f32.mrb[0].mxu0
  %v656 = vpop.f32.mrb[0].mxu0
  %v657 = vadd.f32 %v130, %v656
  %v658 = vpop.f32.mrb[0].mxu0
  %659 = vmatprep.mubr.bf16.mxu0 0
  %660 = vmatmul.mubr.bf16.gmra.mrb[0].mxu0 %v402
  %v661 = vpop.f32.mrb[0].mxu0
  %v662 = vadd.f32 %v130, %v661
  %v663 = vpop.f32.mrb[0].mxu0
  %v664 = vpop.f32.mrb[0].mxu0
  %v665 = vadd.f32 %v130, %v664
  %v666 = vpop.f32.mrb[0].mxu0
  %667 = vmatprep.mubr.bf16.mxu0 0
  %668 = vmatmul.mubr.bf16.gmra.mrb[0].mxu0 %v405
  %v669 = vpop.f32.mrb[0].mxu0
  %v670 = vadd.f32 %v130, %v669
  %v671 = vpop.f32.mrb[0].mxu0
  %v672 = vpop.f32.mrb[0].mxu0
  %v673 = vadd.f32 %v130, %v672
  %v674 = vpop.f32.mrb[0].mxu0
  %675 = vmatprep.mubr.bf16.mxu0 0
  %676 = vmatmul.mubr.bf16.gmra.mrb[0].mxu0 %v408
  %v677 = vpop.f32.mrb[0].mxu0
  %v678 = vadd.f32 %v130, %v677
  %v679 = vpop.f32.mrb[0].mxu0
  %v680 = vpop.f32.mrb[0].mxu0
  %v681 = vadd.f32 %v130, %v680
  %v682 = vpop.f32.mrb[0].mxu0
  %683 = vmatprep.mubr.bf16.mxu0 0
  %684 = vmatmul.mubr.bf16.gmra.mrb[0].mxu0 %v411
  %v685 = vpop.f32.mrb[0].mxu0
  %v686 = vadd.f32 %v130, %v685
  %v687 = vpop.f32.mrb[0].mxu0
  %v688 = vpop.f32.mrb[0].mxu0
  %v689 = vadd.f32 %v130, %v688
  %v690 = vpop.f32.mrb[0].mxu0
  %691 = vmatprep.mubr.bf16.mxu0 0
  %692 = vmatmul.mubr.bf16.gmra.mrb[0].mxu0 %v414
  %v693 = vpop.f32.mrb[0].mxu0
  %v694 = vadd.f32 %v130, %v693
  %v695 = vpop.f32.mrb[0].mxu0
  %v696 = vpop.f32.mrb[0].mxu0
  %v697 = vadd.f32 %v130, %v696
  %v698 = vpop.f32.mrb[0].mxu0
  %699 = vmatprep.mubr.bf16.mxu0 0
  %700 = vmatmul.mubr.bf16.gmra.mrb[0].mxu0 %v417
  %v701 = vpop.f32.mrb[0].mxu0
  %v702 = vadd.f32 %v130, %v701
  %v703 = vpop.f32.mrb[0].mxu0
  %v704 = vpop.f32.mrb[0].mxu0
  %v705 = vadd.f32 %v130, %v704
  %v706 = vpop.f32.mrb[0].mxu0
  %707 = vdwg.mxu0
  %v708 = vsub.f32 0.0, %v454
  %v709 = vsub.f32 0.0, %v457
  %v710 = vsub.f32 0.0, %v462
  %v711 = vsub.f32 0.0, %v465
  %v712 = vsub.f32 0.0, %v470
  %v713 = vsub.f32 0.0, %v473
  %v714 = vsub.f32 0.0, %v478
  %v715 = vsub.f32 0.0, %v481
  %v716 = vsub.f32 0.0, %v486
  %v717 = vsub.f32 0.0, %v489
  %v718 = vsub.f32 0.0, %v494
  %v719 = vsub.f32 0.0, %v497
  %v720 = vsub.f32 0.0, %v502
  %v721 = vsub.f32 0.0, %v505
  %v722 = vsub.f32 0.0, %v510
  %v723 = vsub.f32 0.0, %v513
  %v724 = vsub.f32 0.0, %v518
  %v725 = vsub.f32 0.0, %v521
  %v726 = vsub.f32 0.0, %v526
  %v727 = vsub.f32 0.0, %v529
  %v728 = vsub.f32 0.0, %v534
  %v729 = vsub.f32 0.0, %v537
  %v730 = vsub.f32 0.0, %v542
  %v731 = vsub.f32 0.0, %v545
  %v732 = vsub.f32 0.0, %v550
  %v733 = vsub.f32 0.0, %v553
  %v734 = vsub.f32 0.0, %v558
  %v735 = vsub.f32 0.0, %v561
  %v736 = vsub.f32 0.0, %v566
  %v737 = vsub.f32 0.0, %v569
  %v738 = vsub.f32 0.0, %v574
  %v739 = vsub.f32 0.0, %v577
  %v740 = vsub.f32 0.0, %v582
  %v741 = vsub.f32 0.0, %v585
  %v742 = vsub.f32 0.0, %v590
  %v743 = vsub.f32 0.0, %v593
  %v744 = vsub.f32 0.0, %v598
  %v745 = vsub.f32 0.0, %v601
  %v746 = vsub.f32 0.0, %v606
  %v747 = vsub.f32 0.0, %v609
  %v748 = vsub.f32 0.0, %v614
  %v749 = vsub.f32 0.0, %v617
  %v750 = vsub.f32 0.0, %v622
  %v751 = vsub.f32 0.0, %v625
  %v752 = vsub.f32 0.0, %v630
  %v753 = vsub.f32 0.0, %v633
  %v754 = vsub.f32 0.0, %v638
  %v755 = vsub.f32 0.0, %v641
  %v756 = vsub.f32 0.0, %v646
  %v757 = vsub.f32 0.0, %v649
  %v758 = vsub.f32 0.0, %v654
  %v759 = vsub.f32 0.0, %v657
  %v760 = vsub.f32 0.0, %v662
  %v761 = vsub.f32 0.0, %v665
  %v762 = vsub.f32 0.0, %v670
  %v763 = vsub.f32 0.0, %v673
  %v764 = vsub.f32 0.0, %v678
  %v765 = vsub.f32 0.0, %v681
  %v766 = vsub.f32 0.0, %v686
  %v767 = vsub.f32 0.0, %v689
  %v768 = vsub.f32 0.0, %v694
  %v769 = vsub.f32 0.0, %v697
  %v770 = vsub.f32 0.0, %v702
  %v771 = vsub.f32 0.0, %v705
  %v772 = vmul.f32 %v708, 1.442695
  %v773 = vpow.pop %v772
  %v774 = vmul.f32 %v709, 1.442695
  %v775 = vpow.pop %v774
  %v776 = vmul.f32 %v710, 1.442695
  %v777 = vpow.pop %v776
  %v778 = vmul.f32 %v711, 1.442695
  %v779 = vpow.pop %v778
  %v780 = vmul.f32 %v712, 1.442695
  %v781 = vpow.pop %v780
  %v782 = vmul.f32 %v713, 1.442695
  %v783 = vpow.pop %v782
  %v784 = vmul.f32 %v714, 1.442695
  %v785 = vpow.pop %v784
  %v786 = vmul.f32 %v715, 1.442695
  %v787 = vpow.pop %v786
  %v788 = vmul.f32 %v716, 1.442695
  %v789 = vpow.pop %v788
  %v790 = vmul.f32 %v717, 1.442695
  %v791 = vpow.pop %v790
  %v792 = vmul.f32 %v718, 1.442695
  %v793 = vpow.pop %v792
  %v794 = vmul.f32 %v719, 1.442695
  %v795 = vpow.pop %v794
  %v796 = vmul.f32 %v720, 1.442695
  %v797 = vpow.pop %v796
  %v798 = vmul.f32 %v721, 1.442695
  %v799 = vpow.pop %v798
  %v800 = vmul.f32 %v722, 1.442695
  %v801 = vpow.pop %v800
  %v802 = vmul.f32 %v723, 1.442695
  %v803 = vpow.pop %v802
  %v804 = vmul.f32 %v724, 1.442695
  %v805 = vpow.pop %v804
  %v806 = vmul.f32 %v725, 1.442695
  %v807 = vpow.pop %v806
  %v808 = vmul.f32 %v726, 1.442695
  %v809 = vpow.pop %v808
  %v810 = vmul.f32 %v727, 1.442695
  %v811 = vpow.pop %v810
  %v812 = vmul.f32 %v728, 1.442695
  %v813 = vpow.pop %v812
  %v814 = vmul.f32 %v729, 1.442695
  %v815 = vpow.pop %v814
  %v816 = vmul.f32 %v730, 1.442695
  %v817 = vpow.pop %v816
  %v818 = vmul.f32 %v731, 1.442695
  %v819 = vpow.pop %v818
  %v820 = vmul.f32 %v732, 1.442695
  %v821 = vpow.pop %v820
  %v822 = vmul.f32 %v733, 1.442695
  %v823 = vpow.pop %v822
  %v824 = vmul.f32 %v734, 1.442695
  %v825 = vpow.pop %v824
  %v826 = vmul.f32 %v735, 1.442695
  %v827 = vpow.pop %v826
  %v828 = vmul.f32 %v736, 1.442695
  %v829 = vpow.pop %v828
  %v830 = vmul.f32 %v737, 1.442695
  %v831 = vpow.pop %v830
  %v832 = vmul.f32 %v738, 1.442695
  %v833 = vpow.pop %v832
  %v834 = vmul.f32 %v739, 1.442695
  %v835 = vpow.pop %v834
  %v836 = vmul.f32 %v740, 1.442695
  %v837 = vpow.pop %v836
  %v838 = vmul.f32 %v741, 1.442695
  %v839 = vpow.pop %v838
  %v840 = vmul.f32 %v742, 1.442695
  %v841 = vpow.pop %v840
  %v842 = vmul.f32 %v743, 1.442695
  %v843 = vpow.pop %v842
  %v844 = vmul.f32 %v744, 1.442695
  %v845 = vpow.pop %v844
  %v846 = vmul.f32 %v745, 1.442695
  %v847 = vpow.pop %v846
  %v848 = vmul.f32 %v746, 1.442695
  %v849 = vpow.pop %v848
  %v850 = vmul.f32 %v747, 1.442695
  %v851 = vpow.pop %v850
  %v852 = vmul.f32 %v748, 1.442695
  %v853 = vpow.pop %v852
  %v854 = vmul.f32 %v749, 1.442695
  %v855 = vpow.pop %v854
  %v856 = vmul.f32 %v750, 1.442695
  %v857 = vpow.pop %v856
  %v858 = vmul.f32 %v751, 1.442695
  %v859 = vpow.pop %v858
  %v860 = vmul.f32 %v752, 1.442695
  %v861 = vpow.pop %v860
  %v862 = vmul.f32 %v753, 1.442695
  %v863 = vpow.pop %v862
  %v864 = vmul.f32 %v754, 1.442695
  %v865 = vpow.pop %v864
  %v866 = vmul.f32 %v755, 1.442695
  %v867 = vpow.pop %v866
  %v868 = vmul.f32 %v756, 1.442695
  %v869 = vpow.pop %v868
  %v870 = vmul.f32 %v757, 1.442695
  %v871 = vpow.pop %v870
  %v872 = vmul.f32 %v758, 1.442695
  %v873 = vpow.pop %v872
  %v874 = vmul.f32 %v759, 1.442695
  %v875 = vpow.pop %v874
  %v876 = vmul.f32 %v760, 1.442695
  %v877 = vpow.pop %v876
  %v878 = vmul.f32 %v761, 1.442695
  %v879 = vpow.pop %v878
  %v880 = vmul.f32 %v762, 1.442695
  %v881 = vpow.pop %v880
  %v882 = vmul.f32 %v763, 1.442695
  %v883 = vpow.pop %v882
  %v884 = vmul.f32 %v764, 1.442695
  %v885 = vpow.pop %v884
  %v886 = vmul.f32 %v765, 1.442695
  %v887 = vpow.pop %v886
  %v888 = vmul.f32 %v766, 1.442695
  %v889 = vpow.pop %v888
  %v890 = vmul.f32 %v767, 1.442695
  %v891 = vpow.pop %v890
  %v892 = vmul.f32 %v768, 1.442695
  %v893 = vpow.pop %v892
  %v894 = vmul.f32 %v769, 1.442695
  %v895 = vpow.pop %v894
  %v896 = vmul.f32 %v770, 1.442695
  %v897 = vpow.pop %v896
  %v898 = vmul.f32 %v771, 1.442695
  %v899 = vpow.pop %v898
  %v900 = vadd.f32 %v773, 1.0
  %v901 = vadd.f32 %v775, 1.0
  %v902 = vadd.f32 %v777, 1.0
  %v903 = vadd.f32 %v779, 1.0
  %v904 = vadd.f32 %v781, 1.0
  %v905 = vadd.f32 %v783, 1.0
  %v906 = vadd.f32 %v785, 1.0
  %v907 = vadd.f32 %v787, 1.0
  %v908 = vadd.f32 %v789, 1.0
  %v909 = vadd.f32 %v791, 1.0
  %v910 = vadd.f32 %v793, 1.0
  %v911 = vadd.f32 %v795, 1.0
  %v912 = vadd.f32 %v797, 1.0
  %v913 = vadd.f32 %v799, 1.0
  %v914 = vadd.f32 %v801, 1.0
  %v915 = vadd.f32 %v803, 1.0
  %v916 = vadd.f32 %v805, 1.0
  %v917 = vadd.f32 %v807, 1.0
  %v918 = vadd.f32 %v809, 1.0
  %v919 = vadd.f32 %v811, 1.0
  %v920 = vadd.f32 %v813, 1.0
  %v921 = vadd.f32 %v815, 1.0
  %v922 = vadd.f32 %v817, 1.0
  %v923 = vadd.f32 %v819, 1.0
  %v924 = vadd.f32 %v821, 1.0
  %v925 = vadd.f32 %v823, 1.0
  %v926 = vadd.f32 %v825, 1.0
  %v927 = vadd.f32 %v827, 1.0
  %v928 = vadd.f32 %v829, 1.0
  %v929 = vadd.f32 %v831, 1.0
  %v930 = vadd.f32 %v833, 1.0
  %v931 = vadd.f32 %v835, 1.0
  %v932 = vadd.f32 %v837, 1.0
  %v933 = vadd.f32 %v839, 1.0
  %v934 = vadd.f32 %v841, 1.0
  %v935 = vadd.f32 %v843, 1.0
  %v936 = vadd.f32 %v845, 1.0
  %v937 = vadd.f32 %v847, 1.0
  %v938 = vadd.f32 %v849, 1.0
  %v939 = vadd.f32 %v851, 1.0
  %v940 = vadd.f32 %v853, 1.0
  %v941 = vadd.f32 %v855, 1.0
  %v942 = vadd.f32 %v857, 1.0
  %v943 = vadd.f32 %v859, 1.0
  %v944 = vadd.f32 %v861, 1.0
  %v945 = vadd.f32 %v863, 1.0
  %v946 = vadd.f32 %v865, 1.0
  %v947 = vadd.f32 %v867, 1.0
  %v948 = vadd.f32 %v869, 1.0
  %v949 = vadd.f32 %v871, 1.0
  %v950 = vadd.f32 %v873, 1.0
  %v951 = vadd.f32 %v875, 1.0
  %v952 = vadd.f32 %v877, 1.0
  %v953 = vadd.f32 %v879, 1.0
  %v954 = vadd.f32 %v881, 1.0
  %v955 = vadd.f32 %v883, 1.0
  %v956 = vadd.f32 %v885, 1.0
  %v957 = vadd.f32 %v887, 1.0
  %v958 = vadd.f32 %v889, 1.0
  %v959 = vadd.f32 %v891, 1.0
  %v960 = vadd.f32 %v893, 1.0
  %v961 = vadd.f32 %v895, 1.0
  %v962 = vadd.f32 %v897, 1.0
  %v963 = vadd.f32 %v899, 1.0
  %v964 = vrcp.pop %v900
  %v965 = vmul.f32 1.0, %v964
  %v966 = vrcp.pop %v901
  %v967 = vmul.f32 1.0, %v966
  %v968 = vrcp.pop %v902
  %v969 = vmul.f32 1.0, %v968
  %v970 = vrcp.pop %v903
  %v971 = vmul.f32 1.0, %v970
  %v972 = vrcp.pop %v904
  %v973 = vmul.f32 1.0, %v972
  %v974 = vrcp.pop %v905
  %v975 = vmul.f32 1.0, %v974
  %v976 = vrcp.pop %v906
  %v977 = vmul.f32 1.0, %v976
  %v978 = vrcp.pop %v907
  %v979 = vmul.f32 1.0, %v978
  %v980 = vrcp.pop %v908
  %v981 = vmul.f32 1.0, %v980
  %v982 = vrcp.pop %v909
  %v983 = vmul.f32 1.0, %v982
  %v984 = vrcp.pop %v910
  %v985 = vmul.f32 1.0, %v984
  %v986 = vrcp.pop %v911
  %v987 = vmul.f32 1.0, %v986
  %v988 = vrcp.pop %v912
  %v989 = vmul.f32 1.0, %v988
  %v990 = vrcp.pop %v913
  %v991 = vmul.f32 1.0, %v990
  %v992 = vrcp.pop %v914
  %v993 = vmul.f32 1.0, %v992
  %v994 = vrcp.pop %v915
  %v995 = vmul.f32 1.0, %v994
  %v996 = vrcp.pop %v916
  %v997 = vmul.f32 1.0, %v996
  %v998 = vrcp.pop %v917
  %v999 = vmul.f32 1.0, %v998
  %v1000 = vrcp.pop %v918
  %v1001 = vmul.f32 1.0, %v1000
  %v1002 = vrcp.pop %v919
  %v1003 = vmul.f32 1.0, %v1002
  %v1004 = vrcp.pop %v920
  %v1005 = vmul.f32 1.0, %v1004
  %v1006 = vrcp.pop %v921
  %v1007 = vmul.f32 1.0, %v1006
  %v1008 = vrcp.pop %v922
  %v1009 = vmul.f32 1.0, %v1008
  %v1010 = vrcp.pop %v923
  %v1011 = vmul.f32 1.0, %v1010
  %v1012 = vrcp.pop %v924
  %v1013 = vmul.f32 1.0, %v1012
  %v1014 = vrcp.pop %v925
  %v1015 = vmul.f32 1.0, %v1014
  %v1016 = vrcp.pop %v926
  %v1017 = vmul.f32 1.0, %v1016
  %v1018 = vrcp.pop %v927
  %v1019 = vmul.f32 1.0, %v1018
  %v1020 = vrcp.pop %v928
  %v1021 = vmul.f32 1.0, %v1020
  %v1022 = vrcp.pop %v929
  %v1023 = vmul.f32 1.0, %v1022
  %v1024 = vrcp.pop %v930
  %v1025 = vmul.f32 1.0, %v1024
  %v1026 = vrcp.pop %v931
  %v1027 = vmul.f32 1.0, %v1026
  %v1028 = vrcp.pop %v932
  %v1029 = vmul.f32 1.0, %v1028
  %v1030 = vrcp.pop %v933
  %v1031 = vmul.f32 1.0, %v1030
  %v1032 = vrcp.pop %v934
  %v1033 = vmul.f32 1.0, %v1032
  %v1034 = vrcp.pop %v935
  %v1035 = vmul.f32 1.0, %v1034
  %v1036 = vrcp.pop %v936
  %v1037 = vmul.f32 1.0, %v1036
  %v1038 = vrcp.pop %v937
  %v1039 = vmul.f32 1.0, %v1038
  %v1040 = vrcp.pop %v938
  %v1041 = vmul.f32 1.0, %v1040
  %v1042 = vrcp.pop %v939
  %v1043 = vmul.f32 1.0, %v1042
  %v1044 = vrcp.pop %v940
  %v1045 = vmul.f32 1.0, %v1044
  %v1046 = vrcp.pop %v941
  %v1047 = vmul.f32 1.0, %v1046
  %v1048 = vrcp.pop %v942
  %v1049 = vmul.f32 1.0, %v1048
  %v1050 = vrcp.pop %v943
  %v1051 = vmul.f32 1.0, %v1050
  %v1052 = vrcp.pop %v944
  %v1053 = vmul.f32 1.0, %v1052
  %v1054 = vrcp.pop %v945
  %v1055 = vmul.f32 1.0, %v1054
  %v1056 = vrcp.pop %v946
  %v1057 = vmul.f32 1.0, %v1056
  %v1058 = vrcp.pop %v947
  %v1059 = vmul.f32 1.0, %v1058
  %v1060 = vrcp.pop %v948
  %v1061 = vmul.f32 1.0, %v1060
  %v1062 = vrcp.pop %v949
  %v1063 = vmul.f32 1.0, %v1062
  %v1064 = vrcp.pop %v950
  %v1065 = vmul.f32 1.0, %v1064
  %v1066 = vrcp.pop %v951
  %v1067 = vmul.f32 1.0, %v1066
  %v1068 = vrcp.pop %v952
  %v1069 = vmul.f32 1.0, %v1068
  %v1070 = vrcp.pop %v953
  %v1071 = vmul.f32 1.0, %v1070
  %v1072 = vrcp.pop %v954
  %v1073 = vmul.f32 1.0, %v1072
  %v1074 = vrcp.pop %v955
  %v1075 = vmul.f32 1.0, %v1074
  %v1076 = vrcp.pop %v956
  %v1077 = vmul.f32 1.0, %v1076
  %v1078 = vrcp.pop %v957
  %v1079 = vmul.f32 1.0, %v1078
  %v1080 = vrcp.pop %v958
  %v1081 = vmul.f32 1.0, %v1080
  %v1082 = vrcp.pop %v959
  %v1083 = vmul.f32 1.0, %v1082
  %v1084 = vrcp.pop %v960
  %v1085 = vmul.f32 1.0, %v1084
  %v1086 = vrcp.pop %v961
  %v1087 = vmul.f32 1.0, %v1086
  %v1088 = vrcp.pop %v962
  %v1089 = vmul.f32 1.0, %v1088
  %v1090 = vrcp.pop %v963
  %v1091 = vmul.f32 1.0, %v1090
  %v1092 = vmul.f32 %v454, %v965
  %v1093 = vmul.f32 %v457, %v967
  %v1094 = vmul.f32 %v462, %v969
  %v1095 = vmul.f32 %v465, %v971
  %v1096 = vmul.f32 %v470, %v973
  %v1097 = vmul.f32 %v473, %v975
  %v1098 = vmul.f32 %v478, %v977
  %v1099 = vmul.f32 %v481, %v979
  %v1100 = vmul.f32 %v486, %v981
  %v1101 = vmul.f32 %v489, %v983
  %v1102 = vmul.f32 %v494, %v985
  %v1103 = vmul.f32 %v497, %v987
  %v1104 = vmul.f32 %v502, %v989
  %v1105 = vmul.f32 %v505, %v991
  %v1106 = vmul.f32 %v510, %v993
  %v1107 = vmul.f32 %v513, %v995
  %v1108 = vmul.f32 %v518, %v997
  %v1109 = vmul.f32 %v521, %v999
  %v1110 = vmul.f32 %v526, %v1001
  %v1111 = vmul.f32 %v529, %v1003
  %v1112 = vmul.f32 %v534, %v1005
  %v1113 = vmul.f32 %v537, %v1007
  %v1114 = vmul.f32 %v542, %v1009
  %v1115 = vmul.f32 %v545, %v1011
  %v1116 = vmul.f32 %v550, %v1013
  %v1117 = vmul.f32 %v553, %v1015
  %v1118 = vmul.f32 %v558, %v1017
  %v1119 = vmul.f32 %v561, %v1019
  %v1120 = vmul.f32 %v566, %v1021
  %v1121 = vmul.f32 %v569, %v1023
  %v1122 = vmul.f32 %v574, %v1025
  %v1123 = vmul.f32 %v577, %v1027
  %v1124 = vmul.f32 %v582, %v1029
  %v1125 = vmul.f32 %v585, %v1031
  %v1126 = vmul.f32 %v590, %v1033
  %v1127 = vmul.f32 %v593, %v1035
  %v1128 = vmul.f32 %v598, %v1037
  %v1129 = vmul.f32 %v601, %v1039
  %v1130 = vmul.f32 %v606, %v1041
  %v1131 = vmul.f32 %v609, %v1043
  %v1132 = vmul.f32 %v614, %v1045
  %v1133 = vmul.f32 %v617, %v1047
  %v1134 = vmul.f32 %v622, %v1049
  %v1135 = vmul.f32 %v625, %v1051
  %v1136 = vmul.f32 %v630, %v1053
  %v1137 = vmul.f32 %v633, %v1055
  %v1138 = vmul.f32 %v638, %v1057
  %v1139 = vmul.f32 %v641, %v1059
  %v1140 = vmul.f32 %v646, %v1061
  %v1141 = vmul.f32 %v649, %v1063
  %v1142 = vmul.f32 %v654, %v1065
  %v1143 = vmul.f32 %v657, %v1067
  %v1144 = vmul.f32 %v662, %v1069
  %v1145 = vmul.f32 %v665, %v1071
  %v1146 = vmul.f32 %v670, %v1073
  %v1147 = vmul.f32 %v673, %v1075
  %v1148 = vmul.f32 %v678, %v1077
  %v1149 = vmul.f32 %v681, %v1079
  %v1150 = vmul.f32 %v686, %v1081
  %v1151 = vmul.f32 %v689, %v1083
  %v1152 = vmul.f32 %v694, %v1085
  %v1153 = vmul.f32 %v697, %v1087
  %v1154 = vmul.f32 %v702, %v1089
  %v1155 = vmul.f32 %v705, %v1091
  %1156 = vst [vmem:[%s4] sm:$0xff] %v1092
  %1157 = vst [vmem:[%s4 + $0x8] sm:$0xff] %v1093
  %1158 = vst [vmem:[%s4 + $0x10] sm:$0xff] %v1094
  %1159 = vst [vmem:[%s4 + $0x18] sm:$0xff] %v1095
  %1160 = vst [vmem:[%s4 + $0x20] sm:$0xff] %v1096
  %1161 = vst [vmem:[%s4 + $0x28] sm:$0xff] %v1097
  %1162 = vst [vmem:[%s4 + $0x30] sm:$0xff] %v1098
  %1163 = vst [vmem:[%s4 + $0x38] sm:$0xff] %v1099
  %1164 = vst [vmem:[%s4 + $0x40] sm:$0xff] %v1100
  %1165 = vst [vmem:[%s4 + $0x48] sm:$0xff] %v1101
  %1166 = vst [vmem:[%s4 + $0x50] sm:$0xff] %v1102
  %1167 = vst [vmem:[%s4 + $0x58] sm:$0xff] %v1103
  %1168 = vst [vmem:[%s4 + $0x60] sm:$0xff] %v1104
  %1169 = vst [vmem:[%s4 + $0x68] sm:$0xff] %v1105
  %1170 = vst [vmem:[%s4 + $0x70] sm:$0xff] %v1106
  %1171 = vst [vmem:[%s4 + $0x78] sm:$0xff] %v1107
  %1172 = vst [vmem:[%s4 + $0x80] sm:$0xff] %v1108
  %1173 = vst [vmem:[%s4 + $0x88] sm:$0xff] %v1109
  %1174 = vst [vmem:[%s4 + $0x90] sm:$0xff] %v1110
  %1175 = vst [vmem:[%s4 + $0x98] sm:$0xff] %v1111
  %1176 = vst [vmem:[%s4 + $0xa0] sm:$0xff] %v1112
  %1177 = vst [vmem:[%s4 + $0xa8] sm:$0xff] %v1113
  %1178 = vst [vmem:[%s4 + $0xb0] sm:$0xff] %v1114
  %1179 = vst [vmem:[%s4 + $0xb8] sm:$0xff] %v1115
  %1180 = vst [vmem:[%s4 + $0xc0] sm:$0xff] %v1116
  %1181 = vst [vmem:[%s4 + $0xc8] sm:$0xff] %v1117
  %1182 = vst [vmem:[%s4 + $0xd0] sm:$0xff] %v1118
  %1183 = vst [vmem:[%s4 + $0xd8] sm:$0xff] %v1119
  %1184 = vst [vmem:[%s4 + $0xe0] sm:$0xff] %v1120
  %1185 = vst [vmem:[%s4 + $0xe8] sm:$0xff] %v1121
  %1186 = vst [vmem:[%s4 + $0xf0] sm:$0xff] %v1122
  %1187 = vst [vmem:[%s4 + $0xf8] sm:$0xff] %v1123
  %1188 = vst [vmem:[%s4 + $0x100] sm:$0xff] %v1124
  %1189 = vst [vmem:[%s4 + $0x108] sm:$0xff] %v1125
  %1190 = vst [vmem:[%s4 + $0x110] sm:$0xff] %v1126
  %1191 = vst [vmem:[%s4 + $0x118] sm:$0xff] %v1127
  %1192 = vst [vmem:[%s4 + $0x120] sm:$0xff] %v1128
  %1193 = vst [vmem:[%s4 + $0x128] sm:$0xff] %v1129
  %1194 = vst [vmem:[%s4 + $0x130] sm:$0xff] %v1130
  %1195 = vst [vmem:[%s4 + $0x138] sm:$0xff] %v1131
  %1196 = vst [vmem:[%s4 + $0x140] sm:$0xff] %v1132
  %1197 = vst [vmem:[%s4 + $0x148] sm:$0xff] %v1133
  %1198 = vst [vmem:[%s4 + $0x150] sm:$0xff] %v1134
  %1199 = vst [vmem:[%s4 + $0x158] sm:$0xff] %v1135
  %1200 = vst [vmem:[%s4 + $0x160] sm:$0xff] %v1136
  %1201 = vst [vmem:[%s4 + $0x168] sm:$0xff] %v1137
  %1202 = vst [vmem:[%s4 + $0x170] sm:$0xff] %v1138
  %1203 = vst [vmem:[%s4 + $0x178] sm:$0xff] %v1139
  %1204 = vst [vmem:[%s4 + $0x180] sm:$0xff] %v1140
  %1205 = vst [vmem:[%s4 + $0x188] sm:$0xff] %v1141
  %1206 = vst [vmem:[%s4 + $0x190] sm:$0xff] %v1142
  %1207 = vst [vmem:[%s4 + $0x198] sm:$0xff] %v1143
  %1208 = vst [vmem:[%s4 + $0x1a0] sm:$0xff] %v1144
  %1209 = vst [vmem:[%s4 + $0x1a8] sm:$0xff] %v1145
  %1210 = vst [vmem:[%s4 + $0x1b0] sm:$0xff] %v1146
  %1211 = vst [vmem:[%s4 + $0x1b8] sm:$0xff] %v1147
  %1212 = vst [vmem:[%s4 + $0x1c0] sm:$0xff] %v1148
  %1213 = vst [vmem:[%s4 + $0x1c8] sm:$0xff] %v1149
  %1214 = vst [vmem:[%s4 + $0x1d0] sm:$0xff] %v1150
  %1215 = vst [vmem:[%s4 + $0x1d8] sm:$0xff] %v1151
  %1216 = vst [vmem:[%s4 + $0x1e0] sm:$0xff] %v1152
  %1217 = vst [vmem:[%s4 + $0x1e8] sm:$0xff] %v1153
  %1218 = vst [vmem:[%s4 + $0x1f0] sm:$0xff] %v1154
  %1219 = vst [vmem:[%s4 + $0x1f8] sm:$0xff] %v1155
  // Predicated region
  $region14: #{efficientdet_forward.22} parent=0 // pred_check
    _
  $region15: #{efficientdet_forward.22} parent=0 // pred_check_branch
    %1221 = sbr.rel (0) target = $region17
  $region16: #{efficientdet_forward.22} parent=0 // pred_region
    _
  $region17: #{efficientdet_forward.22} parent=0 // pred_fallthru
    _
  // Predicated region
  $region18: #{efficientdet_forward.22} parent=0 // pred_check
    _
  $region19: #{efficientdet_forward.22} parent=0 // pred_check_branch
    %1223 = sbr.rel (0) target = $region21
  $region20: #{efficientdet_forward.22} parent=0 // pred_region
    _
  $region21: #{efficientdet_forward.22} parent=0 // pred_fallthru
    _

// kernel: efficientdet_forward.23
$region0: #{efficientdet_forward.23}
  #allocation0 [shape = 'u32[]', space=smem, size = 0x4, offset = 0x4, fixed_abs, tag = 'smem constant byte address 0x4 - core index']
  #allocation1 [shape = 'u32[144,128]{1,0:T(1,128)}', space=vmem, size = 0x12000, scoped, tag = 'internal scratch']
  #allocation2 [shape = 's32[1]{0}', space=sflag, size = 0x4, scoped, tag = 'scoped memory for efficientdet_forward.23']
  #allocation3 [shape = 's32[1]{0:T(128)S(6)}', space=smem, size = 0x200, scoped, tag = 'prefetched SMEM operand 0']
  %s0 = inlined_call_operand.<no memory space> [shape: s32[1], index: 0, kind: input, shape index: {}]
  %s1 = inlined_call_operand.vmem [shape: bf16[128,80], index: 1, kind: input, shape index: {}]
  %s2 = inlined_call_operand.vmem [shape: bf16[1,80,128], index: 2, kind: input, shape index: {}]
  %s3 = inlined_call_operand.vmem [shape: f32[1,1,128], index: 3, kind: input, shape index: {}]
  %s4 = inlined_call_operand.vmem [shape: f32[128,128], index: 4, kind: output, shape index: {}]
  %s5 = sld [smem:[#allocation0]]
  $region22: #{efficientdet_forward.23} parent=0
    _
  %s7 = ssub.s32 1, %s5
  %s8 = scalar_select 0, %s7, %s5
  %9 = sst [smem:[#allocation3]] %s0
  // Predicated region
  $region2: #{efficientdet_forward.23} parent=0 // pred_check
    _
  $region3: #{efficientdet_forward.23} parent=0 // pred_check_branch
    %11 = sbr.rel (0) target = $region5
  $region4: #{efficientdet_forward.23} parent=0 // pred_region
    _
  $region5: #{efficientdet_forward.23} parent=0 // pred_fallthru
    _
  // Predicated region
  $region6: #{efficientdet_forward.23} parent=0 // pred_check
    _
  $region7: #{efficientdet_forward.23} parent=0 // pred_check_branch
    %13 = sbr.rel (0) target = $region9
  $region8: #{efficientdet_forward.23} parent=0 // pred_region
    %s14 = sld [smem:[#allocation3]]
    %p15 = scmp.lt.s32.totalorder %s14, 0
    %s16 = scalar_select %p15, %s14, 0
    %s17 = smul.addr %s16, 10
    %s18 = smul.addr %s17, 4
    %s19 = scalar_lea.vmem %s2, %s18
    %s20 = sld [smem:[#allocation3]]
  $region9: #{efficientdet_forward.23} parent=0 // pred_fallthru
    _
  // Predicated region
  $region10: #{efficientdet_forward.23} parent=0 // pred_check
    _
  $region11: #{efficientdet_forward.23} parent=0 // pred_check_branch
    %22 = sbr.rel (0) target = $region13
  $region12: #{efficientdet_forward.23} parent=0 // pred_region
    %s23 = sld [smem:[#allocation3]]
    %p24 = scmp.lt.s32.totalorder %s23, 0
    %s25 = scalar_select %p24, %s23, 0
    %s26 = scalar_lea.vmem %s3, %s25
    %s27 = sld [smem:[#allocation3]]
  $region13: #{efficientdet_forward.23} parent=0 // pred_fallthru
    _
  %s28 = sld [smem:[#allocation3]]
  %p29 = scmp.lt.s32.totalorder %s28, 0
  %s30 = scalar_select %p29, %s28, 0
  %s31 = smul.addr %s30, 10
  %s32 = smul.addr %s31, 4
  %s33 = scalar_lea.vmem %s2, %s32
  %s34 = sld [smem:[#allocation3]]
  %p35 = scmp.lt.s32.totalorder %s34, 0
  %s36 = scalar_select %p35, %s34, 0
  %s37 = scalar_lea.vmem %s3, %s36
  %s38 = sld [smem:[#allocation3]]
  %p39 = scmp.lt.s32.totalorder %s38, 0
  %s40 = scalar_select %p39, %s38, 0
  %s41 = smul.addr %s40, 10
  %s42 = smul.addr %s41, 4
  %s43 = scalar_lea.vmem %s2, %s42
  %s44 = sld [smem:[#allocation3]]
  %s45 = sld [smem:[#allocation3]]
  %p46 = scmp.lt.s32.totalorder %s45, 0
  %s47 = scalar_select %p46, %s45, 0
  %s48 = scalar_lea.vmem %s3, %s47
  %s49 = sld [smem:[#allocation3]]
  %v51 = vld [vmem:[%s1] sm:$0xf]
  %v52 = vld [vmem:[%s1 + $0x4] sm:$0xf]
  %v53 = vld [vmem:[%s1 + $0x8] sm:$0xf]
  %v54 = vld [vmem:[%s1 + $0xc] sm:$0xf]
  %v55 = vld [vmem:[%s1 + $0x10] sm:$0xf]
  %v56 = vld [vmem:[%s1 + $0x14] sm:$0xf]
  %v57 = vld [vmem:[%s1 + $0x18] sm:$0xf]
  %v58 = vld [vmem:[%s1 + $0x1c] sm:$0xf]
  %v59 = vld [vmem:[%s1 + $0x20] sm:$0xf]
  %v60 = vld [vmem:[%s1 + $0x24] sm:$0xf]
  %v61 = vld [vmem:[%s1 + $0x28] sm:$0xf]
  %v62 = vld [vmem:[%s1 + $0x2c] sm:$0xf]
  %v63 = vld [vmem:[%s1 + $0x30] sm:$0xf]
  %v64 = vld [vmem:[%s1 + $0x34] sm:$0xf]
  %v65 = vld [vmem:[%s1 + $0x38] sm:$0xf]
  %v66 = vld [vmem:[%s1 + $0x3c] sm:$0xf]
  %v67 = vld [vmem:[%s43] sm:$0xf]
  %v68 = vld [vmem:[%s43 + $0x4] sm:$0xf]
  %v69 = vld [vmem:[%s43 + $0x8] sm:$0xf]
  %v70 = vld [vmem:[%s43 + $0xc] sm:$0xf]
  %v71 = vld [vmem:[%s43 + $0x10] sm:$0xf]
  %v72 = vld [vmem:[%s43 + $0x14] sm:$0xf]
  %v73 = vld [vmem:[%s43 + $0x18] sm:$0xf]
  %v74 = vld [vmem:[%s43 + $0x1c] sm:$0xf]
  %v75 = vld [vmem:[%s43 + $0x20] sm:$0xf]
  %v76 = vld [vmem:[%s43 + $0x24] sm:$0xf]
  %v77 = vld [vmem:[%s48] sm:$0x1]
  %v79 = vlaneseq
  %v80 = vshrl.u32 %v79, 7
  %v81 = vsub.s32 0, %v80
  %v82 = vrot.slane %v77, %v81
  %v100 = vunpack.c.l.b16 %v51
  %v101 = vunpack.c.l.b16 %v52
  %v102 = vunpack.c.l.b16 %v53
  %v103 = vunpack.c.l.b16 %v54
  %v104 = vunpack.c.l.b16 %v55
  %v105 = vunpack.c.l.b16 %v56
  %v106 = vunpack.c.l.b16 %v57
  %v107 = vunpack.c.l.b16 %v58
  %v108 = vunpack.c.l.b16 %v59
  %v109 = vunpack.c.l.b16 %v60
  %v110 = vunpack.c.l.b16 %v61
  %v111 = vunpack.c.l.b16 %v62
  %v112 = vunpack.c.l.b16 %v63
  %v113 = vunpack.c.l.b16 %v64
  %v114 = vunpack.c.l.b16 %v65
  %v115 = vunpack.c.l.b16 %v66
  %v116 = vpack.c.b16 %v101, %v100
  %v117 = vpack.c.b16 %v103, %v102
  %v118 = vpack.c.b16 %v105, %v104
  %v119 = vpack.c.b16 %v107, %v106
  %v120 = vpack.c.b16 %v109, %v108
  %v121 = vpack.c.b16 %v111, %v110
  %v122 = vpack.c.b16 %v113, %v112
  %v123 = vpack.c.b16 %v115, %v114
  %v134 = vunpack.c.l.b16 %v67
  %v135 = vunpack.c.l.b16 %v68
  %v136 = vunpack.c.l.b16 %v69
  %v137 = vunpack.c.l.b16 %v70
  %v138 = vunpack.c.l.b16 %v71
  %v139 = vunpack.c.l.b16 %v72
  %v140 = vunpack.c.l.b16 %v73
  %v141 = vunpack.c.l.b16 %v74
  %v142 = vunpack.c.l.b16 %v75
  %v143 = vunpack.c.l.b16 %v76
  %v144 = vpack.c.b16 %v135, %v134
  %v145 = vpack.c.b16 %v137, %v136
  %v146 = vpack.c.b16 %v139, %v138
  %v147 = vpack.c.b16 %v141, %v140
  %v148 = vpack.c.b16 %v143, %v142
  %vm154 = vcmask 654336
  %v156 = vsel %vm154, %v116, 0
  %v159 = vsel %vm154, %v117, 0
  %v162 = vsel %vm154, %v118, 0
  %v165 = vsel %vm154, %v119, 0
  %v168 = vsel %vm154, %v120, 0
  %v171 = vsel %vm154, %v121, 0
  %v174 = vsel %vm154, %v122, 0
  %v177 = vsel %vm154, %v123, 0
  %179 = vmatprep.subr.bf16.mxu0 0
  %180 = vmatpush1.bf16.msra.mxu0 %v144
  %181 = vmatprep.subr.bf16.mxu0 0
  %182 = vmatpush1.bf16.msra.mxu0 %v145
  %183 = vmatprep.subr.bf16.mxu0 0
  %184 = vmatpush1.bf16.msra.mxu0 %v146
  %185 = vmatprep.subr.bf16.mxu0 0
  %186 = vmatpush1.bf16.msra.mxu0 %v147
  %187 = vmatprep.subr.bf16.mxu0 0
  %188 = vmatpush1.bf16.msra.mxu0 %v148
  %189 = vmatprep.subr.bf16.mxu0 0
  %190 = vmatpush1.bf16.msra.mxu0 0
  %191 = vmatprep.subr.bf16.mxu0 0
  %192 = vmatpush1.bf16.msra.mxu0 0
  %193 = vmatprep.subr.bf16.mxu0 0
  %194 = vmatpush1.bf16.msra.mxu0 0
  %195 = vmatprep.subr.bf16.mxu0 0
  %196 = vmatpush1.bf16.msra.mxu0 0
  %197 = vmatprep.subr.bf16.mxu0 0
  %198 = vmatpush1.bf16.msra.mxu0 0
  %199 = vmatprep.subr.bf16.mxu0 0
  %200 = vmatpush1.bf16.msra.mxu0 0
  %201 = vmatprep.subr.bf16.mxu0 0
  %202 = vmatpush1.bf16.msra.mxu0 0
  %203 = vmatprep.subr.bf16.mxu0 0
  %204 = vmatpush1.bf16.msra.mxu0 0
  %205 = vmatprep.subr.bf16.mxu0 0
  %206 = vmatpush1.bf16.msra.mxu0 0
  %207 = vmatprep.subr.bf16.mxu0 0
  %208 = vmatpush1.bf16.msra.mxu0 0
  %209 = vmatprep.subr.bf16.mxu0 0
  %210 = vmatpush1.bf16.msra.mxu0 0
  %211 = vmatprep.mubr.bf16.mxu0 0
  %212 = vmatmul.mubr.bf16.gmra.mrb[0].mxu0 %v156
  %v213 = vpop.f32.mrb[0].mxu0
  %v214 = vadd.f32 %v82, %v213
  %v215 = vpop.f32.mrb[0].mxu0
  %v216 = vpop.f32.mrb[0].mxu0
  %v217 = vadd.f32 %v82, %v216
  %v218 = vpop.f32.mrb[0].mxu0
  %219 = vmatprep.mubr.bf16.mxu0 0
  %220 = vmatmul.mubr.bf16.gmra.mrb[0].mxu0 %v159
  %v221 = vpop.f32.mrb[0].mxu0
  %v222 = vadd.f32 %v82, %v221
  %v223 = vpop.f32.mrb[0].mxu0
  %v224 = vpop.f32.mrb[0].mxu0
  %v225 = vadd.f32 %v82, %v224
  %v226 = vpop.f32.mrb[0].mxu0
  %227 = vmatprep.mubr.bf16.mxu0 0
  %228 = vmatmul.mubr.bf16.gmra.mrb[0].mxu0 %v162
  %v229 = vpop.f32.mrb[0].mxu0
  %v230 = vadd.f32 %v82, %v229
  %v231 = vpop.f32.mrb[0].mxu0
  %v232 = vpop.f32.mrb[0].mxu0
  %v233 = vadd.f32 %v82, %v232
  %v234 = vpop.f32.mrb[0].mxu0
  %235 = vmatprep.mubr.bf16.mxu0 0
  %236 = vmatmul.mubr.bf16.gmra.mrb[0].mxu0 %v165
  %v237 = vpop.f32.mrb[0].mxu0
  %v238 = vadd.f32 %v82, %v237
  %v239 = vpop.f32.mrb[0].mxu0
  %v240 = vpop.f32.mrb[0].mxu0
  %v241 = vadd.f32 %v82, %v240
  %v242 = vpop.f32.mrb[0].mxu0
  %243 = vmatprep.mubr.bf16.mxu0 0
  %244 = vmatmul.mubr.bf16.gmra.mrb[0].mxu0 %v168
  %v245 = vpop.f32.mrb[0].mxu0
  %v246 = vadd.f32 %v82, %v245
  %v247 = vpop.f32.mrb[0].mxu0
  %v248 = vpop.f32.mrb[0].mxu0
  %v249 = vadd.f32 %v82, %v248
  %v250 = vpop.f32.mrb[0].mxu0
  %251 = vmatprep.mubr.bf16.mxu0 0
  %252 = vmatmul.mubr.bf16.gmra.mrb[0].mxu0 %v171
  %v253 = vpop.f32.mrb[0].mxu0
  %v254 = vadd.f32 %v82, %v253
  %v255 = vpop.f32.mrb[0].mxu0
  %v256 = vpop.f32.mrb[0].mxu0
  %v257 = vadd.f32 %v82, %v256
  %v258 = vpop.f32.mrb[0].mxu0
  %259 = vmatprep.mubr.bf16.mxu0 0
  %260 = vmatmul.mubr.bf16.gmra.mrb[0].mxu0 %v174
  %v261 = vpop.f32.mrb[0].mxu0
  %v262 = vadd.f32 %v82, %v261
  %v263 = vpop.f32.mrb[0].mxu0
  %v264 = vpop.f32.mrb[0].mxu0
  %v265 = vadd.f32 %v82, %v264
  %v266 = vpop.f32.mrb[0].mxu0
  %267 = vmatprep.mubr.bf16.mxu0 0
  %268 = vmatmul.mubr.bf16.gmra.mrb[0].mxu0 %v177
  %v269 = vpop.f32.mrb[0].mxu0
  %v270 = vadd.f32 %v82, %v269
  %v271 = vpop.f32.mrb[0].mxu0
  %v272 = vpop.f32.mrb[0].mxu0
  %v273 = vadd.f32 %v82, %v272
  %v274 = vpop.f32.mrb[0].mxu0
  %275 = vdwg.mxu0
  %v276 = vsub.f32 0.0, %v214
  %v277 = vsub.f32 0.0, %v217
  %v278 = vsub.f32 0.0, %v222
  %v279 = vsub.f32 0.0, %v225
  %v280 = vsub.f32 0.0, %v230
  %v281 = vsub.f32 0.0, %v233
  %v282 = vsub.f32 0.0, %v238
  %v283 = vsub.f32 0.0, %v241
  %v284 = vsub.f32 0.0, %v246
  %v285 = vsub.f32 0.0, %v249
  %v286 = vsub.f32 0.0, %v254
  %v287 = vsub.f32 0.0, %v257
  %v288 = vsub.f32 0.0, %v262
  %v289 = vsub.f32 0.0, %v265
  %v290 = vsub.f32 0.0, %v270
  %v291 = vsub.f32 0.0, %v273
  %v292 = vmul.f32 %v276, 1.442695
  %v293 = vpow.pop %v292
  %v294 = vmul.f32 %v277, 1.442695
  %v295 = vpow.pop %v294
  %v296 = vmul.f32 %v278, 1.442695
  %v297 = vpow.pop %v296
  %v298 = vmul.f32 %v279, 1.442695
  %v299 = vpow.pop %v298
  %v300 = vmul.f32 %v280, 1.442695
  %v301 = vpow.pop %v300
  %v302 = vmul.f32 %v281, 1.442695
  %v303 = vpow.pop %v302
  %v304 = vmul.f32 %v282, 1.442695
  %v305 = vpow.pop %v304
  %v306 = vmul.f32 %v283, 1.442695
  %v307 = vpow.pop %v306
  %v308 = vmul.f32 %v284, 1.442695
  %v309 = vpow.pop %v308
  %v310 = vmul.f32 %v285, 1.442695
  %v311 = vpow.pop %v310
  %v312 = vmul.f32 %v286, 1.442695
  %v313 = vpow.pop %v312
  %v314 = vmul.f32 %v287, 1.442695
  %v315 = vpow.pop %v314
  %v316 = vmul.f32 %v288, 1.442695
  %v317 = vpow.pop %v316
  %v318 = vmul.f32 %v289, 1.442695
  %v319 = vpow.pop %v318
  %v320 = vmul.f32 %v290, 1.442695
  %v321 = vpow.pop %v320
  %v322 = vmul.f32 %v291, 1.442695
  %v323 = vpow.pop %v322
  %v324 = vadd.f32 %v293, 1.0
  %v325 = vadd.f32 %v295, 1.0
  %v326 = vadd.f32 %v297, 1.0
  %v327 = vadd.f32 %v299, 1.0
  %v328 = vadd.f32 %v301, 1.0
  %v329 = vadd.f32 %v303, 1.0
  %v330 = vadd.f32 %v305, 1.0
  %v331 = vadd.f32 %v307, 1.0
  %v332 = vadd.f32 %v309, 1.0
  %v333 = vadd.f32 %v311, 1.0
  %v334 = vadd.f32 %v313, 1.0
  %v335 = vadd.f32 %v315, 1.0
  %v336 = vadd.f32 %v317, 1.0
  %v337 = vadd.f32 %v319, 1.0
  %v338 = vadd.f32 %v321, 1.0
  %v339 = vadd.f32 %v323, 1.0
  %v340 = vrcp.pop %v324
  %v341 = vmul.f32 1.0, %v340
  %v342 = vrcp.pop %v325
  %v343 = vmul.f32 1.0, %v342
  %v344 = vrcp.pop %v326
  %v345 = vmul.f32 1.0, %v344
  %v346 = vrcp.pop %v327
  %v347 = vmul.f32 1.0, %v346
  %v348 = vrcp.pop %v328
  %v349 = vmul.f32 1.0, %v348
  %v350 = vrcp.pop %v329
  %v351 = vmul.f32 1.0, %v350
  %v352 = vrcp.pop %v330
  %v353 = vmul.f32 1.0, %v352
  %v354 = vrcp.pop %v331
  %v355 = vmul.f32 1.0, %v354
  %v356 = vrcp.pop %v332
  %v357 = vmul.f32 1.0, %v356
  %v358 = vrcp.pop %v333
  %v359 = vmul.f32 1.0, %v358
  %v360 = vrcp.pop %v334
  %v361 = vmul.f32 1.0, %v360
  %v362 = vrcp.pop %v335
  %v363 = vmul.f32 1.0, %v362
  %v364 = vrcp.pop %v336
  %v365 = vmul.f32 1.0, %v364
  %v366 = vrcp.pop %v337
  %v367 = vmul.f32 1.0, %v366
  %v368 = vrcp.pop %v338
  %v369 = vmul.f32 1.0, %v368
  %v370 = vrcp.pop %v339
  %v371 = vmul.f32 1.0, %v370
  %v372 = vmul.f32 %v214, %v341
  %v373 = vmul.f32 %v217, %v343
  %v374 = vmul.f32 %v222, %v345
  %v375 = vmul.f32 %v225, %v347
  %v376 = vmul.f32 %v230, %v349
  %v377 = vmul.f32 %v233, %v351
  %v378 = vmul.f32 %v238, %v353
  %v379 = vmul.f32 %v241, %v355
  %v380 = vmul.f32 %v246, %v357
  %v381 = vmul.f32 %v249, %v359
  %v382 = vmul.f32 %v254, %v361
  %v383 = vmul.f32 %v257, %v363
  %v384 = vmul.f32 %v262, %v365
  %v385 = vmul.f32 %v265, %v367
  %v386 = vmul.f32 %v270, %v369
  %v387 = vmul.f32 %v273, %v371
  %388 = vst [vmem:[%s4] sm:$0xff] %v372
  %389 = vst [vmem:[%s4 + $0x8] sm:$0xff] %v373
  %390 = vst [vmem:[%s4 + $0x10] sm:$0xff] %v374
  %391 = vst [vmem:[%s4 + $0x18] sm:$0xff] %v375
  %392 = vst [vmem:[%s4 + $0x20] sm:$0xff] %v376
  %393 = vst [vmem:[%s4 + $0x28] sm:$0xff] %v377
  %394 = vst [vmem:[%s4 + $0x30] sm:$0xff] %v378
  %395 = vst [vmem:[%s4 + $0x38] sm:$0xff] %v379
  %396 = vst [vmem:[%s4 + $0x40] sm:$0xff] %v380
  %397 = vst [vmem:[%s4 + $0x48] sm:$0xff] %v381
  %398 = vst [vmem:[%s4 + $0x50] sm:$0xff] %v382
  %399 = vst [vmem:[%s4 + $0x58] sm:$0xff] %v383
  %400 = vst [vmem:[%s4 + $0x60] sm:$0xff] %v384
  %401 = vst [vmem:[%s4 + $0x68] sm:$0xff] %v385
  %402 = vst [vmem:[%s4 + $0x70] sm:$0xff] %v386
  %403 = vst [vmem:[%s4 + $0x78] sm:$0xff] %v387
  // Predicated region
  $region14: #{efficientdet_forward.23} parent=0 // pred_check
    _
  $region15: #{efficientdet_forward.23} parent=0 // pred_check_branch
    %405 = sbr.rel (0) target = $region17
  $region16: #{efficientdet_forward.23} parent=0 // pred_region
    _
  $region17: #{efficientdet_forward.23} parent=0 // pred_fallthru
    _
  // Predicated region
  $region18: #{efficientdet_forward.23} parent=0 // pred_check
    _
  $region19: #{efficientdet_forward.23} parent=0 // pred_check_branch
    %407 = sbr.rel (0) target = $region21
  $region20: #{efficientdet_forward.23} parent=0 // pred_region
    _
  $region21: #{efficientdet_forward.23} parent=0 // pred_fallthru
    _

// kernel: efficientdet_forward.24
$region0: #{efficientdet_forward.24}
  #allocation0 [shape = 'u32[]', space=smem, size = 0x4, offset = 0x4, fixed_abs, tag = 'smem constant byte address 0x4 - core index']
  #allocation1 [shape = 'u32[144,128]{1,0:T(1,128)}', space=vmem, size = 0x12000, scoped, tag = 'internal scratch']
  #allocation2 [shape = 's32[1]{0}', space=sflag, size = 0x4, scoped, tag = 'scoped memory for efficientdet_forward.24']
  #allocation3 [shape = 's32[1]{0:T(128)S(6)}', space=smem, size = 0x200, scoped, tag = 'prefetched SMEM operand 0']
  %s0 = inlined_call_operand.<no memory space> [shape: s32[1], index: 0, kind: input, shape index: {}]
  %s1 = inlined_call_operand.vmem [shape: bf16[32,80], index: 1, kind: input, shape index: {}]
  %s2 = inlined_call_operand.vmem [shape: bf16[1,80,128], index: 2, kind: input, shape index: {}]
  %s3 = inlined_call_operand.vmem [shape: f32[1,1,128], index: 3, kind: input, shape index: {}]
  %s4 = inlined_call_operand.vmem [shape: f32[32,128], index: 4, kind: output, shape index: {}]
  %s5 = sld [smem:[#allocation0]]
  $region22: #{efficientdet_forward.24} parent=0
    _
  %s7 = ssub.s32 1, %s5
  %s8 = scalar_select 0, %s7, %s5
  %9 = sst [smem:[#allocation3]] %s0
  // Predicated region
  $region2: #{efficientdet_forward.24} parent=0 // pred_check
    _
  $region3: #{efficientdet_forward.24} parent=0 // pred_check_branch
    %11 = sbr.rel (0) target = $region5
  $region4: #{efficientdet_forward.24} parent=0 // pred_region
    _
  $region5: #{efficientdet_forward.24} parent=0 // pred_fallthru
    _
  // Predicated region
  $region6: #{efficientdet_forward.24} parent=0 // pred_check
    _
  $region7: #{efficientdet_forward.24} parent=0 // pred_check_branch
    %13 = sbr.rel (0) target = $region9
  $region8: #{efficientdet_forward.24} parent=0 // pred_region
    %s14 = sld [smem:[#allocation3]]
    %p15 = scmp.lt.s32.totalorder %s14, 0
    %s16 = scalar_select %p15, %s14, 0
    %s17 = smul.addr %s16, 10
    %s18 = smul.addr %s17, 4
    %s19 = scalar_lea.vmem %s2, %s18
    %s20 = sld [smem:[#allocation3]]
  $region9: #{efficientdet_forward.24} parent=0 // pred_fallthru
    _
  // Predicated region
  $region10: #{efficientdet_forward.24} parent=0 // pred_check
    _
  $region11: #{efficientdet_forward.24} parent=0 // pred_check_branch
    %22 = sbr.rel (0) target = $region13
  $region12: #{efficientdet_forward.24} parent=0 // pred_region
    %s23 = sld [smem:[#allocation3]]
    %p24 = scmp.lt.s32.totalorder %s23, 0
    %s25 = scalar_select %p24, %s23, 0
    %s26 = scalar_lea.vmem %s3, %s25
    %s27 = sld [smem:[#allocation3]]
  $region13: #{efficientdet_forward.24} parent=0 // pred_fallthru
    _
  %s28 = sld [smem:[#allocation3]]
  %p29 = scmp.lt.s32.totalorder %s28, 0
  %s30 = scalar_select %p29, %s28, 0
  %s31 = smul.addr %s30, 10
  %s32 = smul.addr %s31, 4
  %s33 = scalar_lea.vmem %s2, %s32
  %s34 = sld [smem:[#allocation3]]
  %p35 = scmp.lt.s32.totalorder %s34, 0
  %s36 = scalar_select %p35, %s34, 0
  %s37 = scalar_lea.vmem %s3, %s36
  %s38 = sld [smem:[#allocation3]]
  %p39 = scmp.lt.s32.totalorder %s38, 0
  %s40 = scalar_select %p39, %s38, 0
  %s41 = smul.addr %s40, 10
  %s42 = smul.addr %s41, 4
  %s43 = scalar_lea.vmem %s2, %s42
  %s44 = sld [smem:[#allocation3]]
  %s45 = sld [smem:[#allocation3]]
  %p46 = scmp.lt.s32.totalorder %s45, 0
  %s47 = scalar_select %p46, %s45, 0
  %s48 = scalar_lea.vmem %s3, %s47
  %s49 = sld [smem:[#allocation3]]
  %v51 = vld [vmem:[%s1] sm:$0xf]
  %v52 = vld [vmem:[%s1 + $0x4] sm:$0xf]
  %v53 = vld [vmem:[%s1 + $0x8] sm:$0xf]
  %v54 = vld [vmem:[%s1 + $0xc] sm:$0xf]
  %v55 = vld [vmem:[%s43] sm:$0xf]
  %v56 = vld [vmem:[%s43 + $0x4] sm:$0xf]
  %v57 = vld [vmem:[%s43 + $0x8] sm:$0xf]
  %v58 = vld [vmem:[%s43 + $0xc] sm:$0xf]
  %v59 = vld [vmem:[%s43 + $0x10] sm:$0xf]
  %v60 = vld [vmem:[%s43 + $0x14] sm:$0xf]
  %v61 = vld [vmem:[%s43 + $0x18] sm:$0xf]
  %v62 = vld [vmem:[%s43 + $0x1c] sm:$0xf]
  %v63 = vld [vmem:[%s43 + $0x20] sm:$0xf]
  %v64 = vld [vmem:[%s43 + $0x24] sm:$0xf]
  %v65 = vld [vmem:[%s48] sm:$0x1]
  %v67 = vlaneseq
  %v68 = vshrl.u32 %v67, 7
  %v69 = vsub.s32 0, %v68
  %v70 = vrot.slane %v65, %v69
  %v76 = vunpack.c.l.b16 %v51
  %v77 = vunpack.c.l.b16 %v52
  %v78 = vunpack.c.l.b16 %v53
  %v79 = vunpack.c.l.b16 %v54
  %v80 = vpack.c.b16 %v77, %v76
  %v81 = vpack.c.b16 %v79, %v78
  %v92 = vunpack.c.l.b16 %v55
  %v93 = vunpack.c.l.b16 %v56
  %v94 = vunpack.c.l.b16 %v57
  %v95 = vunpack.c.l.b16 %v58
  %v96 = vunpack.c.l.b16 %v59
  %v97 = vunpack.c.l.b16 %v60
  %v98 = vunpack.c.l.b16 %v61
  %v99 = vunpack.c.l.b16 %v62
  %v100 = vunpack.c.l.b16 %v63
  %v101 = vunpack.c.l.b16 %v64
  %v102 = vpack.c.b16 %v93, %v92
  %v103 = vpack.c.b16 %v95, %v94
  %v104 = vpack.c.b16 %v97, %v96
  %v105 = vpack.c.b16 %v99, %v98
  %v106 = vpack.c.b16 %v101, %v100
  %vm112 = vcmask 654336
  %v114 = vsel %vm112, %v80, 0
  %v117 = vsel %vm112, %v81, 0
  %119 = vmatprep.subr.bf16.mxu0 0
  %120 = vmatpush1.bf16.msra.mxu0 %v102
  %121 = vmatprep.subr.bf16.mxu0 0
  %122 = vmatpush1.bf16.msra.mxu0 %v103
  %123 = vmatprep.subr.bf16.mxu0 0
  %124 = vmatpush1.bf16.msra.mxu0 %v104
  %125 = vmatprep.subr.bf16.mxu0 0
  %126 = vmatpush1.bf16.msra.mxu0 %v105
  %127 = vmatprep.subr.bf16.mxu0 0
  %128 = vmatpush1.bf16.msra.mxu0 %v106
  %129 = vmatprep.subr.bf16.mxu0 0
  %130 = vmatpush1.bf16.msra.mxu0 0
  %131 = vmatprep.subr.bf16.mxu0 0
  %132 = vmatpush1.bf16.msra.mxu0 0
  %133 = vmatprep.subr.bf16.mxu0 0
  %134 = vmatpush1.bf16.msra.mxu0 0
  %135 = vmatprep.subr.bf16.mxu0 0
  %136 = vmatpush1.bf16.msra.mxu0 0
  %137 = vmatprep.subr.bf16.mxu0 0
  %138 = vmatpush1.bf16.msra.mxu0 0
  %139 = vmatprep.subr.bf16.mxu0 0
  %140 = vmatpush1.bf16.msra.mxu0 0
  %141 = vmatprep.subr.bf16.mxu0 0
  %142 = vmatpush1.bf16.msra.mxu0 0
  %143 = vmatprep.subr.bf16.mxu0 0
  %144 = vmatpush1.bf16.msra.mxu0 0
  %145 = vmatprep.subr.bf16.mxu0 0
  %146 = vmatpush1.bf16.msra.mxu0 0
  %147 = vmatprep.subr.bf16.mxu0 0
  %148 = vmatpush1.bf16.msra.mxu0 0
  %149 = vmatprep.subr.bf16.mxu0 0
  %150 = vmatpush1.bf16.msra.mxu0 0
  %151 = vmatprep.mubr.bf16.mxu0 0
  %152 = vmatmul.mubr.bf16.gmra.mrb[0].mxu0 %v114
  %v153 = vpop.f32.mrb[0].mxu0
  %v154 = vadd.f32 %v70, %v153
  %v155 = vpop.f32.mrb[0].mxu0
  %v156 = vpop.f32.mrb[0].mxu0
  %v157 = vadd.f32 %v70, %v156
  %v158 = vpop.f32.mrb[0].mxu0
  %159 = vmatprep.mubr.bf16.mxu0 0
  %160 = vmatmul.mubr.bf16.gmra.mrb[0].mxu0 %v117
  %v161 = vpop.f32.mrb[0].mxu0
  %v162 = vadd.f32 %v70, %v161
  %v163 = vpop.f32.mrb[0].mxu0
  %v164 = vpop.f32.mrb[0].mxu0
  %v165 = vadd.f32 %v70, %v164
  %v166 = vpop.f32.mrb[0].mxu0
  %167 = vdwg.mxu0
  %v168 = vsub.f32 0.0, %v154
  %v169 = vsub.f32 0.0, %v157
  %v170 = vsub.f32 0.0, %v162
  %v171 = vsub.f32 0.0, %v165
  %v172 = vmul.f32 %v168, 1.442695
  %v173 = vpow.pop %v172
  %v174 = vmul.f32 %v169, 1.442695
  %v175 = vpow.pop %v174
  %v176 = vmul.f32 %v170, 1.442695
  %v177 = vpow.pop %v176
  %v178 = vmul.f32 %v171, 1.442695
  %v179 = vpow.pop %v178
  %v180 = vadd.f32 %v173, 1.0
  %v181 = vadd.f32 %v175, 1.0
  %v182 = vadd.f32 %v177, 1.0
  %v183 = vadd.f32 %v179, 1.0
  %v184 = vrcp.pop %v180
  %v185 = vmul.f32 1.0, %v184
  %v186 = vrcp.pop %v181
  %v187 = vmul.f32 1.0, %v186
  %v188 = vrcp.pop %v182
  %v189 = vmul.f32 1.0, %v188
  %v190 = vrcp.pop %v183
  %v191 = vmul.f32 1.0, %v190
  %v192 = vmul.f32 %v154, %v185
  %v193 = vmul.f32 %v157, %v187
  %v194 = vmul.f32 %v162, %v189
  %v195 = vmul.f32 %v165, %v191
  %196 = vst [vmem:[%s4] sm:$0xff] %v192
  %197 = vst [vmem:[%s4 + $0x8] sm:$0xff] %v193
  %198 = vst [vmem:[%s4 + $0x10] sm:$0xff] %v194
  %199 = vst [vmem:[%s4 + $0x18] sm:$0xff] %v195
  // Predicated region
  $region14: #{efficientdet_forward.24} parent=0 // pred_check
    _
  $region15: #{efficientdet_forward.24} parent=0 // pred_check_branch
    %201 = sbr.rel (0) target = $region17
  $region16: #{efficientdet_forward.24} parent=0 // pred_region
    _
  $region17: #{efficientdet_forward.24} parent=0 // pred_fallthru
    _
  // Predicated region
  $region18: #{efficientdet_forward.24} parent=0 // pred_check
    _
  $region19: #{efficientdet_forward.24} parent=0 // pred_check_branch
    %203 = sbr.rel (0) target = $region21
  $region20: #{efficientdet_forward.24} parent=0 // pred_region
    _
  $region21: #{efficientdet_forward.24} parent=0 // pred_fallthru
    _

// kernel: efficientdet_forward.27
$region0: #{efficientdet_forward.27}
  #allocation0 [shape = 'u32[]', space=smem, size = 0x4, offset = 0x4, fixed_abs, tag = 'smem constant byte address 0x4 - core index']
  #allocation1 [shape = 'u32[144,128]{1,0:T(1,128)}', space=vmem, size = 0x12000, scoped, tag = 'internal scratch']
  #allocation2 [shape = 's32[1]{0}', space=sflag, size = 0x4, scoped, tag = 'scoped memory for efficientdet_forward.27']
  #allocation3 [shape = 's32[1]{0:T(128)S(6)}', space=smem, size = 0x200, scoped, tag = 'prefetched SMEM operand 0']
  %s0 = inlined_call_operand.<no memory space> [shape: s32[1], index: 0, kind: input, shape index: {}]
  %s1 = inlined_call_operand.vmem [shape: bf16[8,32], index: 1, kind: input, shape index: {}]
  %s2 = inlined_call_operand.vmem [shape: bf16[1,32,128], index: 2, kind: input, shape index: {}]
  %s3 = inlined_call_operand.vmem [shape: f32[1,1,128], index: 3, kind: input, shape index: {}]
  %s4 = inlined_call_operand.vmem [shape: f32[8,128], index: 4, kind: output, shape index: {}]
  %s5 = sld [smem:[#allocation0]]
  $region22: #{efficientdet_forward.27} parent=0
    _
  %s7 = ssub.s32 1, %s5
  %s8 = scalar_select 0, %s7, %s5
  %9 = sst [smem:[#allocation3]] %s0
  // Predicated region
  $region2: #{efficientdet_forward.27} parent=0 // pred_check
    _
  $region3: #{efficientdet_forward.27} parent=0 // pred_check_branch
    %11 = sbr.rel (0) target = $region5
  $region4: #{efficientdet_forward.27} parent=0 // pred_region
    _
  $region5: #{efficientdet_forward.27} parent=0 // pred_fallthru
    _
  // Predicated region
  $region6: #{efficientdet_forward.27} parent=0 // pred_check
    _
  $region7: #{efficientdet_forward.27} parent=0 // pred_check_branch
    %13 = sbr.rel (0) target = $region9
  $region8: #{efficientdet_forward.27} parent=0 // pred_region
    %s14 = sld [smem:[#allocation3]]
    %p15 = scmp.lt.s32.totalorder %s14, 0
    %s16 = scalar_select %p15, %s14, 0
    %s17 = smul.addr %s16, 4
    %s18 = smul.addr %s17, 4
    %s19 = scalar_lea.vmem %s2, %s18
    %s20 = sld [smem:[#allocation3]]
  $region9: #{efficientdet_forward.27} parent=0 // pred_fallthru
    _
  // Predicated region
  $region10: #{efficientdet_forward.27} parent=0 // pred_check
    _
  $region11: #{efficientdet_forward.27} parent=0 // pred_check_branch
    %22 = sbr.rel (0) target = $region13
  $region12: #{efficientdet_forward.27} parent=0 // pred_region
    %s23 = sld [smem:[#allocation3]]
    %p24 = scmp.lt.s32.totalorder %s23, 0
    %s25 = scalar_select %p24, %s23, 0
    %s26 = scalar_lea.vmem %s3, %s25
    %s27 = sld [smem:[#allocation3]]
  $region13: #{efficientdet_forward.27} parent=0 // pred_fallthru
    _
  %s28 = sld [smem:[#allocation3]]
  %p29 = scmp.lt.s32.totalorder %s28, 0
  %s30 = scalar_select %p29, %s28, 0
  %s31 = smul.addr %s30, 4
  %s32 = smul.addr %s31, 4
  %s33 = scalar_lea.vmem %s2, %s32
  %s34 = sld [smem:[#allocation3]]
  %p35 = scmp.lt.s32.totalorder %s34, 0
  %s36 = scalar_select %p35, %s34, 0
  %s37 = scalar_lea.vmem %s3, %s36
  %s38 = sld [smem:[#allocation3]]
  %p39 = scmp.lt.s32.totalorder %s38, 0
  %s40 = scalar_select %p39, %s38, 0
  %s41 = smul.addr %s40, 4
  %s42 = smul.addr %s41, 4
  %s43 = scalar_lea.vmem %s2, %s42
  %s44 = sld [smem:[#allocation3]]
  %s45 = sld [smem:[#allocation3]]
  %p46 = scmp.lt.s32.totalorder %s45, 0
  %s47 = scalar_select %p46, %s45, 0
  %s48 = scalar_lea.vmem %s3, %s47
  %s49 = sld [smem:[#allocation3]]
  %v51 = vld [vmem:[%s1] sm:$0xf]
  %v52 = vld [vmem:[%s43] sm:$0xf]
  %v53 = vld [vmem:[%s43 + $0x4] sm:$0xf]
  %v54 = vld [vmem:[%s43 + $0x8] sm:$0xf]
  %v55 = vld [vmem:[%s43 + $0xc] sm:$0xf]
  %v56 = vld [vmem:[%s48] sm:$0x1]
  %v58 = vlaneseq
  %v59 = vshrl.u32 %v58, 7
  %v60 = vsub.s32 0, %v59
  %v61 = vrot.slane %v56, %v60
  %v67 = vunpack.c.l.b16 %v52
  %v68 = vunpack.c.l.b16 %v53
  %v69 = vunpack.c.l.b16 %v54
  %v70 = vunpack.c.l.b16 %v55
  %v71 = vpack.c.b16 %v68, %v67
  %v72 = vpack.c.b16 %v70, %v69
  %vm75 = vcmask 261120
  %v77 = vsel %vm75, %v51, 0
  %79 = vmatprep.subr.bf16.mxu0 0
  %80 = vmatpush1.bf16.msra.mxu0 %v71
  %81 = vmatprep.subr.bf16.mxu0 0
  %82 = vmatpush1.bf16.msra.mxu0 %v72
  %83 = vmatprep.subr.bf16.mxu0 0
  %84 = vmatpush1.bf16.msra.mxu0 0
  %85 = vmatprep.subr.bf16.mxu0 0
  %86 = vmatpush1.bf16.msra.mxu0 0
  %87 = vmatprep.subr.bf16.mxu0 0
  %88 = vmatpush1.bf16.msra.mxu0 0
  %89 = vmatprep.subr.bf16.mxu0 0
  %90 = vmatpush1.bf16.msra.mxu0 0
  %91 = vmatprep.subr.bf16.mxu0 0
  %92 = vmatpush1.bf16.msra.mxu0 0
  %93 = vmatprep.subr.bf16.mxu0 0
  %94 = vmatpush1.bf16.msra.mxu0 0
  %95 = vmatprep.subr.bf16.mxu0 0
  %96 = vmatpush1.bf16.msra.mxu0 0
  %97 = vmatprep.subr.bf16.mxu0 0
  %98 = vmatpush1.bf16.msra.mxu0 0
  %99 = vmatprep.subr.bf16.mxu0 0
  %100 = vmatpush1.bf16.msra.mxu0 0
  %101 = vmatprep.subr.bf16.mxu0 0
  %102 = vmatpush1.bf16.msra.mxu0 0
  %103 = vmatprep.subr.bf16.mxu0 0
  %104 = vmatpush1.bf16.msra.mxu0 0
  %105 = vmatprep.subr.bf16.mxu0 0
  %106 = vmatpush1.bf16.msra.mxu0 0
  %107 = vmatprep.subr.bf16.mxu0 0
  %108 = vmatpush1.bf16.msra.mxu0 0
  %109 = vmatprep.subr.bf16.mxu0 0
  %110 = vmatpush1.bf16.msra.mxu0 0
  %111 = vmatprep.mubr.bf16.mxu0 0
  %112 = vmatmul.mubr.bf16.gmra.mrb[0].mxu0 %v77
  %v113 = vpop.f32.mrb[0].mxu0
  %v114 = vadd.f32 %v61, %v113
  %v115 = vpop.f32.mrb[0].mxu0
  %v116 = vpop.f32.mrb[0].mxu0
  %v117 = vpop.f32.mrb[0].mxu0
  %118 = vdwg.mxu0
  %119 = vst [vmem:[%s4] sm:$0xff] %v114
  // Predicated region
  $region14: #{efficientdet_forward.27} parent=0 // pred_check
    _
  $region15: #{efficientdet_forward.27} parent=0 // pred_check_branch
    %121 = sbr.rel (0) target = $region17
  $region16: #{efficientdet_forward.27} parent=0 // pred_region
    _
  $region17: #{efficientdet_forward.27} parent=0 // pred_fallthru
    _
  // Predicated region
  $region18: #{efficientdet_forward.27} parent=0 // pred_check
    _
  $region19: #{efficientdet_forward.27} parent=0 // pred_check_branch
    %123 = sbr.rel (0) target = $region21
  $region20: #{efficientdet_forward.27} parent=0 // pred_region
    _
  $region21: #{efficientdet_forward.27} parent=0 // pred_fallthru
    _

// kernel: efficientdet_forward.25
$region0: #{efficientdet_forward.25}
  #allocation0 [shape = 'u32[]', space=smem, size = 0x4, offset = 0x4, fixed_abs, tag = 'smem constant byte address 0x4 - core index']
  #allocation1 [shape = 'u32[144,128]{1,0:T(1,128)}', space=vmem, size = 0x12000, scoped, tag = 'internal scratch']
  #allocation2 [shape = 's32[1]{0}', space=sflag, size = 0x4, scoped, tag = 'scoped memory for efficientdet_forward.25']
  #allocation3 [shape = 's32[1]{0:T(128)S(6)}', space=smem, size = 0x200, scoped, tag = 'prefetched SMEM operand 0']
  %s0 = inlined_call_operand.<no memory space> [shape: s32[1], index: 0, kind: input, shape index: {}]
  %s1 = inlined_call_operand.vmem [shape: bf16[8,144], index: 1, kind: input, shape index: {}]
  %s2 = inlined_call_operand.vmem [shape: bf16[1,144,128], index: 2, kind: input, shape index: {}]
  %s3 = inlined_call_operand.vmem [shape: f32[1,1,128], index: 3, kind: input, shape index: {}]
  %s4 = inlined_call_operand.vmem [shape: f32[8,128], index: 4, kind: output, shape index: {}]
  %s5 = sld [smem:[#allocation0]]
  $region22: #{efficientdet_forward.25} parent=0
    _
  %s7 = ssub.s32 1, %s5
  %s8 = scalar_select 0, %s7, %s5
  %9 = sst [smem:[#allocation3]] %s0
  // Predicated region
  $region2: #{efficientdet_forward.25} parent=0 // pred_check
    _
  $region3: #{efficientdet_forward.25} parent=0 // pred_check_branch
    %11 = sbr.rel (0) target = $region5
  $region4: #{efficientdet_forward.25} parent=0 // pred_region
    _
  $region5: #{efficientdet_forward.25} parent=0 // pred_fallthru
    _
  // Predicated region
  $region6: #{efficientdet_forward.25} parent=0 // pred_check
    _
  $region7: #{efficientdet_forward.25} parent=0 // pred_check_branch
    %13 = sbr.rel (0) target = $region9
  $region8: #{efficientdet_forward.25} parent=0 // pred_region
    %s14 = sld [smem:[#allocation3]]
    %p15 = scmp.lt.s32.totalorder %s14, 0
    %s16 = scalar_select %p15, %s14, 0
    %s17 = smul.addr %s16, 18
    %s18 = smul.addr %s17, 4
    %s19 = scalar_lea.vmem %s2, %s18
    %s20 = sld [smem:[#allocation3]]
  $region9: #{efficientdet_forward.25} parent=0 // pred_fallthru
    _
  // Predicated region
  $region10: #{efficientdet_forward.25} parent=0 // pred_check
    _
  $region11: #{efficientdet_forward.25} parent=0 // pred_check_branch
    %22 = sbr.rel (0) target = $region13
  $region12: #{efficientdet_forward.25} parent=0 // pred_region
    %s23 = sld [smem:[#allocation3]]
    %p24 = scmp.lt.s32.totalorder %s23, 0
    %s25 = scalar_select %p24, %s23, 0
    %s26 = scalar_lea.vmem %s3, %s25
    %s27 = sld [smem:[#allocation3]]
  $region13: #{efficientdet_forward.25} parent=0 // pred_fallthru
    _
  %s28 = sld [smem:[#allocation3]]
  %p29 = scmp.lt.s32.totalorder %s28, 0
  %s30 = scalar_select %p29, %s28, 0
  %s31 = smul.addr %s30, 18
  %s32 = smul.addr %s31, 4
  %s33 = scalar_lea.vmem %s2, %s32
  %s34 = sld [smem:[#allocation3]]
  %p35 = scmp.lt.s32.totalorder %s34, 0
  %s36 = scalar_select %p35, %s34, 0
  %s37 = scalar_lea.vmem %s3, %s36
  %s38 = sld [smem:[#allocation3]]
  %p39 = scmp.lt.s32.totalorder %s38, 0
  %s40 = scalar_select %p39, %s38, 0
  %s41 = smul.addr %s40, 18
  %s42 = smul.addr %s41, 4
  %s43 = scalar_lea.vmem %s2, %s42
  %s44 = sld [smem:[#allocation3]]
  %s45 = sld [smem:[#allocation3]]
  %p46 = scmp.lt.s32.totalorder %s45, 0
  %s47 = scalar_select %p46, %s45, 0
  %s48 = scalar_lea.vmem %s3, %s47
  %s49 = sld [smem:[#allocation3]]
  %v51 = vld [vmem:[%s1] sm:$0xff]
  %v52 = vld [vmem:[%s43] sm:$0xf]
  %v53 = vld [vmem:[%s43 + $0x4] sm:$0xf]
  %v54 = vld [vmem:[%s43 + $0x8] sm:$0xf]
  %v55 = vld [vmem:[%s43 + $0xc] sm:$0xf]
  %v56 = vld [vmem:[%s43 + $0x10] sm:$0xf]
  %v57 = vld [vmem:[%s43 + $0x14] sm:$0xf]
  %v58 = vld [vmem:[%s43 + $0x18] sm:$0xf]
  %v59 = vld [vmem:[%s43 + $0x1c] sm:$0xf]
  %v60 = vld [vmem:[%s43 + $0x20] sm:$0xf]
  %v61 = vld [vmem:[%s43 + $0x24] sm:$0xf]
  %v62 = vld [vmem:[%s43 + $0x28] sm:$0xf]
  %v63 = vld [vmem:[%s43 + $0x2c] sm:$0xf]
  %v64 = vld [vmem:[%s43 + $0x30] sm:$0xf]
  %v65 = vld [vmem:[%s43 + $0x34] sm:$0xf]
  %v66 = vld [vmem:[%s43 + $0x38] sm:$0xf]
  %v67 = vld [vmem:[%s43 + $0x3c] sm:$0xf]
  %v68 = vld [vmem:[%s43 + $0x40] sm:$0xf]
  %v69 = vld [vmem:[%s43 + $0x44] sm:$0xf]
  %v70 = vld [vmem:[%s48] sm:$0x1]
  %v72 = vlaneseq
  %v73 = vshrl.u32 %v72, 7
  %v74 = vsub.s32 0, %v73
  %v75 = vrot.slane %v70, %v74
  %v78 = vunpack.c.l.b16 %v51
  %v79 = vunpack.c.h.b16 %v51
  %v80 = vpack.c.b16 %v78, %v78
  %v81 = vpack.c.b16 %v79, %v79
  %v101 = vunpack.c.l.b16 %v52
  %v102 = vunpack.c.l.b16 %v53
  %v103 = vunpack.c.l.b16 %v54
  %v104 = vunpack.c.l.b16 %v55
  %v105 = vunpack.c.l.b16 %v56
  %v106 = vunpack.c.l.b16 %v57
  %v107 = vunpack.c.l.b16 %v58
  %v108 = vunpack.c.l.b16 %v59
  %v109 = vunpack.c.l.b16 %v60
  %v110 = vunpack.c.l.b16 %v61
  %v111 = vunpack.c.l.b16 %v62
  %v112 = vunpack.c.l.b16 %v63
  %v113 = vunpack.c.l.b16 %v64
  %v114 = vunpack.c.l.b16 %v65
  %v115 = vunpack.c.l.b16 %v66
  %v116 = vunpack.c.l.b16 %v67
  %v117 = vunpack.c.l.b16 %v68
  %v118 = vunpack.c.l.b16 %v69
  %v119 = vpack.c.b16 %v102, %v101
  %v120 = vpack.c.b16 %v104, %v103
  %v121 = vpack.c.b16 %v106, %v105
  %v122 = vpack.c.b16 %v108, %v107
  %v123 = vpack.c.b16 %v110, %v109
  %v124 = vpack.c.b16 %v112, %v111
  %v125 = vpack.c.b16 %v114, %v113
  %v126 = vpack.c.b16 %v116, %v115
  %v127 = vpack.c.b16 %v118, %v117
  %vm137 = vcmask 130048
  %v139 = vsel %vm137, %v81, 0
  %141 = vmatprep.subr.bf16.mxu0 0
  %142 = vmatpush1.bf16.msra.mxu0 %v119
  %143 = vmatprep.subr.bf16.mxu0 0
  %144 = vmatpush1.bf16.msra.mxu0 %v120
  %145 = vmatprep.subr.bf16.mxu0 0
  %146 = vmatpush1.bf16.msra.mxu0 %v121
  %147 = vmatprep.subr.bf16.mxu0 0
  %148 = vmatpush1.bf16.msra.mxu0 %v122
  %149 = vmatprep.subr.bf16.mxu0 0
  %150 = vmatpush1.bf16.msra.mxu0 %v123
  %151 = vmatprep.subr.bf16.mxu0 0
  %152 = vmatpush1.bf16.msra.mxu0 %v124
  %153 = vmatprep.subr.bf16.mxu0 0
  %154 = vmatpush1.bf16.msra.mxu0 %v125
  %155 = vmatprep.subr.bf16.mxu0 0
  %156 = vmatpush1.bf16.msra.mxu0 %v126
  %157 = vmatprep.subr.bf16.mxu0 0
  %158 = vmatpush1.bf16.msra.mxu0 %v127
  %159 = vmatprep.subr.bf16.mxu0 0
  %160 = vmatpush1.bf16.msra.mxu0 0
  %161 = vmatprep.subr.bf16.mxu0 0
  %162 = vmatpush1.bf16.msra.mxu0 0
  %163 = vmatprep.subr.bf16.mxu0 0
  %164 = vmatpush1.bf16.msra.mxu0 0
  %165 = vmatprep.subr.bf16.mxu0 0
  %166 = vmatpush1.bf16.msra.mxu0 0
  %167 = vmatprep.subr.bf16.mxu0 0
  %168 = vmatpush1.bf16.msra.mxu0 0
  %169 = vmatprep.subr.bf16.mxu0 0
  %170 = vmatpush1.bf16.msra.mxu0 0
  %171 = vmatprep.subr.bf16.mxu0 0
  %172 = vmatpush1.bf16.msra.mxu0 0
  %173 = vmatprep.mubr.bf16.mxu0 %v139
  %174 = vmatmul.mubr.bf16.gmra.mrb[0].mxu0 %v80
  %v175 = vpop.f32.mrb[0].mxu0
  %v176 = vadd.f32 %v75, %v175
  %v177 = vpop.f32.mrb[0].mxu0
  %v178 = vpop.f32.mrb[0].mxu0
  %v179 = vpop.f32.mrb[0].mxu0
  %180 = vdwg.mxu0
  %v181 = vsub.f32 0.0, %v176
  %v182 = vmul.f32 %v181, 1.442695
  %v183 = vpow.pop %v182
  %v184 = vadd.f32 %v183, 1.0
  %v185 = vrcp.pop %v184
  %v186 = vmul.f32 1.0, %v185
  %v187 = vmul.f32 %v176, %v186
  %188 = vst [vmem:[%s4] sm:$0xff] %v187
  // Predicated region
  $region14: #{efficientdet_forward.25} parent=0 // pred_check
    _
  $region15: #{efficientdet_forward.25} parent=0 // pred_check_branch
    %190 = sbr.rel (0) target = $region17
  $region16: #{efficientdet_forward.25} parent=0 // pred_region
    _
  $region17: #{efficientdet_forward.25} parent=0 // pred_fallthru
    _
  // Predicated region
  $region18: #{efficientdet_forward.25} parent=0 // pred_check
    _
  $region19: #{efficientdet_forward.25} parent=0 // pred_check_branch
    %192 = sbr.rel (0) target = $region21
  $region20: #{efficientdet_forward.25} parent=0 // pred_region
    _
  $region21: #{efficientdet_forward.25} parent=0 // pred_fallthru
    _

// kernel: efficientdet_forward.28
$region0: #{efficientdet_forward.28}
  #allocation0 [shape = 'u32[]', space=smem, size = 0x4, offset = 0x4, fixed_abs, tag = 'smem constant byte address 0x4 - core index']
  #allocation1 [shape = 'u32[144,128]{1,0:T(1,128)}', space=vmem, size = 0x12000, scoped, tag = 'internal scratch']
  %s0 = inlined_call_operand.vmem [shape: f32[8,128], index: 0, kind: input, shape index: {}]
  %s1 = inlined_call_operand.vmem [shape: f32[8,128], index: 1, kind: input, shape index: {}]
  %s2 = inlined_call_operand.vmem [shape: f32[2], index: 2, kind: input, shape index: {}]
  %s3 = inlined_call_operand.vmem [shape: f32[8,128], index: 3, kind: output, shape index: {}]
  %s4 = sld [smem:[#allocation0]]
  $region26: #{efficientdet_forward.28} parent=0
    _
  %s6 = ssub.s32 1, %s4
  %s7 = scalar_select 0, %s6, %s4
  $region1: #{efficientdet_forward.28} parent=0
    #allocation2 [shape = 'u8[512]{0}', space=smem, size = 0x200, scoped, tag = 'input window, operand 2, single buffered']
    #allocation3 [shape = 's32[1]{0}', space=sflag, size = 0x4, scoped, tag = 'scoped memory for efficientdet_forward.28']
    %8 = vsyncpa [#allocation3], 0
    // Predicated region
    $region2: #{efficientdet_forward.28} parent=1 // pred_check
      _
    $region3: #{efficientdet_forward.28} parent=1 // pred_check_branch
      %10 = sbr.rel (0) target = $region5
    $region4: #{efficientdet_forward.28} parent=1 // pred_region
      _
    $region5: #{efficientdet_forward.28} parent=1 // pred_fallthru
      _
    // Predicated region
    $region6: #{efficientdet_forward.28} parent=1 // pred_check
      _
    $region7: #{efficientdet_forward.28} parent=1 // pred_check_branch
      %12 = sbr.rel (0) target = $region9
    $region8: #{efficientdet_forward.28} parent=1 // pred_region
      _
    $region9: #{efficientdet_forward.28} parent=1 // pred_fallthru
      _
    // Predicated region
    $region10: #{efficientdet_forward.28} parent=1 // pred_check
      _
    $region11: #{efficientdet_forward.28} parent=1 // pred_check_branch
      %14 = sbr.rel (0) target = $region13
    $region12: #{efficientdet_forward.28} parent=1 // pred_region
      %s16 = ssub.s32 16, 16
      %17 = vsyncadd [#allocation3], %s16
      %s19 = sshll.u32 %s2, 4
      %s20 = int_to_ptr.vmem [resolvable:$true] %s19
      %22 = dma.vmem_to_smem %s20, 16, [#allocation2], [#allocation3]
    $region13: #{efficientdet_forward.28} parent=1 // pred_fallthru
      _
    // Predicated region
    $region14: #{efficientdet_forward.28} parent=1 // pred_check
      _
    $region15: #{efficientdet_forward.28} parent=1 // pred_check_branch
      %24 = sbr.rel (0) target = $region17
    $region16: #{efficientdet_forward.28} parent=1 // pred_region
      %25 = dma.done [#allocation3], 16
    $region17: #{efficientdet_forward.28} parent=1 // pred_fallthru
      _
    %26 = sfence
    %s27 = sld [smem:[#allocation2]]
    %s28 = smax.f32 %s27, 0.0
    %s29 = sld [smem:[#allocation2 + $0x1]]
    %s30 = smax.f32 %s29, 0.0
    %s31 = sadd.f32 %s28, %s30
    %s32 = sadd.f32 %s31, 0.0001
    %v33 = vstv %s32
    %v34 = vrcp.pop %v33
    %s35 = vtos %v34
    %v36 = vld [vmem:[%s0] sm:$0xff]
    %s37 = smul.f32 %s28, %s35
    %v38 = vstv %s37
    %v39 = vmul.f32 %v36, %v38
    %v40 = vld [vmem:[%s1] sm:$0xff]
    %s41 = smul.f32 %s30, %s35
    %v42 = vstv %s41
    %v43 = vmul.f32 %v40, %v42
    %v44 = vadd.f32 %v39, %v43
    %v45 = vsub.f32 0.0, %v44
    %v46 = vmul.f32 %v45, 1.442695
    %v47 = vpow.pop %v46
    %v48 = vadd.f32 %v47, 1.0
    %v49 = vrcp.pop %v48
    %v50 = vmul.f32 1.0, %v49
    %v51 = vmul.f32 %v44, %v50
    %52 = vst [vmem:[%s3] sm:$0xff] %v51
    // Predicated region
    $region18: #{efficientdet_forward.28} parent=1 // pred_check
      _
    $region19: #{efficientdet_forward.28} parent=1 // pred_check_branch
      %54 = sbr.rel (0) target = $region21
    $region20: #{efficientdet_forward.28} parent=1 // pred_region
      _
    $region21: #{efficientdet_forward.28} parent=1 // pred_fallthru
      _
    // Predicated region
    $region22: #{efficientdet_forward.28} parent=1 // pred_check
      _
    $region23: #{efficientdet_forward.28} parent=1 // pred_check_branch
      %56 = sbr.rel (0) target = $region25
    $region24: #{efficientdet_forward.28} parent=1 // pred_region
      _
    $region25: #{efficientdet_forward.28} parent=1 // pred_fallthru
      _
    %57 = vsyncpa [#allocation3], 1

// kernel: efficientdet_forward.29
$region0: #{efficientdet_forward.29}
  #allocation0 [shape = 'u32[]', space=smem, size = 0x4, offset = 0x4, fixed_abs, tag = 'smem constant byte address 0x4 - core index']
  #allocation1 [shape = 'u32[144,128]{1,0:T(1,128)}', space=vmem, size = 0x12000, scoped, tag = 'internal scratch']
  #allocation2 [shape = 's32[1]{0}', space=sflag, size = 0x4, scoped, tag = 'scoped memory for efficientdet_forward.29']
  #allocation3 [shape = 's32[1]{0:T(128)S(6)}', space=smem, size = 0x200, scoped, tag = 'prefetched SMEM operand 0']
  %s0 = inlined_call_operand.<no memory space> [shape: s32[1], index: 0, kind: input, shape index: {}]
  %s1 = inlined_call_operand.vmem [shape: bf16[32,144], index: 1, kind: input, shape index: {}]
  %s2 = inlined_call_operand.vmem [shape: bf16[1,144,128], index: 2, kind: input, shape index: {}]
  %s3 = inlined_call_operand.vmem [shape: f32[1,1,128], index: 3, kind: input, shape index: {}]
  %s4 = inlined_call_operand.vmem [shape: f32[32,128], index: 4, kind: output, shape index: {}]
  %s5 = sld [smem:[#allocation0]]
  $region22: #{efficientdet_forward.29} parent=0
    _
  %s7 = ssub.s32 1, %s5
  %s8 = scalar_select 0, %s7, %s5
  %9 = sst [smem:[#allocation3]] %s0
  // Predicated region
  $region2: #{efficientdet_forward.29} parent=0 // pred_check
    _
  $region3: #{efficientdet_forward.29} parent=0 // pred_check_branch
    %11 = sbr.rel (0) target = $region5
  $region4: #{efficientdet_forward.29} parent=0 // pred_region
    _
  $region5: #{efficientdet_forward.29} parent=0 // pred_fallthru
    _
  // Predicated region
  $region6: #{efficientdet_forward.29} parent=0 // pred_check
    _
  $region7: #{efficientdet_forward.29} parent=0 // pred_check_branch
    %13 = sbr.rel (0) target = $region9
  $region8: #{efficientdet_forward.29} parent=0 // pred_region
    %s14 = sld [smem:[#allocation3]]
    %p15 = scmp.lt.s32.totalorder %s14, 0
    %s16 = scalar_select %p15, %s14, 0
    %s17 = smul.addr %s16, 18
    %s18 = smul.addr %s17, 4
    %s19 = scalar_lea.vmem %s2, %s18
    %s20 = sld [smem:[#allocation3]]
  $region9: #{efficientdet_forward.29} parent=0 // pred_fallthru
    _
  // Predicated region
  $region10: #{efficientdet_forward.29} parent=0 // pred_check
    _
  $region11: #{efficientdet_forward.29} parent=0 // pred_check_branch
    %22 = sbr.rel (0) target = $region13
  $region12: #{efficientdet_forward.29} parent=0 // pred_region
    %s23 = sld [smem:[#allocation3]]
    %p24 = scmp.lt.s32.totalorder %s23, 0
    %s25 = scalar_select %p24, %s23, 0
    %s26 = scalar_lea.vmem %s3, %s25
    %s27 = sld [smem:[#allocation3]]
  $region13: #{efficientdet_forward.29} parent=0 // pred_fallthru
    _
  %s28 = sld [smem:[#allocation3]]
  %p29 = scmp.lt.s32.totalorder %s28, 0
  %s30 = scalar_select %p29, %s28, 0
  %s31 = smul.addr %s30, 18
  %s32 = smul.addr %s31, 4
  %s33 = scalar_lea.vmem %s2, %s32
  %s34 = sld [smem:[#allocation3]]
  %p35 = scmp.lt.s32.totalorder %s34, 0
  %s36 = scalar_select %p35, %s34, 0
  %s37 = scalar_lea.vmem %s3, %s36
  %s38 = sld [smem:[#allocation3]]
  %p39 = scmp.lt.s32.totalorder %s38, 0
  %s40 = scalar_select %p39, %s38, 0
  %s41 = smul.addr %s40, 18
  %s42 = smul.addr %s41, 4
  %s43 = scalar_lea.vmem %s2, %s42
  %s44 = sld [smem:[#allocation3]]
  %s45 = sld [smem:[#allocation3]]
  %p46 = scmp.lt.s32.totalorder %s45, 0
  %s47 = scalar_select %p46, %s45, 0
  %s48 = scalar_lea.vmem %s3, %s47
  %s49 = sld [smem:[#allocation3]]
  %v51 = vld [vmem:[%s1] sm:$0xff]
  %v52 = vld [vmem:[%s1 + $0x8] sm:$0xff]
  %v53 = vld [vmem:[%s1 + $0x10] sm:$0xff]
  %v54 = vld [vmem:[%s1 + $0x18] sm:$0xff]
  %v55 = vld [vmem:[%s43] sm:$0xf]
  %v56 = vld [vmem:[%s43 + $0x4] sm:$0xf]
  %v57 = vld [vmem:[%s43 + $0x8] sm:$0xf]
  %v58 = vld [vmem:[%s43 + $0xc] sm:$0xf]
  %v59 = vld [vmem:[%s43 + $0x10] sm:$0xf]
  %v60 = vld [vmem:[%s43 + $0x14] sm:$0xf]
  %v61 = vld [vmem:[%s43 + $0x18] sm:$0xf]
  %v62 = vld [vmem:[%s43 + $0x1c] sm:$0xf]
  %v63 = vld [vmem:[%s43 + $0x20] sm:$0xf]
  %v64 = vld [vmem:[%s43 + $0x24] sm:$0xf]
  %v65 = vld [vmem:[%s43 + $0x28] sm:$0xf]
  %v66 = vld [vmem:[%s43 + $0x2c] sm:$0xf]
  %v67 = vld [vmem:[%s43 + $0x30] sm:$0xf]
  %v68 = vld [vmem:[%s43 + $0x34] sm:$0xf]
  %v69 = vld [vmem:[%s43 + $0x38] sm:$0xf]
  %v70 = vld [vmem:[%s43 + $0x3c] sm:$0xf]
  %v71 = vld [vmem:[%s43 + $0x40] sm:$0xf]
  %v72 = vld [vmem:[%s43 + $0x44] sm:$0xf]
  %v73 = vld [vmem:[%s48] sm:$0x1]
  %v75 = vlaneseq
  %v76 = vshrl.u32 %v75, 7
  %v77 = vsub.s32 0, %v76
  %v78 = vrot.slane %v73, %v77
  %v84 = vunpack.c.l.b16 %v51
  %v85 = vunpack.c.h.b16 %v51
  %v86 = vunpack.c.l.b16 %v52
  %v87 = vunpack.c.h.b16 %v52
  %v88 = vunpack.c.l.b16 %v53
  %v89 = vunpack.c.h.b16 %v53
  %v90 = vunpack.c.l.b16 %v54
  %v91 = vunpack.c.h.b16 %v54
  %v92 = vpack.c.b16 %v86, %v84
  %v93 = vpack.c.b16 %v87, %v85
  %v94 = vpack.c.b16 %v90, %v88
  %v95 = vpack.c.b16 %v91, %v89
  %v116 = vunpack.c.l.b16 %v55
  %v117 = vunpack.c.l.b16 %v56
  %v118 = vunpack.c.l.b16 %v57
  %v119 = vunpack.c.l.b16 %v58
  %v120 = vunpack.c.l.b16 %v59
  %v121 = vunpack.c.l.b16 %v60
  %v122 = vunpack.c.l.b16 %v61
  %v123 = vunpack.c.l.b16 %v62
  %v124 = vunpack.c.l.b16 %v63
  %v125 = vunpack.c.l.b16 %v64
  %v126 = vunpack.c.l.b16 %v65
  %v127 = vunpack.c.l.b16 %v66
  %v128 = vunpack.c.l.b16 %v67
  %v129 = vunpack.c.l.b16 %v68
  %v130 = vunpack.c.l.b16 %v69
  %v131 = vunpack.c.l.b16 %v70
  %v132 = vunpack.c.l.b16 %v71
  %v133 = vunpack.c.l.b16 %v72
  %v134 = vpack.c.b16 %v117, %v116
  %v135 = vpack.c.b16 %v119, %v118
  %v136 = vpack.c.b16 %v121, %v120
  %v137 = vpack.c.b16 %v123, %v122
  %v138 = vpack.c.b16 %v125, %v124
  %v139 = vpack.c.b16 %v127, %v126
  %v140 = vpack.c.b16 %v129, %v128
  %v141 = vpack.c.b16 %v131, %v130
  %v142 = vpack.c.b16 %v133, %v132
  %vm152 = vcmask 130048
  %v154 = vsel %vm152, %v93, 0
  %v157 = vsel %vm152, %v95, 0
  %159 = vmatprep.subr.bf16.mxu0 0
  %160 = vmatpush1.bf16.msra.mxu0 %v134
  %161 = vmatprep.subr.bf16.mxu0 0
  %162 = vmatpush1.bf16.msra.mxu0 %v135
  %163 = vmatprep.subr.bf16.mxu0 0
  %164 = vmatpush1.bf16.msra.mxu0 %v136
  %165 = vmatprep.subr.bf16.mxu0 0
  %166 = vmatpush1.bf16.msra.mxu0 %v137
  %167 = vmatprep.subr.bf16.mxu0 0
  %168 = vmatpush1.bf16.msra.mxu0 %v138
  %169 = vmatprep.subr.bf16.mxu0 0
  %170 = vmatpush1.bf16.msra.mxu0 %v139
  %171 = vmatprep.subr.bf16.mxu0 0
  %172 = vmatpush1.bf16.msra.mxu0 %v140
  %173 = vmatprep.subr.bf16.mxu0 0
  %174 = vmatpush1.bf16.msra.mxu0 %v141
  %175 = vmatprep.subr.bf16.mxu0 0
  %176 = vmatpush1.bf16.msra.mxu0 %v142
  %177 = vmatprep.subr.bf16.mxu0 0
  %178 = vmatpush1.bf16.msra.mxu0 0
  %179 = vmatprep.subr.bf16.mxu0 0
  %180 = vmatpush1.bf16.msra.mxu0 0
  %181 = vmatprep.subr.bf16.mxu0 0
  %182 = vmatpush1.bf16.msra.mxu0 0
  %183 = vmatprep.subr.bf16.mxu0 0
  %184 = vmatpush1.bf16.msra.mxu0 0
  %185 = vmatprep.subr.bf16.mxu0 0
  %186 = vmatpush1.bf16.msra.mxu0 0
  %187 = vmatprep.subr.bf16.mxu0 0
  %188 = vmatpush1.bf16.msra.mxu0 0
  %189 = vmatprep.subr.bf16.mxu0 0
  %190 = vmatpush1.bf16.msra.mxu0 0
  %191 = vmatprep.mubr.bf16.mxu0 %v154
  %192 = vmatmul.mubr.bf16.gmra.mrb[0].mxu0 %v92
  %v193 = vpop.f32.mrb[0].mxu0
  %v194 = vadd.f32 %v78, %v193
  %v195 = vpop.f32.mrb[0].mxu0
  %v196 = vpop.f32.mrb[0].mxu0
  %v197 = vadd.f32 %v78, %v196
  %v198 = vpop.f32.mrb[0].mxu0
  %199 = vmatprep.mubr.bf16.mxu0 %v157
  %200 = vmatmul.mubr.bf16.gmra.mrb[0].mxu0 %v94
  %v201 = vpop.f32.mrb[0].mxu0
  %v202 = vadd.f32 %v78, %v201
  %v203 = vpop.f32.mrb[0].mxu0
  %v204 = vpop.f32.mrb[0].mxu0
  %v205 = vadd.f32 %v78, %v204
  %v206 = vpop.f32.mrb[0].mxu0
  %207 = vdwg.mxu0
  %208 = vst [vmem:[%s4] sm:$0xff] %v194
  %209 = vst [vmem:[%s4 + $0x8] sm:$0xff] %v197
  %210 = vst [vmem:[%s4 + $0x10] sm:$0xff] %v202
  %211 = vst [vmem:[%s4 + $0x18] sm:$0xff] %v205
  // Predicated region
  $region14: #{efficientdet_forward.29} parent=0 // pred_check
    _
  $region15: #{efficientdet_forward.29} parent=0 // pred_check_branch
    %213 = sbr.rel (0) target = $region17
  $region16: #{efficientdet_forward.29} parent=0 // pred_region
    _
  $region17: #{efficientdet_forward.29} parent=0 // pred_fallthru
    _
  // Predicated region
  $region18: #{efficientdet_forward.29} parent=0 // pred_check
    _
  $region19: #{efficientdet_forward.29} parent=0 // pred_check_branch
    %215 = sbr.rel (0) target = $region21
  $region20: #{efficientdet_forward.29} parent=0 // pred_region
    _
  $region21: #{efficientdet_forward.29} parent=0 // pred_fallthru
    _

// kernel: efficientdet_forward.30
$region0: #{efficientdet_forward.30}
  #allocation0 [shape = 'u32[]', space=smem, size = 0x4, offset = 0x4, fixed_abs, tag = 'smem constant byte address 0x4 - core index']
  #allocation1 [shape = 'u32[144,128]{1,0:T(1,128)}', space=vmem, size = 0x12000, scoped, tag = 'internal scratch']
  %s0 = inlined_call_operand.vmem [shape: f32[16,128], index: 0, kind: input, shape index: {}]
  %s1 = inlined_call_operand.vmem [shape: f32[16,128], index: 1, kind: input, shape index: {}]
  %s2 = inlined_call_operand.vmem [shape: f32[2], index: 2, kind: input, shape index: {}]
  %s3 = inlined_call_operand.vmem [shape: f32[16,128], index: 3, kind: output, shape index: {}]
  %s4 = sld [smem:[#allocation0]]
  $region26: #{efficientdet_forward.30} parent=0
    _
  %s6 = ssub.s32 1, %s4
  %s7 = scalar_select 0, %s6, %s4
  $region1: #{efficientdet_forward.30} parent=0
    #allocation2 [shape = 'u8[512]{0}', space=smem, size = 0x200, scoped, tag = 'input window, operand 2, single buffered']
    #allocation3 [shape = 's32[1]{0}', space=sflag, size = 0x4, scoped, tag = 'scoped memory for efficientdet_forward.30']
    %8 = vsyncpa [#allocation3], 0
    // Predicated region
    $region2: #{efficientdet_forward.30} parent=1 // pred_check
      _
    $region3: #{efficientdet_forward.30} parent=1 // pred_check_branch
      %10 = sbr.rel (0) target = $region5
    $region4: #{efficientdet_forward.30} parent=1 // pred_region
      _
    $region5: #{efficientdet_forward.30} parent=1 // pred_fallthru
      _
    // Predicated region
    $region6: #{efficientdet_forward.30} parent=1 // pred_check
      _
    $region7: #{efficientdet_forward.30} parent=1 // pred_check_branch
      %12 = sbr.rel (0) target = $region9
    $region8: #{efficientdet_forward.30} parent=1 // pred_region
      _
    $region9: #{efficientdet_forward.30} parent=1 // pred_fallthru
      _
    // Predicated region
    $region10: #{efficientdet_forward.30} parent=1 // pred_check
      _
    $region11: #{efficientdet_forward.30} parent=1 // pred_check_branch
      %14 = sbr.rel (0) target = $region13
    $region12: #{efficientdet_forward.30} parent=1 // pred_region
      %s16 = ssub.s32 16, 16
      %17 = vsyncadd [#allocation3], %s16
      %s19 = sshll.u32 %s2, 4
      %s20 = int_to_ptr.vmem [resolvable:$true] %s19
      %22 = dma.vmem_to_smem %s20, 16, [#allocation2], [#allocation3]
    $region13: #{efficientdet_forward.30} parent=1 // pred_fallthru
      _
    // Predicated region
    $region14: #{efficientdet_forward.30} parent=1 // pred_check
      _
    $region15: #{efficientdet_forward.30} parent=1 // pred_check_branch
      %24 = sbr.rel (0) target = $region17
    $region16: #{efficientdet_forward.30} parent=1 // pred_region
      %25 = dma.done [#allocation3], 16
    $region17: #{efficientdet_forward.30} parent=1 // pred_fallthru
      _
    %26 = sfence
    %s27 = sld [smem:[#allocation2]]
    %s28 = smax.f32 %s27, 0.0
    %s29 = sld [smem:[#allocation2 + $0x1]]
    %s30 = smax.f32 %s29, 0.0
    %s31 = sadd.f32 %s28, %s30
    %s32 = sadd.f32 %s31, 0.0001
    %v33 = vstv %s32
    %v34 = vrcp.pop %v33
    %s35 = vtos %v34
    %v36 = vld [vmem:[%s0] sm:$0xff]
    %v37 = vld [vmem:[%s0 + $0x8] sm:$0xff]
    %s38 = smul.f32 %s28, %s35
    %v39 = vstv %s38
    %v40 = vmul.f32 %v36, %v39
    %v41 = vmul.f32 %v37, %v39
    %v42 = vld [vmem:[%s1] sm:$0xff]
    %v43 = vld [vmem:[%s1 + $0x8] sm:$0xff]
    %s44 = smul.f32 %s30, %s35
    %v45 = vstv %s44
    %v46 = vmul.f32 %v42, %v45
    %v47 = vmul.f32 %v43, %v45
    %v48 = vadd.f32 %v40, %v46
    %v49 = vadd.f32 %v41, %v47
    %v50 = vsub.f32 0.0, %v48
    %v51 = vsub.f32 0.0, %v49
    %v52 = vmul.f32 %v50, 1.442695
    %v53 = vpow.pop %v52
    %v54 = vmul.f32 %v51, 1.442695
    %v55 = vpow.pop %v54
    %v56 = vadd.f32 %v53, 1.0
    %v57 = vadd.f32 %v55, 1.0
    %v58 = vrcp.pop %v56
    %v59 = vmul.f32 1.0, %v58
    %v60 = vrcp.pop %v57
    %v61 = vmul.f32 1.0, %v60
    %v62 = vmul.f32 %v48, %v59
    %v63 = vmul.f32 %v49, %v61
    %64 = vst [vmem:[%s3] sm:$0xff] %v62
    %65 = vst [vmem:[%s3 + $0x8] sm:$0xff] %v63
    // Predicated region
    $region18: #{efficientdet_forward.30} parent=1 // pred_check
      _
    $region19: #{efficientdet_forward.30} parent=1 // pred_check_branch
      %67 = sbr.rel (0) target = $region21
    $region20: #{efficientdet_forward.30} parent=1 // pred_region
      _
    $region21: #{efficientdet_forward.30} parent=1 // pred_fallthru
      _
    // Predicated region
    $region22: #{efficientdet_forward.30} parent=1 // pred_check
      _
    $region23: #{efficientdet_forward.30} parent=1 // pred_check_branch
      %69 = sbr.rel (0) target = $region25
    $region24: #{efficientdet_forward.30} parent=1 // pred_region
      _
    $region25: #{efficientdet_forward.30} parent=1 // pred_fallthru
      _
    %70 = vsyncpa [#allocation3], 1

// kernel: efficientdet_forward.26
$region0: #{efficientdet_forward.26}
  #allocation0 [shape = 'u32[]', space=smem, size = 0x4, offset = 0x4, fixed_abs, tag = 'smem constant byte address 0x4 - core index']
  #allocation1 [shape = 'u32[144,128]{1,0:T(1,128)}', space=vmem, size = 0x12000, scoped, tag = 'internal scratch']
  #allocation2 [shape = 's32[1]{0}', space=sflag, size = 0x4, scoped, tag = 'scoped memory for efficientdet_forward.26']
  #allocation3 [shape = 's32[1]{0:T(128)S(6)}', space=smem, size = 0x200, scoped, tag = 'prefetched SMEM operand 0']
  %s0 = inlined_call_operand.<no memory space> [shape: s32[1], index: 0, kind: input, shape index: {}]
  %s1 = inlined_call_operand.vmem [shape: bf16[128,16], index: 1, kind: input, shape index: {}]
  %s2 = inlined_call_operand.vmem [shape: bf16[1,16,128], index: 2, kind: input, shape index: {}]
  %s3 = inlined_call_operand.vmem [shape: f32[1,1,128], index: 3, kind: input, shape index: {}]
  %s4 = inlined_call_operand.vmem [shape: f32[128,128], index: 4, kind: output, shape index: {}]
  %s5 = sld [smem:[#allocation0]]
  $region22: #{efficientdet_forward.26} parent=0
    _
  %s7 = ssub.s32 1, %s5
  %s8 = scalar_select 0, %s7, %s5
  %9 = sst [smem:[#allocation3]] %s0
  // Predicated region
  $region2: #{efficientdet_forward.26} parent=0 // pred_check
    _
  $region3: #{efficientdet_forward.26} parent=0 // pred_check_branch
    %11 = sbr.rel (0) target = $region5
  $region4: #{efficientdet_forward.26} parent=0 // pred_region
    _
  $region5: #{efficientdet_forward.26} parent=0 // pred_fallthru
    _
  // Predicated region
  $region6: #{efficientdet_forward.26} parent=0 // pred_check
    _
  $region7: #{efficientdet_forward.26} parent=0 // pred_check_branch
    %13 = sbr.rel (0) target = $region9
  $region8: #{efficientdet_forward.26} parent=0 // pred_region
    %s14 = sld [smem:[#allocation3]]
    %p15 = scmp.lt.s32.totalorder %s14, 0
    %s16 = scalar_select %p15, %s14, 0
    %s17 = smul.addr %s16, 2
    %s18 = smul.addr %s17, 4
    %s19 = scalar_lea.vmem %s2, %s18
    %s20 = sld [smem:[#allocation3]]
  $region9: #{efficientdet_forward.26} parent=0 // pred_fallthru
    _
  // Predicated region
  $region10: #{efficientdet_forward.26} parent=0 // pred_check
    _
  $region11: #{efficientdet_forward.26} parent=0 // pred_check_branch
    %22 = sbr.rel (0) target = $region13
  $region12: #{efficientdet_forward.26} parent=0 // pred_region
    %s23 = sld [smem:[#allocation3]]
    %p24 = scmp.lt.s32.totalorder %s23, 0
    %s25 = scalar_select %p24, %s23, 0
    %s26 = scalar_lea.vmem %s3, %s25
    %s27 = sld [smem:[#allocation3]]
  $region13: #{efficientdet_forward.26} parent=0 // pred_fallthru
    _
  %s28 = sld [smem:[#allocation3]]
  %p29 = scmp.lt.s32.totalorder %s28, 0
  %s30 = scalar_select %p29, %s28, 0
  %s31 = smul.addr %s30, 2
  %s32 = smul.addr %s31, 4
  %s33 = scalar_lea.vmem %s2, %s32
  %s34 = sld [smem:[#allocation3]]
  %p35 = scmp.lt.s32.totalorder %s34, 0
  %s36 = scalar_select %p35, %s34, 0
  %s37 = scalar_lea.vmem %s3, %s36
  %s38 = sld [smem:[#allocation3]]
  %p39 = scmp.lt.s32.totalorder %s38, 0
  %s40 = scalar_select %p39, %s38, 0
  %s41 = smul.addr %s40, 2
  %s42 = smul.addr %s41, 4
  %s43 = scalar_lea.vmem %s2, %s42
  %s44 = sld [smem:[#allocation3]]
  %s45 = sld [smem:[#allocation3]]
  %p46 = scmp.lt.s32.totalorder %s45, 0
  %s47 = scalar_select %p46, %s45, 0
  %s48 = scalar_lea.vmem %s3, %s47
  %s49 = sld [smem:[#allocation3]]
  %v51 = vld [vmem:[%s1] sm:$0xf]
  %v52 = vld [vmem:[%s1 + $0x4] sm:$0xf]
  %v53 = vld [vmem:[%s1 + $0x8] sm:$0xf]
  %v54 = vld [vmem:[%s1 + $0xc] sm:$0xf]
  %v55 = vld [vmem:[%s1 + $0x10] sm:$0xf]
  %v56 = vld [vmem:[%s1 + $0x14] sm:$0xf]
  %v57 = vld [vmem:[%s1 + $0x18] sm:$0xf]
  %v58 = vld [vmem:[%s1 + $0x1c] sm:$0xf]
  %v59 = vld [vmem:[%s1 + $0x20] sm:$0xf]
  %v60 = vld [vmem:[%s1 + $0x24] sm:$0xf]
  %v61 = vld [vmem:[%s1 + $0x28] sm:$0xf]
  %v62 = vld [vmem:[%s1 + $0x2c] sm:$0xf]
  %v63 = vld [vmem:[%s1 + $0x30] sm:$0xf]
  %v64 = vld [vmem:[%s1 + $0x34] sm:$0xf]
  %v65 = vld [vmem:[%s1 + $0x38] sm:$0xf]
  %v66 = vld [vmem:[%s1 + $0x3c] sm:$0xf]
  %v67 = vld [vmem:[%s43] sm:$0xf]
  %v68 = vld [vmem:[%s43 + $0x4] sm:$0xf]
  %v69 = vld [vmem:[%s48] sm:$0x1]
  %v71 = vlaneseq
  %v72 = vshrl.u32 %v71, 7
  %v73 = vsub.s32 0, %v72
  %v74 = vrot.slane %v69, %v73
  %v92 = vunpack.c.l.b16 %v51
  %v93 = vunpack.c.l.b16 %v52
  %v94 = vunpack.c.l.b16 %v53
  %v95 = vunpack.c.l.b16 %v54
  %v96 = vunpack.c.l.b16 %v55
  %v97 = vunpack.c.l.b16 %v56
  %v98 = vunpack.c.l.b16 %v57
  %v99 = vunpack.c.l.b16 %v58
  %v100 = vunpack.c.l.b16 %v59
  %v101 = vunpack.c.l.b16 %v60
  %v102 = vunpack.c.l.b16 %v61
  %v103 = vunpack.c.l.b16 %v62
  %v104 = vunpack.c.l.b16 %v63
  %v105 = vunpack.c.l.b16 %v64
  %v106 = vunpack.c.l.b16 %v65
  %v107 = vunpack.c.l.b16 %v66
  %v108 = vpack.c.b16 %v93, %v92
  %v109 = vpack.c.b16 %v95, %v94
  %v110 = vpack.c.b16 %v97, %v96
  %v111 = vpack.c.b16 %v99, %v98
  %v112 = vpack.c.b16 %v101, %v100
  %v113 = vpack.c.b16 %v103, %v102
  %v114 = vpack.c.b16 %v105, %v104
  %v115 = vpack.c.b16 %v107, %v106
  %v118 = vunpack.c.l.b16 %v67
  %v119 = vunpack.c.l.b16 %v68
  %v120 = vpack.c.b16 %v119, %v118
  %vm122 = vcmask 130048
  %v124 = vsel %vm122, %v108, 0
  %v127 = vsel %vm122, %v109, 0
  %v130 = vsel %vm122, %v110, 0
  %v133 = vsel %vm122, %v111, 0
  %v136 = vsel %vm122, %v112, 0
  %v139 = vsel %vm122, %v113, 0
  %v142 = vsel %vm122, %v114, 0
  %v145 = vsel %vm122, %v115, 0
  %147 = vmatprep.subr.bf16.mxu0 0
  %148 = vmatpush1.bf16.msra.mxu0 %v120
  %149 = vmatprep.subr.bf16.mxu0 0
  %150 = vmatpush1.bf16.msra.mxu0 0
  %151 = vmatprep.subr.bf16.mxu0 0
  %152 = vmatpush1.bf16.msra.mxu0 0
  %153 = vmatprep.subr.bf16.mxu0 0
  %154 = vmatpush1.bf16.msra.mxu0 0
  %155 = vmatprep.subr.bf16.mxu0 0
  %156 = vmatpush1.bf16.msra.mxu0 0
  %157 = vmatprep.subr.bf16.mxu0 0
  %158 = vmatpush1.bf16.msra.mxu0 0
  %159 = vmatprep.subr.bf16.mxu0 0
  %160 = vmatpush1.bf16.msra.mxu0 0
  %161 = vmatprep.subr.bf16.mxu0 0
  %162 = vmatpush1.bf16.msra.mxu0 0
  %163 = vmatprep.subr.bf16.mxu0 0
  %164 = vmatpush1.bf16.msra.mxu0 0
  %165 = vmatprep.subr.bf16.mxu0 0
  %166 = vmatpush1.bf16.msra.mxu0 0
  %167 = vmatprep.subr.bf16.mxu0 0
  %168 = vmatpush1.bf16.msra.mxu0 0
  %169 = vmatprep.subr.bf16.mxu0 0
  %170 = vmatpush1.bf16.msra.mxu0 0
  %171 = vmatprep.subr.bf16.mxu0 0
  %172 = vmatpush1.bf16.msra.mxu0 0
  %173 = vmatprep.subr.bf16.mxu0 0
  %174 = vmatpush1.bf16.msra.mxu0 0
  %175 = vmatprep.subr.bf16.mxu0 0
  %176 = vmatpush1.bf16.msra.mxu0 0
  %177 = vmatprep.subr.bf16.mxu0 0
  %178 = vmatpush1.bf16.msra.mxu0 0
  %179 = vmatprep.mubr.bf16.mxu0 0
  %180 = vmatmul.mubr.bf16.gmra.mrb[0].mxu0 %v124
  %v181 = vpop.f32.mrb[0].mxu0
  %v182 = vadd.f32 %v74, %v181
  %v183 = vpop.f32.mrb[0].mxu0
  %v184 = vpop.f32.mrb[0].mxu0
  %v185 = vadd.f32 %v74, %v184
  %v186 = vpop.f32.mrb[0].mxu0
  %187 = vmatprep.mubr.bf16.mxu0 0
  %188 = vmatmul.mubr.bf16.gmra.mrb[0].mxu0 %v127
  %v189 = vpop.f32.mrb[0].mxu0
  %v190 = vadd.f32 %v74, %v189
  %v191 = vpop.f32.mrb[0].mxu0
  %v192 = vpop.f32.mrb[0].mxu0
  %v193 = vadd.f32 %v74, %v192
  %v194 = vpop.f32.mrb[0].mxu0
  %195 = vmatprep.mubr.bf16.mxu0 0
  %196 = vmatmul.mubr.bf16.gmra.mrb[0].mxu0 %v130
  %v197 = vpop.f32.mrb[0].mxu0
  %v198 = vadd.f32 %v74, %v197
  %v199 = vpop.f32.mrb[0].mxu0
  %v200 = vpop.f32.mrb[0].mxu0
  %v201 = vadd.f32 %v74, %v200
  %v202 = vpop.f32.mrb[0].mxu0
  %203 = vmatprep.mubr.bf16.mxu0 0
  %204 = vmatmul.mubr.bf16.gmra.mrb[0].mxu0 %v133
  %v205 = vpop.f32.mrb[0].mxu0
  %v206 = vadd.f32 %v74, %v205
  %v207 = vpop.f32.mrb[0].mxu0
  %v208 = vpop.f32.mrb[0].mxu0
  %v209 = vadd.f32 %v74, %v208
  %v210 = vpop.f32.mrb[0].mxu0
  %211 = vmatprep.mubr.bf16.mxu0 0
  %212 = vmatmul.mubr.bf16.gmra.mrb[0].mxu0 %v136
  %v213 = vpop.f32.mrb[0].mxu0
  %v214 = vadd.f32 %v74, %v213
  %v215 = vpop.f32.mrb[0].mxu0
  %v216 = vpop.f32.mrb[0].mxu0
  %v217 = vadd.f32 %v74, %v216
  %v218 = vpop.f32.mrb[0].mxu0
  %219 = vmatprep.mubr.bf16.mxu0 0
  %220 = vmatmul.mubr.bf16.gmra.mrb[0].mxu0 %v139
  %v221 = vpop.f32.mrb[0].mxu0
  %v222 = vadd.f32 %v74, %v221
  %v223 = vpop.f32.mrb[0].mxu0
  %v224 = vpop.f32.mrb[0].mxu0
  %v225 = vadd.f32 %v74, %v224
  %v226 = vpop.f32.mrb[0].mxu0
  %227 = vmatprep.mubr.bf16.mxu0 0
  %228 = vmatmul.mubr.bf16.gmra.mrb[0].mxu0 %v142
  %v229 = vpop.f32.mrb[0].mxu0
  %v230 = vadd.f32 %v74, %v229
  %v231 = vpop.f32.mrb[0].mxu0
  %v232 = vpop.f32.mrb[0].mxu0
  %v233 = vadd.f32 %v74, %v232
  %v234 = vpop.f32.mrb[0].mxu0
  %235 = vmatprep.mubr.bf16.mxu0 0
  %236 = vmatmul.mubr.bf16.gmra.mrb[0].mxu0 %v145
  %v237 = vpop.f32.mrb[0].mxu0
  %v238 = vadd.f32 %v74, %v237
  %v239 = vpop.f32.mrb[0].mxu0
  %v240 = vpop.f32.mrb[0].mxu0
  %v241 = vadd.f32 %v74, %v240
  %v242 = vpop.f32.mrb[0].mxu0
  %243 = vdwg.mxu0
  %244 = vst [vmem:[%s4] sm:$0xff] %v182
  %245 = vst [vmem:[%s4 + $0x8] sm:$0xff] %v185
  %246 = vst [vmem:[%s4 + $0x10] sm:$0xff] %v190
  %247 = vst [vmem:[%s4 + $0x18] sm:$0xff] %v193
  %248 = vst [vmem:[%s4 + $0x20] sm:$0xff] %v198
  %249 = vst [vmem:[%s4 + $0x28] sm:$0xff] %v201
  %250 = vst [vmem:[%s4 + $0x30] sm:$0xff] %v206
  %251 = vst [vmem:[%s4 + $0x38] sm:$0xff] %v209
  %252 = vst [vmem:[%s4 + $0x40] sm:$0xff] %v214
  %253 = vst [vmem:[%s4 + $0x48] sm:$0xff] %v217
  %254 = vst [vmem:[%s4 + $0x50] sm:$0xff] %v222
  %255 = vst [vmem:[%s4 + $0x58] sm:$0xff] %v225
  %256 = vst [vmem:[%s4 + $0x60] sm:$0xff] %v230
  %257 = vst [vmem:[%s4 + $0x68] sm:$0xff] %v233
  %258 = vst [vmem:[%s4 + $0x70] sm:$0xff] %v238
  %259 = vst [vmem:[%s4 + $0x78] sm:$0xff] %v241
  // Predicated region
  $region14: #{efficientdet_forward.26} parent=0 // pred_check
    _
  $region15: #{efficientdet_forward.26} parent=0 // pred_check_branch
    %261 = sbr.rel (0) target = $region17
  $region16: #{efficientdet_forward.26} parent=0 // pred_region
    _
  $region17: #{efficientdet_forward.26} parent=0 // pred_fallthru
    _
  // Predicated region
  $region18: #{efficientdet_forward.26} parent=0 // pred_check
    _
  $region19: #{efficientdet_forward.26} parent=0 // pred_check_branch
    %263 = sbr.rel (0) target = $region21
  $region20: #{efficientdet_forward.26} parent=0 // pred_region
    _
  $region21: #{efficientdet_forward.26} parent=0 // pred_fallthru
    _

// kernel: efficientdet_forward.31
$region0: #{efficientdet_forward.31}
  #allocation0 [shape = 'u32[]', space=smem, size = 0x4, offset = 0x4, fixed_abs, tag = 'smem constant byte address 0x4 - core index']
  #allocation1 [shape = 'u32[144,128]{1,0:T(1,128)}', space=vmem, size = 0x12000, scoped, tag = 'internal scratch']
  #allocation2 [shape = 's32[1]{0}', space=sflag, size = 0x4, scoped, tag = 'scoped memory for efficientdet_forward.31']
  #allocation3 [shape = 's32[1]{0:T(128)S(6)}', space=smem, size = 0x200, scoped, tag = 'prefetched SMEM operand 0']
  %s0 = inlined_call_operand.<no memory space> [shape: s32[1], index: 0, kind: input, shape index: {}]
  %s1 = inlined_call_operand.vmem [shape: bf16[128,144], index: 1, kind: input, shape index: {}]
  %s2 = inlined_call_operand.vmem [shape: bf16[1,144,128], index: 2, kind: input, shape index: {}]
  %s3 = inlined_call_operand.vmem [shape: f32[1,1,128], index: 3, kind: input, shape index: {}]
  %s4 = inlined_call_operand.vmem [shape: f32[128,128], index: 4, kind: output, shape index: {}]
  %s5 = sld [smem:[#allocation0]]
  $region22: #{efficientdet_forward.31} parent=0
    _
  %s7 = ssub.s32 1, %s5
  %s8 = scalar_select 0, %s7, %s5
  %9 = sst [smem:[#allocation3]] %s0
  // Predicated region
  $region2: #{efficientdet_forward.31} parent=0 // pred_check
    _
  $region3: #{efficientdet_forward.31} parent=0 // pred_check_branch
    %11 = sbr.rel (0) target = $region5
  $region4: #{efficientdet_forward.31} parent=0 // pred_region
    _
  $region5: #{efficientdet_forward.31} parent=0 // pred_fallthru
    _
  // Predicated region
  $region6: #{efficientdet_forward.31} parent=0 // pred_check
    _
  $region7: #{efficientdet_forward.31} parent=0 // pred_check_branch
    %13 = sbr.rel (0) target = $region9
  $region8: #{efficientdet_forward.31} parent=0 // pred_region
    %s14 = sld [smem:[#allocation3]]
    %p15 = scmp.lt.s32.totalorder %s14, 0
    %s16 = scalar_select %p15, %s14, 0
    %s17 = smul.addr %s16, 18
    %s18 = smul.addr %s17, 4
    %s19 = scalar_lea.vmem %s2, %s18
    %s20 = sld [smem:[#allocation3]]
  $region9: #{efficientdet_forward.31} parent=0 // pred_fallthru
    _
  // Predicated region
  $region10: #{efficientdet_forward.31} parent=0 // pred_check
    _
  $region11: #{efficientdet_forward.31} parent=0 // pred_check_branch
    %22 = sbr.rel (0) target = $region13
  $region12: #{efficientdet_forward.31} parent=0 // pred_region
    %s23 = sld [smem:[#allocation3]]
    %p24 = scmp.lt.s32.totalorder %s23, 0
    %s25 = scalar_select %p24, %s23, 0
    %s26 = scalar_lea.vmem %s3, %s25
    %s27 = sld [smem:[#allocation3]]
  $region13: #{efficientdet_forward.31} parent=0 // pred_fallthru
    _
  %s28 = sld [smem:[#allocation3]]
  %p29 = scmp.lt.s32.totalorder %s28, 0
  %s30 = scalar_select %p29, %s28, 0
  %s31 = smul.addr %s30, 18
  %s32 = smul.addr %s31, 4
  %s33 = scalar_lea.vmem %s2, %s32
  %s34 = sld [smem:[#allocation3]]
  %p35 = scmp.lt.s32.totalorder %s34, 0
  %s36 = scalar_select %p35, %s34, 0
  %s37 = scalar_lea.vmem %s3, %s36
  %s38 = sld [smem:[#allocation3]]
  %p39 = scmp.lt.s32.totalorder %s38, 0
  %s40 = scalar_select %p39, %s38, 0
  %s41 = smul.addr %s40, 18
  %s42 = smul.addr %s41, 4
  %s43 = scalar_lea.vmem %s2, %s42
  %s44 = sld [smem:[#allocation3]]
  %s45 = sld [smem:[#allocation3]]
  %p46 = scmp.lt.s32.totalorder %s45, 0
  %s47 = scalar_select %p46, %s45, 0
  %s48 = scalar_lea.vmem %s3, %s47
  %s49 = sld [smem:[#allocation3]]
  %v51 = vld [vmem:[%s1] sm:$0xff]
  %v52 = vld [vmem:[%s1 + $0x8] sm:$0xff]
  %v53 = vld [vmem:[%s1 + $0x10] sm:$0xff]
  %v54 = vld [vmem:[%s1 + $0x18] sm:$0xff]
  %v55 = vld [vmem:[%s1 + $0x20] sm:$0xff]
  %v56 = vld [vmem:[%s1 + $0x28] sm:$0xff]
  %v57 = vld [vmem:[%s1 + $0x30] sm:$0xff]
  %v58 = vld [vmem:[%s1 + $0x38] sm:$0xff]
  %v59 = vld [vmem:[%s1 + $0x40] sm:$0xff]
  %v60 = vld [vmem:[%s1 + $0x48] sm:$0xff]
  %v61 = vld [vmem:[%s1 + $0x50] sm:$0xff]
  %v62 = vld [vmem:[%s1 + $0x58] sm:$0xff]
  %v63 = vld [vmem:[%s1 + $0x60] sm:$0xff]
  %v64 = vld [vmem:[%s1 + $0x68] sm:$0xff]
  %v65 = vld [vmem:[%s1 + $0x70] sm:$0xff]
  %v66 = vld [vmem:[%s1 + $0x78] sm:$0xff]
  %v67 = vld [vmem:[%s43] sm:$0xf]
  %v68 = vld [vmem:[%s43 + $0x4] sm:$0xf]
  %v69 = vld [vmem:[%s43 + $0x8] sm:$0xf]
  %v70 = vld [vmem:[%s43 + $0xc] sm:$0xf]
  %v71 = vld [vmem:[%s43 + $0x10] sm:$0xf]
  %v72 = vld [vmem:[%s43 + $0x14] sm:$0xf]
  %v73 = vld [vmem:[%s43 + $0x18] sm:$0xf]
  %v74 = vld [vmem:[%s43 + $0x1c] sm:$0xf]
  %v75 = vld [vmem:[%s43 + $0x20] sm:$0xf]
  %v76 = vld [vmem:[%s43 + $0x24] sm:$0xf]
  %v77 = vld [vmem:[%s43 + $0x28] sm:$0xf]
  %v78 = vld [vmem:[%s43 + $0x2c] sm:$0xf]
  %v79 = vld [vmem:[%s43 + $0x30] sm:$0xf]
  %v80 = vld [vmem:[%s43 + $0x34] sm:$0xf]
  %v81 = vld [vmem:[%s43 + $0x38] sm:$0xf]
  %v82 = vld [vmem:[%s43 + $0x3c] sm:$0xf]
  %v83 = vld [vmem:[%s43 + $0x40] sm:$0xf]
  %v84 = vld [vmem:[%s43 + $0x44] sm:$0xf]
  %v85 = vld [vmem:[%s48] sm:$0x1]
  %v87 = vlaneseq
  %v88 = vshrl.u32 %v87, 7
  %v89 = vsub.s32 0, %v88
  %v90 = vrot.slane %v85, %v89
  %v108 = vunpack.c.l.b16 %v51
  %v109 = vunpack.c.h.b16 %v51
  %v110 = vunpack.c.l.b16 %v52
  %v111 = vunpack.c.h.b16 %v52
  %v112 = vunpack.c.l.b16 %v53
  %v113 = vunpack.c.h.b16 %v53
  %v114 = vunpack.c.l.b16 %v54
  %v115 = vunpack.c.h.b16 %v54
  %v116 = vunpack.c.l.b16 %v55
  %v117 = vunpack.c.h.b16 %v55
  %v118 = vunpack.c.l.b16 %v56
  %v119 = vunpack.c.h.b16 %v56
  %v120 = vunpack.c.l.b16 %v57
  %v121 = vunpack.c.h.b16 %v57
  %v122 = vunpack.c.l.b16 %v58
  %v123 = vunpack.c.h.b16 %v58
  %v124 = vunpack.c.l.b16 %v59
  %v125 = vunpack.c.h.b16 %v59
  %v126 = vunpack.c.l.b16 %v60
  %v127 = vunpack.c.h.b16 %v60
  %v128 = vunpack.c.l.b16 %v61
  %v129 = vunpack.c.h.b16 %v61
  %v130 = vunpack.c.l.b16 %v62
  %v131 = vunpack.c.h.b16 %v62
  %v132 = vunpack.c.l.b16 %v63
  %v133 = vunpack.c.h.b16 %v63
  %v134 = vunpack.c.l.b16 %v64
  %v135 = vunpack.c.h.b16 %v64
  %v136 = vunpack.c.l.b16 %v65
  %v137 = vunpack.c.h.b16 %v65
  %v138 = vunpack.c.l.b16 %v66
  %v139 = vunpack.c.h.b16 %v66
  %v140 = vpack.c.b16 %v110, %v108
  %v141 = vpack.c.b16 %v111, %v109
  %v142 = vpack.c.b16 %v114, %v112
  %v143 = vpack.c.b16 %v115, %v113
  %v144 = vpack.c.b16 %v118, %v116
  %v145 = vpack.c.b16 %v119, %v117
  %v146 = vpack.c.b16 %v122, %v120
  %v147 = vpack.c.b16 %v123, %v121
  %v148 = vpack.c.b16 %v126, %v124
  %v149 = vpack.c.b16 %v127, %v125
  %v150 = vpack.c.b16 %v130, %v128
  %v151 = vpack.c.b16 %v131, %v129
  %v152 = vpack.c.b16 %v134, %v132
  %v153 = vpack.c.b16 %v135, %v133
  %v154 = vpack.c.b16 %v138, %v136
  %v155 = vpack.c.b16 %v139, %v137
  %v182 = vunpack.c.l.b16 %v67
  %v183 = vunpack.c.l.b16 %v68
  %v184 = vunpack.c.l.b16 %v69
  %v185 = vunpack.c.l.b16 %v70
  %v186 = vunpack.c.l.b16 %v71
  %v187 = vunpack.c.l.b16 %v72
  %v188 = vunpack.c.l.b16 %v73
  %v189 = vunpack.c.l.b16 %v74
  %v190 = vunpack.c.l.b16 %v75
  %v191 = vunpack.c.l.b16 %v76
  %v192 = vunpack.c.l.b16 %v77
  %v193 = vunpack.c.l.b16 %v78
  %v194 = vunpack.c.l.b16 %v79
  %v195 = vunpack.c.l.b16 %v80
  %v196 = vunpack.c.l.b16 %v81
  %v197 = vunpack.c.l.b16 %v82
  %v198 = vunpack.c.l.b16 %v83
  %v199 = vunpack.c.l.b16 %v84
  %v200 = vpack.c.b16 %v183, %v182
  %v201 = vpack.c.b16 %v185, %v184
  %v202 = vpack.c.b16 %v187, %v186
  %v203 = vpack.c.b16 %v189, %v188
  %v204 = vpack.c.b16 %v191, %v190
  %v205 = vpack.c.b16 %v193, %v192
  %v206 = vpack.c.b16 %v195, %v194
  %v207 = vpack.c.b16 %v197, %v196
  %v208 = vpack.c.b16 %v199, %v198
  %vm218 = vcmask 130048
  %v220 = vsel %vm218, %v141, 0
  %v223 = vsel %vm218, %v143, 0
  %v226 = vsel %vm218, %v145, 0
  %v229 = vsel %vm218, %v147, 0
  %v232 = vsel %vm218, %v149, 0
  %v235 = vsel %vm218, %v151, 0
  %v238 = vsel %vm218, %v153, 0
  %v241 = vsel %vm218, %v155, 0
  %243 = vmatprep.subr.bf16.mxu0 0
  %244 = vmatpush1.bf16.msra.mxu0 %v200
  %245 = vmatprep.subr.bf16.mxu0 0
  %246 = vmatpush1.bf16.msra.mxu0 %v201
  %247 = vmatprep.subr.bf16.mxu0 0
  %248 = vmatpush1.bf16.msra.mxu0 %v202
  %249 = vmatprep.subr.bf16.mxu0 0
  %250 = vmatpush1.bf16.msra.mxu0 %v203
  %251 = vmatprep.subr.bf16.mxu0 0
  %252 = vmatpush1.bf16.msra.mxu0 %v204
  %253 = vmatprep.subr.bf16.mxu0 0
  %254 = vmatpush1.bf16.msra.mxu0 %v205
  %255 = vmatprep.subr.bf16.mxu0 0
  %256 = vmatpush1.bf16.msra.mxu0 %v206
  %257 = vmatprep.subr.bf16.mxu0 0
  %258 = vmatpush1.bf16.msra.mxu0 %v207
  %259 = vmatprep.subr.bf16.mxu0 0
  %260 = vmatpush1.bf16.msra.mxu0 %v208
  %261 = vmatprep.subr.bf16.mxu0 0
  %262 = vmatpush1.bf16.msra.mxu0 0
  %263 = vmatprep.subr.bf16.mxu0 0
  %264 = vmatpush1.bf16.msra.mxu0 0
  %265 = vmatprep.subr.bf16.mxu0 0
  %266 = vmatpush1.bf16.msra.mxu0 0
  %267 = vmatprep.subr.bf16.mxu0 0
  %268 = vmatpush1.bf16.msra.mxu0 0
  %269 = vmatprep.subr.bf16.mxu0 0
  %270 = vmatpush1.bf16.msra.mxu0 0
  %271 = vmatprep.subr.bf16.mxu0 0
  %272 = vmatpush1.bf16.msra.mxu0 0
  %273 = vmatprep.subr.bf16.mxu0 0
  %274 = vmatpush1.bf16.msra.mxu0 0
  %275 = vmatprep.mubr.bf16.mxu0 %v220
  %276 = vmatmul.mubr.bf16.gmra.mrb[0].mxu0 %v140
  %v277 = vpop.f32.mrb[0].mxu0
  %v278 = vadd.f32 %v90, %v277
  %v279 = vpop.f32.mrb[0].mxu0
  %v280 = vpop.f32.mrb[0].mxu0
  %v281 = vadd.f32 %v90, %v280
  %v282 = vpop.f32.mrb[0].mxu0
  %283 = vmatprep.mubr.bf16.mxu0 %v223
  %284 = vmatmul.mubr.bf16.gmra.mrb[0].mxu0 %v142
  %v285 = vpop.f32.mrb[0].mxu0
  %v286 = vadd.f32 %v90, %v285
  %v287 = vpop.f32.mrb[0].mxu0
  %v288 = vpop.f32.mrb[0].mxu0
  %v289 = vadd.f32 %v90, %v288
  %v290 = vpop.f32.mrb[0].mxu0
  %291 = vmatprep.mubr.bf16.mxu0 %v226
  %292 = vmatmul.mubr.bf16.gmra.mrb[0].mxu0 %v144
  %v293 = vpop.f32.mrb[0].mxu0
  %v294 = vadd.f32 %v90, %v293
  %v295 = vpop.f32.mrb[0].mxu0
  %v296 = vpop.f32.mrb[0].mxu0
  %v297 = vadd.f32 %v90, %v296
  %v298 = vpop.f32.mrb[0].mxu0
  %299 = vmatprep.mubr.bf16.mxu0 %v229
  %300 = vmatmul.mubr.bf16.gmra.mrb[0].mxu0 %v146
  %v301 = vpop.f32.mrb[0].mxu0
  %v302 = vadd.f32 %v90, %v301
  %v303 = vpop.f32.mrb[0].mxu0
  %v304 = vpop.f32.mrb[0].mxu0
  %v305 = vadd.f32 %v90, %v304
  %v306 = vpop.f32.mrb[0].mxu0
  %307 = vmatprep.mubr.bf16.mxu0 %v232
  %308 = vmatmul.mubr.bf16.gmra.mrb[0].mxu0 %v148
  %v309 = vpop.f32.mrb[0].mxu0
  %v310 = vadd.f32 %v90, %v309
  %v311 = vpop.f32.mrb[0].mxu0
  %v312 = vpop.f32.mrb[0].mxu0
  %v313 = vadd.f32 %v90, %v312
  %v314 = vpop.f32.mrb[0].mxu0
  %315 = vmatprep.mubr.bf16.mxu0 %v235
  %316 = vmatmul.mubr.bf16.gmra.mrb[0].mxu0 %v150
  %v317 = vpop.f32.mrb[0].mxu0
  %v318 = vadd.f32 %v90, %v317
  %v319 = vpop.f32.mrb[0].mxu0
  %v320 = vpop.f32.mrb[0].mxu0
  %v321 = vadd.f32 %v90, %v320
  %v322 = vpop.f32.mrb[0].mxu0
  %323 = vmatprep.mubr.bf16.mxu0 %v238
  %324 = vmatmul.mubr.bf16.gmra.mrb[0].mxu0 %v152
  %v325 = vpop.f32.mrb[0].mxu0
  %v326 = vadd.f32 %v90, %v325
  %v327 = vpop.f32.mrb[0].mxu0
  %v328 = vpop.f32.mrb[0].mxu0
  %v329 = vadd.f32 %v90, %v328
  %v330 = vpop.f32.mrb[0].mxu0
  %331 = vmatprep.mubr.bf16.mxu0 %v241
  %332 = vmatmul.mubr.bf16.gmra.mrb[0].mxu0 %v154
  %v333 = vpop.f32.mrb[0].mxu0
  %v334 = vadd.f32 %v90, %v333
  %v335 = vpop.f32.mrb[0].mxu0
  %v336 = vpop.f32.mrb[0].mxu0
  %v337 = vadd.f32 %v90, %v336
  %v338 = vpop.f32.mrb[0].mxu0
  %339 = vdwg.mxu0
  %340 = vst [vmem:[%s4] sm:$0xff] %v278
  %341 = vst [vmem:[%s4 + $0x8] sm:$0xff] %v281
  %342 = vst [vmem:[%s4 + $0x10] sm:$0xff] %v286
  %343 = vst [vmem:[%s4 + $0x18] sm:$0xff] %v289
  %344 = vst [vmem:[%s4 + $0x20] sm:$0xff] %v294
  %345 = vst [vmem:[%s4 + $0x28] sm:$0xff] %v297
  %346 = vst [vmem:[%s4 + $0x30] sm:$0xff] %v302
  %347 = vst [vmem:[%s4 + $0x38] sm:$0xff] %v305
  %348 = vst [vmem:[%s4 + $0x40] sm:$0xff] %v310
  %349 = vst [vmem:[%s4 + $0x48] sm:$0xff] %v313
  %350 = vst [vmem:[%s4 + $0x50] sm:$0xff] %v318
  %351 = vst [vmem:[%s4 + $0x58] sm:$0xff] %v321
  %352 = vst [vmem:[%s4 + $0x60] sm:$0xff] %v326
  %353 = vst [vmem:[%s4 + $0x68] sm:$0xff] %v329
  %354 = vst [vmem:[%s4 + $0x70] sm:$0xff] %v334
  %355 = vst [vmem:[%s4 + $0x78] sm:$0xff] %v337
  // Predicated region
  $region14: #{efficientdet_forward.31} parent=0 // pred_check
    _
  $region15: #{efficientdet_forward.31} parent=0 // pred_check_branch
    %357 = sbr.rel (0) target = $region17
  $region16: #{efficientdet_forward.31} parent=0 // pred_region
    _
  $region17: #{efficientdet_forward.31} parent=0 // pred_fallthru
    _
  // Predicated region
  $region18: #{efficientdet_forward.31} parent=0 // pred_check
    _
  $region19: #{efficientdet_forward.31} parent=0 // pred_check_branch
    %359 = sbr.rel (0) target = $region21
  $region20: #{efficientdet_forward.31} parent=0 // pred_region
    _
  $region21: #{efficientdet_forward.31} parent=0 // pred_fallthru
    _

// kernel: efficientdet_forward.32
$region0: #{efficientdet_forward.32}
  #allocation0 [shape = 'u32[]', space=smem, size = 0x4, offset = 0x4, fixed_abs, tag = 'smem constant byte address 0x4 - core index']
  #allocation1 [shape = 'u32[144,128]{1,0:T(1,128)}', space=vmem, size = 0x12000, scoped, tag = 'internal scratch']
  %s0 = inlined_call_operand.vmem [shape: f32[8,128], index: 0, kind: input, shape index: {}]
  %s1 = inlined_call_operand.vmem [shape: f32[8,128], index: 1, kind: input, shape index: {}]
  %s2 = inlined_call_operand.vmem [shape: f32[8,128], index: 2, kind: input, shape index: {}]
  %s3 = inlined_call_operand.vmem [shape: f32[3], index: 3, kind: input, shape index: {}]
  %s4 = inlined_call_operand.vmem [shape: f32[8,128], index: 4, kind: output, shape index: {}]
  %s5 = sld [smem:[#allocation0]]
  $region30: #{efficientdet_forward.32} parent=0
    _
  %s7 = ssub.s32 1, %s5
  %s8 = scalar_select 0, %s7, %s5
  $region1: #{efficientdet_forward.32} parent=0
    #allocation2 [shape = 'u8[512]{0}', space=smem, size = 0x200, scoped, tag = 'input window, operand 3, single buffered']
    #allocation3 [shape = 's32[1]{0}', space=sflag, size = 0x4, scoped, tag = 'scoped memory for efficientdet_forward.32']
    %9 = vsyncpa [#allocation3], 0
    // Predicated region
    $region2: #{efficientdet_forward.32} parent=1 // pred_check
      _
    $region3: #{efficientdet_forward.32} parent=1 // pred_check_branch
      %11 = sbr.rel (0) target = $region5
    $region4: #{efficientdet_forward.32} parent=1 // pred_region
      _
    $region5: #{efficientdet_forward.32} parent=1 // pred_fallthru
      _
    // Predicated region
    $region6: #{efficientdet_forward.32} parent=1 // pred_check
      _
    $region7: #{efficientdet_forward.32} parent=1 // pred_check_branch
      %13 = sbr.rel (0) target = $region9
    $region8: #{efficientdet_forward.32} parent=1 // pred_region
      _
    $region9: #{efficientdet_forward.32} parent=1 // pred_fallthru
      _
    // Predicated region
    $region10: #{efficientdet_forward.32} parent=1 // pred_check
      _
    $region11: #{efficientdet_forward.32} parent=1 // pred_check_branch
      %15 = sbr.rel (0) target = $region13
    $region12: #{efficientdet_forward.32} parent=1 // pred_region
      _
    $region13: #{efficientdet_forward.32} parent=1 // pred_fallthru
      _
    // Predicated region
    $region14: #{efficientdet_forward.32} parent=1 // pred_check
      _
    $region15: #{efficientdet_forward.32} parent=1 // pred_check_branch
      %17 = sbr.rel (0) target = $region17
    $region16: #{efficientdet_forward.32} parent=1 // pred_region
      %s19 = ssub.s32 16, 16
      %20 = vsyncadd [#allocation3], %s19
      %s22 = sshll.u32 %s3, 4
      %s23 = int_to_ptr.vmem [resolvable:$true] %s22
      %25 = dma.vmem_to_smem %s23, 16, [#allocation2], [#allocation3]
    $region17: #{efficientdet_forward.32} parent=1 // pred_fallthru
      _
    // Predicated region
    $region18: #{efficientdet_forward.32} parent=1 // pred_check
      _
    $region19: #{efficientdet_forward.32} parent=1 // pred_check_branch
      %27 = sbr.rel (0) target = $region21
    $region20: #{efficientdet_forward.32} parent=1 // pred_region
      %28 = dma.done [#allocation3], 16
    $region21: #{efficientdet_forward.32} parent=1 // pred_fallthru
      _
    %29 = sfence
    %s30 = sld [smem:[#allocation2]]
    %s31 = smax.f32 %s30, 0.0
    %s32 = sld [smem:[#allocation2 + $0x1]]
    %s33 = smax.f32 %s32, 0.0
    %s34 = sld [smem:[#allocation2 + $0x2]]
    %s35 = smax.f32 %s34, 0.0
    %s36 = sadd.f32 %s31, %s33
    %s37 = sadd.f32 %s36, %s35
    %s38 = sadd.f32 %s37, 0.0001
    %v39 = vstv %s38
    %v40 = vrcp.pop %v39
    %s41 = vtos %v40
    %v42 = vld [vmem:[%s0] sm:$0xff]
    %s43 = smul.f32 %s31, %s41
    %v44 = vstv %s43
    %v45 = vmul.f32 %v42, %v44
    %v46 = vld [vmem:[%s1] sm:$0xff]
    %s47 = smul.f32 %s33, %s41
    %v48 = vstv %s47
    %v49 = vmul.f32 %v46, %v48
    %v50 = vadd.f32 %v45, %v49
    %v51 = vld [vmem:[%s2] sm:$0xff]
    %s52 = smul.f32 %s35, %s41
    %v53 = vstv %s52
    %v54 = vmul.f32 %v51, %v53
    %v55 = vadd.f32 %v50, %v54
    %v56 = vsub.f32 0.0, %v55
    %v57 = vmul.f32 %v56, 1.442695
    %v58 = vpow.pop %v57
    %v59 = vadd.f32 %v58, 1.0
    %v60 = vrcp.pop %v59
    %v61 = vmul.f32 1.0, %v60
    %v62 = vmul.f32 %v55, %v61
    %63 = vst [vmem:[%s4] sm:$0xff] %v62
    // Predicated region
    $region22: #{efficientdet_forward.32} parent=1 // pred_check
      _
    $region23: #{efficientdet_forward.32} parent=1 // pred_check_branch
      %65 = sbr.rel (0) target = $region25
    $region24: #{efficientdet_forward.32} parent=1 // pred_region
      _
    $region25: #{efficientdet_forward.32} parent=1 // pred_fallthru
      _
    // Predicated region
    $region26: #{efficientdet_forward.32} parent=1 // pred_check
      _
    $region27: #{efficientdet_forward.32} parent=1 // pred_check_branch
      %67 = sbr.rel (0) target = $region29
    $region28: #{efficientdet_forward.32} parent=1 // pred_region
      _
    $region29: #{efficientdet_forward.32} parent=1 // pred_fallthru
      _
    %68 = vsyncpa [#allocation3], 1

// kernel: efficientdet_forward.39
$region0: #{efficientdet_forward.39}
  #allocation0 [shape = 'u32[]', space=smem, size = 0x4, offset = 0x4, fixed_abs, tag = 'smem constant byte address 0x4 - core index']
  #allocation1 [shape = 'u32[144,128]{1,0:T(1,128)}', space=vmem, size = 0x12000, scoped, tag = 'internal scratch']
  #allocation2 [shape = 's32[1]{0}', space=sflag, size = 0x4, scoped, tag = 'scoped memory for efficientdet_forward.39']
  #allocation3 [shape = 'u8[512]{0}', space=smem, size = 0x200, scoped, tag = 'prefetched SMEM operand 0']
  %s0 = inlined_call_operand.vmem [shape: s32[3], index: 0, kind: input, shape index: {}]
  %s1 = inlined_call_operand.vmem [shape: bf16[384,144], index: 1, kind: input, shape index: {}]
  %s2 = inlined_call_operand.vmem [shape: bf16[3,144,128], index: 2, kind: input, shape index: {}]
  %s3 = inlined_call_operand.vmem [shape: f32[3,1,128], index: 3, kind: input, shape index: {}]
  %s4 = inlined_call_operand.vmem [shape: f32[384,128], index: 4, kind: output, shape index: {}]
  %s5 = sld [smem:[#allocation0]]
  $region45: #{efficientdet_forward.39} parent=0
    _
  %s7 = ssub.s32 1, %s5
  %s8 = scalar_select 0, %s7, %s5
  %s9 = sshll.u32 %s0, 4
  %s10 = int_to_ptr.vmem [resolvable:$true] %s9
  %12 = dma.vmem_to_smem %s10, 16, [#allocation3], [#allocation2]
  %13 = dma.done [#allocation2], 16
  %14 = sfence
  loop: start=0, step=1, limit=5
  $region2: #{efficientdet_forward.39} parent=0 // loop_pre_header
    _
  $region3: #{efficientdet_forward.39} parent=0 // loop_header
    %s16 = sphi 0, %s20
    %p17 = scmp.ge.s32.totalorder %s16, 5
    %s26 = sphi 0, %s28
    %s29 = sphi 0, %s26
    %s30 = sphi 0, %s29
    %s46 = sphi 0, %s30
    %s54 = sphi 0, %s56
    %s57 = sphi 0, %s54
    %s58 = sphi 0, %s57
    %s74 = sphi 0, %s58
    %s82 = sphi 0, %s84
    %s85 = sphi 0, %s82
    %s86 = sphi 0, %s85
    %s102 = sphi 0, %s86
    %s108 = sphi 0, %s110
    %s111 = sphi 0, %s108
    %s112 = sphi 0, %s111
    %s128 = sphi 0, %s112
  $region4: #{efficientdet_forward.39} parent=0 // loop_header_branch
    %19 = sbr.rel (%p17) target = $region8
  $region5: #{efficientdet_forward.39} parent=0 // loop_body
    %s21 = ssub.s32 %s16, 1
    %s22 = ssub.s32 %s16, 2
    %s23 = sadd.s32 %s16, 1
    %s24 = ssub.s32 %s16, %s23
    %p25 = scmp.eq.s32.totalorder %s24, 0
    %s27 = sadd.s32 %s26, 1
    %s28 = scalar_select %p25, %s26, %s27
    %p31 = pneg %p25
    %p32 = scmp.eq.s32.totalorder %s16, 2
    %p33 = por %p31, %p32
    %p34 = scmp.ne.s32.totalorder %s26, %s29
    %p35 = scmp.eq.s32.totalorder %s16, 0
    %p36 = por %p34, %p35
    %p37 = scmp.ne.s32.totalorder %s26, %s29
    %p38 = scmp.eq.s32.totalorder %s21, 2
    %p39 = por %p37, %p38
    %p40 = scmp.ne.s32.totalorder %s29, %s30
    %p41 = scmp.eq.s32.totalorder %s21, 0
    %p42 = por %p40, %p41
    %p43 = scmp.ne.s32.totalorder %s29, %s30
    %p44 = scmp.eq.s32.totalorder %s22, 2
    %p45 = por %p43, %p44
    %p47 = scmp.ne.s32.totalorder %s30, %s46
    %p48 = scmp.eq.s32.totalorder %s22, 0
    %p49 = por %p47, %p48
    %s50 = sld [smem:[#allocation3 + %s16]]
    %s51 = sld [smem:[#allocation3 + %s23]]
    %s52 = ssub.s32 %s50, %s51
    %p53 = scmp.eq.s32.totalorder %s52, 0
    %s55 = sadd.s32 %s54, 1
    %s56 = scalar_select %p53, %s54, %s55
    %p59 = pneg %p53
    %p60 = scmp.eq.s32.totalorder %s16, 2
    %p61 = por %p59, %p60
    %p62 = scmp.ne.s32.totalorder %s54, %s57
    %p63 = scmp.eq.s32.totalorder %s16, 0
    %p64 = por %p62, %p63
    %p65 = scmp.ne.s32.totalorder %s54, %s57
    %p66 = scmp.eq.s32.totalorder %s21, 2
    %p67 = por %p65, %p66
    %p68 = scmp.ne.s32.totalorder %s57, %s58
    %p69 = scmp.eq.s32.totalorder %s21, 0
    %p70 = por %p68, %p69
    %p71 = scmp.ne.s32.totalorder %s57, %s58
    %p72 = scmp.eq.s32.totalorder %s22, 2
    %p73 = por %p71, %p72
    %p75 = scmp.ne.s32.totalorder %s58, %s74
    %p76 = scmp.eq.s32.totalorder %s22, 0
    %p77 = por %p75, %p76
    %s78 = sld [smem:[#allocation3 + %s16]]
    %s79 = sld [smem:[#allocation3 + %s23]]
    %s80 = ssub.s32 %s78, %s79
    %p81 = scmp.eq.s32.totalorder %s80, 0
    %s83 = sadd.s32 %s82, 1
    %s84 = scalar_select %p81, %s82, %s83
    %p87 = pneg %p81
    %p88 = scmp.eq.s32.totalorder %s16, 2
    %p89 = por %p87, %p88
    %p90 = scmp.ne.s32.totalorder %s82, %s85
    %p91 = scmp.eq.s32.totalorder %s16, 0
    %p92 = por %p90, %p91
    %p93 = scmp.ne.s32.totalorder %s82, %s85
    %p94 = scmp.eq.s32.totalorder %s21, 2
    %p95 = por %p93, %p94
    %p96 = scmp.ne.s32.totalorder %s85, %s86
    %p97 = scmp.eq.s32.totalorder %s21, 0
    %p98 = por %p96, %p97
    %p99 = scmp.ne.s32.totalorder %s85, %s86
    %p100 = scmp.eq.s32.totalorder %s22, 2
    %p101 = por %p99, %p100
    %p103 = scmp.ne.s32.totalorder %s86, %s102
    %p104 = scmp.eq.s32.totalorder %s22, 0
    %p105 = por %p103, %p104
    %s106 = ssub.s32 %s16, %s23
    %p107 = scmp.eq.s32.totalorder %s106, 0
    %s109 = sadd.s32 %s108, 1
    %s110 = scalar_select %p107, %s108, %s109
    %p113 = pneg %p107
    %p114 = scmp.eq.s32.totalorder %s16, 2
    %p115 = por %p113, %p114
    %p116 = scmp.ne.s32.totalorder %s108, %s111
    %p117 = scmp.eq.s32.totalorder %s16, 0
    %p118 = por %p116, %p117
    %p119 = scmp.ne.s32.totalorder %s108, %s111
    %p120 = scmp.eq.s32.totalorder %s21, 2
    %p121 = por %p119, %p120
    %p122 = scmp.ne.s32.totalorder %s111, %s112
    %p123 = scmp.eq.s32.totalorder %s21, 0
    %p124 = por %p122, %p123
    %p125 = scmp.ne.s32.totalorder %s111, %s112
    %p126 = scmp.eq.s32.totalorder %s22, 2
    %p127 = por %p125, %p126
    %p129 = scmp.ne.s32.totalorder %s112, %s128
    %p130 = scmp.eq.s32.totalorder %s22, 0
    %p131 = por %p129, %p130
    %p132 = scmp.le.s32.totalorder 1, %s16
    %p133 = scmp.lt.s32.totalorder %s16, 4
    %p134 = pnand %p132, %p133
    %p135 = pneg %p134
    // Predicated region
    $region9: #{efficientdet_forward.39} parent=5 // pred_check
      _
    $region10: #{efficientdet_forward.39} parent=5 // pred_check_branch
      %137 = sbr.rel (%p134) target = $region12
    $region11: #{efficientdet_forward.39} parent=5 // pred_region
      %s138 = ssub.s32 %s16, 1
    $region12: #{efficientdet_forward.39} parent=5 // pred_fallthru
      _
    %p139 = scmp.lt.s32.totalorder %s16, 3
    // Predicated region
    $region13: #{efficientdet_forward.39} parent=5 // pred_check
      %p140 = pneg %p139
    $region14: #{efficientdet_forward.39} parent=5 // pred_check_branch
      %142 = sbr.rel (%p140) target = $region16
    $region15: #{efficientdet_forward.39} parent=5 // pred_region
      // Predicated region
      $region17: #{efficientdet_forward.39} parent=15 // pred_check
        %p143 = pneg %p36
      $region18: #{efficientdet_forward.39} parent=15 // pred_check_branch
        %145 = sbr.rel (%p143) target = $region20
      $region19: #{efficientdet_forward.39} parent=15 // pred_region
        %s146 = smul.u32 16, %s16
        %p147 = scmp.lt.s32.totalorder %s146, 47
        %s148 = scalar_select %p147, %s146, 47
        %s149 = smul.addr %s148, 2
        %s150 = smul.addr %s149, 4
        %s151 = scalar_lea.vmem %s1, %s150
        %s152 = smul.u32 16, %s16
      $region20: #{efficientdet_forward.39} parent=15 // pred_fallthru
        _
      // Predicated region
      $region21: #{efficientdet_forward.39} parent=15 // pred_check
        %p153 = pneg %p64
      $region22: #{efficientdet_forward.39} parent=15 // pred_check_branch
        %155 = sbr.rel (%p153) target = $region24
      $region23: #{efficientdet_forward.39} parent=15 // pred_region
        %s156 = sld [smem:[#allocation3 + %s16]]
        %p157 = scmp.lt.s32.totalorder %s156, 2
        %s158 = scalar_select %p157, %s156, 2
        %s159 = smul.addr %s158, 18
        %s160 = smul.addr %s159, 4
        %s161 = scalar_lea.vmem %s2, %s160
        %s162 = sld [smem:[#allocation3 + %s16]]
      $region24: #{efficientdet_forward.39} parent=15 // pred_fallthru
        _
      // Predicated region
      $region25: #{efficientdet_forward.39} parent=15 // pred_check
        %p163 = pneg %p92
      $region26: #{efficientdet_forward.39} parent=15 // pred_check_branch
        %165 = sbr.rel (%p163) target = $region28
      $region27: #{efficientdet_forward.39} parent=15 // pred_region
        %s166 = sld [smem:[#allocation3 + %s16]]
        %p167 = scmp.lt.s32.totalorder %s166, 2
        %s168 = scalar_select %p167, %s166, 2
        %s169 = scalar_lea.vmem %s3, %s168
        %s170 = sld [smem:[#allocation3 + %s16]]
      $region28: #{efficientdet_forward.39} parent=15 // pred_fallthru
        _
    $region16: #{efficientdet_forward.39} parent=5 // pred_fallthru
      _
    %p171 = scmp.le.s32.totalorder 1, %s16
    %p172 = scmp.lt.s32.totalorder %s16, 4
    %p173 = pnand %p171, %p172
    %p174 = pneg %p173
    // Predicated region
    $region29: #{efficientdet_forward.39} parent=5 // pred_check
      _
    $region30: #{efficientdet_forward.39} parent=5 // pred_check_branch
      %176 = sbr.rel (%p173) target = $region32
    $region31: #{efficientdet_forward.39} parent=5 // pred_region
      %s177 = ssub.s32 %s16, 1
      %s178 = smul.u32 16, %s21
      %p179 = scmp.lt.s32.totalorder %s178, 47
      %s180 = scalar_select %p179, %s178, 47
      %s181 = smul.addr %s180, 2
      %s182 = smul.addr %s181, 4
      %s183 = scalar_lea.vmem %s1, %s182
      %p184 = pneg %p42
      %p185 = pneg %p39
      %s186 = sld [smem:[#allocation3 + %s21]]
      %p187 = scmp.lt.s32.totalorder %s186, 2
      %s188 = scalar_select %p187, %s186, 2
      %s189 = smul.addr %s188, 18
      %s190 = smul.addr %s189, 4
      %s191 = scalar_lea.vmem %s2, %s190
      %p192 = pneg %p70
      %p193 = pneg %p67
      %s194 = sld [smem:[#allocation3 + %s21]]
      %p195 = scmp.lt.s32.totalorder %s194, 2
      %s196 = scalar_select %p195, %s194, 2
      %s197 = scalar_lea.vmem %s3, %s196
      %p198 = pneg %p98
      %p199 = pneg %p95
      %p200 = pneg %p124
      %p201 = pneg %p121
      %s202 = smul.u32 16, %s21
      %p203 = scmp.lt.s32.totalorder %s202, 47
      %s204 = scalar_select %p203, %s202, 47
      %s205 = smul.addr %s204, 8
      %s206 = scalar_lea.vmem %s4, %s205
      %s207 = smul.u32 16, %s21
      %p208 = scmp.lt.s32.totalorder %s207, 47
      %s209 = scalar_select %p208, %s207, 47
      %s210 = smul.addr %s209, 2
      %s211 = smul.addr %s210, 4
      %s212 = scalar_lea.vmem %s1, %s211
      %s213 = smul.u32 16, %s21
      %s214 = sld [smem:[#allocation3 + %s21]]
      %p215 = scmp.lt.s32.totalorder %s214, 2
      %s216 = scalar_select %p215, %s214, 2
      %s217 = smul.addr %s216, 18
      %s218 = smul.addr %s217, 4
      %s219 = scalar_lea.vmem %s2, %s218
      %s220 = sld [smem:[#allocation3 + %s21]]
      %s221 = sld [smem:[#allocation3 + %s21]]
      %p222 = scmp.lt.s32.totalorder %s221, 2
      %s223 = scalar_select %p222, %s221, 2
      %s224 = scalar_lea.vmem %s3, %s223
      %s225 = sld [smem:[#allocation3 + %s21]]
      %s226 = smul.u32 16, %s21
      %p227 = scmp.lt.s32.totalorder %s226, 47
      %s228 = scalar_select %p227, %s226, 47
      %s229 = smul.addr %s228, 8
      %s230 = scalar_lea.vmem %s4, %s229
      %s231 = smul.u32 16, %s21
      %v233 = vld [vmem:[%s212] sm:$0xff]
      %v234 = vld [vmem:[%s212 + $0x8] sm:$0xff]
      %v235 = vld [vmem:[%s212 + $0x10] sm:$0xff]
      %v236 = vld [vmem:[%s212 + $0x18] sm:$0xff]
      %v237 = vld [vmem:[%s212 + $0x20] sm:$0xff]
      %v238 = vld [vmem:[%s212 + $0x28] sm:$0xff]
      %v239 = vld [vmem:[%s212 + $0x30] sm:$0xff]
      %v240 = vld [vmem:[%s212 + $0x38] sm:$0xff]
      %v241 = vld [vmem:[%s212 + $0x40] sm:$0xff]
      %v242 = vld [vmem:[%s212 + $0x48] sm:$0xff]
      %v243 = vld [vmem:[%s212 + $0x50] sm:$0xff]
      %v244 = vld [vmem:[%s212 + $0x58] sm:$0xff]
      %v245 = vld [vmem:[%s212 + $0x60] sm:$0xff]
      %v246 = vld [vmem:[%s212 + $0x68] sm:$0xff]
      %v247 = vld [vmem:[%s212 + $0x70] sm:$0xff]
      %v248 = vld [vmem:[%s212 + $0x78] sm:$0xff]
      %v249 = vld [vmem:[%s219] sm:$0xf]
      %v250 = vld [vmem:[%s219 + $0x4] sm:$0xf]
      %v251 = vld [vmem:[%s219 + $0x8] sm:$0xf]
      %v252 = vld [vmem:[%s219 + $0xc] sm:$0xf]
      %v253 = vld [vmem:[%s219 + $0x10] sm:$0xf]
      %v254 = vld [vmem:[%s219 + $0x14] sm:$0xf]
      %v255 = vld [vmem:[%s219 + $0x18] sm:$0xf]
      %v256 = vld [vmem:[%s219 + $0x1c] sm:$0xf]
      %v257 = vld [vmem:[%s219 + $0x20] sm:$0xf]
      %v258 = vld [vmem:[%s219 + $0x24] sm:$0xf]
      %v259 = vld [vmem:[%s219 + $0x28] sm:$0xf]
      %v260 = vld [vmem:[%s219 + $0x2c] sm:$0xf]
      %v261 = vld [vmem:[%s219 + $0x30] sm:$0xf]
      %v262 = vld [vmem:[%s219 + $0x34] sm:$0xf]
      %v263 = vld [vmem:[%s219 + $0x38] sm:$0xf]
      %v264 = vld [vmem:[%s219 + $0x3c] sm:$0xf]
      %v265 = vld [vmem:[%s219 + $0x40] sm:$0xf]
      %v266 = vld [vmem:[%s219 + $0x44] sm:$0xf]
      %v267 = vld [vmem:[%s224] sm:$0x1]
      %v269 = vlaneseq
      %v270 = vshrl.u32 %v269, 7
      %v271 = vsub.s32 0, %v270
      %v272 = vrot.slane %v267, %v271
      %v290 = vunpack.c.l.b16 %v233
      %v291 = vunpack.c.h.b16 %v233
      %v292 = vunpack.c.l.b16 %v234
      %v293 = vunpack.c.h.b16 %v234
      %v294 = vunpack.c.l.b16 %v235
      %v295 = vunpack.c.h.b16 %v235
      %v296 = vunpack.c.l.b16 %v236
      %v297 = vunpack.c.h.b16 %v236
      %v298 = vunpack.c.l.b16 %v237
      %v299 = vunpack.c.h.b16 %v237
      %v300 = vunpack.c.l.b16 %v238
      %v301 = vunpack.c.h.b16 %v238
      %v302 = vunpack.c.l.b16 %v239
      %v303 = vunpack.c.h.b16 %v239
      %v304 = vunpack.c.l.b16 %v240
      %v305 = vunpack.c.h.b16 %v240
      %v306 = vunpack.c.l.b16 %v241
      %v307 = vunpack.c.h.b16 %v241
      %v308 = vunpack.c.l.b16 %v242
      %v309 = vunpack.c.h.b16 %v242
      %v310 = vunpack.c.l.b16 %v243
      %v311 = vunpack.c.h.b16 %v243
      %v312 = vunpack.c.l.b16 %v244
      %v313 = vunpack.c.h.b16 %v244
      %v314 = vunpack.c.l.b16 %v245
      %v315 = vunpack.c.h.b16 %v245
      %v316 = vunpack.c.l.b16 %v246
      %v317 = vunpack.c.h.b16 %v246
      %v318 = vunpack.c.l.b16 %v247
      %v319 = vunpack.c.h.b16 %v247
      %v320 = vunpack.c.l.b16 %v248
      %v321 = vunpack.c.h.b16 %v248
      %v322 = vpack.c.b16 %v292, %v290
      %v323 = vpack.c.b16 %v293, %v291
      %v324 = vpack.c.b16 %v296, %v294
      %v325 = vpack.c.b16 %v297, %v295
      %v326 = vpack.c.b16 %v300, %v298
      %v327 = vpack.c.b16 %v301, %v299
      %v328 = vpack.c.b16 %v304, %v302
      %v329 = vpack.c.b16 %v305, %v303
      %v330 = vpack.c.b16 %v308, %v306
      %v331 = vpack.c.b16 %v309, %v307
      %v332 = vpack.c.b16 %v312, %v310
      %v333 = vpack.c.b16 %v313, %v311
      %v334 = vpack.c.b16 %v316, %v314
      %v335 = vpack.c.b16 %v317, %v315
      %v336 = vpack.c.b16 %v320, %v318
      %v337 = vpack.c.b16 %v321, %v319
      %v364 = vunpack.c.l.b16 %v249
      %v365 = vunpack.c.l.b16 %v250
      %v366 = vunpack.c.l.b16 %v251
      %v367 = vunpack.c.l.b16 %v252
      %v368 = vunpack.c.l.b16 %v253
      %v369 = vunpack.c.l.b16 %v254
      %v370 = vunpack.c.l.b16 %v255
      %v371 = vunpack.c.l.b16 %v256
      %v372 = vunpack.c.l.b16 %v257
      %v373 = vunpack.c.l.b16 %v258
      %v374 = vunpack.c.l.b16 %v259
      %v375 = vunpack.c.l.b16 %v260
      %v376 = vunpack.c.l.b16 %v261
      %v377 = vunpack.c.l.b16 %v262
      %v378 = vunpack.c.l.b16 %v263
      %v379 = vunpack.c.l.b16 %v264
      %v380 = vunpack.c.l.b16 %v265
      %v381 = vunpack.c.l.b16 %v266
      %v382 = vpack.c.b16 %v365, %v364
      %v383 = vpack.c.b16 %v367, %v366
      %v384 = vpack.c.b16 %v369, %v368
      %v385 = vpack.c.b16 %v371, %v370
      %v386 = vpack.c.b16 %v373, %v372
      %v387 = vpack.c.b16 %v375, %v374
      %v388 = vpack.c.b16 %v377, %v376
      %v389 = vpack.c.b16 %v379, %v378
      %v390 = vpack.c.b16 %v381, %v380
      %vm400 = vcmask 130048
      %v402 = vsel %vm400, %v323, 0
      %v405 = vsel %vm400, %v325, 0
      %v408 = vsel %vm400, %v327, 0
      %v411 = vsel %vm400, %v329, 0
      %v414 = vsel %vm400, %v331, 0
      %v417 = vsel %vm400, %v333, 0
      %v420 = vsel %vm400, %v335, 0
      %v423 = vsel %vm400, %v337, 0
      %425 = vmatprep.subr.bf16.mxu0 0
      %426 = vmatpush1.bf16.msra.mxu0 %v382
      %427 = vmatprep.subr.bf16.mxu0 0
      %428 = vmatpush1.bf16.msra.mxu0 %v383
      %429 = vmatprep.subr.bf16.mxu0 0
      %430 = vmatpush1.bf16.msra.mxu0 %v384
      %431 = vmatprep.subr.bf16.mxu0 0
      %432 = vmatpush1.bf16.msra.mxu0 %v385
      %433 = vmatprep.subr.bf16.mxu0 0
      %434 = vmatpush1.bf16.msra.mxu0 %v386
      %435 = vmatprep.subr.bf16.mxu0 0
      %436 = vmatpush1.bf16.msra.mxu0 %v387
      %437 = vmatprep.subr.bf16.mxu0 0
      %438 = vmatpush1.bf16.msra.mxu0 %v388
      %439 = vmatprep.subr.bf16.mxu0 0
      %440 = vmatpush1.bf16.msra.mxu0 %v389
      %441 = vmatprep.subr.bf16.mxu0 0
      %442 = vmatpush1.bf16.msra.mxu0 %v390
      %443 = vmatprep.subr.bf16.mxu0 0
      %444 = vmatpush1.bf16.msra.mxu0 0
      %445 = vmatprep.subr.bf16.mxu0 0
      %446 = vmatpush1.bf16.msra.mxu0 0
      %447 = vmatprep.subr.bf16.mxu0 0
      %448 = vmatpush1.bf16.msra.mxu0 0
      %449 = vmatprep.subr.bf16.mxu0 0
      %450 = vmatpush1.bf16.msra.mxu0 0
      %451 = vmatprep.subr.bf16.mxu0 0
      %452 = vmatpush1.bf16.msra.mxu0 0
      %453 = vmatprep.subr.bf16.mxu0 0
      %454 = vmatpush1.bf16.msra.mxu0 0
      %455 = vmatprep.subr.bf16.mxu0 0
      %456 = vmatpush1.bf16.msra.mxu0 0
      %457 = vmatprep.mubr.bf16.mxu0 %v402
      %458 = vmatmul.mubr.bf16.gmra.mrb[0].mxu0 %v322
      %v459 = vpop.f32.mrb[0].mxu0
      %v460 = vadd.f32 %v272, %v459
      %v461 = vpop.f32.mrb[0].mxu0
      %v462 = vpop.f32.mrb[0].mxu0
      %v463 = vadd.f32 %v272, %v462
      %v464 = vpop.f32.mrb[0].mxu0
      %465 = vmatprep.mubr.bf16.mxu0 %v405
      %466 = vmatmul.mubr.bf16.gmra.mrb[0].mxu0 %v324
      %v467 = vpop.f32.mrb[0].mxu0
      %v468 = vadd.f32 %v272, %v467
      %v469 = vpop.f32.mrb[0].mxu0
      %v470 = vpop.f32.mrb[0].mxu0
      %v471 = vadd.f32 %v272, %v470
      %v472 = vpop.f32.mrb[0].mxu0
      %473 = vmatprep.mubr.bf16.mxu0 %v408
      %474 = vmatmul.mubr.bf16.gmra.mrb[0].mxu0 %v326
      %v475 = vpop.f32.mrb[0].mxu0
      %v476 = vadd.f32 %v272, %v475
      %v477 = vpop.f32.mrb[0].mxu0
      %v478 = vpop.f32.mrb[0].mxu0
      %v479 = vadd.f32 %v272, %v478
      %v480 = vpop.f32.mrb[0].mxu0
      %481 = vmatprep.mubr.bf16.mxu0 %v411
      %482 = vmatmul.mubr.bf16.gmra.mrb[0].mxu0 %v328
      %v483 = vpop.f32.mrb[0].mxu0
      %v484 = vadd.f32 %v272, %v483
      %v485 = vpop.f32.mrb[0].mxu0
      %v486 = vpop.f32.mrb[0].mxu0
      %v487 = vadd.f32 %v272, %v486
      %v488 = vpop.f32.mrb[0].mxu0
      %489 = vmatprep.mubr.bf16.mxu0 %v414
      %490 = vmatmul.mubr.bf16.gmra.mrb[0].mxu0 %v330
      %v491 = vpop.f32.mrb[0].mxu0
      %v492 = vadd.f32 %v272, %v491
      %v493 = vpop.f32.mrb[0].mxu0
      %v494 = vpop.f32.mrb[0].mxu0
      %v495 = vadd.f32 %v272, %v494
      %v496 = vpop.f32.mrb[0].mxu0
      %497 = vmatprep.mubr.bf16.mxu0 %v417
      %498 = vmatmul.mubr.bf16.gmra.mrb[0].mxu0 %v332
      %v499 = vpop.f32.mrb[0].mxu0
      %v500 = vadd.f32 %v272, %v499
      %v501 = vpop.f32.mrb[0].mxu0
      %v502 = vpop.f32.mrb[0].mxu0
      %v503 = vadd.f32 %v272, %v502
      %v504 = vpop.f32.mrb[0].mxu0
      %505 = vmatprep.mubr.bf16.mxu0 %v420
      %506 = vmatmul.mubr.bf16.gmra.mrb[0].mxu0 %v334
      %v507 = vpop.f32.mrb[0].mxu0
      %v508 = vadd.f32 %v272, %v507
      %v509 = vpop.f32.mrb[0].mxu0
      %v510 = vpop.f32.mrb[0].mxu0
      %v511 = vadd.f32 %v272, %v510
      %v512 = vpop.f32.mrb[0].mxu0
      %513 = vmatprep.mubr.bf16.mxu0 %v423
      %514 = vmatmul.mubr.bf16.gmra.mrb[0].mxu0 %v336
      %v515 = vpop.f32.mrb[0].mxu0
      %v516 = vadd.f32 %v272, %v515
      %v517 = vpop.f32.mrb[0].mxu0
      %v518 = vpop.f32.mrb[0].mxu0
      %v519 = vadd.f32 %v272, %v518
      %v520 = vpop.f32.mrb[0].mxu0
      %521 = vdwg.mxu0
      %v522 = vsub.f32 0.0, %v460
      %v523 = vsub.f32 0.0, %v463
      %v524 = vsub.f32 0.0, %v468
      %v525 = vsub.f32 0.0, %v471
      %v526 = vsub.f32 0.0, %v476
      %v527 = vsub.f32 0.0, %v479
      %v528 = vsub.f32 0.0, %v484
      %v529 = vsub.f32 0.0, %v487
      %v530 = vsub.f32 0.0, %v492
      %v531 = vsub.f32 0.0, %v495
      %v532 = vsub.f32 0.0, %v500
      %v533 = vsub.f32 0.0, %v503
      %v534 = vsub.f32 0.0, %v508
      %v535 = vsub.f32 0.0, %v511
      %v536 = vsub.f32 0.0, %v516
      %v537 = vsub.f32 0.0, %v519
      %v538 = vmul.f32 %v522, 1.442695
      %v539 = vpow.pop %v538
      %v540 = vmul.f32 %v523, 1.442695
      %v541 = vpow.pop %v540
      %v542 = vmul.f32 %v524, 1.442695
      %v543 = vpow.pop %v542
      %v544 = vmul.f32 %v525, 1.442695
      %v545 = vpow.pop %v544
      %v546 = vmul.f32 %v526, 1.442695
      %v547 = vpow.pop %v546
      %v548 = vmul.f32 %v527, 1.442695
      %v549 = vpow.pop %v548
      %v550 = vmul.f32 %v528, 1.442695
      %v551 = vpow.pop %v550
      %v552 = vmul.f32 %v529, 1.442695
      %v553 = vpow.pop %v552
      %v554 = vmul.f32 %v530, 1.442695
      %v555 = vpow.pop %v554
      %v556 = vmul.f32 %v531, 1.442695
      %v557 = vpow.pop %v556
      %v558 = vmul.f32 %v532, 1.442695
      %v559 = vpow.pop %v558
      %v560 = vmul.f32 %v533, 1.442695
      %v561 = vpow.pop %v560
      %v562 = vmul.f32 %v534, 1.442695
      %v563 = vpow.pop %v562
      %v564 = vmul.f32 %v535, 1.442695
      %v565 = vpow.pop %v564
      %v566 = vmul.f32 %v536, 1.442695
      %v567 = vpow.pop %v566
      %v568 = vmul.f32 %v537, 1.442695
      %v569 = vpow.pop %v568
      %v570 = vadd.f32 %v539, 1.0
      %v571 = vadd.f32 %v541, 1.0
      %v572 = vadd.f32 %v543, 1.0
      %v573 = vadd.f32 %v545, 1.0
      %v574 = vadd.f32 %v547, 1.0
      %v575 = vadd.f32 %v549, 1.0
      %v576 = vadd.f32 %v551, 1.0
      %v577 = vadd.f32 %v553, 1.0
      %v578 = vadd.f32 %v555, 1.0
      %v579 = vadd.f32 %v557, 1.0
      %v580 = vadd.f32 %v559, 1.0
      %v581 = vadd.f32 %v561, 1.0
      %v582 = vadd.f32 %v563, 1.0
      %v583 = vadd.f32 %v565, 1.0
      %v584 = vadd.f32 %v567, 1.0
      %v585 = vadd.f32 %v569, 1.0
      %v586 = vrcp.pop %v570
      %v587 = vmul.f32 1.0, %v586
      %v588 = vrcp.pop %v571
      %v589 = vmul.f32 1.0, %v588
      %v590 = vrcp.pop %v572
      %v591 = vmul.f32 1.0, %v590
      %v592 = vrcp.pop %v573
      %v593 = vmul.f32 1.0, %v592
      %v594 = vrcp.pop %v574
      %v595 = vmul.f32 1.0, %v594
      %v596 = vrcp.pop %v575
      %v597 = vmul.f32 1.0, %v596
      %v598 = vrcp.pop %v576
      %v599 = vmul.f32 1.0, %v598
      %v600 = vrcp.pop %v577
      %v601 = vmul.f32 1.0, %v600
      %v602 = vrcp.pop %v578
      %v603 = vmul.f32 1.0, %v602
      %v604 = vrcp.pop %v579
      %v605 = vmul.f32 1.0, %v604
      %v606 = vrcp.pop %v580
      %v607 = vmul.f32 1.0, %v606
      %v608 = vrcp.pop %v581
      %v609 = vmul.f32 1.0, %v608
      %v610 = vrcp.pop %v582
      %v611 = vmul.f32 1.0, %v610
      %v612 = vrcp.pop %v583
      %v613 = vmul.f32 1.0, %v612
      %v614 = vrcp.pop %v584
      %v615 = vmul.f32 1.0, %v614
      %v616 = vrcp.pop %v585
      %v617 = vmul.f32 1.0, %v616
      %v618 = vmul.f32 %v460, %v587
      %v619 = vmul.f32 %v463, %v589
      %v620 = vmul.f32 %v468, %v591
      %v621 = vmul.f32 %v471, %v593
      %v622 = vmul.f32 %v476, %v595
      %v623 = vmul.f32 %v479, %v597
      %v624 = vmul.f32 %v484, %v599
      %v625 = vmul.f32 %v487, %v601
      %v626 = vmul.f32 %v492, %v603
      %v627 = vmul.f32 %v495, %v605
      %v628 = vmul.f32 %v500, %v607
      %v629 = vmul.f32 %v503, %v609
      %v630 = vmul.f32 %v508, %v611
      %v631 = vmul.f32 %v511, %v613
      %v632 = vmul.f32 %v516, %v615
      %v633 = vmul.f32 %v519, %v617
      %634 = vst [vmem:[%s230] sm:$0xff] %v618
      %635 = vst [vmem:[%s230 + $0x8] sm:$0xff] %v619
      %636 = vst [vmem:[%s230 + $0x10] sm:$0xff] %v620
      %637 = vst [vmem:[%s230 + $0x18] sm:$0xff] %v621
      %638 = vst [vmem:[%s230 + $0x20] sm:$0xff] %v622
      %639 = vst [vmem:[%s230 + $0x28] sm:$0xff] %v623
      %640 = vst [vmem:[%s230 + $0x30] sm:$0xff] %v624
      %641 = vst [vmem:[%s230 + $0x38] sm:$0xff] %v625
      %642 = vst [vmem:[%s230 + $0x40] sm:$0xff] %v626
      %643 = vst [vmem:[%s230 + $0x48] sm:$0xff] %v627
      %644 = vst [vmem:[%s230 + $0x50] sm:$0xff] %v628
      %645 = vst [vmem:[%s230 + $0x58] sm:$0xff] %v629
      %646 = vst [vmem:[%s230 + $0x60] sm:$0xff] %v630
      %647 = vst [vmem:[%s230 + $0x68] sm:$0xff] %v631
      %648 = vst [vmem:[%s230 + $0x70] sm:$0xff] %v632
      %649 = vst [vmem:[%s230 + $0x78] sm:$0xff] %v633
      %s650 = smul.u32 16, %s21
      %p651 = scmp.lt.s32.totalorder %s650, 47
      %s652 = scalar_select %p651, %s650, 47
      %s653 = smul.addr %s652, 8
      %s654 = scalar_lea.vmem %s4, %s653
      // Predicated region
      $region33: #{efficientdet_forward.39} parent=31 // pred_check
        %p655 = pneg %p121
      $region34: #{efficientdet_forward.39} parent=31 // pred_check_branch
        %657 = sbr.rel (%p655) target = $region36
      $region35: #{efficientdet_forward.39} parent=31 // pred_region
        %s658 = smul.u32 16, %s21
      $region36: #{efficientdet_forward.39} parent=31 // pred_fallthru
        _
    $region32: #{efficientdet_forward.39} parent=5 // pred_fallthru
      _
    %p659 = scmp.le.s32.totalorder 2, %s16
    // Predicated region
    $region37: #{efficientdet_forward.39} parent=5 // pred_check
      %p660 = pneg %p659
    $region38: #{efficientdet_forward.39} parent=5 // pred_check_branch
      %662 = sbr.rel (%p660) target = $region40
    $region39: #{efficientdet_forward.39} parent=5 // pred_region
      %s663 = ssub.s32 %s16, 2
      // Predicated region
      $region41: #{efficientdet_forward.39} parent=39 // pred_check
        %p664 = pneg %p127
      $region42: #{efficientdet_forward.39} parent=39 // pred_check_branch
        %666 = sbr.rel (%p664) target = $region44
      $region43: #{efficientdet_forward.39} parent=39 // pred_region
        %s667 = smul.u32 16, %s22
        %p668 = scmp.lt.s32.totalorder %s667, 47
        %s669 = scalar_select %p668, %s667, 47
        %s670 = smul.addr %s669, 8
        %s671 = scalar_lea.vmem %s4, %s670
      $region44: #{efficientdet_forward.39} parent=39 // pred_fallthru
        _
    $region40: #{efficientdet_forward.39} parent=5 // pred_fallthru
      _
  $region6: #{efficientdet_forward.39} parent=0 // loop_footer
    %s20 = sadd.s32 1, %s16
  $region7: #{efficientdet_forward.39} parent=0 // loop_footer_branch
    %15 = sbr.rel target = $region3
  $region8: #{efficientdet_forward.39} parent=0 // loop_exit
    _

// kernel: efficientdet_forward.35
$region0: #{efficientdet_forward.35}
  #allocation0 [shape = 'u32[]', space=smem, size = 0x4, offset = 0x4, fixed_abs, tag = 'smem constant byte address 0x4 - core index']
  #allocation1 [shape = 'u32[144,128]{1,0:T(1,128)}', space=vmem, size = 0x12000, scoped, tag = 'internal scratch']
  #allocation2 [shape = 's32[1]{0}', space=sflag, size = 0x4, scoped, tag = 'scoped memory for efficientdet_forward.35']
  #allocation3 [shape = 's32[1]{0:T(128)S(6)}', space=smem, size = 0x200, scoped, tag = 'prefetched SMEM operand 0']
  %s0 = inlined_call_operand.<no memory space> [shape: s32[1], index: 0, kind: input, shape index: {}]
  %s1 = inlined_call_operand.vmem [shape: bf16[8,144], index: 1, kind: input, shape index: {}]
  %s2 = inlined_call_operand.vmem [shape: bf16[1,144,128], index: 2, kind: input, shape index: {}]
  %s3 = inlined_call_operand.vmem [shape: f32[1,1,128], index: 3, kind: input, shape index: {}]
  %s4 = inlined_call_operand.vmem [shape: f32[8,128], index: 4, kind: output, shape index: {}]
  %s5 = sld [smem:[#allocation0]]
  $region22: #{efficientdet_forward.35} parent=0
    _
  %s7 = ssub.s32 1, %s5
  %s8 = scalar_select 0, %s7, %s5
  %9 = sst [smem:[#allocation3]] %s0
  // Predicated region
  $region2: #{efficientdet_forward.35} parent=0 // pred_check
    _
  $region3: #{efficientdet_forward.35} parent=0 // pred_check_branch
    %11 = sbr.rel (0) target = $region5
  $region4: #{efficientdet_forward.35} parent=0 // pred_region
    _
  $region5: #{efficientdet_forward.35} parent=0 // pred_fallthru
    _
  // Predicated region
  $region6: #{efficientdet_forward.35} parent=0 // pred_check
    _
  $region7: #{efficientdet_forward.35} parent=0 // pred_check_branch
    %13 = sbr.rel (0) target = $region9
  $region8: #{efficientdet_forward.35} parent=0 // pred_region
    %s14 = sld [smem:[#allocation3]]
    %p15 = scmp.lt.s32.totalorder %s14, 0
    %s16 = scalar_select %p15, %s14, 0
    %s17 = smul.addr %s16, 18
    %s18 = smul.addr %s17, 4
    %s19 = scalar_lea.vmem %s2, %s18
    %s20 = sld [smem:[#allocation3]]
  $region9: #{efficientdet_forward.35} parent=0 // pred_fallthru
    _
  // Predicated region
  $region10: #{efficientdet_forward.35} parent=0 // pred_check
    _
  $region11: #{efficientdet_forward.35} parent=0 // pred_check_branch
    %22 = sbr.rel (0) target = $region13
  $region12: #{efficientdet_forward.35} parent=0 // pred_region
    %s23 = sld [smem:[#allocation3]]
    %p24 = scmp.lt.s32.totalorder %s23, 0
    %s25 = scalar_select %p24, %s23, 0
    %s26 = scalar_lea.vmem %s3, %s25
    %s27 = sld [smem:[#allocation3]]
  $region13: #{efficientdet_forward.35} parent=0 // pred_fallthru
    _
  %s28 = sld [smem:[#allocation3]]
  %p29 = scmp.lt.s32.totalorder %s28, 0
  %s30 = scalar_select %p29, %s28, 0
  %s31 = smul.addr %s30, 18
  %s32 = smul.addr %s31, 4
  %s33 = scalar_lea.vmem %s2, %s32
  %s34 = sld [smem:[#allocation3]]
  %p35 = scmp.lt.s32.totalorder %s34, 0
  %s36 = scalar_select %p35, %s34, 0
  %s37 = scalar_lea.vmem %s3, %s36
  %s38 = sld [smem:[#allocation3]]
  %p39 = scmp.lt.s32.totalorder %s38, 0
  %s40 = scalar_select %p39, %s38, 0
  %s41 = smul.addr %s40, 18
  %s42 = smul.addr %s41, 4
  %s43 = scalar_lea.vmem %s2, %s42
  %s44 = sld [smem:[#allocation3]]
  %s45 = sld [smem:[#allocation3]]
  %p46 = scmp.lt.s32.totalorder %s45, 0
  %s47 = scalar_select %p46, %s45, 0
  %s48 = scalar_lea.vmem %s3, %s47
  %s49 = sld [smem:[#allocation3]]
  %v51 = vld [vmem:[%s1] sm:$0xff]
  %v52 = vld [vmem:[%s43] sm:$0xf]
  %v53 = vld [vmem:[%s43 + $0x4] sm:$0xf]
  %v54 = vld [vmem:[%s43 + $0x8] sm:$0xf]
  %v55 = vld [vmem:[%s43 + $0xc] sm:$0xf]
  %v56 = vld [vmem:[%s43 + $0x10] sm:$0xf]
  %v57 = vld [vmem:[%s43 + $0x14] sm:$0xf]
  %v58 = vld [vmem:[%s43 + $0x18] sm:$0xf]
  %v59 = vld [vmem:[%s43 + $0x1c] sm:$0xf]
  %v60 = vld [vmem:[%s43 + $0x20] sm:$0xf]
  %v61 = vld [vmem:[%s43 + $0x24] sm:$0xf]
  %v62 = vld [vmem:[%s43 + $0x28] sm:$0xf]
  %v63 = vld [vmem:[%s43 + $0x2c] sm:$0xf]
  %v64 = vld [vmem:[%s43 + $0x30] sm:$0xf]
  %v65 = vld [vmem:[%s43 + $0x34] sm:$0xf]
  %v66 = vld [vmem:[%s43 + $0x38] sm:$0xf]
  %v67 = vld [vmem:[%s43 + $0x3c] sm:$0xf]
  %v68 = vld [vmem:[%s43 + $0x40] sm:$0xf]
  %v69 = vld [vmem:[%s43 + $0x44] sm:$0xf]
  %v70 = vld [vmem:[%s48] sm:$0x1]
  %v72 = vlaneseq
  %v73 = vshrl.u32 %v72, 7
  %v74 = vsub.s32 0, %v73
  %v75 = vrot.slane %v70, %v74
  %v78 = vunpack.c.l.b16 %v51
  %v79 = vunpack.c.h.b16 %v51
  %v80 = vpack.c.b16 %v78, %v78
  %v81 = vpack.c.b16 %v79, %v79
  %v101 = vunpack.c.l.b16 %v52
  %v102 = vunpack.c.l.b16 %v53
  %v103 = vunpack.c.l.b16 %v54
  %v104 = vunpack.c.l.b16 %v55
  %v105 = vunpack.c.l.b16 %v56
  %v106 = vunpack.c.l.b16 %v57
  %v107 = vunpack.c.l.b16 %v58
  %v108 = vunpack.c.l.b16 %v59
  %v109 = vunpack.c.l.b16 %v60
  %v110 = vunpack.c.l.b16 %v61
  %v111 = vunpack.c.l.b16 %v62
  %v112 = vunpack.c.l.b16 %v63
  %v113 = vunpack.c.l.b16 %v64
  %v114 = vunpack.c.l.b16 %v65
  %v115 = vunpack.c.l.b16 %v66
  %v116 = vunpack.c.l.b16 %v67
  %v117 = vunpack.c.l.b16 %v68
  %v118 = vunpack.c.l.b16 %v69
  %v119 = vpack.c.b16 %v102, %v101
  %v120 = vpack.c.b16 %v104, %v103
  %v121 = vpack.c.b16 %v106, %v105
  %v122 = vpack.c.b16 %v108, %v107
  %v123 = vpack.c.b16 %v110, %v109
  %v124 = vpack.c.b16 %v112, %v111
  %v125 = vpack.c.b16 %v114, %v113
  %v126 = vpack.c.b16 %v116, %v115
  %v127 = vpack.c.b16 %v118, %v117
  %vm137 = vcmask 130048
  %v139 = vsel %vm137, %v81, 0
  %141 = vmatprep.subr.bf16.mxu0 0
  %142 = vmatpush1.bf16.msra.mxu0 %v119
  %143 = vmatprep.subr.bf16.mxu0 0
  %144 = vmatpush1.bf16.msra.mxu0 %v120
  %145 = vmatprep.subr.bf16.mxu0 0
  %146 = vmatpush1.bf16.msra.mxu0 %v121
  %147 = vmatprep.subr.bf16.mxu0 0
  %148 = vmatpush1.bf16.msra.mxu0 %v122
  %149 = vmatprep.subr.bf16.mxu0 0
  %150 = vmatpush1.bf16.msra.mxu0 %v123
  %151 = vmatprep.subr.bf16.mxu0 0
  %152 = vmatpush1.bf16.msra.mxu0 %v124
  %153 = vmatprep.subr.bf16.mxu0 0
  %154 = vmatpush1.bf16.msra.mxu0 %v125
  %155 = vmatprep.subr.bf16.mxu0 0
  %156 = vmatpush1.bf16.msra.mxu0 %v126
  %157 = vmatprep.subr.bf16.mxu0 0
  %158 = vmatpush1.bf16.msra.mxu0 %v127
  %159 = vmatprep.subr.bf16.mxu0 0
  %160 = vmatpush1.bf16.msra.mxu0 0
  %161 = vmatprep.subr.bf16.mxu0 0
  %162 = vmatpush1.bf16.msra.mxu0 0
  %163 = vmatprep.subr.bf16.mxu0 0
  %164 = vmatpush1.bf16.msra.mxu0 0
  %165 = vmatprep.subr.bf16.mxu0 0
  %166 = vmatpush1.bf16.msra.mxu0 0
  %167 = vmatprep.subr.bf16.mxu0 0
  %168 = vmatpush1.bf16.msra.mxu0 0
  %169 = vmatprep.subr.bf16.mxu0 0
  %170 = vmatpush1.bf16.msra.mxu0 0
  %171 = vmatprep.subr.bf16.mxu0 0
  %172 = vmatpush1.bf16.msra.mxu0 0
  %173 = vmatprep.mubr.bf16.mxu0 %v139
  %174 = vmatmul.mubr.bf16.gmra.mrb[0].mxu0 %v80
  %v175 = vpop.f32.mrb[0].mxu0
  %v176 = vadd.f32 %v75, %v175
  %v177 = vpop.f32.mrb[0].mxu0
  %v178 = vpop.f32.mrb[0].mxu0
  %v179 = vpop.f32.mrb[0].mxu0
  %180 = vdwg.mxu0
  %181 = vst [vmem:[%s4] sm:$0xff] %v176
  // Predicated region
  $region14: #{efficientdet_forward.35} parent=0 // pred_check
    _
  $region15: #{efficientdet_forward.35} parent=0 // pred_check_branch
    %183 = sbr.rel (0) target = $region17
  $region16: #{efficientdet_forward.35} parent=0 // pred_region
    _
  $region17: #{efficientdet_forward.35} parent=0 // pred_fallthru
    _
  // Predicated region
  $region18: #{efficientdet_forward.35} parent=0 // pred_check
    _
  $region19: #{efficientdet_forward.35} parent=0 // pred_check_branch
    %185 = sbr.rel (0) target = $region21
  $region20: #{efficientdet_forward.35} parent=0 // pred_region
    _
  $region21: #{efficientdet_forward.35} parent=0 // pred_fallthru
    _

// kernel: efficientdet_forward.41
$region0: #{efficientdet_forward.41}
  #allocation0 [shape = 'u32[]', space=smem, size = 0x4, offset = 0x4, fixed_abs, tag = 'smem constant byte address 0x4 - core index']
  #allocation1 [shape = 'u32[144,128]{1,0:T(1,128)}', space=vmem, size = 0x12000, scoped, tag = 'internal scratch']
  #allocation2 [shape = 's32[1]{0}', space=sflag, size = 0x4, scoped, tag = 'scoped memory for efficientdet_forward.41']
  #allocation3 [shape = 'u8[512]{0}', space=smem, size = 0x200, scoped, tag = 'prefetched SMEM operand 0']
  %s0 = inlined_call_operand.vmem [shape: s32[3], index: 0, kind: input, shape index: {}]
  %s1 = inlined_call_operand.vmem [shape: bf16[384,144], index: 1, kind: input, shape index: {}]
  %s2 = inlined_call_operand.vmem [shape: bf16[1,144,128], index: 2, kind: input, shape index: {}]
  %s3 = inlined_call_operand.vmem [shape: f32[1,1,128], index: 3, kind: input, shape index: {}]
  %s4 = inlined_call_operand.vmem [shape: f32[384,128], index: 4, kind: output, shape index: {}]
  %s5 = sld [smem:[#allocation0]]
  $region45: #{efficientdet_forward.41} parent=0
    _
  %s7 = ssub.s32 1, %s5
  %s8 = scalar_select 0, %s7, %s5
  %s9 = sshll.u32 %s0, 4
  %s10 = int_to_ptr.vmem [resolvable:$true] %s9
  %12 = dma.vmem_to_smem %s10, 16, [#allocation3], [#allocation2]
  %13 = dma.done [#allocation2], 16
  %14 = sfence
  loop: start=0, step=1, limit=5
  $region2: #{efficientdet_forward.41} parent=0 // loop_pre_header
    _
  $region3: #{efficientdet_forward.41} parent=0 // loop_header
    %s16 = sphi 0, %s20
    %p17 = scmp.ge.s32.totalorder %s16, 5
    %s26 = sphi 0, %s28
    %s29 = sphi 0, %s26
    %s30 = sphi 0, %s29
    %s46 = sphi 0, %s30
    %s54 = sphi 0, %s56
    %s57 = sphi 0, %s54
    %s58 = sphi 0, %s57
    %s74 = sphi 0, %s58
    %s82 = sphi 0, %s84
    %s85 = sphi 0, %s82
    %s86 = sphi 0, %s85
    %s102 = sphi 0, %s86
    %s108 = sphi 0, %s110
    %s111 = sphi 0, %s108
    %s112 = sphi 0, %s111
    %s128 = sphi 0, %s112
  $region4: #{efficientdet_forward.41} parent=0 // loop_header_branch
    %19 = sbr.rel (%p17) target = $region8
  $region5: #{efficientdet_forward.41} parent=0 // loop_body
    %s21 = ssub.s32 %s16, 1
    %s22 = ssub.s32 %s16, 2
    %s23 = sadd.s32 %s16, 1
    %s24 = ssub.s32 %s16, %s23
    %p25 = scmp.eq.s32.totalorder %s24, 0
    %s27 = sadd.s32 %s26, 1
    %s28 = scalar_select %p25, %s26, %s27
    %p31 = pneg %p25
    %p32 = scmp.eq.s32.totalorder %s16, 2
    %p33 = por %p31, %p32
    %p34 = scmp.ne.s32.totalorder %s26, %s29
    %p35 = scmp.eq.s32.totalorder %s16, 0
    %p36 = por %p34, %p35
    %p37 = scmp.ne.s32.totalorder %s26, %s29
    %p38 = scmp.eq.s32.totalorder %s21, 2
    %p39 = por %p37, %p38
    %p40 = scmp.ne.s32.totalorder %s29, %s30
    %p41 = scmp.eq.s32.totalorder %s21, 0
    %p42 = por %p40, %p41
    %p43 = scmp.ne.s32.totalorder %s29, %s30
    %p44 = scmp.eq.s32.totalorder %s22, 2
    %p45 = por %p43, %p44
    %p47 = scmp.ne.s32.totalorder %s30, %s46
    %p48 = scmp.eq.s32.totalorder %s22, 0
    %p49 = por %p47, %p48
    %s50 = sld [smem:[#allocation3 + %s16]]
    %s51 = sld [smem:[#allocation3 + %s23]]
    %s52 = ssub.s32 %s50, %s51
    %p53 = scmp.eq.s32.totalorder %s52, 0
    %s55 = sadd.s32 %s54, 1
    %s56 = scalar_select %p53, %s54, %s55
    %p59 = pneg %p53
    %p60 = scmp.eq.s32.totalorder %s16, 2
    %p61 = por %p59, %p60
    %p62 = scmp.ne.s32.totalorder %s54, %s57
    %p63 = scmp.eq.s32.totalorder %s16, 0
    %p64 = por %p62, %p63
    %p65 = scmp.ne.s32.totalorder %s54, %s57
    %p66 = scmp.eq.s32.totalorder %s21, 2
    %p67 = por %p65, %p66
    %p68 = scmp.ne.s32.totalorder %s57, %s58
    %p69 = scmp.eq.s32.totalorder %s21, 0
    %p70 = por %p68, %p69
    %p71 = scmp.ne.s32.totalorder %s57, %s58
    %p72 = scmp.eq.s32.totalorder %s22, 2
    %p73 = por %p71, %p72
    %p75 = scmp.ne.s32.totalorder %s58, %s74
    %p76 = scmp.eq.s32.totalorder %s22, 0
    %p77 = por %p75, %p76
    %s78 = sld [smem:[#allocation3 + %s16]]
    %s79 = sld [smem:[#allocation3 + %s23]]
    %s80 = ssub.s32 %s78, %s79
    %p81 = scmp.eq.s32.totalorder %s80, 0
    %s83 = sadd.s32 %s82, 1
    %s84 = scalar_select %p81, %s82, %s83
    %p87 = pneg %p81
    %p88 = scmp.eq.s32.totalorder %s16, 2
    %p89 = por %p87, %p88
    %p90 = scmp.ne.s32.totalorder %s82, %s85
    %p91 = scmp.eq.s32.totalorder %s16, 0
    %p92 = por %p90, %p91
    %p93 = scmp.ne.s32.totalorder %s82, %s85
    %p94 = scmp.eq.s32.totalorder %s21, 2
    %p95 = por %p93, %p94
    %p96 = scmp.ne.s32.totalorder %s85, %s86
    %p97 = scmp.eq.s32.totalorder %s21, 0
    %p98 = por %p96, %p97
    %p99 = scmp.ne.s32.totalorder %s85, %s86
    %p100 = scmp.eq.s32.totalorder %s22, 2
    %p101 = por %p99, %p100
    %p103 = scmp.ne.s32.totalorder %s86, %s102
    %p104 = scmp.eq.s32.totalorder %s22, 0
    %p105 = por %p103, %p104
    %s106 = ssub.s32 %s16, %s23
    %p107 = scmp.eq.s32.totalorder %s106, 0
    %s109 = sadd.s32 %s108, 1
    %s110 = scalar_select %p107, %s108, %s109
    %p113 = pneg %p107
    %p114 = scmp.eq.s32.totalorder %s16, 2
    %p115 = por %p113, %p114
    %p116 = scmp.ne.s32.totalorder %s108, %s111
    %p117 = scmp.eq.s32.totalorder %s16, 0
    %p118 = por %p116, %p117
    %p119 = scmp.ne.s32.totalorder %s108, %s111
    %p120 = scmp.eq.s32.totalorder %s21, 2
    %p121 = por %p119, %p120
    %p122 = scmp.ne.s32.totalorder %s111, %s112
    %p123 = scmp.eq.s32.totalorder %s21, 0
    %p124 = por %p122, %p123
    %p125 = scmp.ne.s32.totalorder %s111, %s112
    %p126 = scmp.eq.s32.totalorder %s22, 2
    %p127 = por %p125, %p126
    %p129 = scmp.ne.s32.totalorder %s112, %s128
    %p130 = scmp.eq.s32.totalorder %s22, 0
    %p131 = por %p129, %p130
    %p132 = scmp.le.s32.totalorder 1, %s16
    %p133 = scmp.lt.s32.totalorder %s16, 4
    %p134 = pnand %p132, %p133
    %p135 = pneg %p134
    // Predicated region
    $region9: #{efficientdet_forward.41} parent=5 // pred_check
      _
    $region10: #{efficientdet_forward.41} parent=5 // pred_check_branch
      %137 = sbr.rel (%p134) target = $region12
    $region11: #{efficientdet_forward.41} parent=5 // pred_region
      %s138 = ssub.s32 %s16, 1
    $region12: #{efficientdet_forward.41} parent=5 // pred_fallthru
      _
    %p139 = scmp.lt.s32.totalorder %s16, 3
    // Predicated region
    $region13: #{efficientdet_forward.41} parent=5 // pred_check
      %p140 = pneg %p139
    $region14: #{efficientdet_forward.41} parent=5 // pred_check_branch
      %142 = sbr.rel (%p140) target = $region16
    $region15: #{efficientdet_forward.41} parent=5 // pred_region
      // Predicated region
      $region17: #{efficientdet_forward.41} parent=15 // pred_check
        %p143 = pneg %p36
      $region18: #{efficientdet_forward.41} parent=15 // pred_check_branch
        %145 = sbr.rel (%p143) target = $region20
      $region19: #{efficientdet_forward.41} parent=15 // pred_region
        %s146 = smul.u32 16, %s16
        %p147 = scmp.lt.s32.totalorder %s146, 47
        %s148 = scalar_select %p147, %s146, 47
        %s149 = smul.addr %s148, 2
        %s150 = smul.addr %s149, 4
        %s151 = scalar_lea.vmem %s1, %s150
        %s152 = smul.u32 16, %s16
      $region20: #{efficientdet_forward.41} parent=15 // pred_fallthru
        _
      // Predicated region
      $region21: #{efficientdet_forward.41} parent=15 // pred_check
        %p153 = pneg %p64
      $region22: #{efficientdet_forward.41} parent=15 // pred_check_branch
        %155 = sbr.rel (%p153) target = $region24
      $region23: #{efficientdet_forward.41} parent=15 // pred_region
        %s156 = sld [smem:[#allocation3 + %s16]]
        %p157 = scmp.lt.s32.totalorder %s156, 0
        %s158 = scalar_select %p157, %s156, 0
        %s159 = smul.addr %s158, 18
        %s160 = smul.addr %s159, 4
        %s161 = scalar_lea.vmem %s2, %s160
        %s162 = sld [smem:[#allocation3 + %s16]]
      $region24: #{efficientdet_forward.41} parent=15 // pred_fallthru
        _
      // Predicated region
      $region25: #{efficientdet_forward.41} parent=15 // pred_check
        %p163 = pneg %p92
      $region26: #{efficientdet_forward.41} parent=15 // pred_check_branch
        %165 = sbr.rel (%p163) target = $region28
      $region27: #{efficientdet_forward.41} parent=15 // pred_region
        %s166 = sld [smem:[#allocation3 + %s16]]
        %p167 = scmp.lt.s32.totalorder %s166, 0
        %s168 = scalar_select %p167, %s166, 0
        %s169 = scalar_lea.vmem %s3, %s168
        %s170 = sld [smem:[#allocation3 + %s16]]
      $region28: #{efficientdet_forward.41} parent=15 // pred_fallthru
        _
    $region16: #{efficientdet_forward.41} parent=5 // pred_fallthru
      _
    %p171 = scmp.le.s32.totalorder 1, %s16
    %p172 = scmp.lt.s32.totalorder %s16, 4
    %p173 = pnand %p171, %p172
    %p174 = pneg %p173
    // Predicated region
    $region29: #{efficientdet_forward.41} parent=5 // pred_check
      _
    $region30: #{efficientdet_forward.41} parent=5 // pred_check_branch
      %176 = sbr.rel (%p173) target = $region32
    $region31: #{efficientdet_forward.41} parent=5 // pred_region
      %s177 = ssub.s32 %s16, 1
      %s178 = smul.u32 16, %s21
      %p179 = scmp.lt.s32.totalorder %s178, 47
      %s180 = scalar_select %p179, %s178, 47
      %s181 = smul.addr %s180, 2
      %s182 = smul.addr %s181, 4
      %s183 = scalar_lea.vmem %s1, %s182
      %p184 = pneg %p42
      %p185 = pneg %p39
      %s186 = sld [smem:[#allocation3 + %s21]]
      %p187 = scmp.lt.s32.totalorder %s186, 0
      %s188 = scalar_select %p187, %s186, 0
      %s189 = smul.addr %s188, 18
      %s190 = smul.addr %s189, 4
      %s191 = scalar_lea.vmem %s2, %s190
      %p192 = pneg %p70
      %p193 = pneg %p67
      %s194 = sld [smem:[#allocation3 + %s21]]
      %p195 = scmp.lt.s32.totalorder %s194, 0
      %s196 = scalar_select %p195, %s194, 0
      %s197 = scalar_lea.vmem %s3, %s196
      %p198 = pneg %p98
      %p199 = pneg %p95
      %p200 = pneg %p124
      %p201 = pneg %p121
      %s202 = smul.u32 16, %s21
      %p203 = scmp.lt.s32.totalorder %s202, 47
      %s204 = scalar_select %p203, %s202, 47
      %s205 = smul.addr %s204, 8
      %s206 = scalar_lea.vmem %s4, %s205
      %s207 = smul.u32 16, %s21
      %p208 = scmp.lt.s32.totalorder %s207, 47
      %s209 = scalar_select %p208, %s207, 47
      %s210 = smul.addr %s209, 2
      %s211 = smul.addr %s210, 4
      %s212 = scalar_lea.vmem %s1, %s211
      %s213 = smul.u32 16, %s21
      %s214 = sld [smem:[#allocation3 + %s21]]
      %p215 = scmp.lt.s32.totalorder %s214, 0
      %s216 = scalar_select %p215, %s214, 0
      %s217 = smul.addr %s216, 18
      %s218 = smul.addr %s217, 4
      %s219 = scalar_lea.vmem %s2, %s218
      %s220 = sld [smem:[#allocation3 + %s21]]
      %s221 = sld [smem:[#allocation3 + %s21]]
      %p222 = scmp.lt.s32.totalorder %s221, 0
      %s223 = scalar_select %p222, %s221, 0
      %s224 = scalar_lea.vmem %s3, %s223
      %s225 = sld [smem:[#allocation3 + %s21]]
      %s226 = smul.u32 16, %s21
      %p227 = scmp.lt.s32.totalorder %s226, 47
      %s228 = scalar_select %p227, %s226, 47
      %s229 = smul.addr %s228, 8
      %s230 = scalar_lea.vmem %s4, %s229
      %s231 = smul.u32 16, %s21
      %v233 = vld [vmem:[%s212] sm:$0xff]
      %v234 = vld [vmem:[%s212 + $0x8] sm:$0xff]
      %v235 = vld [vmem:[%s212 + $0x10] sm:$0xff]
      %v236 = vld [vmem:[%s212 + $0x18] sm:$0xff]
      %v237 = vld [vmem:[%s212 + $0x20] sm:$0xff]
      %v238 = vld [vmem:[%s212 + $0x28] sm:$0xff]
      %v239 = vld [vmem:[%s212 + $0x30] sm:$0xff]
      %v240 = vld [vmem:[%s212 + $0x38] sm:$0xff]
      %v241 = vld [vmem:[%s212 + $0x40] sm:$0xff]
      %v242 = vld [vmem:[%s212 + $0x48] sm:$0xff]
      %v243 = vld [vmem:[%s212 + $0x50] sm:$0xff]
      %v244 = vld [vmem:[%s212 + $0x58] sm:$0xff]
      %v245 = vld [vmem:[%s212 + $0x60] sm:$0xff]
      %v246 = vld [vmem:[%s212 + $0x68] sm:$0xff]
      %v247 = vld [vmem:[%s212 + $0x70] sm:$0xff]
      %v248 = vld [vmem:[%s212 + $0x78] sm:$0xff]
      %v249 = vld [vmem:[%s219] sm:$0xf]
      %v250 = vld [vmem:[%s219 + $0x4] sm:$0xf]
      %v251 = vld [vmem:[%s219 + $0x8] sm:$0xf]
      %v252 = vld [vmem:[%s219 + $0xc] sm:$0xf]
      %v253 = vld [vmem:[%s219 + $0x10] sm:$0xf]
      %v254 = vld [vmem:[%s219 + $0x14] sm:$0xf]
      %v255 = vld [vmem:[%s219 + $0x18] sm:$0xf]
      %v256 = vld [vmem:[%s219 + $0x1c] sm:$0xf]
      %v257 = vld [vmem:[%s219 + $0x20] sm:$0xf]
      %v258 = vld [vmem:[%s219 + $0x24] sm:$0xf]
      %v259 = vld [vmem:[%s219 + $0x28] sm:$0xf]
      %v260 = vld [vmem:[%s219 + $0x2c] sm:$0xf]
      %v261 = vld [vmem:[%s219 + $0x30] sm:$0xf]
      %v262 = vld [vmem:[%s219 + $0x34] sm:$0xf]
      %v263 = vld [vmem:[%s219 + $0x38] sm:$0xf]
      %v264 = vld [vmem:[%s219 + $0x3c] sm:$0xf]
      %v265 = vld [vmem:[%s219 + $0x40] sm:$0xf]
      %v266 = vld [vmem:[%s219 + $0x44] sm:$0xf]
      %v267 = vld [vmem:[%s224] sm:$0x1]
      %v269 = vlaneseq
      %v270 = vshrl.u32 %v269, 7
      %v271 = vsub.s32 0, %v270
      %v272 = vrot.slane %v267, %v271
      %v290 = vunpack.c.l.b16 %v233
      %v291 = vunpack.c.h.b16 %v233
      %v292 = vunpack.c.l.b16 %v234
      %v293 = vunpack.c.h.b16 %v234
      %v294 = vunpack.c.l.b16 %v235
      %v295 = vunpack.c.h.b16 %v235
      %v296 = vunpack.c.l.b16 %v236
      %v297 = vunpack.c.h.b16 %v236
      %v298 = vunpack.c.l.b16 %v237
      %v299 = vunpack.c.h.b16 %v237
      %v300 = vunpack.c.l.b16 %v238
      %v301 = vunpack.c.h.b16 %v238
      %v302 = vunpack.c.l.b16 %v239
      %v303 = vunpack.c.h.b16 %v239
      %v304 = vunpack.c.l.b16 %v240
      %v305 = vunpack.c.h.b16 %v240
      %v306 = vunpack.c.l.b16 %v241
      %v307 = vunpack.c.h.b16 %v241
      %v308 = vunpack.c.l.b16 %v242
      %v309 = vunpack.c.h.b16 %v242
      %v310 = vunpack.c.l.b16 %v243
      %v311 = vunpack.c.h.b16 %v243
      %v312 = vunpack.c.l.b16 %v244
      %v313 = vunpack.c.h.b16 %v244
      %v314 = vunpack.c.l.b16 %v245
      %v315 = vunpack.c.h.b16 %v245
      %v316 = vunpack.c.l.b16 %v246
      %v317 = vunpack.c.h.b16 %v246
      %v318 = vunpack.c.l.b16 %v247
      %v319 = vunpack.c.h.b16 %v247
      %v320 = vunpack.c.l.b16 %v248
      %v321 = vunpack.c.h.b16 %v248
      %v322 = vpack.c.b16 %v292, %v290
      %v323 = vpack.c.b16 %v293, %v291
      %v324 = vpack.c.b16 %v296, %v294
      %v325 = vpack.c.b16 %v297, %v295
      %v326 = vpack.c.b16 %v300, %v298
      %v327 = vpack.c.b16 %v301, %v299
      %v328 = vpack.c.b16 %v304, %v302
      %v329 = vpack.c.b16 %v305, %v303
      %v330 = vpack.c.b16 %v308, %v306
      %v331 = vpack.c.b16 %v309, %v307
      %v332 = vpack.c.b16 %v312, %v310
      %v333 = vpack.c.b16 %v313, %v311
      %v334 = vpack.c.b16 %v316, %v314
      %v335 = vpack.c.b16 %v317, %v315
      %v336 = vpack.c.b16 %v320, %v318
      %v337 = vpack.c.b16 %v321, %v319
      %v364 = vunpack.c.l.b16 %v249
      %v365 = vunpack.c.l.b16 %v250
      %v366 = vunpack.c.l.b16 %v251
      %v367 = vunpack.c.l.b16 %v252
      %v368 = vunpack.c.l.b16 %v253
      %v369 = vunpack.c.l.b16 %v254
      %v370 = vunpack.c.l.b16 %v255
      %v371 = vunpack.c.l.b16 %v256
      %v372 = vunpack.c.l.b16 %v257
      %v373 = vunpack.c.l.b16 %v258
      %v374 = vunpack.c.l.b16 %v259
      %v375 = vunpack.c.l.b16 %v260
      %v376 = vunpack.c.l.b16 %v261
      %v377 = vunpack.c.l.b16 %v262
      %v378 = vunpack.c.l.b16 %v263
      %v379 = vunpack.c.l.b16 %v264
      %v380 = vunpack.c.l.b16 %v265
      %v381 = vunpack.c.l.b16 %v266
      %v382 = vpack.c.b16 %v365, %v364
      %v383 = vpack.c.b16 %v367, %v366
      %v384 = vpack.c.b16 %v369, %v368
      %v385 = vpack.c.b16 %v371, %v370
      %v386 = vpack.c.b16 %v373, %v372
      %v387 = vpack.c.b16 %v375, %v374
      %v388 = vpack.c.b16 %v377, %v376
      %v389 = vpack.c.b16 %v379, %v378
      %v390 = vpack.c.b16 %v381, %v380
      %vm400 = vcmask 130048
      %v402 = vsel %vm400, %v323, 0
      %v405 = vsel %vm400, %v325, 0
      %v408 = vsel %vm400, %v327, 0
      %v411 = vsel %vm400, %v329, 0
      %v414 = vsel %vm400, %v331, 0
      %v417 = vsel %vm400, %v333, 0
      %v420 = vsel %vm400, %v335, 0
      %v423 = vsel %vm400, %v337, 0
      %425 = vmatprep.subr.bf16.mxu0 0
      %426 = vmatpush1.bf16.msra.mxu0 %v382
      %427 = vmatprep.subr.bf16.mxu0 0
      %428 = vmatpush1.bf16.msra.mxu0 %v383
      %429 = vmatprep.subr.bf16.mxu0 0
      %430 = vmatpush1.bf16.msra.mxu0 %v384
      %431 = vmatprep.subr.bf16.mxu0 0
      %432 = vmatpush1.bf16.msra.mxu0 %v385
      %433 = vmatprep.subr.bf16.mxu0 0
      %434 = vmatpush1.bf16.msra.mxu0 %v386
      %435 = vmatprep.subr.bf16.mxu0 0
      %436 = vmatpush1.bf16.msra.mxu0 %v387
      %437 = vmatprep.subr.bf16.mxu0 0
      %438 = vmatpush1.bf16.msra.mxu0 %v388
      %439 = vmatprep.subr.bf16.mxu0 0
      %440 = vmatpush1.bf16.msra.mxu0 %v389
      %441 = vmatprep.subr.bf16.mxu0 0
      %442 = vmatpush1.bf16.msra.mxu0 %v390
      %443 = vmatprep.subr.bf16.mxu0 0
      %444 = vmatpush1.bf16.msra.mxu0 0
      %445 = vmatprep.subr.bf16.mxu0 0
      %446 = vmatpush1.bf16.msra.mxu0 0
      %447 = vmatprep.subr.bf16.mxu0 0
      %448 = vmatpush1.bf16.msra.mxu0 0
      %449 = vmatprep.subr.bf16.mxu0 0
      %450 = vmatpush1.bf16.msra.mxu0 0
      %451 = vmatprep.subr.bf16.mxu0 0
      %452 = vmatpush1.bf16.msra.mxu0 0
      %453 = vmatprep.subr.bf16.mxu0 0
      %454 = vmatpush1.bf16.msra.mxu0 0
      %455 = vmatprep.subr.bf16.mxu0 0
      %456 = vmatpush1.bf16.msra.mxu0 0
      %457 = vmatprep.mubr.bf16.mxu0 %v402
      %458 = vmatmul.mubr.bf16.gmra.mrb[0].mxu0 %v322
      %v459 = vpop.f32.mrb[0].mxu0
      %v460 = vadd.f32 %v272, %v459
      %v461 = vpop.f32.mrb[0].mxu0
      %v462 = vpop.f32.mrb[0].mxu0
      %v463 = vadd.f32 %v272, %v462
      %v464 = vpop.f32.mrb[0].mxu0
      %465 = vmatprep.mubr.bf16.mxu0 %v405
      %466 = vmatmul.mubr.bf16.gmra.mrb[0].mxu0 %v324
      %v467 = vpop.f32.mrb[0].mxu0
      %v468 = vadd.f32 %v272, %v467
      %v469 = vpop.f32.mrb[0].mxu0
      %v470 = vpop.f32.mrb[0].mxu0
      %v471 = vadd.f32 %v272, %v470
      %v472 = vpop.f32.mrb[0].mxu0
      %473 = vmatprep.mubr.bf16.mxu0 %v408
      %474 = vmatmul.mubr.bf16.gmra.mrb[0].mxu0 %v326
      %v475 = vpop.f32.mrb[0].mxu0
      %v476 = vadd.f32 %v272, %v475
      %v477 = vpop.f32.mrb[0].mxu0
      %v478 = vpop.f32.mrb[0].mxu0
      %v479 = vadd.f32 %v272, %v478
      %v480 = vpop.f32.mrb[0].mxu0
      %481 = vmatprep.mubr.bf16.mxu0 %v411
      %482 = vmatmul.mubr.bf16.gmra.mrb[0].mxu0 %v328
      %v483 = vpop.f32.mrb[0].mxu0
      %v484 = vadd.f32 %v272, %v483
      %v485 = vpop.f32.mrb[0].mxu0
      %v486 = vpop.f32.mrb[0].mxu0
      %v487 = vadd.f32 %v272, %v486
      %v488 = vpop.f32.mrb[0].mxu0
      %489 = vmatprep.mubr.bf16.mxu0 %v414
      %490 = vmatmul.mubr.bf16.gmra.mrb[0].mxu0 %v330
      %v491 = vpop.f32.mrb[0].mxu0
      %v492 = vadd.f32 %v272, %v491
      %v493 = vpop.f32.mrb[0].mxu0
      %v494 = vpop.f32.mrb[0].mxu0
      %v495 = vadd.f32 %v272, %v494
      %v496 = vpop.f32.mrb[0].mxu0
      %497 = vmatprep.mubr.bf16.mxu0 %v417
      %498 = vmatmul.mubr.bf16.gmra.mrb[0].mxu0 %v332
      %v499 = vpop.f32.mrb[0].mxu0
      %v500 = vadd.f32 %v272, %v499
      %v501 = vpop.f32.mrb[0].mxu0
      %v502 = vpop.f32.mrb[0].mxu0
      %v503 = vadd.f32 %v272, %v502
      %v504 = vpop.f32.mrb[0].mxu0
      %505 = vmatprep.mubr.bf16.mxu0 %v420
      %506 = vmatmul.mubr.bf16.gmra.mrb[0].mxu0 %v334
      %v507 = vpop.f32.mrb[0].mxu0
      %v508 = vadd.f32 %v272, %v507
      %v509 = vpop.f32.mrb[0].mxu0
      %v510 = vpop.f32.mrb[0].mxu0
      %v511 = vadd.f32 %v272, %v510
      %v512 = vpop.f32.mrb[0].mxu0
      %513 = vmatprep.mubr.bf16.mxu0 %v423
      %514 = vmatmul.mubr.bf16.gmra.mrb[0].mxu0 %v336
      %v515 = vpop.f32.mrb[0].mxu0
      %v516 = vadd.f32 %v272, %v515
      %v517 = vpop.f32.mrb[0].mxu0
      %v518 = vpop.f32.mrb[0].mxu0
      %v519 = vadd.f32 %v272, %v518
      %v520 = vpop.f32.mrb[0].mxu0
      %521 = vdwg.mxu0
      %522 = vst [vmem:[%s230] sm:$0xff] %v460
      %523 = vst [vmem:[%s230 + $0x8] sm:$0xff] %v463
      %524 = vst [vmem:[%s230 + $0x10] sm:$0xff] %v468
      %525 = vst [vmem:[%s230 + $0x18] sm:$0xff] %v471
      %526 = vst [vmem:[%s230 + $0x20] sm:$0xff] %v476
      %527 = vst [vmem:[%s230 + $0x28] sm:$0xff] %v479
      %528 = vst [vmem:[%s230 + $0x30] sm:$0xff] %v484
      %529 = vst [vmem:[%s230 + $0x38] sm:$0xff] %v487
      %530 = vst [vmem:[%s230 + $0x40] sm:$0xff] %v492
      %531 = vst [vmem:[%s230 + $0x48] sm:$0xff] %v495
      %532 = vst [vmem:[%s230 + $0x50] sm:$0xff] %v500
      %533 = vst [vmem:[%s230 + $0x58] sm:$0xff] %v503
      %534 = vst [vmem:[%s230 + $0x60] sm:$0xff] %v508
      %535 = vst [vmem:[%s230 + $0x68] sm:$0xff] %v511
      %536 = vst [vmem:[%s230 + $0x70] sm:$0xff] %v516
      %537 = vst [vmem:[%s230 + $0x78] sm:$0xff] %v519
      %s538 = smul.u32 16, %s21
      %p539 = scmp.lt.s32.totalorder %s538, 47
      %s540 = scalar_select %p539, %s538, 47
      %s541 = smul.addr %s540, 8
      %s542 = scalar_lea.vmem %s4, %s541
      // Predicated region
      $region33: #{efficientdet_forward.41} parent=31 // pred_check
        %p543 = pneg %p121
      $region34: #{efficientdet_forward.41} parent=31 // pred_check_branch
        %545 = sbr.rel (%p543) target = $region36
      $region35: #{efficientdet_forward.41} parent=31 // pred_region
        %s546 = smul.u32 16, %s21
      $region36: #{efficientdet_forward.41} parent=31 // pred_fallthru
        _
    $region32: #{efficientdet_forward.41} parent=5 // pred_fallthru
      _
    %p547 = scmp.le.s32.totalorder 2, %s16
    // Predicated region
    $region37: #{efficientdet_forward.41} parent=5 // pred_check
      %p548 = pneg %p547
    $region38: #{efficientdet_forward.41} parent=5 // pred_check_branch
      %550 = sbr.rel (%p548) target = $region40
    $region39: #{efficientdet_forward.41} parent=5 // pred_region
      %s551 = ssub.s32 %s16, 2
      // Predicated region
      $region41: #{efficientdet_forward.41} parent=39 // pred_check
        %p552 = pneg %p127
      $region42: #{efficientdet_forward.41} parent=39 // pred_check_branch
        %554 = sbr.rel (%p552) target = $region44
      $region43: #{efficientdet_forward.41} parent=39 // pred_region
        %s555 = smul.u32 16, %s22
        %p556 = scmp.lt.s32.totalorder %s555, 47
        %s557 = scalar_select %p556, %s555, 47
        %s558 = smul.addr %s557, 8
        %s559 = scalar_lea.vmem %s4, %s558
      $region44: #{efficientdet_forward.41} parent=39 // pred_fallthru
        _
    $region40: #{efficientdet_forward.41} parent=5 // pred_fallthru
      _
  $region6: #{efficientdet_forward.41} parent=0 // loop_footer
    %s20 = sadd.s32 1, %s16
  $region7: #{efficientdet_forward.41} parent=0 // loop_footer_branch
    %15 = sbr.rel target = $region3
  $region8: #{efficientdet_forward.41} parent=0 // loop_exit
    _

</llo_original>
